<compile_context>
chip_gen: v6e
topology: v6e:2x2x1
jax: 0.10.0
libtpu: 0.0.40
codegen_flags: <defaults>
</compile_context>

<pallas_src>
import jax
import jax.numpy as jnp
from jax.experimental import pallas as pl
from jax.experimental.pallas import tpu as pltpu

# ------------------------- model configuration (small) -------------------------
BATCH = 2
IN_CH = 3
IMG = 16
PATCH = 4
GRID_N = IMG // PATCH          # 4
NUM_PATCHES = GRID_N * GRID_N  # 16
SEQ = NUM_PATCHES + 1          # 17 (CLS token)
SEQ_PAD = 24                   # per-image rows padded to a sublane multiple
TOT = BATCH * SEQ_PAD          # 48 rows in the fused activation slab
WIDTH = 32                     # transformer width
HEADS = 4
HEAD_DIM = WIDTH // HEADS      # 8
LAYERS = 2
MLP_DIM = 4 * WIDTH            # 128
OUTPUT_DIM = 16
OUT_PAD = 128                  # lane-dense kernel output; sliced in the wrapper
PATCH_DIM = IN_CH * PATCH * PATCH  # 48
LN_EPS = 1e-5
ATTN_SCALE = 1.0 / float(HEAD_DIM) ** 0.5


# ------------------------------- fused Pallas kernel ----------------------------

def _layernorm(x, g, b):
    mu = jnp.mean(x, axis=-1, keepdims=True)
    var = jnp.mean((x - mu) ** 2, axis=-1, keepdims=True)
    return (x - mu) * jax.lax.rsqrt(var + LN_EPS) * g + b


def _encoder_kernel(
    patches_ref,                                   # (TOT, PATCH_DIM)
    conv_w_ref,                                    # (PATCH_DIM, WIDTH)
    pos_cls_ref,                                   # (TOT, WIDTH)  pos emb (+cls in row0), tiled per image
    ln_pre_g_ref, ln_pre_b_ref,                    # (1, WIDTH)
    ln1_g_ref, ln1_b_ref,                          # (LAYERS, 1, WIDTH)
    qkv_w_ref, qkv_b_ref,                          # (LAYERS, WIDTH, 3W) / (LAYERS, 1, 3W)  (scale folded into Q)
    wo_ref, bo_ref,                                # (LAYERS, WIDTH, WIDTH) / (LAYERS, 1, WIDTH)
    ln2_g_ref, ln2_b_ref,                          # (LAYERS, 1, WIDTH)
    fc1_w_ref, fc1_b_ref,                          # (LAYERS, WIDTH, MLP) / (LAYERS, 1, MLP)
    fc2_w_ref, fc2_b_ref,                          # (LAYERS, MLP, WIDTH) / (LAYERS, 1, WIDTH)
    ln_post_g_ref, ln_post_b_ref,                  # (1, WIDTH)
    proj_ref,                                      # (WIDTH, OUT_PAD)
    o_ref,                                         # (BATCH, OUT_PAD)
    attn_ref,                                      # VMEM scratch (TOT, WIDTH)
):
    # Patch embedding (conv1 with kernel=stride=PATCH, no bias) as one matmul over
    # the whole batch slab.  CLS slots (row 0 of each image) are zero in the patch
    # slab; pos_cls already holds class_embedding + positional_embedding[0] there.
    x = jnp.dot(patches_ref[...], conv_w_ref[...],
                preferred_element_type=jnp.float32)           # (TOT, WIDTH)
    x = x + pos_cls_ref[...]
    x = _layernorm(x, ln_pre_g_ref[...], ln_pre_b_ref[...])

    # Padded rows (17..23 of each image) never feed attention K/V; zero them once
    # in the attention scratch so the out-projection slab stays well defined.
    attn_ref[...] = jnp.zeros_like(attn_ref)

    for l in range(LAYERS):                                   # tiny model: static unroll
        # --- multi-head self-attention ---
        y = _layernorm(x, ln1_g_ref[l], ln1_b_ref[l])
        # Fused QKV: one (TOT, W) @ (W, 3W) lane-dense matmul; attention scale was
        # folded into the Q third of the weights/bias offline.
        qkv = jnp.dot(y, qkv_w_ref[l], preferred_element_type=jnp.float32) + qkv_b_ref[l]

        for b in range(BATCH):                                # images are independent
            r0 = b * SEQ_PAD                                  # sublane-aligned start
            q = qkv[r0:r0 + SEQ, 0 * WIDTH:1 * WIDTH]         # (SEQ, W), pre-scaled
            k = qkv[r0:r0 + SEQ, 1 * WIDTH:2 * WIDTH]
            v = qkv[r0:r0 + SEQ, 2 * WIDTH:3 * WIDTH]
            heads = []
            for h in range(HEADS):
                c0 = h * HEAD_DIM
                qh = q[:, c0:c0 + HEAD_DIM]
                kh = k[:, c0:c0 + HEAD_DIM]
                vh = v[:, c0:c0 + HEAD_DIM]
                # q . k^T without materializing a transpose: contract last dims.
                s = jax.lax.dot_general(qh, kh, (((1,), (1,)), ((), ())),
                                        preferred_element_type=jnp.float32)  # (SEQ, SEQ)
                m = jnp.max(s, axis=-1, keepdims=True)
                p = jnp.exp(s - m)
                p = p * pl.reciprocal(jnp.sum(p, axis=-1, keepdims=True), approx=True)
                heads.append(jnp.dot(p, vh, preferred_element_type=jnp.float32))  # (SEQ, HD)
            # Re-assemble heads along lanes and park them in the (TOT, W) scratch.
            attn_ref[r0:r0 + SEQ, :] = jnp.concatenate(heads, axis=-1)

        # Single full-width out-projection for the whole slab: (TOT, W) @ (W, W).
        x = x + jnp.dot(attn_ref[...], wo_ref[l],
                        preferred_element_type=jnp.float32) + bo_ref[l]

        # --- MLP with QuickGELU ---
        y = _layernorm(x, ln2_g_ref[l], ln2_b_ref[l])
        h1 = jnp.dot(y, fc1_w_ref[l], preferred_element_type=jnp.float32) + fc1_b_ref[l]
        h1 = h1 * jax.nn.sigmoid(1.702 * h1)                  # QuickGELU
        x = x + (jnp.dot(h1, fc2_w_ref[l], preferred_element_type=jnp.float32)
                 + fc2_b_ref[l])

    # ln_post on each image's CLS token (rows 0, SEQ_PAD, ...), then projection.
    cls = jnp.concatenate(
        [x[b * SEQ_PAD:b * SEQ_PAD + 1, :] for b in range(BATCH)], axis=0)  # (B, W)
    cls = _layernorm(cls, ln_post_g_ref[...], ln_post_b_ref[...])
    o_ref[...] = jnp.dot(cls, proj_ref[...], preferred_element_type=jnp.float32)


# ------------------------------- kernel wrapper ---------------------------------

_WEIGHT_ORDER = (
    "conv_w", "pos_cls", "ln_pre_g", "ln_pre_b",
    "ln1_g", "ln1_b", "qkv_w", "qkv_b", "wo", "bo",
    "ln2_g", "ln2_b", "fc1_w", "fc1_b", "fc2_w", "fc2_b",
    "ln_post_g", "ln_post_b", "proj",
)


def _full_spec(shape):
    n = len(shape)
    return pl.BlockSpec(shape, lambda i, _n=n: (0,) * _n)


def encode_image(kparams, images):
    """CLIP VisionTransformer forward. images: (B, C, H, W) -> (B, OUTPUT_DIM)."""
    B = images.shape[0]
    assert B == BATCH, "kernel is specialized to the configured batch size"
    # im2col for the strided patch conv (NCHW, kernel=stride=PATCH).  Each image
    # gets 1 leading zero row (CLS slot) and SEQ_PAD-SEQ trailing zero rows so the
    # per-image slab is sublane-aligned; then the batch is folded into one slab.
    x = images.reshape(B, IN_CH, GRID_N, PATCH, GRID_N, PATCH)
    x = x.transpose(0, 2, 4, 1, 3, 5).reshape(B, NUM_PATCHES, PATCH_DIM)
    patches = jnp.pad(x, ((0, 0), (1, SEQ_PAD - SEQ), (0, 0)))
    patches = patches.reshape(B * SEQ_PAD, PATCH_DIM)          # (TOT, PATCH_DIM)

    weights = [kparams[k] for k in _WEIGHT_ORDER]
    in_specs = [_full_spec(patches.shape)] + [_full_spec(w.shape) for w in weights]

    out = pl.pallas_call(
        _encoder_kernel,
        out_shape=jax.ShapeDtypeStruct((B, OUT_PAD), jnp.float32),
        grid=(1,),                                             # single fused step
        in_specs=in_specs,
        out_specs=pl.BlockSpec((B, OUT_PAD), lambda i: (0, 0)),
        scratch_shapes=[pltpu.VMEM((TOT, WIDTH), jnp.float32)],
        compiler_params=pltpu.CompilerParams(dimension_semantics=("arbitrary",)),
    )(patches, *weights)
    return out[:, :OUTPUT_DIM]


# ------------------------------ parameter handling --------------------------------

def init_params(key):
    """CLIP-layout parameters (same structure as the PyTorch VisionTransformer)."""
    keys = jax.random.split(key, 8 + 10 * LAYERS)
    ki = iter(keys)
    nrm = lambda shape, std: std * jax.random.normal(next(ki), shape, jnp.float32)

    params = {
        "conv1_w": nrm((WIDTH, IN_CH, PATCH, PATCH), 0.02),   # conv1, bias=False
        "class_embedding": nrm((WIDTH,), 0.02),
        "positional_embedding": nrm((SEQ, WIDTH), 0.01),
        "ln_pre_g": jnp.ones((WIDTH,), jnp.float32),
        "ln_pre_b": jnp.zeros((WIDTH,), jnp.float32),
        "ln_post_g": jnp.ones((WIDTH,), jnp.float32),
        "ln_post_b": jnp.zeros((WIDTH,), jnp.float32),
        "proj": nrm((WIDTH, OUTPUT_DIM), 0.02),
        "blocks": [],
    }
    for _ in range(LAYERS):
        params["blocks"].append({
            "ln1_g": jnp.ones((WIDTH,), jnp.float32),
            "ln1_b": jnp.zeros((WIDTH,), jnp.float32),
            "ln2_g": jnp.ones((WIDTH,), jnp.float32),
            "ln2_b": jnp.zeros((WIDTH,), jnp.float32),
            "qkv_w": nrm((WIDTH, 3 * WIDTH), 0.02),           # fused in-proj (in, out)
            "qkv_b": jnp.zeros((3 * WIDTH,), jnp.float32),
            "out_w": nrm((WIDTH, WIDTH), 0.02),
            "out_b": jnp.zeros((WIDTH,), jnp.float32),
            "fc1_w": nrm((WIDTH, MLP_DIM), 0.02),
            "fc1_b": jnp.zeros((MLP_DIM,), jnp.float32),
            "fc2_w": nrm((MLP_DIM, WIDTH), 0.02),
            "fc2_b": jnp.zeros((WIDTH,), jnp.float32),
        })
    return params


def prepare_params(p):
    """Reshape CLIP-layout params into the fused-kernel layout (done once)."""
    L, W = LAYERS, WIDTH
    stacks = {k: jnp.stack([blk[k] for blk in p["blocks"]]) for k in p["blocks"][0]}

    # Fold the attention scale into the Q third of the fused QKV projection so the
    # kernel never multiplies by ATTN_SCALE.
    scale = jnp.concatenate([jnp.full((W,), ATTN_SCALE, jnp.float32),
                             jnp.ones((2 * W,), jnp.float32)])
    qkv_w = stacks["qkv_w"] * scale                           # (L, W, 3W), lane-dense
    qkv_b = stacks["qkv_b"] * scale                           # (L, 3W)

    # Positional embedding with the class embedding folded into row 0, padded to
    # SEQ_PAD rows per image and tiled for the folded batch slab.
    pos = p["positional_embedding"].at[0].add(p["class_embedding"])
    pos = jnp.pad(pos, ((0, SEQ_PAD - SEQ), (0, 0)))          # (SEQ_PAD, W)
    pos = jnp.tile(pos, (BATCH, 1))                           # (TOT, W)

    # 128-lane padded output projection (wrapper slices back to OUTPUT_DIM).
    proj = jnp.zeros((W, OUT_PAD), jnp.float32).at[:, :OUTPUT_DIM].set(p["proj"])

    return {
        "conv_w": p["conv1_w"].reshape(W, PATCH_DIM).T,       # (PATCH_DIM, W)
        "pos_cls": pos,
        "ln_pre_g": p["ln_pre_g"].reshape(1, W),
        "ln_pre_b": p["ln_pre_b"].reshape(1, W),
        "ln1_g": stacks["ln1_g"].reshape(L, 1, W),
        "ln1_b": stacks["ln1_b"].reshape(L, 1, W),
        "qkv_w": qkv_w,
        "qkv_b": qkv_b.reshape(L, 1, 3 * W),
        "wo": stacks["out_w"],                                # (L, W, W)
        "bo": stacks["out_b"].reshape(L, 1, W),
        "ln2_g": stacks["ln2_g"].reshape(L, 1, W),
        "ln2_b": stacks["ln2_b"].reshape(L, 1, W),
        "fc1_w": stacks["fc1_w"],                             # (L, W, MLP)
        "fc1_b": stacks["fc1_b"].reshape(L, 1, MLP_DIM),
        "fc2_w": stacks["fc2_w"],                             # (L, MLP, W)
        "fc2_b": stacks["fc2_b"].reshape(L, 1, W),
        "ln_post_g": p["ln_post_g"].reshape(1, W),
        "ln_post_b": p["ln_post_b"].reshape(1, W),
        "proj": proj,
    }


# ------------------------------ pure-JAX reference --------------------------------

def _reference(params, images):
    B = images.shape[0]
    x = images.reshape(B, IN_CH, GRID_N, PATCH, GRID_N, PATCH)
    x = x.transpose(0, 2, 4, 1, 3, 5).reshape(B, NUM_PATCHES, PATCH_DIM)
    x = x @ params["conv1_w"].reshape(WIDTH, PATCH_DIM).T
    cls = jnp.broadcast_to(params["class_embedding"], (B, 1, WIDTH))
    x = jnp.concatenate([cls, x], axis=1) + params["positional_embedding"][None]

    def ln(t, g, b):
        mu = t.mean(-1, keepdims=True)
        var = ((t - mu) ** 2).mean(-1, keepdims=True)
        return (t - mu) / jnp.sqrt(var + LN_EPS) * g + b

    x = ln(x, params["ln_pre_g"], params["ln_pre_b"])
    for blk in params["blocks"]:
        y = ln(x, blk["ln1_g"], blk["ln1_b"])
        qkv = y @ blk["qkv_w"] + blk["qkv_b"]
        q, k, v = jnp.split(qkv, 3, axis=-1)
        heads = lambda t: t.reshape(B, SEQ, HEADS, HEAD_DIM).transpose(0, 2, 1, 3)
        q, k, v = heads(q), heads(k), heads(v)
        s = jnp.einsum("bhqd,bhkd->bhqk", q, k) * ATTN_SCALE
        o = jnp.einsum("bhqk,bhkd->bhqd", jax.nn.softmax(s, axis=-1), v)
        o = o.transpose(0, 2, 1, 3).reshape(B, SEQ, WIDTH)
        x = x + (o @ blk["out_w"] + blk["out_b"])
        y = ln(x, blk["ln2_g"], blk["ln2_b"])
        h = y @ blk["fc1_w"] + blk["fc1_b"]
        h = h * jax.nn.sigmoid(1.702 * h)
        x = x + (h @ blk["fc2_w"] + blk["fc2_b"])
    cls_tok = ln(x[:, 0, :], params["ln_post_g"], params["ln_post_b"])
    return cls_tok @ params["proj"]


# ------------------------------------ main ---------------------------------------

if __name__ == "__main__":
    key = jax.random.PRNGKey(0)
    k_img, k_par = jax.random.split(key)
    images = jax.random.normal(k_img, (BATCH, IN_CH, IMG, IMG), jnp.float32)
    params = init_params(k_par)
    kparams = prepare_params(params)

    out = jax.jit(encode_image)(kparams, images)
    out = jax.block_until_ready(out)

    assert out.shape == (BATCH, OUTPUT_DIM), out.shape
    assert out.dtype == jnp.float32
    assert bool(jnp.all(jnp.isfinite(out)))

    ref = _reference(params, images)
    assert bool(jnp.allclose(out, ref, rtol=2e-2, atol=2e-2)), "mismatch vs reference"

    print("KERNEL_OK")
</pallas_src>

<mosaic_0001>
module attributes {stable_mosaic.version = 11 : i64} {
  func.func @_encoder_kernel(%arg0: i32, %arg1: memref<48x48xf32, #tpu.memory_space<vmem>>, %arg2: memref<48x32xf32, #tpu.memory_space<vmem>>, %arg3: memref<48x32xf32, #tpu.memory_space<vmem>>, %arg4: memref<1x32xf32, #tpu.memory_space<vmem>>, %arg5: memref<1x32xf32, #tpu.memory_space<vmem>>, %arg6: memref<2x1x32xf32, #tpu.memory_space<vmem>>, %arg7: memref<2x1x32xf32, #tpu.memory_space<vmem>>, %arg8: memref<2x32x96xf32, #tpu.memory_space<vmem>>, %arg9: memref<2x1x96xf32, #tpu.memory_space<vmem>>, %arg10: memref<2x32x32xf32, #tpu.memory_space<vmem>>, %arg11: memref<2x1x32xf32, #tpu.memory_space<vmem>>, %arg12: memref<2x1x32xf32, #tpu.memory_space<vmem>>, %arg13: memref<2x1x32xf32, #tpu.memory_space<vmem>>, %arg14: memref<2x32x128xf32, #tpu.memory_space<vmem>>, %arg15: memref<2x1x128xf32, #tpu.memory_space<vmem>>, %arg16: memref<2x128x32xf32, #tpu.memory_space<vmem>>, %arg17: memref<2x1x32xf32, #tpu.memory_space<vmem>>, %arg18: memref<1x32xf32, #tpu.memory_space<vmem>>, %arg19: memref<1x32xf32, #tpu.memory_space<vmem>>, %arg20: memref<32x128xf32, #tpu.memory_space<vmem>>, %arg21: memref<2x128xf32, #tpu.memory_space<vmem>>, %arg22: memref<48x32xf32, #tpu.memory_space<vmem>>) attributes {dimension_semantics = [#tpu.dimension_semantics<arbitrary>], iteration_bounds = array<i64: 1>, scalar_prefetch = 0 : i64, scratch_operands = 1 : i64, tpu.core_type = #tpu.core_type<tc>, window_params = [{pipeline_mode = #tpu.pipeline_mode<synchronous>, transform_indices = @transform_0, window_bounds = array<i64: 48, 48>}, {pipeline_mode = #tpu.pipeline_mode<synchronous>, transform_indices = @transform_1, window_bounds = array<i64: 48, 32>}, {pipeline_mode = #tpu.pipeline_mode<synchronous>, transform_indices = @transform_2, window_bounds = array<i64: 48, 32>}, {pipeline_mode = #tpu.pipeline_mode<synchronous>, transform_indices = @transform_3, window_bounds = array<i64: 1, 32>}, {pipeline_mode = #tpu.pipeline_mode<synchronous>, transform_indices = @transform_4, window_bounds = array<i64: 1, 32>}, {pipeline_mode = #tpu.pipeline_mode<synchronous>, transform_indices = @transform_5, window_bounds = array<i64: 2, 1, 32>}, {pipeline_mode = #tpu.pipeline_mode<synchronous>, transform_indices = @transform_6, window_bounds = array<i64: 2, 1, 32>}, {pipeline_mode = #tpu.pipeline_mode<synchronous>, transform_indices = @transform_7, window_bounds = array<i64: 2, 32, 96>}, {pipeline_mode = #tpu.pipeline_mode<synchronous>, transform_indices = @transform_8, window_bounds = array<i64: 2, 1, 96>}, {pipeline_mode = #tpu.pipeline_mode<synchronous>, transform_indices = @transform_9, window_bounds = array<i64: 2, 32, 32>}, {pipeline_mode = #tpu.pipeline_mode<synchronous>, transform_indices = @transform_10, window_bounds = array<i64: 2, 1, 32>}, {pipeline_mode = #tpu.pipeline_mode<synchronous>, transform_indices = @transform_11, window_bounds = array<i64: 2, 1, 32>}, {pipeline_mode = #tpu.pipeline_mode<synchronous>, transform_indices = @transform_12, window_bounds = array<i64: 2, 1, 32>}, {pipeline_mode = #tpu.pipeline_mode<synchronous>, transform_indices = @transform_13, window_bounds = array<i64: 2, 32, 128>}, {pipeline_mode = #tpu.pipeline_mode<synchronous>, transform_indices = @transform_14, window_bounds = array<i64: 2, 1, 128>}, {pipeline_mode = #tpu.pipeline_mode<synchronous>, transform_indices = @transform_15, window_bounds = array<i64: 2, 128, 32>}, {pipeline_mode = #tpu.pipeline_mode<synchronous>, transform_indices = @transform_16, window_bounds = array<i64: 2, 1, 32>}, {pipeline_mode = #tpu.pipeline_mode<synchronous>, transform_indices = @transform_17, window_bounds = array<i64: 1, 32>}, {pipeline_mode = #tpu.pipeline_mode<synchronous>, transform_indices = @transform_18, window_bounds = array<i64: 1, 32>}, {pipeline_mode = #tpu.pipeline_mode<synchronous>, transform_indices = @transform_19, window_bounds = array<i64: 32, 128>}, {pipeline_mode = #tpu.pipeline_mode<synchronous>, transform_indices = @transform_20, window_bounds = array<i64: 2, 128>}]} {
    %c0 = arith.constant 0 : index
    %c0_0 = arith.constant 0 : index
    %0 = vector.load %arg1[%c0, %c0_0] : memref<48x48xf32, #tpu.memory_space<vmem>>, vector<48x48xf32>
    %c0_1 = arith.constant 0 : index
    %c0_2 = arith.constant 0 : index
    %1 = vector.load %arg2[%c0_1, %c0_2] : memref<48x32xf32, #tpu.memory_space<vmem>>, vector<48x32xf32>
    %cst = arith.constant dense<0.000000e+00> : vector<48x32xf32>
    %2 = tpu.matmul %0, %1, %cst {dimension_numbers = #tpu.dot_dimension_numbers<[1], [0], [0], [1], [0, 0, 1, 1], [], []>} : vector<48x48xf32>, vector<48x32xf32>, vector<48x32xf32> -> vector<48x32xf32>
    %c0_3 = arith.constant 0 : index
    %c0_4 = arith.constant 0 : index
    %3 = vector.load %arg3[%c0_3, %c0_4] : memref<48x32xf32, #tpu.memory_space<vmem>>, vector<48x32xf32>
    %4 = arith.addf %2, %3 : vector<48x32xf32>
    %c0_5 = arith.constant 0 : index
    %c0_6 = arith.constant 0 : index
    %5 = vector.load %arg4[%c0_5, %c0_6] : memref<1x32xf32, #tpu.memory_space<vmem>>, vector<1x32xf32>
    %c0_7 = arith.constant 0 : index
    %c0_8 = arith.constant 0 : index
    %6 = vector.load %arg5[%c0_7, %c0_8] : memref<1x32xf32, #tpu.memory_space<vmem>>, vector<1x32xf32>
    %cst_9 = arith.constant dense<0.000000e+00> : vector<48xf32>
    %7 = vector.multi_reduction <add>, %4, %cst_9 [1] : vector<48x32xf32> to vector<48xf32>
    %8 = vector.shape_cast %7 : vector<48xf32> to vector<48x1xf32>
    %cst_10 = arith.constant 3.200000e+01 : f32
    %9 = vector.broadcast %cst_10 : f32 to vector<48x1xf32>
    %10 = arith.divf %8, %9 : vector<48x1xf32>
    %11 = vector.broadcast %10 : vector<48x1xf32> to vector<48x32xf32>
    %12 = arith.subf %4, %11 : vector<48x32xf32>
    %13 = arith.mulf %12, %12 : vector<48x32xf32>
    %cst_11 = arith.constant dense<0.000000e+00> : vector<48xf32>
    %14 = vector.multi_reduction <add>, %13, %cst_11 [1] : vector<48x32xf32> to vector<48xf32>
    %15 = vector.shape_cast %14 : vector<48xf32> to vector<48x1xf32>
    %cst_12 = arith.constant 3.200000e+01 : f32
    %16 = vector.broadcast %cst_12 : f32 to vector<48x1xf32>
    %17 = arith.divf %15, %16 : vector<48x1xf32>
    %18 = vector.broadcast %10 : vector<48x1xf32> to vector<48x32xf32>
    %19 = arith.subf %4, %18 : vector<48x32xf32>
    %cst_13 = arith.constant 9.99999974E-6 : f32
    %20 = vector.broadcast %cst_13 : f32 to vector<48x1xf32>
    %21 = arith.addf %17, %20 : vector<48x1xf32>
    %22 = math.rsqrt %21 : vector<48x1xf32>
    %23 = vector.broadcast %22 : vector<48x1xf32> to vector<48x32xf32>
    %24 = arith.mulf %19, %23 : vector<48x32xf32>
    %25 = vector.broadcast %5 : vector<1x32xf32> to vector<48x32xf32>
    %26 = arith.mulf %24, %25 : vector<48x32xf32>
    %27 = vector.broadcast %6 : vector<1x32xf32> to vector<48x32xf32>
    %28 = arith.addf %26, %27 : vector<48x32xf32>
    %cst_14 = arith.constant 0.000000e+00 : f32
    %29 = vector.broadcast %cst_14 : f32 to vector<48x32xf32>
    %c0_15 = arith.constant 0 : index
    %c0_16 = arith.constant 0 : index
    %30 = vector.load %arg22[%c0_15, %c0_16] : memref<48x32xf32, #tpu.memory_space<vmem>>, vector<48x32xf32>
    tpu.vector_store %arg22[%c0_15, %c0_16], %29 {strides = array<i32>} : memref<48x32xf32, #tpu.memory_space<vmem>>, vector<48x32xf32>,
    %c0_17 = arith.constant 0 : index
    %c0_18 = arith.constant 0 : index
    %c0_19 = arith.constant 0 : index
    %31 = vector.load %arg6[%c0_17, %c0_18, %c0_19] : memref<2x1x32xf32, #tpu.memory_space<vmem>>, vector<1x1x32xf32>
    %32 = vector.shape_cast %31 : vector<1x1x32xf32> to vector<1x32xf32>
    %c0_20 = arith.constant 0 : index
    %c0_21 = arith.constant 0 : index
    %c0_22 = arith.constant 0 : index
    %33 = vector.load %arg7[%c0_20, %c0_21, %c0_22] : memref<2x1x32xf32, #tpu.memory_space<vmem>>, vector<1x1x32xf32>
    %34 = vector.shape_cast %33 : vector<1x1x32xf32> to vector<1x32xf32>
    %cst_23 = arith.constant dense<0.000000e+00> : vector<48xf32>
    %35 = vector.multi_reduction <add>, %28, %cst_23 [1] : vector<48x32xf32> to vector<48xf32>
    %36 = vector.shape_cast %35 : vector<48xf32> to vector<48x1xf32>
    %cst_24 = arith.constant 3.200000e+01 : f32
    %37 = vector.broadcast %cst_24 : f32 to vector<48x1xf32>
    %38 = arith.divf %36, %37 : vector<48x1xf32>
    %39 = vector.broadcast %38 : vector<48x1xf32> to vector<48x32xf32>
    %40 = arith.subf %28, %39 : vector<48x32xf32>
    %41 = arith.mulf %40, %40 : vector<48x32xf32>
    %cst_25 = arith.constant dense<0.000000e+00> : vector<48xf32>
    %42 = vector.multi_reduction <add>, %41, %cst_25 [1] : vector<48x32xf32> to vector<48xf32>
    %43 = vector.shape_cast %42 : vector<48xf32> to vector<48x1xf32>
    %cst_26 = arith.constant 3.200000e+01 : f32
    %44 = vector.broadcast %cst_26 : f32 to vector<48x1xf32>
    %45 = arith.divf %43, %44 : vector<48x1xf32>
    %46 = vector.broadcast %38 : vector<48x1xf32> to vector<48x32xf32>
    %47 = arith.subf %28, %46 : vector<48x32xf32>
    %cst_27 = arith.constant 9.99999974E-6 : f32
    %48 = vector.broadcast %cst_27 : f32 to vector<48x1xf32>
    %49 = arith.addf %45, %48 : vector<48x1xf32>
    %50 = math.rsqrt %49 : vector<48x1xf32>
    %51 = vector.broadcast %50 : vector<48x1xf32> to vector<48x32xf32>
    %52 = arith.mulf %47, %51 : vector<48x32xf32>
    %53 = vector.broadcast %32 : vector<1x32xf32> to vector<48x32xf32>
    %54 = arith.mulf %52, %53 : vector<48x32xf32>
    %55 = vector.broadcast %34 : vector<1x32xf32> to vector<48x32xf32>
    %56 = arith.addf %54, %55 : vector<48x32xf32>
    %c0_28 = arith.constant 0 : index
    %c0_29 = arith.constant 0 : index
    %c0_30 = arith.constant 0 : index
    %57 = vector.load %arg8[%c0_28, %c0_29, %c0_30] : memref<2x32x96xf32, #tpu.memory_space<vmem>>, vector<1x32x96xf32>
    %58 = vector.shape_cast %57 : vector<1x32x96xf32> to vector<32x96xf32>
    %cst_31 = arith.constant dense<0.000000e+00> : vector<48x96xf32>
    %59 = tpu.matmul %56, %58, %cst_31 {dimension_numbers = #tpu.dot_dimension_numbers<[1], [0], [0], [1], [0, 0, 1, 1], [], []>} : vector<48x32xf32>, vector<32x96xf32>, vector<48x96xf32> -> vector<48x96xf32>
    %c0_32 = arith.constant 0 : index
    %c0_33 = arith.constant 0 : index
    %c0_34 = arith.constant 0 : index
    %60 = vector.load %arg9[%c0_32, %c0_33, %c0_34] : memref<2x1x96xf32, #tpu.memory_space<vmem>>, vector<1x1x96xf32>
    %61 = vector.shape_cast %60 : vector<1x1x96xf32> to vector<1x96xf32>
    %62 = vector.broadcast %61 : vector<1x96xf32> to vector<48x96xf32>
    %63 = arith.addf %59, %62 : vector<48x96xf32>
    %64 = vector.extract_strided_slice %63 {offsets = [0, 0], sizes = [17, 32], strides = [1, 1]} : vector<48x96xf32> to vector<17x32xf32>
    %65 = vector.extract_strided_slice %63 {offsets = [0, 32], sizes = [17, 32], strides = [1, 1]} : vector<48x96xf32> to vector<17x32xf32>
    %66 = vector.extract_strided_slice %63 {offsets = [0, 64], sizes = [17, 32], strides = [1, 1]} : vector<48x96xf32> to vector<17x32xf32>
    %67 = vector.extract_strided_slice %64 {offsets = [0, 0], sizes = [17, 8], strides = [1, 1]} : vector<17x32xf32> to vector<17x8xf32>
    %68 = vector.extract_strided_slice %65 {offsets = [0, 0], sizes = [17, 8], strides = [1, 1]} : vector<17x32xf32> to vector<17x8xf32>
    %69 = vector.extract_strided_slice %66 {offsets = [0, 0], sizes = [17, 8], strides = [1, 1]} : vector<17x32xf32> to vector<17x8xf32>
    %cst_35 = arith.constant dense<0.000000e+00> : vector<17x17xf32>
    %70 = tpu.matmul %67, %68, %cst_35 {dimension_numbers = #tpu.dot_dimension_numbers<[1], [1], [0], [0], [0, 0, 1, 0], [], []>} : vector<17x8xf32>, vector<17x8xf32>, vector<17x17xf32> -> vector<17x17xf32>
    %cst_36 = arith.constant dense<0xFF800000> : vector<17xf32>
    %71 = vector.multi_reduction <maximumf>, %70, %cst_36 [1] : vector<17x17xf32> to vector<17xf32>
    %72 = vector.shape_cast %71 : vector<17xf32> to vector<17x1xf32>
    %73 = vector.broadcast %72 : vector<17x1xf32> to vector<17x17xf32>
    %74 = arith.subf %70, %73 : vector<17x17xf32>
    %75 = math.exp %74 : vector<17x17xf32>
    %cst_37 = arith.constant dense<0.000000e+00> : vector<17xf32>
    %76 = vector.multi_reduction <add>, %75, %cst_37 [1] : vector<17x17xf32> to vector<17xf32>
    %77 = vector.shape_cast %76 : vector<17xf32> to vector<17x1xf32>
    %78 = tpu.reciprocal %77 {approx = true} : vector<17x1xf32> -> vector<17x1xf32>
    %79 = vector.broadcast %78 : vector<17x1xf32> to vector<17x17xf32>
    %80 = arith.mulf %75, %79 : vector<17x17xf32>
    %cst_38 = arith.constant dense<0.000000e+00> : vector<17x8xf32>
    %81 = tpu.matmul %80, %69, %cst_38 {dimension_numbers = #tpu.dot_dimension_numbers<[1], [0], [0], [1], [0, 0, 1, 1], [], []>} : vector<17x17xf32>, vector<17x8xf32>, vector<17x8xf32> -> vector<17x8xf32>
    %82 = vector.extract_strided_slice %64 {offsets = [0, 8], sizes = [17, 8], strides = [1, 1]} : vector<17x32xf32> to vector<17x8xf32>
    %83 = vector.extract_strided_slice %65 {offsets = [0, 8], sizes = [17, 8], strides = [1, 1]} : vector<17x32xf32> to vector<17x8xf32>
    %84 = vector.extract_strided_slice %66 {offsets = [0, 8], sizes = [17, 8], strides = [1, 1]} : vector<17x32xf32> to vector<17x8xf32>
    %cst_39 = arith.constant dense<0.000000e+00> : vector<17x17xf32>
    %85 = tpu.matmul %82, %83, %cst_39 {dimension_numbers = #tpu.dot_dimension_numbers<[1], [1], [0], [0], [0, 0, 1, 0], [], []>} : vector<17x8xf32>, vector<17x8xf32>, vector<17x17xf32> -> vector<17x17xf32>
    %cst_40 = arith.constant dense<0xFF800000> : vector<17xf32>
    %86 = vector.multi_reduction <maximumf>, %85, %cst_40 [1] : vector<17x17xf32> to vector<17xf32>
    %87 = vector.shape_cast %86 : vector<17xf32> to vector<17x1xf32>
    %88 = vector.broadcast %87 : vector<17x1xf32> to vector<17x17xf32>
    %89 = arith.subf %85, %88 : vector<17x17xf32>
    %90 = math.exp %89 : vector<17x17xf32>
    %cst_41 = arith.constant dense<0.000000e+00> : vector<17xf32>
    %91 = vector.multi_reduction <add>, %90, %cst_41 [1] : vector<17x17xf32> to vector<17xf32>
    %92 = vector.shape_cast %91 : vector<17xf32> to vector<17x1xf32>
    %93 = tpu.reciprocal %92 {approx = true} : vector<17x1xf32> -> vector<17x1xf32>
    %94 = vector.broadcast %93 : vector<17x1xf32> to vector<17x17xf32>
    %95 = arith.mulf %90, %94 : vector<17x17xf32>
    %cst_42 = arith.constant dense<0.000000e+00> : vector<17x8xf32>
    %96 = tpu.matmul %95, %84, %cst_42 {dimension_numbers = #tpu.dot_dimension_numbers<[1], [0], [0], [1], [0, 0, 1, 1], [], []>} : vector<17x17xf32>, vector<17x8xf32>, vector<17x8xf32> -> vector<17x8xf32>
    %97 = vector.extract_strided_slice %64 {offsets = [0, 16], sizes = [17, 8], strides = [1, 1]} : vector<17x32xf32> to vector<17x8xf32>
    %98 = vector.extract_strided_slice %65 {offsets = [0, 16], sizes = [17, 8], strides = [1, 1]} : vector<17x32xf32> to vector<17x8xf32>
    %99 = vector.extract_strided_slice %66 {offsets = [0, 16], sizes = [17, 8], strides = [1, 1]} : vector<17x32xf32> to vector<17x8xf32>
    %cst_43 = arith.constant dense<0.000000e+00> : vector<17x17xf32>
    %100 = tpu.matmul %97, %98, %cst_43 {dimension_numbers = #tpu.dot_dimension_numbers<[1], [1], [0], [0], [0, 0, 1, 0], [], []>} : vector<17x8xf32>, vector<17x8xf32>, vector<17x17xf32> -> vector<17x17xf32>
    %cst_44 = arith.constant dense<0xFF800000> : vector<17xf32>
    %101 = vector.multi_reduction <maximumf>, %100, %cst_44 [1] : vector<17x17xf32> to vector<17xf32>
    %102 = vector.shape_cast %101 : vector<17xf32> to vector<17x1xf32>
    %103 = vector.broadcast %102 : vector<17x1xf32> to vector<17x17xf32>
    %104 = arith.subf %100, %103 : vector<17x17xf32>
    %105 = math.exp %104 : vector<17x17xf32>
    %cst_45 = arith.constant dense<0.000000e+00> : vector<17xf32>
    %106 = vector.multi_reduction <add>, %105, %cst_45 [1] : vector<17x17xf32> to vector<17xf32>
    %107 = vector.shape_cast %106 : vector<17xf32> to vector<17x1xf32>
    %108 = tpu.reciprocal %107 {approx = true} : vector<17x1xf32> -> vector<17x1xf32>
    %109 = vector.broadcast %108 : vector<17x1xf32> to vector<17x17xf32>
    %110 = arith.mulf %105, %109 : vector<17x17xf32>
    %cst_46 = arith.constant dense<0.000000e+00> : vector<17x8xf32>
    %111 = tpu.matmul %110, %99, %cst_46 {dimension_numbers = #tpu.dot_dimension_numbers<[1], [0], [0], [1], [0, 0, 1, 1], [], []>} : vector<17x17xf32>, vector<17x8xf32>, vector<17x8xf32> -> vector<17x8xf32>
    %112 = vector.extract_strided_slice %64 {offsets = [0, 24], sizes = [17, 8], strides = [1, 1]} : vector<17x32xf32> to vector<17x8xf32>
    %113 = vector.extract_strided_slice %65 {offsets = [0, 24], sizes = [17, 8], strides = [1, 1]} : vector<17x32xf32> to vector<17x8xf32>
    %114 = vector.extract_strided_slice %66 {offsets = [0, 24], sizes = [17, 8], strides = [1, 1]} : vector<17x32xf32> to vector<17x8xf32>
    %cst_47 = arith.constant dense<0.000000e+00> : vector<17x17xf32>
    %115 = tpu.matmul %112, %113, %cst_47 {dimension_numbers = #tpu.dot_dimension_numbers<[1], [1], [0], [0], [0, 0, 1, 0], [], []>} : vector<17x8xf32>, vector<17x8xf32>, vector<17x17xf32> -> vector<17x17xf32>
    %cst_48 = arith.constant dense<0xFF800000> : vector<17xf32>
    %116 = vector.multi_reduction <maximumf>, %115, %cst_48 [1] : vector<17x17xf32> to vector<17xf32>
    %117 = vector.shape_cast %116 : vector<17xf32> to vector<17x1xf32>
    %118 = vector.broadcast %117 : vector<17x1xf32> to vector<17x17xf32>
    %119 = arith.subf %115, %118 : vector<17x17xf32>
    %120 = math.exp %119 : vector<17x17xf32>
    %cst_49 = arith.constant dense<0.000000e+00> : vector<17xf32>
    %121 = vector.multi_reduction <add>, %120, %cst_49 [1] : vector<17x17xf32> to vector<17xf32>
    %122 = vector.shape_cast %121 : vector<17xf32> to vector<17x1xf32>
    %123 = tpu.reciprocal %122 {approx = true} : vector<17x1xf32> -> vector<17x1xf32>
    %124 = vector.broadcast %123 : vector<17x1xf32> to vector<17x17xf32>
    %125 = arith.mulf %120, %124 : vector<17x17xf32>
    %cst_50 = arith.constant dense<0.000000e+00> : vector<17x8xf32>
    %126 = tpu.matmul %125, %114, %cst_50 {dimension_numbers = #tpu.dot_dimension_numbers<[1], [0], [0], [1], [0, 0, 1, 1], [], []>} : vector<17x17xf32>, vector<17x8xf32>, vector<17x8xf32> -> vector<17x8xf32>
    %127 = tpu.concatenate %81, %96, %111, %126 in 1 : vector<17x8xf32>, vector<17x8xf32>, vector<17x8xf32>, vector<17x8xf32> -> vector<17x32xf32>
    %c0_51 = arith.constant 0 : index
    %c0_52 = arith.constant 0 : index
    %128 = vector.load %arg22[%c0_51, %c0_52] : memref<48x32xf32, #tpu.memory_space<vmem>>, vector<17x32xf32>
    tpu.vector_store %arg22[%c0_51, %c0_52], %127 {strides = array<i32>} : memref<48x32xf32, #tpu.memory_space<vmem>>, vector<17x32xf32>,
    %129 = vector.extract_strided_slice %63 {offsets = [24, 0], sizes = [17, 32], strides = [1, 1]} : vector<48x96xf32> to vector<17x32xf32>
    %130 = vector.extract_strided_slice %63 {offsets = [24, 32], sizes = [17, 32], strides = [1, 1]} : vector<48x96xf32> to vector<17x32xf32>
    %131 = vector.extract_strided_slice %63 {offsets = [24, 64], sizes = [17, 32], strides = [1, 1]} : vector<48x96xf32> to vector<17x32xf32>
    %132 = vector.extract_strided_slice %129 {offsets = [0, 0], sizes = [17, 8], strides = [1, 1]} : vector<17x32xf32> to vector<17x8xf32>
    %133 = vector.extract_strided_slice %130 {offsets = [0, 0], sizes = [17, 8], strides = [1, 1]} : vector<17x32xf32> to vector<17x8xf32>
    %134 = vector.extract_strided_slice %131 {offsets = [0, 0], sizes = [17, 8], strides = [1, 1]} : vector<17x32xf32> to vector<17x8xf32>
    %cst_53 = arith.constant dense<0.000000e+00> : vector<17x17xf32>
    %135 = tpu.matmul %132, %133, %cst_53 {dimension_numbers = #tpu.dot_dimension_numbers<[1], [1], [0], [0], [0, 0, 1, 0], [], []>} : vector<17x8xf32>, vector<17x8xf32>, vector<17x17xf32> -> vector<17x17xf32>
    %cst_54 = arith.constant dense<0xFF800000> : vector<17xf32>
    %136 = vector.multi_reduction <maximumf>, %135, %cst_54 [1] : vector<17x17xf32> to vector<17xf32>
    %137 = vector.shape_cast %136 : vector<17xf32> to vector<17x1xf32>
    %138 = vector.broadcast %137 : vector<17x1xf32> to vector<17x17xf32>
    %139 = arith.subf %135, %138 : vector<17x17xf32>
    %140 = math.exp %139 : vector<17x17xf32>
    %cst_55 = arith.constant dense<0.000000e+00> : vector<17xf32>
    %141 = vector.multi_reduction <add>, %140, %cst_55 [1] : vector<17x17xf32> to vector<17xf32>
    %142 = vector.shape_cast %141 : vector<17xf32> to vector<17x1xf32>
    %143 = tpu.reciprocal %142 {approx = true} : vector<17x1xf32> -> vector<17x1xf32>
    %144 = vector.broadcast %143 : vector<17x1xf32> to vector<17x17xf32>
    %145 = arith.mulf %140, %144 : vector<17x17xf32>
    %cst_56 = arith.constant dense<0.000000e+00> : vector<17x8xf32>
    %146 = tpu.matmul %145, %134, %cst_56 {dimension_numbers = #tpu.dot_dimension_numbers<[1], [0], [0], [1], [0, 0, 1, 1], [], []>} : vector<17x17xf32>, vector<17x8xf32>, vector<17x8xf32> -> vector<17x8xf32>
    %147 = vector.extract_strided_slice %129 {offsets = [0, 8], sizes = [17, 8], strides = [1, 1]} : vector<17x32xf32> to vector<17x8xf32>
    %148 = vector.extract_strided_slice %130 {offsets = [0, 8], sizes = [17, 8], strides = [1, 1]} : vector<17x32xf32> to vector<17x8xf32>
    %149 = vector.extract_strided_slice %131 {offsets = [0, 8], sizes = [17, 8], strides = [1, 1]} : vector<17x32xf32> to vector<17x8xf32>
    %cst_57 = arith.constant dense<0.000000e+00> : vector<17x17xf32>
    %150 = tpu.matmul %147, %148, %cst_57 {dimension_numbers = #tpu.dot_dimension_numbers<[1], [1], [0], [0], [0, 0, 1, 0], [], []>} : vector<17x8xf32>, vector<17x8xf32>, vector<17x17xf32> -> vector<17x17xf32>
    %cst_58 = arith.constant dense<0xFF800000> : vector<17xf32>
    %151 = vector.multi_reduction <maximumf>, %150, %cst_58 [1] : vector<17x17xf32> to vector<17xf32>
    %152 = vector.shape_cast %151 : vector<17xf32> to vector<17x1xf32>
    %153 = vector.broadcast %152 : vector<17x1xf32> to vector<17x17xf32>
    %154 = arith.subf %150, %153 : vector<17x17xf32>
    %155 = math.exp %154 : vector<17x17xf32>
    %cst_59 = arith.constant dense<0.000000e+00> : vector<17xf32>
    %156 = vector.multi_reduction <add>, %155, %cst_59 [1] : vector<17x17xf32> to vector<17xf32>
    %157 = vector.shape_cast %156 : vector<17xf32> to vector<17x1xf32>
    %158 = tpu.reciprocal %157 {approx = true} : vector<17x1xf32> -> vector<17x1xf32>
    %159 = vector.broadcast %158 : vector<17x1xf32> to vector<17x17xf32>
    %160 = arith.mulf %155, %159 : vector<17x17xf32>
    %cst_60 = arith.constant dense<0.000000e+00> : vector<17x8xf32>
    %161 = tpu.matmul %160, %149, %cst_60 {dimension_numbers = #tpu.dot_dimension_numbers<[1], [0], [0], [1], [0, 0, 1, 1], [], []>} : vector<17x17xf32>, vector<17x8xf32>, vector<17x8xf32> -> vector<17x8xf32>
    %162 = vector.extract_strided_slice %129 {offsets = [0, 16], sizes = [17, 8], strides = [1, 1]} : vector<17x32xf32> to vector<17x8xf32>
    %163 = vector.extract_strided_slice %130 {offsets = [0, 16], sizes = [17, 8], strides = [1, 1]} : vector<17x32xf32> to vector<17x8xf32>
    %164 = vector.extract_strided_slice %131 {offsets = [0, 16], sizes = [17, 8], strides = [1, 1]} : vector<17x32xf32> to vector<17x8xf32>
    %cst_61 = arith.constant dense<0.000000e+00> : vector<17x17xf32>
    %165 = tpu.matmul %162, %163, %cst_61 {dimension_numbers = #tpu.dot_dimension_numbers<[1], [1], [0], [0], [0, 0, 1, 0], [], []>} : vector<17x8xf32>, vector<17x8xf32>, vector<17x17xf32> -> vector<17x17xf32>
    %cst_62 = arith.constant dense<0xFF800000> : vector<17xf32>
    %166 = vector.multi_reduction <maximumf>, %165, %cst_62 [1] : vector<17x17xf32> to vector<17xf32>
    %167 = vector.shape_cast %166 : vector<17xf32> to vector<17x1xf32>
    %168 = vector.broadcast %167 : vector<17x1xf32> to vector<17x17xf32>
    %169 = arith.subf %165, %168 : vector<17x17xf32>
    %170 = math.exp %169 : vector<17x17xf32>
    %cst_63 = arith.constant dense<0.000000e+00> : vector<17xf32>
    %171 = vector.multi_reduction <add>, %170, %cst_63 [1] : vector<17x17xf32> to vector<17xf32>
    %172 = vector.shape_cast %171 : vector<17xf32> to vector<17x1xf32>
    %173 = tpu.reciprocal %172 {approx = true} : vector<17x1xf32> -> vector<17x1xf32>
    %174 = vector.broadcast %173 : vector<17x1xf32> to vector<17x17xf32>
    %175 = arith.mulf %170, %174 : vector<17x17xf32>
    %cst_64 = arith.constant dense<0.000000e+00> : vector<17x8xf32>
    %176 = tpu.matmul %175, %164, %cst_64 {dimension_numbers = #tpu.dot_dimension_numbers<[1], [0], [0], [1], [0, 0, 1, 1], [], []>} : vector<17x17xf32>, vector<17x8xf32>, vector<17x8xf32> -> vector<17x8xf32>
    %177 = vector.extract_strided_slice %129 {offsets = [0, 24], sizes = [17, 8], strides = [1, 1]} : vector<17x32xf32> to vector<17x8xf32>
    %178 = vector.extract_strided_slice %130 {offsets = [0, 24], sizes = [17, 8], strides = [1, 1]} : vector<17x32xf32> to vector<17x8xf32>
    %179 = vector.extract_strided_slice %131 {offsets = [0, 24], sizes = [17, 8], strides = [1, 1]} : vector<17x32xf32> to vector<17x8xf32>
    %cst_65 = arith.constant dense<0.000000e+00> : vector<17x17xf32>
    %180 = tpu.matmul %177, %178, %cst_65 {dimension_numbers = #tpu.dot_dimension_numbers<[1], [1], [0], [0], [0, 0, 1, 0], [], []>} : vector<17x8xf32>, vector<17x8xf32>, vector<17x17xf32> -> vector<17x17xf32>
    %cst_66 = arith.constant dense<0xFF800000> : vector<17xf32>
    %181 = vector.multi_reduction <maximumf>, %180, %cst_66 [1] : vector<17x17xf32> to vector<17xf32>
    %182 = vector.shape_cast %181 : vector<17xf32> to vector<17x1xf32>
    %183 = vector.broadcast %182 : vector<17x1xf32> to vector<17x17xf32>
    %184 = arith.subf %180, %183 : vector<17x17xf32>
    %185 = math.exp %184 : vector<17x17xf32>
    %cst_67 = arith.constant dense<0.000000e+00> : vector<17xf32>
    %186 = vector.multi_reduction <add>, %185, %cst_67 [1] : vector<17x17xf32> to vector<17xf32>
    %187 = vector.shape_cast %186 : vector<17xf32> to vector<17x1xf32>
    %188 = tpu.reciprocal %187 {approx = true} : vector<17x1xf32> -> vector<17x1xf32>
    %189 = vector.broadcast %188 : vector<17x1xf32> to vector<17x17xf32>
    %190 = arith.mulf %185, %189 : vector<17x17xf32>
    %cst_68 = arith.constant dense<0.000000e+00> : vector<17x8xf32>
    %191 = tpu.matmul %190, %179, %cst_68 {dimension_numbers = #tpu.dot_dimension_numbers<[1], [0], [0], [1], [0, 0, 1, 1], [], []>} : vector<17x17xf32>, vector<17x8xf32>, vector<17x8xf32> -> vector<17x8xf32>
    %192 = tpu.concatenate %146, %161, %176, %191 in 1 : vector<17x8xf32>, vector<17x8xf32>, vector<17x8xf32>, vector<17x8xf32> -> vector<17x32xf32>
    %c24 = arith.constant 24 : index
    %c0_69 = arith.constant 0 : index
    %193 = vector.load %arg22[%c24, %c0_69] : memref<48x32xf32, #tpu.memory_space<vmem>>, vector<17x32xf32>
    tpu.vector_store %arg22[%c24, %c0_69], %192 {strides = array<i32>} : memref<48x32xf32, #tpu.memory_space<vmem>>, vector<17x32xf32>,
    %c0_70 = arith.constant 0 : index
    %c0_71 = arith.constant 0 : index
    %194 = vector.load %arg22[%c0_70, %c0_71] : memref<48x32xf32, #tpu.memory_space<vmem>>, vector<48x32xf32>
    %c0_72 = arith.constant 0 : index
    %c0_73 = arith.constant 0 : index
    %c0_74 = arith.constant 0 : index
    %195 = vector.load %arg10[%c0_72, %c0_73, %c0_74] : memref<2x32x32xf32, #tpu.memory_space<vmem>>, vector<1x32x32xf32>
    %196 = vector.shape_cast %195 : vector<1x32x32xf32> to vector<32x32xf32>
    %cst_75 = arith.constant dense<0.000000e+00> : vector<48x32xf32>
    %197 = tpu.matmul %194, %196, %cst_75 {dimension_numbers = #tpu.dot_dimension_numbers<[1], [0], [0], [1], [0, 0, 1, 1], [], []>} : vector<48x32xf32>, vector<32x32xf32>, vector<48x32xf32> -> vector<48x32xf32>
    %198 = arith.addf %28, %197 : vector<48x32xf32>
    %c0_76 = arith.constant 0 : index
    %c0_77 = arith.constant 0 : index
    %c0_78 = arith.constant 0 : index
    %199 = vector.load %arg11[%c0_76, %c0_77, %c0_78] : memref<2x1x32xf32, #tpu.memory_space<vmem>>, vector<1x1x32xf32>
    %200 = vector.shape_cast %199 : vector<1x1x32xf32> to vector<1x32xf32>
    %201 = vector.broadcast %200 : vector<1x32xf32> to vector<48x32xf32>
    %202 = arith.addf %198, %201 : vector<48x32xf32>
    %c0_79 = arith.constant 0 : index
    %c0_80 = arith.constant 0 : index
    %c0_81 = arith.constant 0 : index
    %203 = vector.load %arg12[%c0_79, %c0_80, %c0_81] : memref<2x1x32xf32, #tpu.memory_space<vmem>>, vector<1x1x32xf32>
    %204 = vector.shape_cast %203 : vector<1x1x32xf32> to vector<1x32xf32>
    %c0_82 = arith.constant 0 : index
    %c0_83 = arith.constant 0 : index
    %c0_84 = arith.constant 0 : index
    %205 = vector.load %arg13[%c0_82, %c0_83, %c0_84] : memref<2x1x32xf32, #tpu.memory_space<vmem>>, vector<1x1x32xf32>
    %206 = vector.shape_cast %205 : vector<1x1x32xf32> to vector<1x32xf32>
    %cst_85 = arith.constant dense<0.000000e+00> : vector<48xf32>
    %207 = vector.multi_reduction <add>, %202, %cst_85 [1] : vector<48x32xf32> to vector<48xf32>
    %208 = vector.shape_cast %207 : vector<48xf32> to vector<48x1xf32>
    %cst_86 = arith.constant 3.200000e+01 : f32
    %209 = vector.broadcast %cst_86 : f32 to vector<48x1xf32>
    %210 = arith.divf %208, %209 : vector<48x1xf32>
    %211 = vector.broadcast %210 : vector<48x1xf32> to vector<48x32xf32>
    %212 = arith.subf %202, %211 : vector<48x32xf32>
    %213 = arith.mulf %212, %212 : vector<48x32xf32>
    %cst_87 = arith.constant dense<0.000000e+00> : vector<48xf32>
    %214 = vector.multi_reduction <add>, %213, %cst_87 [1] : vector<48x32xf32> to vector<48xf32>
    %215 = vector.shape_cast %214 : vector<48xf32> to vector<48x1xf32>
    %cst_88 = arith.constant 3.200000e+01 : f32
    %216 = vector.broadcast %cst_88 : f32 to vector<48x1xf32>
    %217 = arith.divf %215, %216 : vector<48x1xf32>
    %218 = vector.broadcast %210 : vector<48x1xf32> to vector<48x32xf32>
    %219 = arith.subf %202, %218 : vector<48x32xf32>
    %cst_89 = arith.constant 9.99999974E-6 : f32
    %220 = vector.broadcast %cst_89 : f32 to vector<48x1xf32>
    %221 = arith.addf %217, %220 : vector<48x1xf32>
    %222 = math.rsqrt %221 : vector<48x1xf32>
    %223 = vector.broadcast %222 : vector<48x1xf32> to vector<48x32xf32>
    %224 = arith.mulf %219, %223 : vector<48x32xf32>
    %225 = vector.broadcast %204 : vector<1x32xf32> to vector<48x32xf32>
    %226 = arith.mulf %224, %225 : vector<48x32xf32>
    %227 = vector.broadcast %206 : vector<1x32xf32> to vector<48x32xf32>
    %228 = arith.addf %226, %227 : vector<48x32xf32>
    %c0_90 = arith.constant 0 : index
    %c0_91 = arith.constant 0 : index
    %c0_92 = arith.constant 0 : index
    %229 = vector.load %arg14[%c0_90, %c0_91, %c0_92] : memref<2x32x128xf32, #tpu.memory_space<vmem>>, vector<1x32x128xf32>
    %230 = vector.shape_cast %229 : vector<1x32x128xf32> to vector<32x128xf32>
    %cst_93 = arith.constant dense<0.000000e+00> : vector<48x128xf32>
    %231 = tpu.matmul %228, %230, %cst_93 {dimension_numbers = #tpu.dot_dimension_numbers<[1], [0], [0], [1], [0, 0, 1, 1], [], []>} : vector<48x32xf32>, vector<32x128xf32>, vector<48x128xf32> -> vector<48x128xf32>
    %c0_94 = arith.constant 0 : index
    %c0_95 = arith.constant 0 : index
    %c0_96 = arith.constant 0 : index
    %232 = vector.load %arg15[%c0_94, %c0_95, %c0_96] : memref<2x1x128xf32, #tpu.memory_space<vmem>>, vector<1x1x128xf32>
    %233 = vector.shape_cast %232 : vector<1x1x128xf32> to vector<1x128xf32>
    %234 = vector.broadcast %233 : vector<1x128xf32> to vector<48x128xf32>
    %235 = arith.addf %231, %234 : vector<48x128xf32>
    %cst_97 = arith.constant 1.702000e+00 : f32
    %236 = vector.broadcast %cst_97 : f32 to vector<48x128xf32>
    %237 = arith.mulf %236, %235 : vector<48x128xf32>
    %238 = arith.negf %237 : vector<48x128xf32>
    %239 = math.exp %238 : vector<48x128xf32>
    %cst_98 = arith.constant 1.000000e+00 : f32
    %240 = vector.broadcast %cst_98 : f32 to vector<48x128xf32>
    %241 = arith.addf %240, %239 : vector<48x128xf32>
    %242 = arith.divf %240, %241 : vector<48x128xf32>
    %243 = arith.mulf %235, %242 : vector<48x128xf32>
    %c0_99 = arith.constant 0 : index
    %c0_100 = arith.constant 0 : index
    %c0_101 = arith.constant 0 : index
    %244 = vector.load %arg16[%c0_99, %c0_100, %c0_101] : memref<2x128x32xf32, #tpu.memory_space<vmem>>, vector<1x128x32xf32>
    %245 = vector.shape_cast %244 : vector<1x128x32xf32> to vector<128x32xf32>
    %cst_102 = arith.constant dense<0.000000e+00> : vector<48x32xf32>
    %246 = tpu.matmul %243, %245, %cst_102 {dimension_numbers = #tpu.dot_dimension_numbers<[1], [0], [0], [1], [0, 0, 1, 1], [], []>} : vector<48x128xf32>, vector<128x32xf32>, vector<48x32xf32> -> vector<48x32xf32>
    %c0_103 = arith.constant 0 : index
    %c0_104 = arith.constant 0 : index
    %c0_105 = arith.constant 0 : index
    %247 = vector.load %arg17[%c0_103, %c0_104, %c0_105] : memref<2x1x32xf32, #tpu.memory_space<vmem>>, vector<1x1x32xf32>
    %248 = vector.shape_cast %247 : vector<1x1x32xf32> to vector<1x32xf32>
    %249 = vector.broadcast %248 : vector<1x32xf32> to vector<48x32xf32>
    %250 = arith.addf %246, %249 : vector<48x32xf32>
    %251 = arith.addf %202, %250 : vector<48x32xf32>
    %c1 = arith.constant 1 : index
    %c0_106 = arith.constant 0 : index
    %c0_107 = arith.constant 0 : index
    %252 = vector.load %arg6[%c1, %c0_106, %c0_107] : memref<2x1x32xf32, #tpu.memory_space<vmem>>, vector<1x1x32xf32>
    %253 = vector.shape_cast %252 : vector<1x1x32xf32> to vector<1x32xf32>
    %c1_108 = arith.constant 1 : index
    %c0_109 = arith.constant 0 : index
    %c0_110 = arith.constant 0 : index
    %254 = vector.load %arg7[%c1_108, %c0_109, %c0_110] : memref<2x1x32xf32, #tpu.memory_space<vmem>>, vector<1x1x32xf32>
    %255 = vector.shape_cast %254 : vector<1x1x32xf32> to vector<1x32xf32>
    %cst_111 = arith.constant dense<0.000000e+00> : vector<48xf32>
    %256 = vector.multi_reduction <add>, %251, %cst_111 [1] : vector<48x32xf32> to vector<48xf32>
    %257 = vector.shape_cast %256 : vector<48xf32> to vector<48x1xf32>
    %cst_112 = arith.constant 3.200000e+01 : f32
    %258 = vector.broadcast %cst_112 : f32 to vector<48x1xf32>
    %259 = arith.divf %257, %258 : vector<48x1xf32>
    %260 = vector.broadcast %259 : vector<48x1xf32> to vector<48x32xf32>
    %261 = arith.subf %251, %260 : vector<48x32xf32>
    %262 = arith.mulf %261, %261 : vector<48x32xf32>
    %cst_113 = arith.constant dense<0.000000e+00> : vector<48xf32>
    %263 = vector.multi_reduction <add>, %262, %cst_113 [1] : vector<48x32xf32> to vector<48xf32>
    %264 = vector.shape_cast %263 : vector<48xf32> to vector<48x1xf32>
    %cst_114 = arith.constant 3.200000e+01 : f32
    %265 = vector.broadcast %cst_114 : f32 to vector<48x1xf32>
    %266 = arith.divf %264, %265 : vector<48x1xf32>
    %267 = vector.broadcast %259 : vector<48x1xf32> to vector<48x32xf32>
    %268 = arith.subf %251, %267 : vector<48x32xf32>
    %cst_115 = arith.constant 9.99999974E-6 : f32
    %269 = vector.broadcast %cst_115 : f32 to vector<48x1xf32>
    %270 = arith.addf %266, %269 : vector<48x1xf32>
    %271 = math.rsqrt %270 : vector<48x1xf32>
    %272 = vector.broadcast %271 : vector<48x1xf32> to vector<48x32xf32>
    %273 = arith.mulf %268, %272 : vector<48x32xf32>
    %274 = vector.broadcast %253 : vector<1x32xf32> to vector<48x32xf32>
    %275 = arith.mulf %273, %274 : vector<48x32xf32>
    %276 = vector.broadcast %255 : vector<1x32xf32> to vector<48x32xf32>
    %277 = arith.addf %275, %276 : vector<48x32xf32>
    %c1_116 = arith.constant 1 : index
    %c0_117 = arith.constant 0 : index
    %c0_118 = arith.constant 0 : index
    %278 = vector.load %arg8[%c1_116, %c0_117, %c0_118] : memref<2x32x96xf32, #tpu.memory_space<vmem>>, vector<1x32x96xf32>
    %279 = vector.shape_cast %278 : vector<1x32x96xf32> to vector<32x96xf32>
    %cst_119 = arith.constant dense<0.000000e+00> : vector<48x96xf32>
    %280 = tpu.matmul %277, %279, %cst_119 {dimension_numbers = #tpu.dot_dimension_numbers<[1], [0], [0], [1], [0, 0, 1, 1], [], []>} : vector<48x32xf32>, vector<32x96xf32>, vector<48x96xf32> -> vector<48x96xf32>
    %c1_120 = arith.constant 1 : index
    %c0_121 = arith.constant 0 : index
    %c0_122 = arith.constant 0 : index
    %281 = vector.load %arg9[%c1_120, %c0_121, %c0_122] : memref<2x1x96xf32, #tpu.memory_space<vmem>>, vector<1x1x96xf32>
    %282 = vector.shape_cast %281 : vector<1x1x96xf32> to vector<1x96xf32>
    %283 = vector.broadcast %282 : vector<1x96xf32> to vector<48x96xf32>
    %284 = arith.addf %280, %283 : vector<48x96xf32>
    %285 = vector.extract_strided_slice %284 {offsets = [0, 0], sizes = [17, 32], strides = [1, 1]} : vector<48x96xf32> to vector<17x32xf32>
    %286 = vector.extract_strided_slice %284 {offsets = [0, 32], sizes = [17, 32], strides = [1, 1]} : vector<48x96xf32> to vector<17x32xf32>
    %287 = vector.extract_strided_slice %284 {offsets = [0, 64], sizes = [17, 32], strides = [1, 1]} : vector<48x96xf32> to vector<17x32xf32>
    %288 = vector.extract_strided_slice %285 {offsets = [0, 0], sizes = [17, 8], strides = [1, 1]} : vector<17x32xf32> to vector<17x8xf32>
    %289 = vector.extract_strided_slice %286 {offsets = [0, 0], sizes = [17, 8], strides = [1, 1]} : vector<17x32xf32> to vector<17x8xf32>
    %290 = vector.extract_strided_slice %287 {offsets = [0, 0], sizes = [17, 8], strides = [1, 1]} : vector<17x32xf32> to vector<17x8xf32>
    %cst_123 = arith.constant dense<0.000000e+00> : vector<17x17xf32>
    %291 = tpu.matmul %288, %289, %cst_123 {dimension_numbers = #tpu.dot_dimension_numbers<[1], [1], [0], [0], [0, 0, 1, 0], [], []>} : vector<17x8xf32>, vector<17x8xf32>, vector<17x17xf32> -> vector<17x17xf32>
    %cst_124 = arith.constant dense<0xFF800000> : vector<17xf32>
    %292 = vector.multi_reduction <maximumf>, %291, %cst_124 [1] : vector<17x17xf32> to vector<17xf32>
    %293 = vector.shape_cast %292 : vector<17xf32> to vector<17x1xf32>
    %294 = vector.broadcast %293 : vector<17x1xf32> to vector<17x17xf32>
    %295 = arith.subf %291, %294 : vector<17x17xf32>
    %296 = math.exp %295 : vector<17x17xf32>
    %cst_125 = arith.constant dense<0.000000e+00> : vector<17xf32>
    %297 = vector.multi_reduction <add>, %296, %cst_125 [1] : vector<17x17xf32> to vector<17xf32>
    %298 = vector.shape_cast %297 : vector<17xf32> to vector<17x1xf32>
    %299 = tpu.reciprocal %298 {approx = true} : vector<17x1xf32> -> vector<17x1xf32>
    %300 = vector.broadcast %299 : vector<17x1xf32> to vector<17x17xf32>
    %301 = arith.mulf %296, %300 : vector<17x17xf32>
    %cst_126 = arith.constant dense<0.000000e+00> : vector<17x8xf32>
    %302 = tpu.matmul %301, %290, %cst_126 {dimension_numbers = #tpu.dot_dimension_numbers<[1], [0], [0], [1], [0, 0, 1, 1], [], []>} : vector<17x17xf32>, vector<17x8xf32>, vector<17x8xf32> -> vector<17x8xf32>
    %303 = vector.extract_strided_slice %285 {offsets = [0, 8], sizes = [17, 8], strides = [1, 1]} : vector<17x32xf32> to vector<17x8xf32>
    %304 = vector.extract_strided_slice %286 {offsets = [0, 8], sizes = [17, 8], strides = [1, 1]} : vector<17x32xf32> to vector<17x8xf32>
    %305 = vector.extract_strided_slice %287 {offsets = [0, 8], sizes = [17, 8], strides = [1, 1]} : vector<17x32xf32> to vector<17x8xf32>
    %cst_127 = arith.constant dense<0.000000e+00> : vector<17x17xf32>
    %306 = tpu.matmul %303, %304, %cst_127 {dimension_numbers = #tpu.dot_dimension_numbers<[1], [1], [0], [0], [0, 0, 1, 0], [], []>} : vector<17x8xf32>, vector<17x8xf32>, vector<17x17xf32> -> vector<17x17xf32>
    %cst_128 = arith.constant dense<0xFF800000> : vector<17xf32>
    %307 = vector.multi_reduction <maximumf>, %306, %cst_128 [1] : vector<17x17xf32> to vector<17xf32>
    %308 = vector.shape_cast %307 : vector<17xf32> to vector<17x1xf32>
    %309 = vector.broadcast %308 : vector<17x1xf32> to vector<17x17xf32>
    %310 = arith.subf %306, %309 : vector<17x17xf32>
    %311 = math.exp %310 : vector<17x17xf32>
    %cst_129 = arith.constant dense<0.000000e+00> : vector<17xf32>
    %312 = vector.multi_reduction <add>, %311, %cst_129 [1] : vector<17x17xf32> to vector<17xf32>
    %313 = vector.shape_cast %312 : vector<17xf32> to vector<17x1xf32>
    %314 = tpu.reciprocal %313 {approx = true} : vector<17x1xf32> -> vector<17x1xf32>
    %315 = vector.broadcast %314 : vector<17x1xf32> to vector<17x17xf32>
    %316 = arith.mulf %311, %315 : vector<17x17xf32>
    %cst_130 = arith.constant dense<0.000000e+00> : vector<17x8xf32>
    %317 = tpu.matmul %316, %305, %cst_130 {dimension_numbers = #tpu.dot_dimension_numbers<[1], [0], [0], [1], [0, 0, 1, 1], [], []>} : vector<17x17xf32>, vector<17x8xf32>, vector<17x8xf32> -> vector<17x8xf32>
    %318 = vector.extract_strided_slice %285 {offsets = [0, 16], sizes = [17, 8], strides = [1, 1]} : vector<17x32xf32> to vector<17x8xf32>
    %319 = vector.extract_strided_slice %286 {offsets = [0, 16], sizes = [17, 8], strides = [1, 1]} : vector<17x32xf32> to vector<17x8xf32>
    %320 = vector.extract_strided_slice %287 {offsets = [0, 16], sizes = [17, 8], strides = [1, 1]} : vector<17x32xf32> to vector<17x8xf32>
    %cst_131 = arith.constant dense<0.000000e+00> : vector<17x17xf32>
    %321 = tpu.matmul %318, %319, %cst_131 {dimension_numbers = #tpu.dot_dimension_numbers<[1], [1], [0], [0], [0, 0, 1, 0], [], []>} : vector<17x8xf32>, vector<17x8xf32>, vector<17x17xf32> -> vector<17x17xf32>
    %cst_132 = arith.constant dense<0xFF800000> : vector<17xf32>
    %322 = vector.multi_reduction <maximumf>, %321, %cst_132 [1] : vector<17x17xf32> to vector<17xf32>
    %323 = vector.shape_cast %322 : vector<17xf32> to vector<17x1xf32>
    %324 = vector.broadcast %323 : vector<17x1xf32> to vector<17x17xf32>
    %325 = arith.subf %321, %324 : vector<17x17xf32>
    %326 = math.exp %325 : vector<17x17xf32>
    %cst_133 = arith.constant dense<0.000000e+00> : vector<17xf32>
    %327 = vector.multi_reduction <add>, %326, %cst_133 [1] : vector<17x17xf32> to vector<17xf32>
    %328 = vector.shape_cast %327 : vector<17xf32> to vector<17x1xf32>
    %329 = tpu.reciprocal %328 {approx = true} : vector<17x1xf32> -> vector<17x1xf32>
    %330 = vector.broadcast %329 : vector<17x1xf32> to vector<17x17xf32>
    %331 = arith.mulf %326, %330 : vector<17x17xf32>
    %cst_134 = arith.constant dense<0.000000e+00> : vector<17x8xf32>
    %332 = tpu.matmul %331, %320, %cst_134 {dimension_numbers = #tpu.dot_dimension_numbers<[1], [0], [0], [1], [0, 0, 1, 1], [], []>} : vector<17x17xf32>, vector<17x8xf32>, vector<17x8xf32> -> vector<17x8xf32>
    %333 = vector.extract_strided_slice %285 {offsets = [0, 24], sizes = [17, 8], strides = [1, 1]} : vector<17x32xf32> to vector<17x8xf32>
    %334 = vector.extract_strided_slice %286 {offsets = [0, 24], sizes = [17, 8], strides = [1, 1]} : vector<17x32xf32> to vector<17x8xf32>
    %335 = vector.extract_strided_slice %287 {offsets = [0, 24], sizes = [17, 8], strides = [1, 1]} : vector<17x32xf32> to vector<17x8xf32>
    %cst_135 = arith.constant dense<0.000000e+00> : vector<17x17xf32>
    %336 = tpu.matmul %333, %334, %cst_135 {dimension_numbers = #tpu.dot_dimension_numbers<[1], [1], [0], [0], [0, 0, 1, 0], [], []>} : vector<17x8xf32>, vector<17x8xf32>, vector<17x17xf32> -> vector<17x17xf32>
    %cst_136 = arith.constant dense<0xFF800000> : vector<17xf32>
    %337 = vector.multi_reduction <maximumf>, %336, %cst_136 [1] : vector<17x17xf32> to vector<17xf32>
    %338 = vector.shape_cast %337 : vector<17xf32> to vector<17x1xf32>
    %339 = vector.broadcast %338 : vector<17x1xf32> to vector<17x17xf32>
    %340 = arith.subf %336, %339 : vector<17x17xf32>
    %341 = math.exp %340 : vector<17x17xf32>
    %cst_137 = arith.constant dense<0.000000e+00> : vector<17xf32>
    %342 = vector.multi_reduction <add>, %341, %cst_137 [1] : vector<17x17xf32> to vector<17xf32>
    %343 = vector.shape_cast %342 : vector<17xf32> to vector<17x1xf32>
    %344 = tpu.reciprocal %343 {approx = true} : vector<17x1xf32> -> vector<17x1xf32>
    %345 = vector.broadcast %344 : vector<17x1xf32> to vector<17x17xf32>
    %346 = arith.mulf %341, %345 : vector<17x17xf32>
    %cst_138 = arith.constant dense<0.000000e+00> : vector<17x8xf32>
    %347 = tpu.matmul %346, %335, %cst_138 {dimension_numbers = #tpu.dot_dimension_numbers<[1], [0], [0], [1], [0, 0, 1, 1], [], []>} : vector<17x17xf32>, vector<17x8xf32>, vector<17x8xf32> -> vector<17x8xf32>
    %348 = tpu.concatenate %302, %317, %332, %347 in 1 : vector<17x8xf32>, vector<17x8xf32>, vector<17x8xf32>, vector<17x8xf32> -> vector<17x32xf32>
    %c0_139 = arith.constant 0 : index
    %c0_140 = arith.constant 0 : index
    %349 = vector.load %arg22[%c0_139, %c0_140] : memref<48x32xf32, #tpu.memory_space<vmem>>, vector<17x32xf32>
    tpu.vector_store %arg22[%c0_139, %c0_140], %348 {strides = array<i32>} : memref<48x32xf32, #tpu.memory_space<vmem>>, vector<17x32xf32>,
    %350 = vector.extract_strided_slice %284 {offsets = [24, 0], sizes = [17, 32], strides = [1, 1]} : vector<48x96xf32> to vector<17x32xf32>
    %351 = vector.extract_strided_slice %284 {offsets = [24, 32], sizes = [17, 32], strides = [1, 1]} : vector<48x96xf32> to vector<17x32xf32>
    %352 = vector.extract_strided_slice %284 {offsets = [24, 64], sizes = [17, 32], strides = [1, 1]} : vector<48x96xf32> to vector<17x32xf32>
    %353 = vector.extract_strided_slice %350 {offsets = [0, 0], sizes = [17, 8], strides = [1, 1]} : vector<17x32xf32> to vector<17x8xf32>
    %354 = vector.extract_strided_slice %351 {offsets = [0, 0], sizes = [17, 8], strides = [1, 1]} : vector<17x32xf32> to vector<17x8xf32>
    %355 = vector.extract_strided_slice %352 {offsets = [0, 0], sizes = [17, 8], strides = [1, 1]} : vector<17x32xf32> to vector<17x8xf32>
    %cst_141 = arith.constant dense<0.000000e+00> : vector<17x17xf32>
    %356 = tpu.matmul %353, %354, %cst_141 {dimension_numbers = #tpu.dot_dimension_numbers<[1], [1], [0], [0], [0, 0, 1, 0], [], []>} : vector<17x8xf32>, vector<17x8xf32>, vector<17x17xf32> -> vector<17x17xf32>
    %cst_142 = arith.constant dense<0xFF800000> : vector<17xf32>
    %357 = vector.multi_reduction <maximumf>, %356, %cst_142 [1] : vector<17x17xf32> to vector<17xf32>
    %358 = vector.shape_cast %357 : vector<17xf32> to vector<17x1xf32>
    %359 = vector.broadcast %358 : vector<17x1xf32> to vector<17x17xf32>
    %360 = arith.subf %356, %359 : vector<17x17xf32>
    %361 = math.exp %360 : vector<17x17xf32>
    %cst_143 = arith.constant dense<0.000000e+00> : vector<17xf32>
    %362 = vector.multi_reduction <add>, %361, %cst_143 [1] : vector<17x17xf32> to vector<17xf32>
    %363 = vector.shape_cast %362 : vector<17xf32> to vector<17x1xf32>
    %364 = tpu.reciprocal %363 {approx = true} : vector<17x1xf32> -> vector<17x1xf32>
    %365 = vector.broadcast %364 : vector<17x1xf32> to vector<17x17xf32>
    %366 = arith.mulf %361, %365 : vector<17x17xf32>
    %cst_144 = arith.constant dense<0.000000e+00> : vector<17x8xf32>
    %367 = tpu.matmul %366, %355, %cst_144 {dimension_numbers = #tpu.dot_dimension_numbers<[1], [0], [0], [1], [0, 0, 1, 1], [], []>} : vector<17x17xf32>, vector<17x8xf32>, vector<17x8xf32> -> vector<17x8xf32>
    %368 = vector.extract_strided_slice %350 {offsets = [0, 8], sizes = [17, 8], strides = [1, 1]} : vector<17x32xf32> to vector<17x8xf32>
    %369 = vector.extract_strided_slice %351 {offsets = [0, 8], sizes = [17, 8], strides = [1, 1]} : vector<17x32xf32> to vector<17x8xf32>
    %370 = vector.extract_strided_slice %352 {offsets = [0, 8], sizes = [17, 8], strides = [1, 1]} : vector<17x32xf32> to vector<17x8xf32>
    %cst_145 = arith.constant dense<0.000000e+00> : vector<17x17xf32>
    %371 = tpu.matmul %368, %369, %cst_145 {dimension_numbers = #tpu.dot_dimension_numbers<[1], [1], [0], [0], [0, 0, 1, 0], [], []>} : vector<17x8xf32>, vector<17x8xf32>, vector<17x17xf32> -> vector<17x17xf32>
    %cst_146 = arith.constant dense<0xFF800000> : vector<17xf32>
    %372 = vector.multi_reduction <maximumf>, %371, %cst_146 [1] : vector<17x17xf32> to vector<17xf32>
    %373 = vector.shape_cast %372 : vector<17xf32> to vector<17x1xf32>
    %374 = vector.broadcast %373 : vector<17x1xf32> to vector<17x17xf32>
    %375 = arith.subf %371, %374 : vector<17x17xf32>
    %376 = math.exp %375 : vector<17x17xf32>
    %cst_147 = arith.constant dense<0.000000e+00> : vector<17xf32>
    %377 = vector.multi_reduction <add>, %376, %cst_147 [1] : vector<17x17xf32> to vector<17xf32>
    %378 = vector.shape_cast %377 : vector<17xf32> to vector<17x1xf32>
    %379 = tpu.reciprocal %378 {approx = true} : vector<17x1xf32> -> vector<17x1xf32>
    %380 = vector.broadcast %379 : vector<17x1xf32> to vector<17x17xf32>
    %381 = arith.mulf %376, %380 : vector<17x17xf32>
    %cst_148 = arith.constant dense<0.000000e+00> : vector<17x8xf32>
    %382 = tpu.matmul %381, %370, %cst_148 {dimension_numbers = #tpu.dot_dimension_numbers<[1], [0], [0], [1], [0, 0, 1, 1], [], []>} : vector<17x17xf32>, vector<17x8xf32>, vector<17x8xf32> -> vector<17x8xf32>
    %383 = vector.extract_strided_slice %350 {offsets = [0, 16], sizes = [17, 8], strides = [1, 1]} : vector<17x32xf32> to vector<17x8xf32>
    %384 = vector.extract_strided_slice %351 {offsets = [0, 16], sizes = [17, 8], strides = [1, 1]} : vector<17x32xf32> to vector<17x8xf32>
    %385 = vector.extract_strided_slice %352 {offsets = [0, 16], sizes = [17, 8], strides = [1, 1]} : vector<17x32xf32> to vector<17x8xf32>
    %cst_149 = arith.constant dense<0.000000e+00> : vector<17x17xf32>
    %386 = tpu.matmul %383, %384, %cst_149 {dimension_numbers = #tpu.dot_dimension_numbers<[1], [1], [0], [0], [0, 0, 1, 0], [], []>} : vector<17x8xf32>, vector<17x8xf32>, vector<17x17xf32> -> vector<17x17xf32>
    %cst_150 = arith.constant dense<0xFF800000> : vector<17xf32>
    %387 = vector.multi_reduction <maximumf>, %386, %cst_150 [1] : vector<17x17xf32> to vector<17xf32>
    %388 = vector.shape_cast %387 : vector<17xf32> to vector<17x1xf32>
    %389 = vector.broadcast %388 : vector<17x1xf32> to vector<17x17xf32>
    %390 = arith.subf %386, %389 : vector<17x17xf32>
    %391 = math.exp %390 : vector<17x17xf32>
    %cst_151 = arith.constant dense<0.000000e+00> : vector<17xf32>
    %392 = vector.multi_reduction <add>, %391, %cst_151 [1] : vector<17x17xf32> to vector<17xf32>
    %393 = vector.shape_cast %392 : vector<17xf32> to vector<17x1xf32>
    %394 = tpu.reciprocal %393 {approx = true} : vector<17x1xf32> -> vector<17x1xf32>
    %395 = vector.broadcast %394 : vector<17x1xf32> to vector<17x17xf32>
    %396 = arith.mulf %391, %395 : vector<17x17xf32>
    %cst_152 = arith.constant dense<0.000000e+00> : vector<17x8xf32>
    %397 = tpu.matmul %396, %385, %cst_152 {dimension_numbers = #tpu.dot_dimension_numbers<[1], [0], [0], [1], [0, 0, 1, 1], [], []>} : vector<17x17xf32>, vector<17x8xf32>, vector<17x8xf32> -> vector<17x8xf32>
    %398 = vector.extract_strided_slice %350 {offsets = [0, 24], sizes = [17, 8], strides = [1, 1]} : vector<17x32xf32> to vector<17x8xf32>
    %399 = vector.extract_strided_slice %351 {offsets = [0, 24], sizes = [17, 8], strides = [1, 1]} : vector<17x32xf32> to vector<17x8xf32>
    %400 = vector.extract_strided_slice %352 {offsets = [0, 24], sizes = [17, 8], strides = [1, 1]} : vector<17x32xf32> to vector<17x8xf32>
    %cst_153 = arith.constant dense<0.000000e+00> : vector<17x17xf32>
    %401 = tpu.matmul %398, %399, %cst_153 {dimension_numbers = #tpu.dot_dimension_numbers<[1], [1], [0], [0], [0, 0, 1, 0], [], []>} : vector<17x8xf32>, vector<17x8xf32>, vector<17x17xf32> -> vector<17x17xf32>
    %cst_154 = arith.constant dense<0xFF800000> : vector<17xf32>
    %402 = vector.multi_reduction <maximumf>, %401, %cst_154 [1] : vector<17x17xf32> to vector<17xf32>
    %403 = vector.shape_cast %402 : vector<17xf32> to vector<17x1xf32>
    %404 = vector.broadcast %403 : vector<17x1xf32> to vector<17x17xf32>
    %405 = arith.subf %401, %404 : vector<17x17xf32>
    %406 = math.exp %405 : vector<17x17xf32>
    %cst_155 = arith.constant dense<0.000000e+00> : vector<17xf32>
    %407 = vector.multi_reduction <add>, %406, %cst_155 [1] : vector<17x17xf32> to vector<17xf32>
    %408 = vector.shape_cast %407 : vector<17xf32> to vector<17x1xf32>
    %409 = tpu.reciprocal %408 {approx = true} : vector<17x1xf32> -> vector<17x1xf32>
    %410 = vector.broadcast %409 : vector<17x1xf32> to vector<17x17xf32>
    %411 = arith.mulf %406, %410 : vector<17x17xf32>
    %cst_156 = arith.constant dense<0.000000e+00> : vector<17x8xf32>
    %412 = tpu.matmul %411, %400, %cst_156 {dimension_numbers = #tpu.dot_dimension_numbers<[1], [0], [0], [1], [0, 0, 1, 1], [], []>} : vector<17x17xf32>, vector<17x8xf32>, vector<17x8xf32> -> vector<17x8xf32>
    %413 = tpu.concatenate %367, %382, %397, %412 in 1 : vector<17x8xf32>, vector<17x8xf32>, vector<17x8xf32>, vector<17x8xf32> -> vector<17x32xf32>
    %c24_157 = arith.constant 24 : index
    %c0_158 = arith.constant 0 : index
    %414 = vector.load %arg22[%c24_157, %c0_158] : memref<48x32xf32, #tpu.memory_space<vmem>>, vector<17x32xf32>
    tpu.vector_store %arg22[%c24_157, %c0_158], %413 {strides = array<i32>} : memref<48x32xf32, #tpu.memory_space<vmem>>, vector<17x32xf32>,
    %c0_159 = arith.constant 0 : index
    %c0_160 = arith.constant 0 : index
    %415 = vector.load %arg22[%c0_159, %c0_160] : memref<48x32xf32, #tpu.memory_space<vmem>>, vector<48x32xf32>
    %c1_161 = arith.constant 1 : index
    %c0_162 = arith.constant 0 : index
    %c0_163 = arith.constant 0 : index
    %416 = vector.load %arg10[%c1_161, %c0_162, %c0_163] : memref<2x32x32xf32, #tpu.memory_space<vmem>>, vector<1x32x32xf32>
    %417 = vector.shape_cast %416 : vector<1x32x32xf32> to vector<32x32xf32>
    %cst_164 = arith.constant dense<0.000000e+00> : vector<48x32xf32>
    %418 = tpu.matmul %415, %417, %cst_164 {dimension_numbers = #tpu.dot_dimension_numbers<[1], [0], [0], [1], [0, 0, 1, 1], [], []>} : vector<48x32xf32>, vector<32x32xf32>, vector<48x32xf32> -> vector<48x32xf32>
    %419 = arith.addf %251, %418 : vector<48x32xf32>
    %c1_165 = arith.constant 1 : index
    %c0_166 = arith.constant 0 : index
    %c0_167 = arith.constant 0 : index
    %420 = vector.load %arg11[%c1_165, %c0_166, %c0_167] : memref<2x1x32xf32, #tpu.memory_space<vmem>>, vector<1x1x32xf32>
    %421 = vector.shape_cast %420 : vector<1x1x32xf32> to vector<1x32xf32>
    %422 = vector.broadcast %421 : vector<1x32xf32> to vector<48x32xf32>
    %423 = arith.addf %419, %422 : vector<48x32xf32>
    %c1_168 = arith.constant 1 : index
    %c0_169 = arith.constant 0 : index
    %c0_170 = arith.constant 0 : index
    %424 = vector.load %arg12[%c1_168, %c0_169, %c0_170] : memref<2x1x32xf32, #tpu.memory_space<vmem>>, vector<1x1x32xf32>
    %425 = vector.shape_cast %424 : vector<1x1x32xf32> to vector<1x32xf32>
    %c1_171 = arith.constant 1 : index
    %c0_172 = arith.constant 0 : index
    %c0_173 = arith.constant 0 : index
    %426 = vector.load %arg13[%c1_171, %c0_172, %c0_173] : memref<2x1x32xf32, #tpu.memory_space<vmem>>, vector<1x1x32xf32>
    %427 = vector.shape_cast %426 : vector<1x1x32xf32> to vector<1x32xf32>
    %cst_174 = arith.constant dense<0.000000e+00> : vector<48xf32>
    %428 = vector.multi_reduction <add>, %423, %cst_174 [1] : vector<48x32xf32> to vector<48xf32>
    %429 = vector.shape_cast %428 : vector<48xf32> to vector<48x1xf32>
    %cst_175 = arith.constant 3.200000e+01 : f32
    %430 = vector.broadcast %cst_175 : f32 to vector<48x1xf32>
    %431 = arith.divf %429, %430 : vector<48x1xf32>
    %432 = vector.broadcast %431 : vector<48x1xf32> to vector<48x32xf32>
    %433 = arith.subf %423, %432 : vector<48x32xf32>
    %434 = arith.mulf %433, %433 : vector<48x32xf32>
    %cst_176 = arith.constant dense<0.000000e+00> : vector<48xf32>
    %435 = vector.multi_reduction <add>, %434, %cst_176 [1] : vector<48x32xf32> to vector<48xf32>
    %436 = vector.shape_cast %435 : vector<48xf32> to vector<48x1xf32>
    %cst_177 = arith.constant 3.200000e+01 : f32
    %437 = vector.broadcast %cst_177 : f32 to vector<48x1xf32>
    %438 = arith.divf %436, %437 : vector<48x1xf32>
    %439 = vector.broadcast %431 : vector<48x1xf32> to vector<48x32xf32>
    %440 = arith.subf %423, %439 : vector<48x32xf32>
    %cst_178 = arith.constant 9.99999974E-6 : f32
    %441 = vector.broadcast %cst_178 : f32 to vector<48x1xf32>
    %442 = arith.addf %438, %441 : vector<48x1xf32>
    %443 = math.rsqrt %442 : vector<48x1xf32>
    %444 = vector.broadcast %443 : vector<48x1xf32> to vector<48x32xf32>
    %445 = arith.mulf %440, %444 : vector<48x32xf32>
    %446 = vector.broadcast %425 : vector<1x32xf32> to vector<48x32xf32>
    %447 = arith.mulf %445, %446 : vector<48x32xf32>
    %448 = vector.broadcast %427 : vector<1x32xf32> to vector<48x32xf32>
    %449 = arith.addf %447, %448 : vector<48x32xf32>
    %c1_179 = arith.constant 1 : index
    %c0_180 = arith.constant 0 : index
    %c0_181 = arith.constant 0 : index
    %450 = vector.load %arg14[%c1_179, %c0_180, %c0_181] : memref<2x32x128xf32, #tpu.memory_space<vmem>>, vector<1x32x128xf32>
    %451 = vector.shape_cast %450 : vector<1x32x128xf32> to vector<32x128xf32>
    %cst_182 = arith.constant dense<0.000000e+00> : vector<48x128xf32>
    %452 = tpu.matmul %449, %451, %cst_182 {dimension_numbers = #tpu.dot_dimension_numbers<[1], [0], [0], [1], [0, 0, 1, 1], [], []>} : vector<48x32xf32>, vector<32x128xf32>, vector<48x128xf32> -> vector<48x128xf32>
    %c1_183 = arith.constant 1 : index
    %c0_184 = arith.constant 0 : index
    %c0_185 = arith.constant 0 : index
    %453 = vector.load %arg15[%c1_183, %c0_184, %c0_185] : memref<2x1x128xf32, #tpu.memory_space<vmem>>, vector<1x1x128xf32>
    %454 = vector.shape_cast %453 : vector<1x1x128xf32> to vector<1x128xf32>
    %455 = vector.broadcast %454 : vector<1x128xf32> to vector<48x128xf32>
    %456 = arith.addf %452, %455 : vector<48x128xf32>
    %cst_186 = arith.constant 1.702000e+00 : f32
    %457 = vector.broadcast %cst_186 : f32 to vector<48x128xf32>
    %458 = arith.mulf %457, %456 : vector<48x128xf32>
    %459 = arith.negf %458 : vector<48x128xf32>
    %460 = math.exp %459 : vector<48x128xf32>
    %cst_187 = arith.constant 1.000000e+00 : f32
    %461 = vector.broadcast %cst_187 : f32 to vector<48x128xf32>
    %462 = arith.addf %461, %460 : vector<48x128xf32>
    %463 = arith.divf %461, %462 : vector<48x128xf32>
    %464 = arith.mulf %456, %463 : vector<48x128xf32>
    %c1_188 = arith.constant 1 : index
    %c0_189 = arith.constant 0 : index
    %c0_190 = arith.constant 0 : index
    %465 = vector.load %arg16[%c1_188, %c0_189, %c0_190] : memref<2x128x32xf32, #tpu.memory_space<vmem>>, vector<1x128x32xf32>
    %466 = vector.shape_cast %465 : vector<1x128x32xf32> to vector<128x32xf32>
    %cst_191 = arith.constant dense<0.000000e+00> : vector<48x32xf32>
    %467 = tpu.matmul %464, %466, %cst_191 {dimension_numbers = #tpu.dot_dimension_numbers<[1], [0], [0], [1], [0, 0, 1, 1], [], []>} : vector<48x128xf32>, vector<128x32xf32>, vector<48x32xf32> -> vector<48x32xf32>
    %c1_192 = arith.constant 1 : index
    %c0_193 = arith.constant 0 : index
    %c0_194 = arith.constant 0 : index
    %468 = vector.load %arg17[%c1_192, %c0_193, %c0_194] : memref<2x1x32xf32, #tpu.memory_space<vmem>>, vector<1x1x32xf32>
    %469 = vector.shape_cast %468 : vector<1x1x32xf32> to vector<1x32xf32>
    %470 = vector.broadcast %469 : vector<1x32xf32> to vector<48x32xf32>
    %471 = arith.addf %467, %470 : vector<48x32xf32>
    %472 = arith.addf %423, %471 : vector<48x32xf32>
    %473 = vector.extract_strided_slice %472 {offsets = [0, 0], sizes = [1, 32], strides = [1, 1]} : vector<48x32xf32> to vector<1x32xf32>
    %474 = vector.extract_strided_slice %472 {offsets = [24, 0], sizes = [1, 32], strides = [1, 1]} : vector<48x32xf32> to vector<1x32xf32>
    %475 = tpu.concatenate %473, %474 in 0 : vector<1x32xf32>, vector<1x32xf32> -> vector<2x32xf32>
    %c0_195 = arith.constant 0 : index
    %c0_196 = arith.constant 0 : index
    %476 = vector.load %arg18[%c0_195, %c0_196] : memref<1x32xf32, #tpu.memory_space<vmem>>, vector<1x32xf32>
    %c0_197 = arith.constant 0 : index
    %c0_198 = arith.constant 0 : index
    %477 = vector.load %arg19[%c0_197, %c0_198] : memref<1x32xf32, #tpu.memory_space<vmem>>, vector<1x32xf32>
    %cst_199 = arith.constant dense<0.000000e+00> : vector<2xf32>
    %478 = vector.multi_reduction <add>, %475, %cst_199 [1] : vector<2x32xf32> to vector<2xf32>
    %479 = vector.shape_cast %478 : vector<2xf32> to vector<2x1xf32>
    %cst_200 = arith.constant 3.200000e+01 : f32
    %480 = vector.broadcast %cst_200 : f32 to vector<2x1xf32>
    %481 = arith.divf %479, %480 : vector<2x1xf32>
    %482 = vector.broadcast %481 : vector<2x1xf32> to vector<2x32xf32>
    %483 = arith.subf %475, %482 : vector<2x32xf32>
    %484 = arith.mulf %483, %483 : vector<2x32xf32>
    %cst_201 = arith.constant dense<0.000000e+00> : vector<2xf32>
    %485 = vector.multi_reduction <add>, %484, %cst_201 [1] : vector<2x32xf32> to vector<2xf32>
    %486 = vector.shape_cast %485 : vector<2xf32> to vector<2x1xf32>
    %cst_202 = arith.constant 3.200000e+01 : f32
    %487 = vector.broadcast %cst_202 : f32 to vector<2x1xf32>
    %488 = arith.divf %486, %487 : vector<2x1xf32>
    %489 = vector.broadcast %481 : vector<2x1xf32> to vector<2x32xf32>
    %490 = arith.subf %475, %489 : vector<2x32xf32>
    %cst_203 = arith.constant 9.99999974E-6 : f32
    %491 = vector.broadcast %cst_203 : f32 to vector<2x1xf32>
    %492 = arith.addf %488, %491 : vector<2x1xf32>
    %493 = math.rsqrt %492 : vector<2x1xf32>
    %494 = vector.broadcast %493 : vector<2x1xf32> to vector<2x32xf32>
    %495 = arith.mulf %490, %494 : vector<2x32xf32>
    %496 = vector.broadcast %476 : vector<1x32xf32> to vector<2x32xf32>
    %497 = arith.mulf %495, %496 : vector<2x32xf32>
    %498 = vector.broadcast %477 : vector<1x32xf32> to vector<2x32xf32>
    %499 = arith.addf %497, %498 : vector<2x32xf32>
    %c0_204 = arith.constant 0 : index
    %c0_205 = arith.constant 0 : index
    %500 = vector.load %arg20[%c0_204, %c0_205] : memref<32x128xf32, #tpu.memory_space<vmem>>, vector<32x128xf32>
    %cst_206 = arith.constant dense<0.000000e+00> : vector<2x128xf32>
    %501 = tpu.matmul %499, %500, %cst_206 {dimension_numbers = #tpu.dot_dimension_numbers<[1], [0], [0], [1], [0, 0, 1, 1], [], []>} : vector<2x32xf32>, vector<32x128xf32>, vector<2x128xf32> -> vector<2x128xf32>
    %c0_207 = arith.constant 0 : index
    %c0_208 = arith.constant 0 : index
    %502 = vector.load %arg21[%c0_207, %c0_208] : memref<2x128xf32, #tpu.memory_space<vmem>>, vector<2x128xf32>
    tpu.vector_store %arg21[%c0_207, %c0_208], %501 {strides = array<i32>} : memref<2x128xf32, #tpu.memory_space<vmem>>, vector<2x128xf32>,
    return
  }
  func.func @transform_0(%arg0: i32) -> (i32, i32) {
    %c0_i32 = arith.constant 0 : i32
    %c0_i32_0 = arith.constant 0 : i32
    %c0_i32_1 = arith.constant 0 : i32
    return %c0_i32, %c0_i32_0 : i32, i32
  }
  func.func @transform_1(%arg0: i32) -> (i32, i32) {
    %c0_i32 = arith.constant 0 : i32
    %c0_i32_0 = arith.constant 0 : i32
    %c0_i32_1 = arith.constant 0 : i32
    return %c0_i32, %c0_i32_0 : i32, i32
  }
  func.func @transform_2(%arg0: i32) -> (i32, i32) {
    %c0_i32 = arith.constant 0 : i32
    %c0_i32_0 = arith.constant 0 : i32
    %c0_i32_1 = arith.constant 0 : i32
    return %c0_i32, %c0_i32_0 : i32, i32
  }
  func.func @transform_3(%arg0: i32) -> (i32, i32) {
    %c0_i32 = arith.constant 0 : i32
    %c0_i32_0 = arith.constant 0 : i32
    %c0_i32_1 = arith.constant 0 : i32
    return %c0_i32, %c0_i32_0 : i32, i32
  }
  func.func @transform_4(%arg0: i32) -> (i32, i32) {
    %c0_i32 = arith.constant 0 : i32
    %c0_i32_0 = arith.constant 0 : i32
    %c0_i32_1 = arith.constant 0 : i32
    return %c0_i32, %c0_i32_0 : i32, i32
  }
  func.func @transform_5(%arg0: i32) -> (i32, i32, i32) {
    %c0_i32 = arith.constant 0 : i32
    %c0_i32_0 = arith.constant 0 : i32
    %c0_i32_1 = arith.constant 0 : i32
    %c0_i32_2 = arith.constant 0 : i32
    return %c0_i32, %c0_i32_0, %c0_i32_1 : i32, i32, i32
  }
  func.func @transform_6(%arg0: i32) -> (i32, i32, i32) {
    %c0_i32 = arith.constant 0 : i32
    %c0_i32_0 = arith.constant 0 : i32
    %c0_i32_1 = arith.constant 0 : i32
    %c0_i32_2 = arith.constant 0 : i32
    return %c0_i32, %c0_i32_0, %c0_i32_1 : i32, i32, i32
  }
  func.func @transform_7(%arg0: i32) -> (i32, i32, i32) {
    %c0_i32 = arith.constant 0 : i32
    %c0_i32_0 = arith.constant 0 : i32
    %c0_i32_1 = arith.constant 0 : i32
    %c0_i32_2 = arith.constant 0 : i32
    return %c0_i32, %c0_i32_0, %c0_i32_1 : i32, i32, i32
  }
  func.func @transform_8(%arg0: i32) -> (i32, i32, i32) {
    %c0_i32 = arith.constant 0 : i32
    %c0_i32_0 = arith.constant 0 : i32
    %c0_i32_1 = arith.constant 0 : i32
    %c0_i32_2 = arith.constant 0 : i32
    return %c0_i32, %c0_i32_0, %c0_i32_1 : i32, i32, i32
  }
  func.func @transform_9(%arg0: i32) -> (i32, i32, i32) {
    %c0_i32 = arith.constant 0 : i32
    %c0_i32_0 = arith.constant 0 : i32
    %c0_i32_1 = arith.constant 0 : i32
    %c0_i32_2 = arith.constant 0 : i32
    return %c0_i32, %c0_i32_0, %c0_i32_1 : i32, i32, i32
  }
  func.func @transform_10(%arg0: i32) -> (i32, i32, i32) {
    %c0_i32 = arith.constant 0 : i32
    %c0_i32_0 = arith.constant 0 : i32
    %c0_i32_1 = arith.constant 0 : i32
    %c0_i32_2 = arith.constant 0 : i32
    return %c0_i32, %c0_i32_0, %c0_i32_1 : i32, i32, i32
  }
  func.func @transform_11(%arg0: i32) -> (i32, i32, i32) {
    %c0_i32 = arith.constant 0 : i32
    %c0_i32_0 = arith.constant 0 : i32
    %c0_i32_1 = arith.constant 0 : i32
    %c0_i32_2 = arith.constant 0 : i32
    return %c0_i32, %c0_i32_0, %c0_i32_1 : i32, i32, i32
  }
  func.func @transform_12(%arg0: i32) -> (i32, i32, i32) {
    %c0_i32 = arith.constant 0 : i32
    %c0_i32_0 = arith.constant 0 : i32
    %c0_i32_1 = arith.constant 0 : i32
    %c0_i32_2 = arith.constant 0 : i32
    return %c0_i32, %c0_i32_0, %c0_i32_1 : i32, i32, i32
  }
  func.func @transform_13(%arg0: i32) -> (i32, i32, i32) {
    %c0_i32 = arith.constant 0 : i32
    %c0_i32_0 = arith.constant 0 : i32
    %c0_i32_1 = arith.constant 0 : i32
    %c0_i32_2 = arith.constant 0 : i32
    return %c0_i32, %c0_i32_0, %c0_i32_1 : i32, i32, i32
  }
  func.func @transform_14(%arg0: i32) -> (i32, i32, i32) {
    %c0_i32 = arith.constant 0 : i32
    %c0_i32_0 = arith.constant 0 : i32
    %c0_i32_1 = arith.constant 0 : i32
    %c0_i32_2 = arith.constant 0 : i32
    return %c0_i32, %c0_i32_0, %c0_i32_1 : i32, i32, i32
  }
  func.func @transform_15(%arg0: i32) -> (i32, i32, i32) {
    %c0_i32 = arith.constant 0 : i32
    %c0_i32_0 = arith.constant 0 : i32
    %c0_i32_1 = arith.constant 0 : i32
    %c0_i32_2 = arith.constant 0 : i32
    return %c0_i32, %c0_i32_0, %c0_i32_1 : i32, i32, i32
  }
  func.func @transform_16(%arg0: i32) -> (i32, i32, i32) {
    %c0_i32 = arith.constant 0 : i32
    %c0_i32_0 = arith.constant 0 : i32
    %c0_i32_1 = arith.constant 0 : i32
    %c0_i32_2 = arith.constant 0 : i32
    return %c0_i32, %c0_i32_0, %c0_i32_1 : i32, i32, i32
  }
  func.func @transform_17(%arg0: i32) -> (i32, i32) {
    %c0_i32 = arith.constant 0 : i32
    %c0_i32_0 = arith.constant 0 : i32
    %c0_i32_1 = arith.constant 0 : i32
    return %c0_i32, %c0_i32_0 : i32, i32
  }
  func.func @transform_18(%arg0: i32) -> (i32, i32) {
    %c0_i32 = arith.constant 0 : i32
    %c0_i32_0 = arith.constant 0 : i32
    %c0_i32_1 = arith.constant 0 : i32
    return %c0_i32, %c0_i32_0 : i32, i32
  }
  func.func @transform_19(%arg0: i32) -> (i32, i32) {
    %c0_i32 = arith.constant 0 : i32
    %c0_i32_0 = arith.constant 0 : i32
    %c0_i32_1 = arith.constant 0 : i32
    return %c0_i32, %c0_i32_0 : i32, i32
  }
  func.func @transform_20(%arg0: i32) -> (i32, i32) {
    %c0_i32 = arith.constant 0 : i32
    %c0_i32_0 = arith.constant 0 : i32
    %c0_i32_1 = arith.constant 0 : i32
    return %c0_i32, %c0_i32_0 : i32, i32
  }
}

</mosaic_0001>

<llo_original>
// kernel: encode_image.1
$region0: #{encode_image.1}
  #allocation0 [shape = 'u32[]', space=smem, size = 0x4, offset = 0x4, fixed_abs, tag = 'smem constant byte address 0x4 - core index']
  #allocation1 [shape = 'u32[144,128]{1,0:T(1,128)}', space=vmem, size = 0x12000, scoped, tag = 'internal scratch']
  #allocation2 [shape = 'f32[48,32]{1,0:T(8,128)}', space=vmem, size = 0x6000, scoped, tag = 'scratch operand']
  %s0 = inlined_call_operand.vmem [shape: f32[48,48], index: 0, kind: input, shape index: {}]
  %s1 = inlined_call_operand.vmem [shape: f32[48,32], index: 1, kind: input, shape index: {}]
  %s2 = inlined_call_operand.vmem [shape: f32[48,32], index: 2, kind: input, shape index: {}]
  %s3 = inlined_call_operand.vmem [shape: f32[1,32], index: 3, kind: input, shape index: {}]
  %s4 = inlined_call_operand.vmem [shape: f32[1,32], index: 4, kind: input, shape index: {}]
  %s5 = inlined_call_operand.vmem [shape: f32[2,1,32], index: 5, kind: input, shape index: {}]
  %s6 = inlined_call_operand.vmem [shape: f32[2,1,32], index: 6, kind: input, shape index: {}]
  %s7 = inlined_call_operand.vmem [shape: f32[2,32,96], index: 7, kind: input, shape index: {}]
  %s8 = inlined_call_operand.vmem [shape: f32[2,1,96], index: 8, kind: input, shape index: {}]
  %s9 = inlined_call_operand.vmem [shape: f32[2,32,32], index: 9, kind: input, shape index: {}]
  %s10 = inlined_call_operand.vmem [shape: f32[2,1,32], index: 10, kind: input, shape index: {}]
  %s11 = inlined_call_operand.vmem [shape: f32[2,1,32], index: 11, kind: input, shape index: {}]
  %s12 = inlined_call_operand.vmem [shape: f32[2,1,32], index: 12, kind: input, shape index: {}]
  %s13 = inlined_call_operand.vmem [shape: f32[2,32,128], index: 13, kind: input, shape index: {}]
  %s14 = inlined_call_operand.vmem [shape: f32[2,1,128], index: 14, kind: input, shape index: {}]
  %s15 = inlined_call_operand.vmem [shape: f32[2,128,32], index: 15, kind: input, shape index: {}]
  %s16 = inlined_call_operand.vmem [shape: f32[2,1,32], index: 16, kind: input, shape index: {}]
  %s17 = inlined_call_operand.vmem [shape: f32[1,32], index: 17, kind: input, shape index: {}]
  %s18 = inlined_call_operand.vmem [shape: f32[1,32], index: 18, kind: input, shape index: {}]
  %s19 = inlined_call_operand.vmem [shape: f32[32,128], index: 19, kind: input, shape index: {}]
  %s20 = inlined_call_operand.hbm [shape: f32[2,128], index: 20, kind: output, shape index: {}]
  %s21 = sld [smem:[#allocation0]]
  $region90: #{encode_image.1} parent=0
    _
  %s23 = ssub.s32 1, %s21
  %s24 = scalar_select 0, %s23, %s21
  $region1: #{encode_image.1} parent=0
    #allocation3 [shape = 'u8[1024]{0}', space=vmem, size = 0x400, scoped, tag = 'output window, operand 0, single buffered']
    #allocation4 [shape = 's32[1]{0}', space=sflag, size = 0x4, scoped, tag = 'scoped memory for encode_image.1']
    %25 = vsyncpa [#allocation4], 0
    // Predicated region
    $region2: #{encode_image.1} parent=1 // pred_check
      _
    $region3: #{encode_image.1} parent=1 // pred_check_branch
      %27 = sbr.rel (0) target = $region5
    $region4: #{encode_image.1} parent=1 // pred_region
      _
    $region5: #{encode_image.1} parent=1 // pred_fallthru
      _
    // Predicated region
    $region6: #{encode_image.1} parent=1 // pred_check
      _
    $region7: #{encode_image.1} parent=1 // pred_check_branch
      %29 = sbr.rel (0) target = $region9
    $region8: #{encode_image.1} parent=1 // pred_region
      _
    $region9: #{encode_image.1} parent=1 // pred_fallthru
      _
    // Predicated region
    $region10: #{encode_image.1} parent=1 // pred_check
      _
    $region11: #{encode_image.1} parent=1 // pred_check_branch
      %31 = sbr.rel (0) target = $region13
    $region12: #{encode_image.1} parent=1 // pred_region
      _
    $region13: #{encode_image.1} parent=1 // pred_fallthru
      _
    // Predicated region
    $region14: #{encode_image.1} parent=1 // pred_check
      _
    $region15: #{encode_image.1} parent=1 // pred_check_branch
      %33 = sbr.rel (0) target = $region17
    $region16: #{encode_image.1} parent=1 // pred_region
      _
    $region17: #{encode_image.1} parent=1 // pred_fallthru
      _
    // Predicated region
    $region18: #{encode_image.1} parent=1 // pred_check
      _
    $region19: #{encode_image.1} parent=1 // pred_check_branch
      %35 = sbr.rel (0) target = $region21
    $region20: #{encode_image.1} parent=1 // pred_region
      _
    $region21: #{encode_image.1} parent=1 // pred_fallthru
      _
    // Predicated region
    $region22: #{encode_image.1} parent=1 // pred_check
      _
    $region23: #{encode_image.1} parent=1 // pred_check_branch
      %37 = sbr.rel (0) target = $region25
    $region24: #{encode_image.1} parent=1 // pred_region
      _
    $region25: #{encode_image.1} parent=1 // pred_fallthru
      _
    // Predicated region
    $region26: #{encode_image.1} parent=1 // pred_check
      _
    $region27: #{encode_image.1} parent=1 // pred_check_branch
      %39 = sbr.rel (0) target = $region29
    $region28: #{encode_image.1} parent=1 // pred_region
      _
    $region29: #{encode_image.1} parent=1 // pred_fallthru
      _
    // Predicated region
    $region30: #{encode_image.1} parent=1 // pred_check
      _
    $region31: #{encode_image.1} parent=1 // pred_check_branch
      %41 = sbr.rel (0) target = $region33
    $region32: #{encode_image.1} parent=1 // pred_region
      _
    $region33: #{encode_image.1} parent=1 // pred_fallthru
      _
    // Predicated region
    $region34: #{encode_image.1} parent=1 // pred_check
      _
    $region35: #{encode_image.1} parent=1 // pred_check_branch
      %43 = sbr.rel (0) target = $region37
    $region36: #{encode_image.1} parent=1 // pred_region
      _
    $region37: #{encode_image.1} parent=1 // pred_fallthru
      _
    // Predicated region
    $region38: #{encode_image.1} parent=1 // pred_check
      _
    $region39: #{encode_image.1} parent=1 // pred_check_branch
      %45 = sbr.rel (0) target = $region41
    $region40: #{encode_image.1} parent=1 // pred_region
      _
    $region41: #{encode_image.1} parent=1 // pred_fallthru
      _
    // Predicated region
    $region42: #{encode_image.1} parent=1 // pred_check
      _
    $region43: #{encode_image.1} parent=1 // pred_check_branch
      %47 = sbr.rel (0) target = $region45
    $region44: #{encode_image.1} parent=1 // pred_region
      _
    $region45: #{encode_image.1} parent=1 // pred_fallthru
      _
    // Predicated region
    $region46: #{encode_image.1} parent=1 // pred_check
      _
    $region47: #{encode_image.1} parent=1 // pred_check_branch
      %49 = sbr.rel (0) target = $region49
    $region48: #{encode_image.1} parent=1 // pred_region
      _
    $region49: #{encode_image.1} parent=1 // pred_fallthru
      _
    // Predicated region
    $region50: #{encode_image.1} parent=1 // pred_check
      _
    $region51: #{encode_image.1} parent=1 // pred_check_branch
      %51 = sbr.rel (0) target = $region53
    $region52: #{encode_image.1} parent=1 // pred_region
      _
    $region53: #{encode_image.1} parent=1 // pred_fallthru
      _
    // Predicated region
    $region54: #{encode_image.1} parent=1 // pred_check
      _
    $region55: #{encode_image.1} parent=1 // pred_check_branch
      %53 = sbr.rel (0) target = $region57
    $region56: #{encode_image.1} parent=1 // pred_region
      _
    $region57: #{encode_image.1} parent=1 // pred_fallthru
      _
    // Predicated region
    $region58: #{encode_image.1} parent=1 // pred_check
      _
    $region59: #{encode_image.1} parent=1 // pred_check_branch
      %55 = sbr.rel (0) target = $region61
    $region60: #{encode_image.1} parent=1 // pred_region
      _
    $region61: #{encode_image.1} parent=1 // pred_fallthru
      _
    // Predicated region
    $region62: #{encode_image.1} parent=1 // pred_check
      _
    $region63: #{encode_image.1} parent=1 // pred_check_branch
      %57 = sbr.rel (0) target = $region65
    $region64: #{encode_image.1} parent=1 // pred_region
      _
    $region65: #{encode_image.1} parent=1 // pred_fallthru
      _
    // Predicated region
    $region66: #{encode_image.1} parent=1 // pred_check
      _
    $region67: #{encode_image.1} parent=1 // pred_check_branch
      %59 = sbr.rel (0) target = $region69
    $region68: #{encode_image.1} parent=1 // pred_region
      _
    $region69: #{encode_image.1} parent=1 // pred_fallthru
      _
    // Predicated region
    $region70: #{encode_image.1} parent=1 // pred_check
      _
    $region71: #{encode_image.1} parent=1 // pred_check_branch
      %61 = sbr.rel (0) target = $region73
    $region72: #{encode_image.1} parent=1 // pred_region
      _
    $region73: #{encode_image.1} parent=1 // pred_fallthru
      _
    // Predicated region
    $region74: #{encode_image.1} parent=1 // pred_check
      _
    $region75: #{encode_image.1} parent=1 // pred_check_branch
      %63 = sbr.rel (0) target = $region77
    $region76: #{encode_image.1} parent=1 // pred_region
      _
    $region77: #{encode_image.1} parent=1 // pred_fallthru
      _
    // Predicated region
    $region78: #{encode_image.1} parent=1 // pred_check
      _
    $region79: #{encode_image.1} parent=1 // pred_check_branch
      %65 = sbr.rel (0) target = $region81
    $region80: #{encode_image.1} parent=1 // pred_region
      _
    $region81: #{encode_image.1} parent=1 // pred_fallthru
      _
    %v66 = vld [vmem:[%s0] sm:$0xff]
    %v67 = vld [vmem:[%s0 + $0x8] sm:$0xff]
    %v68 = vld [vmem:[%s0 + $0x10] sm:$0xff]
    %v69 = vld [vmem:[%s0 + $0x18] sm:$0xff]
    %v70 = vld [vmem:[%s0 + $0x20] sm:$0xff]
    %v71 = vld [vmem:[%s0 + $0x28] sm:$0xff]
    %v72 = vld [vmem:[%s1] sm:$0xff]
    %v73 = vld [vmem:[%s1 + $0x8] sm:$0xff]
    %v74 = vld [vmem:[%s1 + $0x10] sm:$0xff]
    %v75 = vld [vmem:[%s1 + $0x18] sm:$0xff]
    %v76 = vld [vmem:[%s1 + $0x20] sm:$0xff]
    %v77 = vld [vmem:[%s1 + $0x28] sm:$0xff]
    %v78 = vld [vmem:[%s2] sm:$0xff]
    %v79 = vld [vmem:[%s2 + $0x8] sm:$0xff]
    %v80 = vld [vmem:[%s2 + $0x10] sm:$0xff]
    %v81 = vld [vmem:[%s2 + $0x18] sm:$0xff]
    %v82 = vld [vmem:[%s2 + $0x20] sm:$0xff]
    %v83 = vld [vmem:[%s2 + $0x28] sm:$0xff]
    %vm84 = vcmask 392192
    %v86 = vsel %vm84, %v66, 0
    %v89 = vsel %vm84, %v67, 0
    %v92 = vsel %vm84, %v68, 0
    %v95 = vsel %vm84, %v69, 0
    %v98 = vsel %vm84, %v70, 0
    %v101 = vsel %vm84, %v71, 0
    %103 = vmatprep.subr.mxu0 0.0
    %104 = vmatpush1.msra.mxu0 0.0
    %105 = vmatprep.subr.mxu0 0.0
    %106 = vmatpush1.msra.mxu0 0.0
    %107 = vmatprep.subr.mxu0 0.0
    %108 = vmatpush1.msra.mxu0 0.0
    %109 = vmatprep.subr.mxu0 0.0
    %110 = vmatpush1.msra.mxu0 0.0
    %111 = vmatprep.subr.mxu0 0.0
    %112 = vmatpush1.msra.mxu0 0.0
    %113 = vmatprep.subr.mxu0 0.0
    %114 = vmatpush1.msra.mxu0 0.0
    %115 = vmatprep.subr.mxu0 0.0
    %116 = vmatpush1.msra.mxu0 0.0
    %117 = vmatprep.subr.mxu0 0.0
    %118 = vmatpush1.msra.mxu0 0.0
    %119 = vmatprep.subr.mxu0 0.0
    %120 = vmatpush1.msra.mxu0 0.0
    %121 = vmatprep.subr.mxu0 0.0
    %122 = vmatpush1.msra.mxu0 0.0
    %123 = vmatprep.subr.mxu0 0.0
    %124 = vmatpush1.msra.mxu0 %v77
    %125 = vmatprep.subr.mxu0 0.0
    %126 = vmatpush1.msra.mxu0 %v76
    %127 = vmatprep.subr.mxu0 0.0
    %128 = vmatpush1.msra.mxu0 %v75
    %129 = vmatprep.subr.mxu0 0.0
    %130 = vmatpush1.msra.mxu0 %v74
    %131 = vmatprep.subr.mxu0 0.0
    %132 = vmatpush1.msra.mxu0 %v73
    %133 = vmatprep.subr.mxu0 0.0
    %134 = vmatpush1.msra.mxu0 %v72
    %135 = vmatprep.subr.mxu0 0.0
    %136 = vmatpush2.msra.mxu0 0.0
    %137 = vmatprep.subr.mxu0 0.0
    %138 = vmatpush2.msra.mxu0 0.0
    %139 = vmatprep.subr.mxu0 0.0
    %140 = vmatpush2.msra.mxu0 0.0
    %141 = vmatprep.subr.mxu0 0.0
    %142 = vmatpush2.msra.mxu0 0.0
    %143 = vmatprep.subr.mxu0 0.0
    %144 = vmatpush2.msra.mxu0 0.0
    %145 = vmatprep.subr.mxu0 0.0
    %146 = vmatpush2.msra.mxu0 0.0
    %147 = vmatprep.subr.mxu0 0.0
    %148 = vmatpush2.msra.mxu0 0.0
    %149 = vmatprep.subr.mxu0 0.0
    %150 = vmatpush2.msra.mxu0 0.0
    %151 = vmatprep.subr.mxu0 0.0
    %152 = vmatpush2.msra.mxu0 0.0
    %153 = vmatprep.subr.mxu0 0.0
    %154 = vmatpush2.msra.mxu0 0.0
    %155 = vmatprep.subr.mxu0 0.0
    %156 = vmatpush2.msra.mxu0 0.0
    %157 = vmatprep.subr.mxu0 0.0
    %158 = vmatpush2.msra.mxu0 0.0
    %159 = vmatprep.subr.mxu0 0.0
    %160 = vmatpush2.msra.mxu0 0.0
    %161 = vmatprep.subr.mxu0 0.0
    %162 = vmatpush2.msra.mxu0 0.0
    %163 = vmatprep.subr.mxu0 0.0
    %164 = vmatpush2.msra.mxu0 0.0
    %165 = vmatprep.subr.mxu0 0.0
    %166 = vmatpush2.msra.mxu0 0.0
    %167 = vmatprep.mubr.f32.mxu0 0.0
    %168 = vmatmul.mubr.f32.gmra.mxu0 %v86
    %v169 = vpop.f32.mrf.mxu0
    %v170 = vadd.f32 %v78, %v169
    %v171 = vpop.f32.mrf.mxu0
    %172 = vmatprep.mubr.f32.mxu0 0.0
    %173 = vmatmul.mubr.f32.gmra.mxu0 %v89
    %v174 = vpop.f32.mrf.mxu0
    %v175 = vadd.f32 %v79, %v174
    %v176 = vpop.f32.mrf.mxu0
    %177 = vmatprep.mubr.f32.mxu0 0.0
    %178 = vmatmul.mubr.f32.gmra.mxu0 %v92
    %v179 = vpop.f32.mrf.mxu0
    %v180 = vadd.f32 %v80, %v179
    %v181 = vpop.f32.mrf.mxu0
    %182 = vmatprep.mubr.f32.mxu0 0.0
    %183 = vmatmul.mubr.f32.gmra.mxu0 %v95
    %v184 = vpop.f32.mrf.mxu0
    %v185 = vadd.f32 %v81, %v184
    %v186 = vpop.f32.mrf.mxu0
    %187 = vmatprep.mubr.f32.mxu0 0.0
    %188 = vmatmul.mubr.f32.gmra.mxu0 %v98
    %v189 = vpop.f32.mrf.mxu0
    %v190 = vadd.f32 %v82, %v189
    %v191 = vpop.f32.mrf.mxu0
    %192 = vmatprep.mubr.f32.mxu0 0.0
    %193 = vmatmul.mubr.f32.gmra.mxu0 %v101
    %v194 = vpop.f32.mrf.mxu0
    %v195 = vadd.f32 %v83, %v194
    %v196 = vpop.f32.mrf.mxu0
    %197 = vdwg.mxu0
    %v198 = vld [vmem:[%s3] sm:$0x1]
    %v199 = vld [vmem:[%s4] sm:$0x1]
    %vm200 = vcmask 261120
    %v201 = vsel %vm200, %v170, 0.0
    %202 = vadd.xlane.f32.xlu0 %v201
    %v203 = vpop.xlane.xlu0 %202
    %v204 = vsel %vm200, %v175, 0.0
    %205 = vadd.xlane.f32.xlu0 %v204
    %v206 = vpop.xlane.xlu0 %205
    %v207 = vsel %vm200, %v180, 0.0
    %208 = vadd.xlane.f32.xlu0 %v207
    %v209 = vpop.xlane.xlu0 %208
    %v210 = vsel %vm200, %v185, 0.0
    %211 = vadd.xlane.f32.xlu0 %v210
    %v212 = vpop.xlane.xlu0 %211
    %v213 = vsel %vm200, %v190, 0.0
    %214 = vadd.xlane.f32.xlu0 %v213
    %v215 = vpop.xlane.xlu0 %214
    %v216 = vsel %vm200, %v195, 0.0
    %217 = vadd.xlane.f32.xlu0 %v216
    %v218 = vpop.xlane.xlu0 %217
    %v219 = vrcp.pop 32.0
    %v220 = vmul.f32 %v203, %v219
    %v221 = vmul.f32 %v206, %v219
    %v222 = vmul.f32 %v209, %v219
    %v223 = vmul.f32 %v212, %v219
    %v224 = vmul.f32 %v215, %v219
    %v225 = vmul.f32 %v218, %v219
    %v226 = vsub.f32 %v170, %v220
    %v227 = vsub.f32 %v175, %v221
    %v228 = vsub.f32 %v180, %v222
    %v229 = vsub.f32 %v185, %v223
    %v230 = vsub.f32 %v190, %v224
    %v231 = vsub.f32 %v195, %v225
    %v232 = vmul.f32 %v226, %v226
    %v233 = vmul.f32 %v227, %v227
    %v234 = vmul.f32 %v228, %v228
    %v235 = vmul.f32 %v229, %v229
    %v236 = vmul.f32 %v230, %v230
    %v237 = vmul.f32 %v231, %v231
    %v238 = vsel %vm200, %v232, 0.0
    %239 = vadd.xlane.f32.xlu0 %v238
    %v240 = vpop.xlane.xlu0 %239
    %v241 = vsel %vm200, %v233, 0.0
    %242 = vadd.xlane.f32.xlu0 %v241
    %v243 = vpop.xlane.xlu0 %242
    %v244 = vsel %vm200, %v234, 0.0
    %245 = vadd.xlane.f32.xlu0 %v244
    %v246 = vpop.xlane.xlu0 %245
    %v247 = vsel %vm200, %v235, 0.0
    %248 = vadd.xlane.f32.xlu0 %v247
    %v249 = vpop.xlane.xlu0 %248
    %v250 = vsel %vm200, %v236, 0.0
    %251 = vadd.xlane.f32.xlu0 %v250
    %v252 = vpop.xlane.xlu0 %251
    %v253 = vsel %vm200, %v237, 0.0
    %254 = vadd.xlane.f32.xlu0 %v253
    %v255 = vpop.xlane.xlu0 %254
    %v256 = vmul.f32 %v240, %v219
    %v257 = vmul.f32 %v243, %v219
    %v258 = vmul.f32 %v246, %v219
    %v259 = vmul.f32 %v249, %v219
    %v260 = vmul.f32 %v252, %v219
    %v261 = vmul.f32 %v255, %v219
    %v262 = vadd.f32 %v256, 1e-05
    %v263 = vadd.f32 %v257, 1e-05
    %v264 = vadd.f32 %v258, 1e-05
    %v265 = vadd.f32 %v259, 1e-05
    %v266 = vadd.f32 %v260, 1e-05
    %v267 = vadd.f32 %v261, 1e-05
    %v268 = vrsqrt.pop %v262
    %v269 = vrsqrt.pop %v263
    %v270 = vrsqrt.pop %v264
    %v271 = vrsqrt.pop %v265
    %v272 = vrsqrt.pop %v266
    %v273 = vrsqrt.pop %v267
    %v274 = vmul.f32 %v226, %v268
    %v275 = vmul.f32 %v227, %v269
    %v276 = vmul.f32 %v228, %v270
    %v277 = vmul.f32 %v229, %v271
    %v278 = vmul.f32 %v230, %v272
    %v279 = vmul.f32 %v231, %v273
    %v281 = vlaneseq
    %v282 = vshrl.u32 %v281, 7
    %v283 = vsub.s32 0, %v282
    %v284 = vrot.slane %v198, %v283
    %v286 = vmul.f32 %v274, %v284
    %v287 = vmul.f32 %v275, %v284
    %v288 = vmul.f32 %v276, %v284
    %v289 = vmul.f32 %v277, %v284
    %v290 = vmul.f32 %v278, %v284
    %v291 = vmul.f32 %v279, %v284
    %v293 = vlaneseq
    %v294 = vshrl.u32 %v293, 7
    %v295 = vsub.s32 0, %v294
    %v296 = vrot.slane %v199, %v295
    %v298 = vadd.f32 %v286, %v296
    %v299 = vadd.f32 %v287, %v296
    %v300 = vadd.f32 %v288, %v296
    %v301 = vadd.f32 %v289, %v296
    %v302 = vadd.f32 %v290, %v296
    %v303 = vadd.f32 %v291, %v296
    %304 = vst.msk [vmem:[#allocation2] sm:$0xff] %vm200, 0.0
    %305 = vst.msk [vmem:[#allocation2 + $0x8] sm:$0xff] %vm200, 0.0
    %306 = vst.msk [vmem:[#allocation2 + $0x10] sm:$0xff] %vm200, 0.0
    %307 = vst.msk [vmem:[#allocation2 + $0x18] sm:$0xff] %vm200, 0.0
    %308 = vst.msk [vmem:[#allocation2 + $0x20] sm:$0xff] %vm200, 0.0
    %309 = vst.msk [vmem:[#allocation2 + $0x28] sm:$0xff] %vm200, 0.0
    %v310 = vld [vmem:[%s5] sm:$0x1]
    %v311 = vld [vmem:[%s6] sm:$0x1]
    %v312 = vsel %vm200, %v298, 0.0
    %313 = vadd.xlane.f32.xlu0 %v312
    %v314 = vpop.xlane.xlu0 %313
    %v315 = vsel %vm200, %v299, 0.0
    %316 = vadd.xlane.f32.xlu0 %v315
    %v317 = vpop.xlane.xlu0 %316
    %v318 = vsel %vm200, %v300, 0.0
    %319 = vadd.xlane.f32.xlu0 %v318
    %v320 = vpop.xlane.xlu0 %319
    %v321 = vsel %vm200, %v301, 0.0
    %322 = vadd.xlane.f32.xlu0 %v321
    %v323 = vpop.xlane.xlu0 %322
    %v324 = vsel %vm200, %v302, 0.0
    %325 = vadd.xlane.f32.xlu0 %v324
    %v326 = vpop.xlane.xlu0 %325
    %v327 = vsel %vm200, %v303, 0.0
    %328 = vadd.xlane.f32.xlu0 %v327
    %v329 = vpop.xlane.xlu0 %328
    %v330 = vmul.f32 %v314, %v219
    %v331 = vmul.f32 %v317, %v219
    %v332 = vmul.f32 %v320, %v219
    %v333 = vmul.f32 %v323, %v219
    %v334 = vmul.f32 %v326, %v219
    %v335 = vmul.f32 %v329, %v219
    %v336 = vsub.f32 %v298, %v330
    %v337 = vsub.f32 %v299, %v331
    %v338 = vsub.f32 %v300, %v332
    %v339 = vsub.f32 %v301, %v333
    %v340 = vsub.f32 %v302, %v334
    %v341 = vsub.f32 %v303, %v335
    %v342 = vmul.f32 %v336, %v336
    %v343 = vmul.f32 %v337, %v337
    %v344 = vmul.f32 %v338, %v338
    %v345 = vmul.f32 %v339, %v339
    %v346 = vmul.f32 %v340, %v340
    %v347 = vmul.f32 %v341, %v341
    %v348 = vsel %vm200, %v342, 0.0
    %349 = vadd.xlane.f32.xlu0 %v348
    %v350 = vpop.xlane.xlu0 %349
    %v351 = vsel %vm200, %v343, 0.0
    %352 = vadd.xlane.f32.xlu0 %v351
    %v353 = vpop.xlane.xlu0 %352
    %v354 = vsel %vm200, %v344, 0.0
    %355 = vadd.xlane.f32.xlu0 %v354
    %v356 = vpop.xlane.xlu0 %355
    %v357 = vsel %vm200, %v345, 0.0
    %358 = vadd.xlane.f32.xlu0 %v357
    %v359 = vpop.xlane.xlu0 %358
    %v360 = vsel %vm200, %v346, 0.0
    %361 = vadd.xlane.f32.xlu0 %v360
    %v362 = vpop.xlane.xlu0 %361
    %v363 = vsel %vm200, %v347, 0.0
    %364 = vadd.xlane.f32.xlu0 %v363
    %v365 = vpop.xlane.xlu0 %364
    %v366 = vmul.f32 %v350, %v219
    %v367 = vmul.f32 %v353, %v219
    %v368 = vmul.f32 %v356, %v219
    %v369 = vmul.f32 %v359, %v219
    %v370 = vmul.f32 %v362, %v219
    %v371 = vmul.f32 %v365, %v219
    %v372 = vadd.f32 %v366, 1e-05
    %v373 = vadd.f32 %v367, 1e-05
    %v374 = vadd.f32 %v368, 1e-05
    %v375 = vadd.f32 %v369, 1e-05
    %v376 = vadd.f32 %v370, 1e-05
    %v377 = vadd.f32 %v371, 1e-05
    %v378 = vrsqrt.pop %v372
    %v379 = vrsqrt.pop %v373
    %v380 = vrsqrt.pop %v374
    %v381 = vrsqrt.pop %v375
    %v382 = vrsqrt.pop %v376
    %v383 = vrsqrt.pop %v377
    %v384 = vmul.f32 %v336, %v378
    %v385 = vmul.f32 %v337, %v379
    %v386 = vmul.f32 %v338, %v380
    %v387 = vmul.f32 %v339, %v381
    %v388 = vmul.f32 %v340, %v382
    %v389 = vmul.f32 %v341, %v383
    %v391 = vlaneseq
    %v392 = vshrl.u32 %v391, 7
    %v393 = vsub.s32 0, %v392
    %v394 = vrot.slane %v310, %v393
    %v396 = vmul.f32 %v384, %v394
    %v397 = vmul.f32 %v385, %v394
    %v398 = vmul.f32 %v386, %v394
    %v399 = vmul.f32 %v387, %v394
    %v400 = vmul.f32 %v388, %v394
    %v401 = vmul.f32 %v389, %v394
    %v403 = vlaneseq
    %v404 = vshrl.u32 %v403, 7
    %v405 = vsub.s32 0, %v404
    %v406 = vrot.slane %v311, %v405
    %v408 = vadd.f32 %v396, %v406
    %v409 = vadd.f32 %v397, %v406
    %v410 = vadd.f32 %v398, %v406
    %v411 = vadd.f32 %v399, %v406
    %v412 = vadd.f32 %v400, %v406
    %v413 = vadd.f32 %v401, %v406
    %v414 = vld [vmem:[%s7] sm:$0xff]
    %v415 = vld [vmem:[%s7 + $0x8] sm:$0xff]
    %v416 = vld [vmem:[%s7 + $0x10] sm:$0xff]
    %v417 = vld [vmem:[%s7 + $0x18] sm:$0xff]
    %v418 = vld [vmem:[%s8] sm:$0x1]
    %v420 = vlaneseq
    %v421 = vshrl.u32 %v420, 7
    %v422 = vsub.s32 0, %v421
    %v423 = vrot.slane %v418, %v422
    %v426 = vsel %vm200, %v408, 0
    %v429 = vsel %vm200, %v409, 0
    %v432 = vsel %vm200, %v410, 0
    %v435 = vsel %vm200, %v411, 0
    %v438 = vsel %vm200, %v412, 0
    %v441 = vsel %vm200, %v413, 0
    %443 = vmatprep.subr.mxu0 0.0
    %444 = vmatpush1.msra.mxu0 0.0
    %445 = vmatprep.subr.mxu0 0.0
    %446 = vmatpush1.msra.mxu0 0.0
    %447 = vmatprep.subr.mxu0 0.0
    %448 = vmatpush1.msra.mxu0 0.0
    %449 = vmatprep.subr.mxu0 0.0
    %450 = vmatpush1.msra.mxu0 0.0
    %451 = vmatprep.subr.mxu0 0.0
    %452 = vmatpush1.msra.mxu0 0.0
    %453 = vmatprep.subr.mxu0 0.0
    %454 = vmatpush1.msra.mxu0 0.0
    %455 = vmatprep.subr.mxu0 0.0
    %456 = vmatpush1.msra.mxu0 0.0
    %457 = vmatprep.subr.mxu0 0.0
    %458 = vmatpush1.msra.mxu0 0.0
    %459 = vmatprep.subr.mxu0 0.0
    %460 = vmatpush1.msra.mxu0 0.0
    %461 = vmatprep.subr.mxu0 0.0
    %462 = vmatpush1.msra.mxu0 0.0
    %463 = vmatprep.subr.mxu0 0.0
    %464 = vmatpush1.msra.mxu0 0.0
    %465 = vmatprep.subr.mxu0 0.0
    %466 = vmatpush1.msra.mxu0 0.0
    %467 = vmatprep.subr.mxu0 0.0
    %468 = vmatpush1.msra.mxu0 %v417
    %469 = vmatprep.subr.mxu0 0.0
    %470 = vmatpush1.msra.mxu0 %v416
    %471 = vmatprep.subr.mxu0 0.0
    %472 = vmatpush1.msra.mxu0 %v415
    %473 = vmatprep.subr.mxu0 0.0
    %474 = vmatpush1.msra.mxu0 %v414
    %475 = vmatprep.subr.mxu0 0.0
    %476 = vmatpush2.msra.mxu0 0.0
    %477 = vmatprep.subr.mxu0 0.0
    %478 = vmatpush2.msra.mxu0 0.0
    %479 = vmatprep.subr.mxu0 0.0
    %480 = vmatpush2.msra.mxu0 0.0
    %481 = vmatprep.subr.mxu0 0.0
    %482 = vmatpush2.msra.mxu0 0.0
    %483 = vmatprep.subr.mxu0 0.0
    %484 = vmatpush2.msra.mxu0 0.0
    %485 = vmatprep.subr.mxu0 0.0
    %486 = vmatpush2.msra.mxu0 0.0
    %487 = vmatprep.subr.mxu0 0.0
    %488 = vmatpush2.msra.mxu0 0.0
    %489 = vmatprep.subr.mxu0 0.0
    %490 = vmatpush2.msra.mxu0 0.0
    %491 = vmatprep.subr.mxu0 0.0
    %492 = vmatpush2.msra.mxu0 0.0
    %493 = vmatprep.subr.mxu0 0.0
    %494 = vmatpush2.msra.mxu0 0.0
    %495 = vmatprep.subr.mxu0 0.0
    %496 = vmatpush2.msra.mxu0 0.0
    %497 = vmatprep.subr.mxu0 0.0
    %498 = vmatpush2.msra.mxu0 0.0
    %499 = vmatprep.subr.mxu0 0.0
    %500 = vmatpush2.msra.mxu0 0.0
    %501 = vmatprep.subr.mxu0 0.0
    %502 = vmatpush2.msra.mxu0 0.0
    %503 = vmatprep.subr.mxu0 0.0
    %504 = vmatpush2.msra.mxu0 0.0
    %505 = vmatprep.subr.mxu0 0.0
    %506 = vmatpush2.msra.mxu0 0.0
    %507 = vmatprep.mubr.f32.mxu0 0.0
    %508 = vmatmul.mubr.f32.gmra.mxu0 %v426
    %v509 = vpop.f32.mrf.mxu0
    %v510 = vadd.f32 %v423, %v509
    %v511 = vpop.f32.mrf.mxu0
    %512 = vmatprep.mubr.f32.mxu0 0.0
    %513 = vmatmul.mubr.f32.gmra.mxu0 %v429
    %v514 = vpop.f32.mrf.mxu0
    %v515 = vadd.f32 %v423, %v514
    %v516 = vpop.f32.mrf.mxu0
    %517 = vmatprep.mubr.f32.mxu0 0.0
    %518 = vmatmul.mubr.f32.gmra.mxu0 %v432
    %v519 = vpop.f32.mrf.mxu0
    %v520 = vadd.f32 %v423, %v519
    %v521 = vpop.f32.mrf.mxu0
    %522 = vmatprep.mubr.f32.mxu0 0.0
    %523 = vmatmul.mubr.f32.gmra.mxu0 %v435
    %v524 = vpop.f32.mrf.mxu0
    %v525 = vadd.f32 %v423, %v524
    %v526 = vpop.f32.mrf.mxu0
    %527 = vmatprep.mubr.f32.mxu0 0.0
    %528 = vmatmul.mubr.f32.gmra.mxu0 %v438
    %v529 = vpop.f32.mrf.mxu0
    %v530 = vadd.f32 %v423, %v529
    %v531 = vpop.f32.mrf.mxu0
    %532 = vmatprep.mubr.f32.mxu0 0.0
    %533 = vmatmul.mubr.f32.gmra.mxu0 %v441
    %v534 = vpop.f32.mrf.mxu0
    %v535 = vadd.f32 %v423, %v534
    %v536 = vpop.f32.mrf.mxu0
    %537 = vdwg.mxu0
    %541 = vrot.lane.b32.xlu0 %v510, 96
    %v542 = vpop.permute.xlu0 %541
    %543 = vrot.lane.b32.xlu0 %v515, 96
    %v544 = vpop.permute.xlu0 %543
    %545 = vrot.lane.b32.xlu0 %v520, 96
    %v546 = vpop.permute.xlu0 %545
    %vm547 = vcmask 64512
    %v548 = vsel %vm547, %v510, 0
    %v550 = vsel %vm547, %v515, 0
    %v552 = vsel %vm547, %v520, 0
    %v554 = vsel %vm547, %v542, 0
    %v556 = vsel %vm547, %v544, 0
    %v558 = vsel %vm547, %v546, 0
    %560 = vmatprep.subr.mxu0 0.0
    %561 = vmatpush1.xpose.msra.mxu0 0.0
    %562 = vmatprep.subr.mxu0 0.0
    %563 = vmatpush1.xpose.msra.mxu0 0.0
    %564 = vmatprep.subr.mxu0 0.0
    %565 = vmatpush1.xpose.msra.mxu0 0.0
    %566 = vmatprep.subr.mxu0 0.0
    %567 = vmatpush1.xpose.msra.mxu0 0.0
    %568 = vmatprep.subr.mxu0 0.0
    %569 = vmatpush1.xpose.msra.mxu0 0.0
    %570 = vmatprep.subr.mxu0 0.0
    %571 = vmatpush1.xpose.msra.mxu0 0.0
    %572 = vmatprep.subr.mxu0 0.0
    %573 = vmatpush1.xpose.msra.mxu0 0.0
    %574 = vmatprep.subr.mxu0 0.0
    %575 = vmatpush1.xpose.msra.mxu0 0.0
    %576 = vmatprep.subr.mxu0 0.0
    %577 = vmatpush1.xpose.msra.mxu0 0.0
    %578 = vmatprep.subr.mxu0 0.0
    %579 = vmatpush1.xpose.msra.mxu0 0.0
    %580 = vmatprep.subr.mxu0 0.0
    %581 = vmatpush1.xpose.msra.mxu0 0.0
    %582 = vmatprep.subr.mxu0 0.0
    %583 = vmatpush1.xpose.msra.mxu0 0.0
    %584 = vmatprep.subr.mxu0 0.0
    %585 = vmatpush1.xpose.msra.mxu0 0.0
    %586 = vmatprep.subr.mxu0 0.0
    %587 = vmatpush1.xpose.msra.mxu0 %v558
    %588 = vmatprep.subr.mxu0 0.0
    %589 = vmatpush1.xpose.msra.mxu0 %v556
    %590 = vmatprep.subr.mxu0 0.0
    %591 = vmatpush1.xpose.msra.mxu0 %v554
    %592 = vmatprep.subr.mxu0 0.0
    %593 = vmatpush2.xpose.msra.mxu0 0.0
    %594 = vmatprep.subr.mxu0 0.0
    %595 = vmatpush2.xpose.msra.mxu0 0.0
    %596 = vmatprep.subr.mxu0 0.0
    %597 = vmatpush2.xpose.msra.mxu0 0.0
    %598 = vmatprep.subr.mxu0 0.0
    %599 = vmatpush2.xpose.msra.mxu0 0.0
    %600 = vmatprep.subr.mxu0 0.0
    %601 = vmatpush2.xpose.msra.mxu0 0.0
    %602 = vmatprep.subr.mxu0 0.0
    %603 = vmatpush2.xpose.msra.mxu0 0.0
    %604 = vmatprep.subr.mxu0 0.0
    %605 = vmatpush2.xpose.msra.mxu0 0.0
    %606 = vmatprep.subr.mxu0 0.0
    %607 = vmatpush2.xpose.msra.mxu0 0.0
    %608 = vmatprep.subr.mxu0 0.0
    %609 = vmatpush2.xpose.msra.mxu0 0.0
    %610 = vmatprep.subr.mxu0 0.0
    %611 = vmatpush2.xpose.msra.mxu0 0.0
    %612 = vmatprep.subr.mxu0 0.0
    %613 = vmatpush2.xpose.msra.mxu0 0.0
    %614 = vmatprep.subr.mxu0 0.0
    %615 = vmatpush2.xpose.msra.mxu0 0.0
    %616 = vmatprep.subr.mxu0 0.0
    %617 = vmatpush2.xpose.msra.mxu0 0.0
    %618 = vmatprep.subr.mxu0 0.0
    %619 = vmatpush2.xpose.msra.mxu0 0.0
    %620 = vmatprep.subr.mxu0 0.0
    %621 = vmatpush2.xpose.msra.mxu0 0.0
    %622 = vmatprep.subr.mxu0 0.0
    %623 = vmatpush2.xpose.msra.mxu0 0.0
    %624 = vmatprep.mubr.f32.mxu0 0.0
    %625 = vmatmul.mubr.f32.gmra.mxu0 %v548
    %v626 = vpop.f32.mrf.mxu0
    %v627 = vadd.f32 0.0, %v626
    %v628 = vpop.f32.mrf.mxu0
    %629 = vmatprep.mubr.f32.mxu0 0.0
    %630 = vmatmul.mubr.f32.gmra.mxu0 %v550
    %v631 = vpop.f32.mrf.mxu0
    %v632 = vadd.f32 0.0, %v631
    %v633 = vpop.f32.mrf.mxu0
    %634 = vmatprep.mubr.f32.mxu0 0.0
    %635 = vmatmul.mubr.f32.gmra.mxu0 %v552
    %v636 = vpop.f32.mrf.mxu0
    %v637 = vadd.f32 0.0, %v636
    %v638 = vpop.f32.mrf.mxu0
    %639 = vdwg.mxu0
    %vm640 = vcmask 138240
    %v641 = vsel %vm640, %v627, -inf
    %642 = vmax.xlane.f32.xlu0 %v641
    %v643 = vpop.xlane.xlu0 %642
    %v644 = vsel %vm640, %v632, -inf
    %645 = vmax.xlane.f32.xlu0 %v644
    %v646 = vpop.xlane.xlu0 %645
    %vm647 = vcmask 131072
    %v648 = vsel %vm647, %v637, -inf
    %649 = vmax.xlane.f32.xlu0 %v648
    %v650 = vpop.xlane.xlu0 %649
    %v651 = vsub.f32 %v627, %v643
    %v652 = vsub.f32 %v632, %v646
    %v653 = vsub.f32 %v637, %v650
    %v654 = vmul.f32 %v651, 1.442695
    %v655 = vpow.pop %v654
    %v656 = vmul.f32 %v652, 1.442695
    %v657 = vpow.pop %v656
    %v658 = vmul.f32 %v653, 1.442695
    %v659 = vpow.pop %v658
    %v660 = vsel %vm640, %v655, 0.0
    %661 = vadd.xlane.f32.xlu0 %v660
    %v662 = vpop.xlane.xlu0 %661
    %v663 = vsel %vm640, %v657, 0.0
    %664 = vadd.xlane.f32.xlu0 %v663
    %v665 = vpop.xlane.xlu0 %664
    %v666 = vsel %vm647, %v659, 0.0
    %667 = vadd.xlane.f32.xlu0 %v666
    %v668 = vpop.xlane.xlu0 %667
    %v669 = vrcp.pop %v662
    %v670 = vrcp.pop %v665
    %v671 = vrcp.pop %v668
    %v672 = vmul.f32 %v655, %v669
    %v673 = vmul.f32 %v657, %v670
    %v674 = vmul.f32 %v659, %v671
    %675 = vrot.lane.b32.xlu0 %v510, 64
    %v676 = vpop.permute.xlu0 %675
    %677 = vrot.lane.b32.xlu0 %v515, 64
    %v678 = vpop.permute.xlu0 %677
    %679 = vrot.lane.b32.xlu0 %v520, 64
    %v680 = vpop.permute.xlu0 %679
    %v684 = vsel %vm640, %v672, 0
    %v687 = vsel %vm640, %v673, 0
    %v690 = vsel %vm640, %v674, 0
    %vm692 = vcmask 1040384
    %v693 = vsel %vm692, %v680, 0
    %695 = vmatprep.subr.mxu0 0.0
    %696 = vmatpush1.msra.mxu0 0.0
    %697 = vmatprep.subr.mxu0 0.0
    %698 = vmatpush1.msra.mxu0 0.0
    %699 = vmatprep.subr.mxu0 0.0
    %700 = vmatpush1.msra.mxu0 0.0
    %701 = vmatprep.subr.mxu0 0.0
    %702 = vmatpush1.msra.mxu0 0.0
    %703 = vmatprep.subr.mxu0 0.0
    %704 = vmatpush1.msra.mxu0 0.0
    %705 = vmatprep.subr.mxu0 0.0
    %706 = vmatpush1.msra.mxu0 0.0
    %707 = vmatprep.subr.mxu0 0.0
    %708 = vmatpush1.msra.mxu0 0.0
    %709 = vmatprep.subr.mxu0 0.0
    %710 = vmatpush1.msra.mxu0 0.0
    %711 = vmatprep.subr.mxu0 0.0
    %712 = vmatpush1.msra.mxu0 0.0
    %713 = vmatprep.subr.mxu0 0.0
    %714 = vmatpush1.msra.mxu0 0.0
    %715 = vmatprep.subr.mxu0 0.0
    %716 = vmatpush1.msra.mxu0 0.0
    %717 = vmatprep.subr.mxu0 0.0
    %718 = vmatpush1.msra.mxu0 0.0
    %719 = vmatprep.subr.mxu0 0.0
    %720 = vmatpush1.msra.mxu0 0.0
    %721 = vmatprep.subr.mxu0 0.0
    %722 = vmatpush1.msra.mxu0 %v693
    %723 = vmatprep.subr.mxu0 0.0
    %724 = vmatpush1.msra.mxu0 %v678
    %725 = vmatprep.subr.mxu0 0.0
    %726 = vmatpush1.msra.mxu0 %v676
    %727 = vmatprep.subr.mxu0 0.0
    %728 = vmatpush2.msra.mxu0 0.0
    %729 = vmatprep.subr.mxu0 0.0
    %730 = vmatpush2.msra.mxu0 0.0
    %731 = vmatprep.subr.mxu0 0.0
    %732 = vmatpush2.msra.mxu0 0.0
    %733 = vmatprep.subr.mxu0 0.0
    %734 = vmatpush2.msra.mxu0 0.0
    %735 = vmatprep.subr.mxu0 0.0
    %736 = vmatpush2.msra.mxu0 0.0
    %737 = vmatprep.subr.mxu0 0.0
    %738 = vmatpush2.msra.mxu0 0.0
    %739 = vmatprep.subr.mxu0 0.0
    %740 = vmatpush2.msra.mxu0 0.0
    %741 = vmatprep.subr.mxu0 0.0
    %742 = vmatpush2.msra.mxu0 0.0
    %743 = vmatprep.subr.mxu0 0.0
    %744 = vmatpush2.msra.mxu0 0.0
    %745 = vmatprep.subr.mxu0 0.0
    %746 = vmatpush2.msra.mxu0 0.0
    %747 = vmatprep.subr.mxu0 0.0
    %748 = vmatpush2.msra.mxu0 0.0
    %749 = vmatprep.subr.mxu0 0.0
    %750 = vmatpush2.msra.mxu0 0.0
    %751 = vmatprep.subr.mxu0 0.0
    %752 = vmatpush2.msra.mxu0 0.0
    %753 = vmatprep.subr.mxu0 0.0
    %754 = vmatpush2.msra.mxu0 0.0
    %755 = vmatprep.subr.mxu0 0.0
    %756 = vmatpush2.msra.mxu0 0.0
    %757 = vmatprep.subr.mxu0 0.0
    %758 = vmatpush2.msra.mxu0 0.0
    %759 = vmatprep.mubr.f32.mxu0 0.0
    %760 = vmatmul.mubr.f32.gmra.mxu0 %v684
    %v761 = vpop.f32.mrf.mxu0
    %v762 = vadd.f32 0.0, %v761
    %v763 = vpop.f32.mrf.mxu0
    %764 = vmatprep.mubr.f32.mxu0 0.0
    %765 = vmatmul.mubr.f32.gmra.mxu0 %v687
    %v766 = vpop.f32.mrf.mxu0
    %v767 = vadd.f32 0.0, %v766
    %v768 = vpop.f32.mrf.mxu0
    %769 = vmatprep.mubr.f32.mxu0 0.0
    %770 = vmatmul.mubr.f32.gmra.mxu0 %v690
    %v771 = vpop.f32.mrf.mxu0
    %v772 = vadd.f32 0.0, %v771
    %v773 = vpop.f32.mrf.mxu0
    %774 = vdwg.mxu0
    %775 = vrot.lane.b32.xlu0 %v510, 120
    %v776 = vpop.permute.xlu0 %775
    %777 = vrot.lane.b32.xlu0 %v515, 120
    %v778 = vpop.permute.xlu0 %777
    %779 = vrot.lane.b32.xlu0 %v520, 120
    %v780 = vpop.permute.xlu0 %779
    %781 = vrot.lane.b32.xlu0 %v510, 88
    %v782 = vpop.permute.xlu0 %781
    %783 = vrot.lane.b32.xlu0 %v515, 88
    %v784 = vpop.permute.xlu0 %783
    %785 = vrot.lane.b32.xlu0 %v520, 88
    %v786 = vpop.permute.xlu0 %785
    %v787 = vsel %vm547, %v776, 0
    %v789 = vsel %vm547, %v778, 0
    %v791 = vsel %vm547, %v780, 0
    %v793 = vsel %vm547, %v782, 0
    %v795 = vsel %vm547, %v784, 0
    %v797 = vsel %vm547, %v786, 0
    %799 = vmatprep.subr.mxu0 0.0
    %800 = vmatpush1.xpose.msra.mxu0 0.0
    %801 = vmatprep.subr.mxu0 0.0
    %802 = vmatpush1.xpose.msra.mxu0 0.0
    %803 = vmatprep.subr.mxu0 0.0
    %804 = vmatpush1.xpose.msra.mxu0 0.0
    %805 = vmatprep.subr.mxu0 0.0
    %806 = vmatpush1.xpose.msra.mxu0 0.0
    %807 = vmatprep.subr.mxu0 0.0
    %808 = vmatpush1.xpose.msra.mxu0 0.0
    %809 = vmatprep.subr.mxu0 0.0
    %810 = vmatpush1.xpose.msra.mxu0 0.0
    %811 = vmatprep.subr.mxu0 0.0
    %812 = vmatpush1.xpose.msra.mxu0 0.0
    %813 = vmatprep.subr.mxu0 0.0
    %814 = vmatpush1.xpose.msra.mxu0 0.0
    %815 = vmatprep.subr.mxu0 0.0
    %816 = vmatpush1.xpose.msra.mxu0 0.0
    %817 = vmatprep.subr.mxu0 0.0
    %818 = vmatpush1.xpose.msra.mxu0 0.0
    %819 = vmatprep.subr.mxu0 0.0
    %820 = vmatpush1.xpose.msra.mxu0 0.0
    %821 = vmatprep.subr.mxu0 0.0
    %822 = vmatpush1.xpose.msra.mxu0 0.0
    %823 = vmatprep.subr.mxu0 0.0
    %824 = vmatpush1.xpose.msra.mxu0 0.0
    %825 = vmatprep.subr.mxu0 0.0
    %826 = vmatpush1.xpose.msra.mxu0 %v797
    %827 = vmatprep.subr.mxu0 0.0
    %828 = vmatpush1.xpose.msra.mxu0 %v795
    %829 = vmatprep.subr.mxu0 0.0
    %830 = vmatpush1.xpose.msra.mxu0 %v793
    %831 = vmatprep.subr.mxu0 0.0
    %832 = vmatpush2.xpose.msra.mxu0 0.0
    %833 = vmatprep.subr.mxu0 0.0
    %834 = vmatpush2.xpose.msra.mxu0 0.0
    %835 = vmatprep.subr.mxu0 0.0
    %836 = vmatpush2.xpose.msra.mxu0 0.0
    %837 = vmatprep.subr.mxu0 0.0
    %838 = vmatpush2.xpose.msra.mxu0 0.0
    %839 = vmatprep.subr.mxu0 0.0
    %840 = vmatpush2.xpose.msra.mxu0 0.0
    %841 = vmatprep.subr.mxu0 0.0
    %842 = vmatpush2.xpose.msra.mxu0 0.0
    %843 = vmatprep.subr.mxu0 0.0
    %844 = vmatpush2.xpose.msra.mxu0 0.0
    %845 = vmatprep.subr.mxu0 0.0
    %846 = vmatpush2.xpose.msra.mxu0 0.0
    %847 = vmatprep.subr.mxu0 0.0
    %848 = vmatpush2.xpose.msra.mxu0 0.0
    %849 = vmatprep.subr.mxu0 0.0
    %850 = vmatpush2.xpose.msra.mxu0 0.0
    %851 = vmatprep.subr.mxu0 0.0
    %852 = vmatpush2.xpose.msra.mxu0 0.0
    %853 = vmatprep.subr.mxu0 0.0
    %854 = vmatpush2.xpose.msra.mxu0 0.0
    %855 = vmatprep.subr.mxu0 0.0
    %856 = vmatpush2.xpose.msra.mxu0 0.0
    %857 = vmatprep.subr.mxu0 0.0
    %858 = vmatpush2.xpose.msra.mxu0 0.0
    %859 = vmatprep.subr.mxu0 0.0
    %860 = vmatpush2.xpose.msra.mxu0 0.0
    %861 = vmatprep.subr.mxu0 0.0
    %862 = vmatpush2.xpose.msra.mxu0 0.0
    %863 = vmatprep.mubr.f32.mxu0 0.0
    %864 = vmatmul.mubr.f32.gmra.mxu0 %v787
    %v865 = vpop.f32.mrf.mxu0
    %v866 = vadd.f32 0.0, %v865
    %v867 = vpop.f32.mrf.mxu0
    %868 = vmatprep.mubr.f32.mxu0 0.0
    %869 = vmatmul.mubr.f32.gmra.mxu0 %v789
    %v870 = vpop.f32.mrf.mxu0
    %v871 = vadd.f32 0.0, %v870
    %v872 = vpop.f32.mrf.mxu0
    %873 = vmatprep.mubr.f32.mxu0 0.0
    %874 = vmatmul.mubr.f32.gmra.mxu0 %v791
    %v875 = vpop.f32.mrf.mxu0
    %v876 = vadd.f32 0.0, %v875
    %v877 = vpop.f32.mrf.mxu0
    %878 = vdwg.mxu0
    %v879 = vsel %vm640, %v866, -inf
    %880 = vmax.xlane.f32.xlu0 %v879
    %v881 = vpop.xlane.xlu0 %880
    %v882 = vsel %vm640, %v871, -inf
    %883 = vmax.xlane.f32.xlu0 %v882
    %v884 = vpop.xlane.xlu0 %883
    %v885 = vsel %vm647, %v876, -inf
    %886 = vmax.xlane.f32.xlu0 %v885
    %v887 = vpop.xlane.xlu0 %886
    %v888 = vsub.f32 %v866, %v881
    %v889 = vsub.f32 %v871, %v884
    %v890 = vsub.f32 %v876, %v887
    %v891 = vmul.f32 %v888, 1.442695
    %v892 = vpow.pop %v891
    %v893 = vmul.f32 %v889, 1.442695
    %v894 = vpow.pop %v893
    %v895 = vmul.f32 %v890, 1.442695
    %v896 = vpow.pop %v895
    %v897 = vsel %vm640, %v892, 0.0
    %898 = vadd.xlane.f32.xlu0 %v897
    %v899 = vpop.xlane.xlu0 %898
    %v900 = vsel %vm640, %v894, 0.0
    %901 = vadd.xlane.f32.xlu0 %v900
    %v902 = vpop.xlane.xlu0 %901
    %v903 = vsel %vm647, %v896, 0.0
    %904 = vadd.xlane.f32.xlu0 %v903
    %v905 = vpop.xlane.xlu0 %904
    %v906 = vrcp.pop %v899
    %v907 = vrcp.pop %v902
    %v908 = vrcp.pop %v905
    %v909 = vmul.f32 %v892, %v906
    %v910 = vmul.f32 %v894, %v907
    %v911 = vmul.f32 %v896, %v908
    %912 = vrot.lane.b32.xlu0 %v510, 56
    %v913 = vpop.permute.xlu0 %912
    %914 = vrot.lane.b32.xlu0 %v515, 56
    %v915 = vpop.permute.xlu0 %914
    %916 = vrot.lane.b32.xlu0 %v520, 56
    %v917 = vpop.permute.xlu0 %916
    %v921 = vsel %vm640, %v909, 0
    %v924 = vsel %vm640, %v910, 0
    %v927 = vsel %vm640, %v911, 0
    %v929 = vsel %vm692, %v917, 0
    %931 = vmatprep.subr.mxu0 0.0
    %932 = vmatpush1.msra.mxu0 0.0
    %933 = vmatprep.subr.mxu0 0.0
    %934 = vmatpush1.msra.mxu0 0.0
    %935 = vmatprep.subr.mxu0 0.0
    %936 = vmatpush1.msra.mxu0 0.0
    %937 = vmatprep.subr.mxu0 0.0
    %938 = vmatpush1.msra.mxu0 0.0
    %939 = vmatprep.subr.mxu0 0.0
    %940 = vmatpush1.msra.mxu0 0.0
    %941 = vmatprep.subr.mxu0 0.0
    %942 = vmatpush1.msra.mxu0 0.0
    %943 = vmatprep.subr.mxu0 0.0
    %944 = vmatpush1.msra.mxu0 0.0
    %945 = vmatprep.subr.mxu0 0.0
    %946 = vmatpush1.msra.mxu0 0.0
    %947 = vmatprep.subr.mxu0 0.0
    %948 = vmatpush1.msra.mxu0 0.0
    %949 = vmatprep.subr.mxu0 0.0
    %950 = vmatpush1.msra.mxu0 0.0
    %951 = vmatprep.subr.mxu0 0.0
    %952 = vmatpush1.msra.mxu0 0.0
    %953 = vmatprep.subr.mxu0 0.0
    %954 = vmatpush1.msra.mxu0 0.0
    %955 = vmatprep.subr.mxu0 0.0
    %956 = vmatpush1.msra.mxu0 0.0
    %957 = vmatprep.subr.mxu0 0.0
    %958 = vmatpush1.msra.mxu0 %v929
    %959 = vmatprep.subr.mxu0 0.0
    %960 = vmatpush1.msra.mxu0 %v915
    %961 = vmatprep.subr.mxu0 0.0
    %962 = vmatpush1.msra.mxu0 %v913
    %963 = vmatprep.subr.mxu0 0.0
    %964 = vmatpush2.msra.mxu0 0.0
    %965 = vmatprep.subr.mxu0 0.0
    %966 = vmatpush2.msra.mxu0 0.0
    %967 = vmatprep.subr.mxu0 0.0
    %968 = vmatpush2.msra.mxu0 0.0
    %969 = vmatprep.subr.mxu0 0.0
    %970 = vmatpush2.msra.mxu0 0.0
    %971 = vmatprep.subr.mxu0 0.0
    %972 = vmatpush2.msra.mxu0 0.0
    %973 = vmatprep.subr.mxu0 0.0
    %974 = vmatpush2.msra.mxu0 0.0
    %975 = vmatprep.subr.mxu0 0.0
    %976 = vmatpush2.msra.mxu0 0.0
    %977 = vmatprep.subr.mxu0 0.0
    %978 = vmatpush2.msra.mxu0 0.0
    %979 = vmatprep.subr.mxu0 0.0
    %980 = vmatpush2.msra.mxu0 0.0
    %981 = vmatprep.subr.mxu0 0.0
    %982 = vmatpush2.msra.mxu0 0.0
    %983 = vmatprep.subr.mxu0 0.0
    %984 = vmatpush2.msra.mxu0 0.0
    %985 = vmatprep.subr.mxu0 0.0
    %986 = vmatpush2.msra.mxu0 0.0
    %987 = vmatprep.subr.mxu0 0.0
    %988 = vmatpush2.msra.mxu0 0.0
    %989 = vmatprep.subr.mxu0 0.0
    %990 = vmatpush2.msra.mxu0 0.0
    %991 = vmatprep.subr.mxu0 0.0
    %992 = vmatpush2.msra.mxu0 0.0
    %993 = vmatprep.subr.mxu0 0.0
    %994 = vmatpush2.msra.mxu0 0.0
    %995 = vmatprep.mubr.f32.mxu0 0.0
    %996 = vmatmul.mubr.f32.gmra.mxu0 %v921
    %v997 = vpop.f32.mrf.mxu0
    %v998 = vadd.f32 0.0, %v997
    %v999 = vpop.f32.mrf.mxu0
    %1000 = vmatprep.mubr.f32.mxu0 0.0
    %1001 = vmatmul.mubr.f32.gmra.mxu0 %v924
    %v1002 = vpop.f32.mrf.mxu0
    %v1003 = vadd.f32 0.0, %v1002
    %v1004 = vpop.f32.mrf.mxu0
    %1005 = vmatprep.mubr.f32.mxu0 0.0
    %1006 = vmatmul.mubr.f32.gmra.mxu0 %v927
    %v1007 = vpop.f32.mrf.mxu0
    %v1008 = vadd.f32 0.0, %v1007
    %v1009 = vpop.f32.mrf.mxu0
    %1010 = vdwg.mxu0
    %1011 = vrot.lane.b32.xlu0 %v510, 112
    %v1012 = vpop.permute.xlu0 %1011
    %1013 = vrot.lane.b32.xlu0 %v515, 112
    %v1014 = vpop.permute.xlu0 %1013
    %1015 = vrot.lane.b32.xlu0 %v520, 112
    %v1016 = vpop.permute.xlu0 %1015
    %1017 = vrot.lane.b32.xlu0 %v510, 80
    %v1018 = vpop.permute.xlu0 %1017
    %1019 = vrot.lane.b32.xlu0 %v515, 80
    %v1020 = vpop.permute.xlu0 %1019
    %1021 = vrot.lane.b32.xlu0 %v520, 80
    %v1022 = vpop.permute.xlu0 %1021
    %v1023 = vsel %vm547, %v1012, 0
    %v1025 = vsel %vm547, %v1014, 0
    %v1027 = vsel %vm547, %v1016, 0
    %v1029 = vsel %vm547, %v1018, 0
    %v1031 = vsel %vm547, %v1020, 0
    %v1033 = vsel %vm547, %v1022, 0
    %1035 = vmatprep.subr.mxu0 0.0
    %1036 = vmatpush1.xpose.msra.mxu0 0.0
    %1037 = vmatprep.subr.mxu0 0.0
    %1038 = vmatpush1.xpose.msra.mxu0 0.0
    %1039 = vmatprep.subr.mxu0 0.0
    %1040 = vmatpush1.xpose.msra.mxu0 0.0
    %1041 = vmatprep.subr.mxu0 0.0
    %1042 = vmatpush1.xpose.msra.mxu0 0.0
    %1043 = vmatprep.subr.mxu0 0.0
    %1044 = vmatpush1.xpose.msra.mxu0 0.0
    %1045 = vmatprep.subr.mxu0 0.0
    %1046 = vmatpush1.xpose.msra.mxu0 0.0
    %1047 = vmatprep.subr.mxu0 0.0
    %1048 = vmatpush1.xpose.msra.mxu0 0.0
    %1049 = vmatprep.subr.mxu0 0.0
    %1050 = vmatpush1.xpose.msra.mxu0 0.0
    %1051 = vmatprep.subr.mxu0 0.0
    %1052 = vmatpush1.xpose.msra.mxu0 0.0
    %1053 = vmatprep.subr.mxu0 0.0
    %1054 = vmatpush1.xpose.msra.mxu0 0.0
    %1055 = vmatprep.subr.mxu0 0.0
    %1056 = vmatpush1.xpose.msra.mxu0 0.0
    %1057 = vmatprep.subr.mxu0 0.0
    %1058 = vmatpush1.xpose.msra.mxu0 0.0
    %1059 = vmatprep.subr.mxu0 0.0
    %1060 = vmatpush1.xpose.msra.mxu0 0.0
    %1061 = vmatprep.subr.mxu0 0.0
    %1062 = vmatpush1.xpose.msra.mxu0 %v1033
    %1063 = vmatprep.subr.mxu0 0.0
    %1064 = vmatpush1.xpose.msra.mxu0 %v1031
    %1065 = vmatprep.subr.mxu0 0.0
    %1066 = vmatpush1.xpose.msra.mxu0 %v1029
    %1067 = vmatprep.subr.mxu0 0.0
    %1068 = vmatpush2.xpose.msra.mxu0 0.0
    %1069 = vmatprep.subr.mxu0 0.0
    %1070 = vmatpush2.xpose.msra.mxu0 0.0
    %1071 = vmatprep.subr.mxu0 0.0
    %1072 = vmatpush2.xpose.msra.mxu0 0.0
    %1073 = vmatprep.subr.mxu0 0.0
    %1074 = vmatpush2.xpose.msra.mxu0 0.0
    %1075 = vmatprep.subr.mxu0 0.0
    %1076 = vmatpush2.xpose.msra.mxu0 0.0
    %1077 = vmatprep.subr.mxu0 0.0
    %1078 = vmatpush2.xpose.msra.mxu0 0.0
    %1079 = vmatprep.subr.mxu0 0.0
    %1080 = vmatpush2.xpose.msra.mxu0 0.0
    %1081 = vmatprep.subr.mxu0 0.0
    %1082 = vmatpush2.xpose.msra.mxu0 0.0
    %1083 = vmatprep.subr.mxu0 0.0
    %1084 = vmatpush2.xpose.msra.mxu0 0.0
    %1085 = vmatprep.subr.mxu0 0.0
    %1086 = vmatpush2.xpose.msra.mxu0 0.0
    %1087 = vmatprep.subr.mxu0 0.0
    %1088 = vmatpush2.xpose.msra.mxu0 0.0
    %1089 = vmatprep.subr.mxu0 0.0
    %1090 = vmatpush2.xpose.msra.mxu0 0.0
    %1091 = vmatprep.subr.mxu0 0.0
    %1092 = vmatpush2.xpose.msra.mxu0 0.0
    %1093 = vmatprep.subr.mxu0 0.0
    %1094 = vmatpush2.xpose.msra.mxu0 0.0
    %1095 = vmatprep.subr.mxu0 0.0
    %1096 = vmatpush2.xpose.msra.mxu0 0.0
    %1097 = vmatprep.subr.mxu0 0.0
    %1098 = vmatpush2.xpose.msra.mxu0 0.0
    %1099 = vmatprep.mubr.f32.mxu0 0.0
    %1100 = vmatmul.mubr.f32.gmra.mxu0 %v1023
    %v1101 = vpop.f32.mrf.mxu0
    %v1102 = vadd.f32 0.0, %v1101
    %v1103 = vpop.f32.mrf.mxu0
    %1104 = vmatprep.mubr.f32.mxu0 0.0
    %1105 = vmatmul.mubr.f32.gmra.mxu0 %v1025
    %v1106 = vpop.f32.mrf.mxu0
    %v1107 = vadd.f32 0.0, %v1106
    %v1108 = vpop.f32.mrf.mxu0
    %1109 = vmatprep.mubr.f32.mxu0 0.0
    %1110 = vmatmul.mubr.f32.gmra.mxu0 %v1027
    %v1111 = vpop.f32.mrf.mxu0
    %v1112 = vadd.f32 0.0, %v1111
    %v1113 = vpop.f32.mrf.mxu0
    %1114 = vdwg.mxu0
    %v1115 = vsel %vm640, %v1102, -inf
    %1116 = vmax.xlane.f32.xlu0 %v1115
    %v1117 = vpop.xlane.xlu0 %1116
    %v1118 = vsel %vm640, %v1107, -inf
    %1119 = vmax.xlane.f32.xlu0 %v1118
    %v1120 = vpop.xlane.xlu0 %1119
    %v1121 = vsel %vm647, %v1112, -inf
    %1122 = vmax.xlane.f32.xlu0 %v1121
    %v1123 = vpop.xlane.xlu0 %1122
    %v1124 = vsub.f32 %v1102, %v1117
    %v1125 = vsub.f32 %v1107, %v1120
    %v1126 = vsub.f32 %v1112, %v1123
    %v1127 = vmul.f32 %v1124, 1.442695
    %v1128 = vpow.pop %v1127
    %v1129 = vmul.f32 %v1125, 1.442695
    %v1130 = vpow.pop %v1129
    %v1131 = vmul.f32 %v1126, 1.442695
    %v1132 = vpow.pop %v1131
    %v1133 = vsel %vm640, %v1128, 0.0
    %1134 = vadd.xlane.f32.xlu0 %v1133
    %v1135 = vpop.xlane.xlu0 %1134
    %v1136 = vsel %vm640, %v1130, 0.0
    %1137 = vadd.xlane.f32.xlu0 %v1136
    %v1138 = vpop.xlane.xlu0 %1137
    %v1139 = vsel %vm647, %v1132, 0.0
    %1140 = vadd.xlane.f32.xlu0 %v1139
    %v1141 = vpop.xlane.xlu0 %1140
    %v1142 = vrcp.pop %v1135
    %v1143 = vrcp.pop %v1138
    %v1144 = vrcp.pop %v1141
    %v1145 = vmul.f32 %v1128, %v1142
    %v1146 = vmul.f32 %v1130, %v1143
    %v1147 = vmul.f32 %v1132, %v1144
    %1148 = vrot.lane.b32.xlu0 %v510, 48
    %v1149 = vpop.permute.xlu0 %1148
    %1150 = vrot.lane.b32.xlu0 %v515, 48
    %v1151 = vpop.permute.xlu0 %1150
    %1152 = vrot.lane.b32.xlu0 %v520, 48
    %v1153 = vpop.permute.xlu0 %1152
    %v1157 = vsel %vm640, %v1145, 0
    %v1160 = vsel %vm640, %v1146, 0
    %v1163 = vsel %vm640, %v1147, 0
    %v1165 = vsel %vm692, %v1153, 0
    %1167 = vmatprep.subr.mxu0 0.0
    %1168 = vmatpush1.msra.mxu0 0.0
    %1169 = vmatprep.subr.mxu0 0.0
    %1170 = vmatpush1.msra.mxu0 0.0
    %1171 = vmatprep.subr.mxu0 0.0
    %1172 = vmatpush1.msra.mxu0 0.0
    %1173 = vmatprep.subr.mxu0 0.0
    %1174 = vmatpush1.msra.mxu0 0.0
    %1175 = vmatprep.subr.mxu0 0.0
    %1176 = vmatpush1.msra.mxu0 0.0
    %1177 = vmatprep.subr.mxu0 0.0
    %1178 = vmatpush1.msra.mxu0 0.0
    %1179 = vmatprep.subr.mxu0 0.0
    %1180 = vmatpush1.msra.mxu0 0.0
    %1181 = vmatprep.subr.mxu0 0.0
    %1182 = vmatpush1.msra.mxu0 0.0
    %1183 = vmatprep.subr.mxu0 0.0
    %1184 = vmatpush1.msra.mxu0 0.0
    %1185 = vmatprep.subr.mxu0 0.0
    %1186 = vmatpush1.msra.mxu0 0.0
    %1187 = vmatprep.subr.mxu0 0.0
    %1188 = vmatpush1.msra.mxu0 0.0
    %1189 = vmatprep.subr.mxu0 0.0
    %1190 = vmatpush1.msra.mxu0 0.0
    %1191 = vmatprep.subr.mxu0 0.0
    %1192 = vmatpush1.msra.mxu0 0.0
    %1193 = vmatprep.subr.mxu0 0.0
    %1194 = vmatpush1.msra.mxu0 %v1165
    %1195 = vmatprep.subr.mxu0 0.0
    %1196 = vmatpush1.msra.mxu0 %v1151
    %1197 = vmatprep.subr.mxu0 0.0
    %1198 = vmatpush1.msra.mxu0 %v1149
    %1199 = vmatprep.subr.mxu0 0.0
    %1200 = vmatpush2.msra.mxu0 0.0
    %1201 = vmatprep.subr.mxu0 0.0
    %1202 = vmatpush2.msra.mxu0 0.0
    %1203 = vmatprep.subr.mxu0 0.0
    %1204 = vmatpush2.msra.mxu0 0.0
    %1205 = vmatprep.subr.mxu0 0.0
    %1206 = vmatpush2.msra.mxu0 0.0
    %1207 = vmatprep.subr.mxu0 0.0
    %1208 = vmatpush2.msra.mxu0 0.0
    %1209 = vmatprep.subr.mxu0 0.0
    %1210 = vmatpush2.msra.mxu0 0.0
    %1211 = vmatprep.subr.mxu0 0.0
    %1212 = vmatpush2.msra.mxu0 0.0
    %1213 = vmatprep.subr.mxu0 0.0
    %1214 = vmatpush2.msra.mxu0 0.0
    %1215 = vmatprep.subr.mxu0 0.0
    %1216 = vmatpush2.msra.mxu0 0.0
    %1217 = vmatprep.subr.mxu0 0.0
    %1218 = vmatpush2.msra.mxu0 0.0
    %1219 = vmatprep.subr.mxu0 0.0
    %1220 = vmatpush2.msra.mxu0 0.0
    %1221 = vmatprep.subr.mxu0 0.0
    %1222 = vmatpush2.msra.mxu0 0.0
    %1223 = vmatprep.subr.mxu0 0.0
    %1224 = vmatpush2.msra.mxu0 0.0
    %1225 = vmatprep.subr.mxu0 0.0
    %1226 = vmatpush2.msra.mxu0 0.0
    %1227 = vmatprep.subr.mxu0 0.0
    %1228 = vmatpush2.msra.mxu0 0.0
    %1229 = vmatprep.subr.mxu0 0.0
    %1230 = vmatpush2.msra.mxu0 0.0
    %1231 = vmatprep.mubr.f32.mxu0 0.0
    %1232 = vmatmul.mubr.f32.gmra.mxu0 %v1157
    %v1233 = vpop.f32.mrf.mxu0
    %v1234 = vadd.f32 0.0, %v1233
    %v1235 = vpop.f32.mrf.mxu0
    %1236 = vmatprep.mubr.f32.mxu0 0.0
    %1237 = vmatmul.mubr.f32.gmra.mxu0 %v1160
    %v1238 = vpop.f32.mrf.mxu0
    %v1239 = vadd.f32 0.0, %v1238
    %v1240 = vpop.f32.mrf.mxu0
    %1241 = vmatprep.mubr.f32.mxu0 0.0
    %1242 = vmatmul.mubr.f32.gmra.mxu0 %v1163
    %v1243 = vpop.f32.mrf.mxu0
    %v1244 = vadd.f32 0.0, %v1243
    %v1245 = vpop.f32.mrf.mxu0
    %1246 = vdwg.mxu0
    %1247 = vrot.lane.b32.xlu0 %v510, 104
    %v1248 = vpop.permute.xlu0 %1247
    %1249 = vrot.lane.b32.xlu0 %v515, 104
    %v1250 = vpop.permute.xlu0 %1249
    %1251 = vrot.lane.b32.xlu0 %v520, 104
    %v1252 = vpop.permute.xlu0 %1251
    %1253 = vrot.lane.b32.xlu0 %v510, 72
    %v1254 = vpop.permute.xlu0 %1253
    %1255 = vrot.lane.b32.xlu0 %v515, 72
    %v1256 = vpop.permute.xlu0 %1255
    %1257 = vrot.lane.b32.xlu0 %v520, 72
    %v1258 = vpop.permute.xlu0 %1257
    %v1259 = vsel %vm547, %v1248, 0
    %v1261 = vsel %vm547, %v1250, 0
    %v1263 = vsel %vm547, %v1252, 0
    %v1265 = vsel %vm547, %v1254, 0
    %v1267 = vsel %vm547, %v1256, 0
    %v1269 = vsel %vm547, %v1258, 0
    %1271 = vmatprep.subr.mxu0 0.0
    %1272 = vmatpush1.xpose.msra.mxu0 0.0
    %1273 = vmatprep.subr.mxu0 0.0
    %1274 = vmatpush1.xpose.msra.mxu0 0.0
    %1275 = vmatprep.subr.mxu0 0.0
    %1276 = vmatpush1.xpose.msra.mxu0 0.0
    %1277 = vmatprep.subr.mxu0 0.0
    %1278 = vmatpush1.xpose.msra.mxu0 0.0
    %1279 = vmatprep.subr.mxu0 0.0
    %1280 = vmatpush1.xpose.msra.mxu0 0.0
    %1281 = vmatprep.subr.mxu0 0.0
    %1282 = vmatpush1.xpose.msra.mxu0 0.0
    %1283 = vmatprep.subr.mxu0 0.0
    %1284 = vmatpush1.xpose.msra.mxu0 0.0
    %1285 = vmatprep.subr.mxu0 0.0
    %1286 = vmatpush1.xpose.msra.mxu0 0.0
    %1287 = vmatprep.subr.mxu0 0.0
    %1288 = vmatpush1.xpose.msra.mxu0 0.0
    %1289 = vmatprep.subr.mxu0 0.0
    %1290 = vmatpush1.xpose.msra.mxu0 0.0
    %1291 = vmatprep.subr.mxu0 0.0
    %1292 = vmatpush1.xpose.msra.mxu0 0.0
    %1293 = vmatprep.subr.mxu0 0.0
    %1294 = vmatpush1.xpose.msra.mxu0 0.0
    %1295 = vmatprep.subr.mxu0 0.0
    %1296 = vmatpush1.xpose.msra.mxu0 0.0
    %1297 = vmatprep.subr.mxu0 0.0
    %1298 = vmatpush1.xpose.msra.mxu0 %v1269
    %1299 = vmatprep.subr.mxu0 0.0
    %1300 = vmatpush1.xpose.msra.mxu0 %v1267
    %1301 = vmatprep.subr.mxu0 0.0
    %1302 = vmatpush1.xpose.msra.mxu0 %v1265
    %1303 = vmatprep.subr.mxu0 0.0
    %1304 = vmatpush2.xpose.msra.mxu0 0.0
    %1305 = vmatprep.subr.mxu0 0.0
    %1306 = vmatpush2.xpose.msra.mxu0 0.0
    %1307 = vmatprep.subr.mxu0 0.0
    %1308 = vmatpush2.xpose.msra.mxu0 0.0
    %1309 = vmatprep.subr.mxu0 0.0
    %1310 = vmatpush2.xpose.msra.mxu0 0.0
    %1311 = vmatprep.subr.mxu0 0.0
    %1312 = vmatpush2.xpose.msra.mxu0 0.0
    %1313 = vmatprep.subr.mxu0 0.0
    %1314 = vmatpush2.xpose.msra.mxu0 0.0
    %1315 = vmatprep.subr.mxu0 0.0
    %1316 = vmatpush2.xpose.msra.mxu0 0.0
    %1317 = vmatprep.subr.mxu0 0.0
    %1318 = vmatpush2.xpose.msra.mxu0 0.0
    %1319 = vmatprep.subr.mxu0 0.0
    %1320 = vmatpush2.xpose.msra.mxu0 0.0
    %1321 = vmatprep.subr.mxu0 0.0
    %1322 = vmatpush2.xpose.msra.mxu0 0.0
    %1323 = vmatprep.subr.mxu0 0.0
    %1324 = vmatpush2.xpose.msra.mxu0 0.0
    %1325 = vmatprep.subr.mxu0 0.0
    %1326 = vmatpush2.xpose.msra.mxu0 0.0
    %1327 = vmatprep.subr.mxu0 0.0
    %1328 = vmatpush2.xpose.msra.mxu0 0.0
    %1329 = vmatprep.subr.mxu0 0.0
    %1330 = vmatpush2.xpose.msra.mxu0 0.0
    %1331 = vmatprep.subr.mxu0 0.0
    %1332 = vmatpush2.xpose.msra.mxu0 0.0
    %1333 = vmatprep.subr.mxu0 0.0
    %1334 = vmatpush2.xpose.msra.mxu0 0.0
    %1335 = vmatprep.mubr.f32.mxu0 0.0
    %1336 = vmatmul.mubr.f32.gmra.mxu0 %v1259
    %v1337 = vpop.f32.mrf.mxu0
    %v1338 = vadd.f32 0.0, %v1337
    %v1339 = vpop.f32.mrf.mxu0
    %1340 = vmatprep.mubr.f32.mxu0 0.0
    %1341 = vmatmul.mubr.f32.gmra.mxu0 %v1261
    %v1342 = vpop.f32.mrf.mxu0
    %v1343 = vadd.f32 0.0, %v1342
    %v1344 = vpop.f32.mrf.mxu0
    %1345 = vmatprep.mubr.f32.mxu0 0.0
    %1346 = vmatmul.mubr.f32.gmra.mxu0 %v1263
    %v1347 = vpop.f32.mrf.mxu0
    %v1348 = vadd.f32 0.0, %v1347
    %v1349 = vpop.f32.mrf.mxu0
    %1350 = vdwg.mxu0
    %v1351 = vsel %vm640, %v1338, -inf
    %1352 = vmax.xlane.f32.xlu0 %v1351
    %v1353 = vpop.xlane.xlu0 %1352
    %v1354 = vsel %vm640, %v1343, -inf
    %1355 = vmax.xlane.f32.xlu0 %v1354
    %v1356 = vpop.xlane.xlu0 %1355
    %v1357 = vsel %vm647, %v1348, -inf
    %1358 = vmax.xlane.f32.xlu0 %v1357
    %v1359 = vpop.xlane.xlu0 %1358
    %v1360 = vsub.f32 %v1338, %v1353
    %v1361 = vsub.f32 %v1343, %v1356
    %v1362 = vsub.f32 %v1348, %v1359
    %v1363 = vmul.f32 %v1360, 1.442695
    %v1364 = vpow.pop %v1363
    %v1365 = vmul.f32 %v1361, 1.442695
    %v1366 = vpow.pop %v1365
    %v1367 = vmul.f32 %v1362, 1.442695
    %v1368 = vpow.pop %v1367
    %v1369 = vsel %vm640, %v1364, 0.0
    %1370 = vadd.xlane.f32.xlu0 %v1369
    %v1371 = vpop.xlane.xlu0 %1370
    %v1372 = vsel %vm640, %v1366, 0.0
    %1373 = vadd.xlane.f32.xlu0 %v1372
    %v1374 = vpop.xlane.xlu0 %1373
    %v1375 = vsel %vm647, %v1368, 0.0
    %1376 = vadd.xlane.f32.xlu0 %v1375
    %v1377 = vpop.xlane.xlu0 %1376
    %v1378 = vrcp.pop %v1371
    %v1379 = vrcp.pop %v1374
    %v1380 = vrcp.pop %v1377
    %v1381 = vmul.f32 %v1364, %v1378
    %v1382 = vmul.f32 %v1366, %v1379
    %v1383 = vmul.f32 %v1368, %v1380
    %1384 = vrot.lane.b32.xlu0 %v510, 40
    %v1385 = vpop.permute.xlu0 %1384
    %1386 = vrot.lane.b32.xlu0 %v515, 40
    %v1387 = vpop.permute.xlu0 %1386
    %1388 = vrot.lane.b32.xlu0 %v520, 40
    %v1389 = vpop.permute.xlu0 %1388
    %v1393 = vsel %vm640, %v1381, 0
    %v1396 = vsel %vm640, %v1382, 0
    %v1399 = vsel %vm640, %v1383, 0
    %v1401 = vsel %vm692, %v1389, 0
    %1403 = vmatprep.subr.mxu0 0.0
    %1404 = vmatpush1.msra.mxu0 0.0
    %1405 = vmatprep.subr.mxu0 0.0
    %1406 = vmatpush1.msra.mxu0 0.0
    %1407 = vmatprep.subr.mxu0 0.0
    %1408 = vmatpush1.msra.mxu0 0.0
    %1409 = vmatprep.subr.mxu0 0.0
    %1410 = vmatpush1.msra.mxu0 0.0
    %1411 = vmatprep.subr.mxu0 0.0
    %1412 = vmatpush1.msra.mxu0 0.0
    %1413 = vmatprep.subr.mxu0 0.0
    %1414 = vmatpush1.msra.mxu0 0.0
    %1415 = vmatprep.subr.mxu0 0.0
    %1416 = vmatpush1.msra.mxu0 0.0
    %1417 = vmatprep.subr.mxu0 0.0
    %1418 = vmatpush1.msra.mxu0 0.0
    %1419 = vmatprep.subr.mxu0 0.0
    %1420 = vmatpush1.msra.mxu0 0.0
    %1421 = vmatprep.subr.mxu0 0.0
    %1422 = vmatpush1.msra.mxu0 0.0
    %1423 = vmatprep.subr.mxu0 0.0
    %1424 = vmatpush1.msra.mxu0 0.0
    %1425 = vmatprep.subr.mxu0 0.0
    %1426 = vmatpush1.msra.mxu0 0.0
    %1427 = vmatprep.subr.mxu0 0.0
    %1428 = vmatpush1.msra.mxu0 0.0
    %1429 = vmatprep.subr.mxu0 0.0
    %1430 = vmatpush1.msra.mxu0 %v1401
    %1431 = vmatprep.subr.mxu0 0.0
    %1432 = vmatpush1.msra.mxu0 %v1387
    %1433 = vmatprep.subr.mxu0 0.0
    %1434 = vmatpush1.msra.mxu0 %v1385
    %1435 = vmatprep.subr.mxu0 0.0
    %1436 = vmatpush2.msra.mxu0 0.0
    %1437 = vmatprep.subr.mxu0 0.0
    %1438 = vmatpush2.msra.mxu0 0.0
    %1439 = vmatprep.subr.mxu0 0.0
    %1440 = vmatpush2.msra.mxu0 0.0
    %1441 = vmatprep.subr.mxu0 0.0
    %1442 = vmatpush2.msra.mxu0 0.0
    %1443 = vmatprep.subr.mxu0 0.0
    %1444 = vmatpush2.msra.mxu0 0.0
    %1445 = vmatprep.subr.mxu0 0.0
    %1446 = vmatpush2.msra.mxu0 0.0
    %1447 = vmatprep.subr.mxu0 0.0
    %1448 = vmatpush2.msra.mxu0 0.0
    %1449 = vmatprep.subr.mxu0 0.0
    %1450 = vmatpush2.msra.mxu0 0.0
    %1451 = vmatprep.subr.mxu0 0.0
    %1452 = vmatpush2.msra.mxu0 0.0
    %1453 = vmatprep.subr.mxu0 0.0
    %1454 = vmatpush2.msra.mxu0 0.0
    %1455 = vmatprep.subr.mxu0 0.0
    %1456 = vmatpush2.msra.mxu0 0.0
    %1457 = vmatprep.subr.mxu0 0.0
    %1458 = vmatpush2.msra.mxu0 0.0
    %1459 = vmatprep.subr.mxu0 0.0
    %1460 = vmatpush2.msra.mxu0 0.0
    %1461 = vmatprep.subr.mxu0 0.0
    %1462 = vmatpush2.msra.mxu0 0.0
    %1463 = vmatprep.subr.mxu0 0.0
    %1464 = vmatpush2.msra.mxu0 0.0
    %1465 = vmatprep.subr.mxu0 0.0
    %1466 = vmatpush2.msra.mxu0 0.0
    %1467 = vmatprep.mubr.f32.mxu0 0.0
    %1468 = vmatmul.mubr.f32.gmra.mxu0 %v1393
    %v1469 = vpop.f32.mrf.mxu0
    %v1470 = vadd.f32 0.0, %v1469
    %v1471 = vpop.f32.mrf.mxu0
    %1472 = vmatprep.mubr.f32.mxu0 0.0
    %1473 = vmatmul.mubr.f32.gmra.mxu0 %v1396
    %v1474 = vpop.f32.mrf.mxu0
    %v1475 = vadd.f32 0.0, %v1474
    %v1476 = vpop.f32.mrf.mxu0
    %1477 = vmatprep.mubr.f32.mxu0 0.0
    %1478 = vmatmul.mubr.f32.gmra.mxu0 %v1399
    %v1479 = vpop.f32.mrf.mxu0
    %v1480 = vadd.f32 0.0, %v1479
    %v1481 = vpop.f32.mrf.mxu0
    %1482 = vdwg.mxu0
    %1486 = vrot.lane.b32.xlu0 %v998, 8
    %v1487 = vpop.permute.xlu0 %1486
    %1488 = vrot.lane.b32.xlu0 %v1003, 8
    %v1489 = vpop.permute.xlu0 %1488
    %1490 = vrot.lane.b32.xlu0 %v1008, 8
    %v1491 = vpop.permute.xlu0 %1490
    %1498 = vrot.lane.b32.xlu0 %v1234, 16
    %v1499 = vpop.permute.xlu0 %1498
    %1500 = vrot.lane.b32.xlu0 %v1239, 16
    %v1501 = vpop.permute.xlu0 %1500
    %1502 = vrot.lane.b32.xlu0 %v1244, 16
    %v1503 = vpop.permute.xlu0 %1502
    %1510 = vrot.lane.b32.xlu0 %v1470, 24
    %v1511 = vpop.permute.xlu0 %1510
    %1512 = vrot.lane.b32.xlu0 %v1475, 24
    %v1513 = vpop.permute.xlu0 %1512
    %1514 = vrot.lane.b32.xlu0 %v1480, 24
    %v1515 = vpop.permute.xlu0 %1514
    %v1519 = vsel %vm547, %v762, %v1487
    %v1520 = vsel %vm547, %v767, %v1489
    %v1521 = vsel %vm547, %v772, %v1491
    %vm1522 = vcmask 130048
    %v1523 = vsel %vm1522, %v1519, %v1499
    %v1524 = vsel %vm1522, %v1520, %v1501
    %v1525 = vsel %vm1522, %v1521, %v1503
    %vm1526 = vcmask 195584
    %v1527 = vsel %vm1526, %v1523, %v1511
    %v1528 = vsel %vm1526, %v1524, %v1513
    %v1529 = vsel %vm1526, %v1525, %v1515
    %1530 = vst.msk [vmem:[#allocation2] sm:$0xff] %vm200, %v1527
    %1531 = vst.msk [vmem:[#allocation2 + $0x8] sm:$0xff] %vm200, %v1528
    %vm1532 = vcmask 253952
    %1533 = vst.msk [vmem:[#allocation2 + $0x10] sm:$0x1] %vm1532, %v1529
    %1537 = vrot.lane.b32.xlu0 %v525, 96
    %v1538 = vpop.permute.xlu0 %1537
    %1539 = vrot.lane.b32.xlu0 %v530, 96
    %v1540 = vpop.permute.xlu0 %1539
    %1541 = vrot.lane.b32.xlu0 %v535, 96
    %v1542 = vpop.permute.xlu0 %1541
    %v1543 = vsel %vm547, %v525, 0
    %v1545 = vsel %vm547, %v530, 0
    %v1547 = vsel %vm547, %v535, 0
    %v1549 = vsel %vm547, %v1538, 0
    %v1551 = vsel %vm547, %v1540, 0
    %v1553 = vsel %vm547, %v1542, 0
    %1555 = vmatprep.subr.mxu0 0.0
    %1556 = vmatpush1.xpose.msra.mxu0 0.0
    %1557 = vmatprep.subr.mxu0 0.0
    %1558 = vmatpush1.xpose.msra.mxu0 0.0
    %1559 = vmatprep.subr.mxu0 0.0
    %1560 = vmatpush1.xpose.msra.mxu0 0.0
    %1561 = vmatprep.subr.mxu0 0.0
    %1562 = vmatpush1.xpose.msra.mxu0 0.0
    %1563 = vmatprep.subr.mxu0 0.0
    %1564 = vmatpush1.xpose.msra.mxu0 0.0
    %1565 = vmatprep.subr.mxu0 0.0
    %1566 = vmatpush1.xpose.msra.mxu0 0.0
    %1567 = vmatprep.subr.mxu0 0.0
    %1568 = vmatpush1.xpose.msra.mxu0 0.0
    %1569 = vmatprep.subr.mxu0 0.0
    %1570 = vmatpush1.xpose.msra.mxu0 0.0
    %1571 = vmatprep.subr.mxu0 0.0
    %1572 = vmatpush1.xpose.msra.mxu0 0.0
    %1573 = vmatprep.subr.mxu0 0.0
    %1574 = vmatpush1.xpose.msra.mxu0 0.0
    %1575 = vmatprep.subr.mxu0 0.0
    %1576 = vmatpush1.xpose.msra.mxu0 0.0
    %1577 = vmatprep.subr.mxu0 0.0
    %1578 = vmatpush1.xpose.msra.mxu0 0.0
    %1579 = vmatprep.subr.mxu0 0.0
    %1580 = vmatpush1.xpose.msra.mxu0 0.0
    %1581 = vmatprep.subr.mxu0 0.0
    %1582 = vmatpush1.xpose.msra.mxu0 %v1553
    %1583 = vmatprep.subr.mxu0 0.0
    %1584 = vmatpush1.xpose.msra.mxu0 %v1551
    %1585 = vmatprep.subr.mxu0 0.0
    %1586 = vmatpush1.xpose.msra.mxu0 %v1549
    %1587 = vmatprep.subr.mxu0 0.0
    %1588 = vmatpush2.xpose.msra.mxu0 0.0
    %1589 = vmatprep.subr.mxu0 0.0
    %1590 = vmatpush2.xpose.msra.mxu0 0.0
    %1591 = vmatprep.subr.mxu0 0.0
    %1592 = vmatpush2.xpose.msra.mxu0 0.0
    %1593 = vmatprep.subr.mxu0 0.0
    %1594 = vmatpush2.xpose.msra.mxu0 0.0
    %1595 = vmatprep.subr.mxu0 0.0
    %1596 = vmatpush2.xpose.msra.mxu0 0.0
    %1597 = vmatprep.subr.mxu0 0.0
    %1598 = vmatpush2.xpose.msra.mxu0 0.0
    %1599 = vmatprep.subr.mxu0 0.0
    %1600 = vmatpush2.xpose.msra.mxu0 0.0
    %1601 = vmatprep.subr.mxu0 0.0
    %1602 = vmatpush2.xpose.msra.mxu0 0.0
    %1603 = vmatprep.subr.mxu0 0.0
    %1604 = vmatpush2.xpose.msra.mxu0 0.0
    %1605 = vmatprep.subr.mxu0 0.0
    %1606 = vmatpush2.xpose.msra.mxu0 0.0
    %1607 = vmatprep.subr.mxu0 0.0
    %1608 = vmatpush2.xpose.msra.mxu0 0.0
    %1609 = vmatprep.subr.mxu0 0.0
    %1610 = vmatpush2.xpose.msra.mxu0 0.0
    %1611 = vmatprep.subr.mxu0 0.0
    %1612 = vmatpush2.xpose.msra.mxu0 0.0
    %1613 = vmatprep.subr.mxu0 0.0
    %1614 = vmatpush2.xpose.msra.mxu0 0.0
    %1615 = vmatprep.subr.mxu0 0.0
    %1616 = vmatpush2.xpose.msra.mxu0 0.0
    %1617 = vmatprep.subr.mxu0 0.0
    %1618 = vmatpush2.xpose.msra.mxu0 0.0
    %1619 = vmatprep.mubr.f32.mxu0 0.0
    %1620 = vmatmul.mubr.f32.gmra.mxu0 %v1543
    %v1621 = vpop.f32.mrf.mxu0
    %v1622 = vadd.f32 0.0, %v1621
    %v1623 = vpop.f32.mrf.mxu0
    %1624 = vmatprep.mubr.f32.mxu0 0.0
    %1625 = vmatmul.mubr.f32.gmra.mxu0 %v1545
    %v1626 = vpop.f32.mrf.mxu0
    %v1627 = vadd.f32 0.0, %v1626
    %v1628 = vpop.f32.mrf.mxu0
    %1629 = vmatprep.mubr.f32.mxu0 0.0
    %1630 = vmatmul.mubr.f32.gmra.mxu0 %v1547
    %v1631 = vpop.f32.mrf.mxu0
    %v1632 = vadd.f32 0.0, %v1631
    %v1633 = vpop.f32.mrf.mxu0
    %1634 = vdwg.mxu0
    %v1635 = vsel %vm640, %v1622, -inf
    %1636 = vmax.xlane.f32.xlu0 %v1635
    %v1637 = vpop.xlane.xlu0 %1636
    %v1638 = vsel %vm640, %v1627, -inf
    %1639 = vmax.xlane.f32.xlu0 %v1638
    %v1640 = vpop.xlane.xlu0 %1639
    %v1641 = vsel %vm647, %v1632, -inf
    %1642 = vmax.xlane.f32.xlu0 %v1641
    %v1643 = vpop.xlane.xlu0 %1642
    %v1644 = vsub.f32 %v1622, %v1637
    %v1645 = vsub.f32 %v1627, %v1640
    %v1646 = vsub.f32 %v1632, %v1643
    %v1647 = vmul.f32 %v1644, 1.442695
    %v1648 = vpow.pop %v1647
    %v1649 = vmul.f32 %v1645, 1.442695
    %v1650 = vpow.pop %v1649
    %v1651 = vmul.f32 %v1646, 1.442695
    %v1652 = vpow.pop %v1651
    %v1653 = vsel %vm640, %v1648, 0.0
    %1654 = vadd.xlane.f32.xlu0 %v1653
    %v1655 = vpop.xlane.xlu0 %1654
    %v1656 = vsel %vm640, %v1650, 0.0
    %1657 = vadd.xlane.f32.xlu0 %v1656
    %v1658 = vpop.xlane.xlu0 %1657
    %v1659 = vsel %vm647, %v1652, 0.0
    %1660 = vadd.xlane.f32.xlu0 %v1659
    %v1661 = vpop.xlane.xlu0 %1660
    %v1662 = vrcp.pop %v1655
    %v1663 = vrcp.pop %v1658
    %v1664 = vrcp.pop %v1661
    %v1665 = vmul.f32 %v1648, %v1662
    %v1666 = vmul.f32 %v1650, %v1663
    %v1667 = vmul.f32 %v1652, %v1664
    %1668 = vrot.lane.b32.xlu0 %v525, 64
    %v1669 = vpop.permute.xlu0 %1668
    %1670 = vrot.lane.b32.xlu0 %v530, 64
    %v1671 = vpop.permute.xlu0 %1670
    %1672 = vrot.lane.b32.xlu0 %v535, 64
    %v1673 = vpop.permute.xlu0 %1672
    %v1677 = vsel %vm640, %v1665, 0
    %v1680 = vsel %vm640, %v1666, 0
    %v1683 = vsel %vm640, %v1667, 0
    %v1685 = vsel %vm692, %v1673, 0
    %1687 = vmatprep.subr.mxu0 0.0
    %1688 = vmatpush1.msra.mxu0 0.0
    %1689 = vmatprep.subr.mxu0 0.0
    %1690 = vmatpush1.msra.mxu0 0.0
    %1691 = vmatprep.subr.mxu0 0.0
    %1692 = vmatpush1.msra.mxu0 0.0
    %1693 = vmatprep.subr.mxu0 0.0
    %1694 = vmatpush1.msra.mxu0 0.0
    %1695 = vmatprep.subr.mxu0 0.0
    %1696 = vmatpush1.msra.mxu0 0.0
    %1697 = vmatprep.subr.mxu0 0.0
    %1698 = vmatpush1.msra.mxu0 0.0
    %1699 = vmatprep.subr.mxu0 0.0
    %1700 = vmatpush1.msra.mxu0 0.0
    %1701 = vmatprep.subr.mxu0 0.0
    %1702 = vmatpush1.msra.mxu0 0.0
    %1703 = vmatprep.subr.mxu0 0.0
    %1704 = vmatpush1.msra.mxu0 0.0
    %1705 = vmatprep.subr.mxu0 0.0
    %1706 = vmatpush1.msra.mxu0 0.0
    %1707 = vmatprep.subr.mxu0 0.0
    %1708 = vmatpush1.msra.mxu0 0.0
    %1709 = vmatprep.subr.mxu0 0.0
    %1710 = vmatpush1.msra.mxu0 0.0
    %1711 = vmatprep.subr.mxu0 0.0
    %1712 = vmatpush1.msra.mxu0 0.0
    %1713 = vmatprep.subr.mxu0 0.0
    %1714 = vmatpush1.msra.mxu0 %v1685
    %1715 = vmatprep.subr.mxu0 0.0
    %1716 = vmatpush1.msra.mxu0 %v1671
    %1717 = vmatprep.subr.mxu0 0.0
    %1718 = vmatpush1.msra.mxu0 %v1669
    %1719 = vmatprep.subr.mxu0 0.0
    %1720 = vmatpush2.msra.mxu0 0.0
    %1721 = vmatprep.subr.mxu0 0.0
    %1722 = vmatpush2.msra.mxu0 0.0
    %1723 = vmatprep.subr.mxu0 0.0
    %1724 = vmatpush2.msra.mxu0 0.0
    %1725 = vmatprep.subr.mxu0 0.0
    %1726 = vmatpush2.msra.mxu0 0.0
    %1727 = vmatprep.subr.mxu0 0.0
    %1728 = vmatpush2.msra.mxu0 0.0
    %1729 = vmatprep.subr.mxu0 0.0
    %1730 = vmatpush2.msra.mxu0 0.0
    %1731 = vmatprep.subr.mxu0 0.0
    %1732 = vmatpush2.msra.mxu0 0.0
    %1733 = vmatprep.subr.mxu0 0.0
    %1734 = vmatpush2.msra.mxu0 0.0
    %1735 = vmatprep.subr.mxu0 0.0
    %1736 = vmatpush2.msra.mxu0 0.0
    %1737 = vmatprep.subr.mxu0 0.0
    %1738 = vmatpush2.msra.mxu0 0.0
    %1739 = vmatprep.subr.mxu0 0.0
    %1740 = vmatpush2.msra.mxu0 0.0
    %1741 = vmatprep.subr.mxu0 0.0
    %1742 = vmatpush2.msra.mxu0 0.0
    %1743 = vmatprep.subr.mxu0 0.0
    %1744 = vmatpush2.msra.mxu0 0.0
    %1745 = vmatprep.subr.mxu0 0.0
    %1746 = vmatpush2.msra.mxu0 0.0
    %1747 = vmatprep.subr.mxu0 0.0
    %1748 = vmatpush2.msra.mxu0 0.0
    %1749 = vmatprep.subr.mxu0 0.0
    %1750 = vmatpush2.msra.mxu0 0.0
    %1751 = vmatprep.mubr.f32.mxu0 0.0
    %1752 = vmatmul.mubr.f32.gmra.mxu0 %v1677
    %v1753 = vpop.f32.mrf.mxu0
    %v1754 = vadd.f32 0.0, %v1753
    %v1755 = vpop.f32.mrf.mxu0
    %1756 = vmatprep.mubr.f32.mxu0 0.0
    %1757 = vmatmul.mubr.f32.gmra.mxu0 %v1680
    %v1758 = vpop.f32.mrf.mxu0
    %v1759 = vadd.f32 0.0, %v1758
    %v1760 = vpop.f32.mrf.mxu0
    %1761 = vmatprep.mubr.f32.mxu0 0.0
    %1762 = vmatmul.mubr.f32.gmra.mxu0 %v1683
    %v1763 = vpop.f32.mrf.mxu0
    %v1764 = vadd.f32 0.0, %v1763
    %v1765 = vpop.f32.mrf.mxu0
    %1766 = vdwg.mxu0
    %1767 = vrot.lane.b32.xlu0 %v525, 120
    %v1768 = vpop.permute.xlu0 %1767
    %1769 = vrot.lane.b32.xlu0 %v530, 120
    %v1770 = vpop.permute.xlu0 %1769
    %1771 = vrot.lane.b32.xlu0 %v535, 120
    %v1772 = vpop.permute.xlu0 %1771
    %1773 = vrot.lane.b32.xlu0 %v525, 88
    %v1774 = vpop.permute.xlu0 %1773
    %1775 = vrot.lane.b32.xlu0 %v530, 88
    %v1776 = vpop.permute.xlu0 %1775
    %1777 = vrot.lane.b32.xlu0 %v535, 88
    %v1778 = vpop.permute.xlu0 %1777
    %v1779 = vsel %vm547, %v1768, 0
    %v1781 = vsel %vm547, %v1770, 0
    %v1783 = vsel %vm547, %v1772, 0
    %v1785 = vsel %vm547, %v1774, 0
    %v1787 = vsel %vm547, %v1776, 0
    %v1789 = vsel %vm547, %v1778, 0
    %1791 = vmatprep.subr.mxu0 0.0
    %1792 = vmatpush1.xpose.msra.mxu0 0.0
    %1793 = vmatprep.subr.mxu0 0.0
    %1794 = vmatpush1.xpose.msra.mxu0 0.0
    %1795 = vmatprep.subr.mxu0 0.0
    %1796 = vmatpush1.xpose.msra.mxu0 0.0
    %1797 = vmatprep.subr.mxu0 0.0
    %1798 = vmatpush1.xpose.msra.mxu0 0.0
    %1799 = vmatprep.subr.mxu0 0.0
    %1800 = vmatpush1.xpose.msra.mxu0 0.0
    %1801 = vmatprep.subr.mxu0 0.0
    %1802 = vmatpush1.xpose.msra.mxu0 0.0
    %1803 = vmatprep.subr.mxu0 0.0
    %1804 = vmatpush1.xpose.msra.mxu0 0.0
    %1805 = vmatprep.subr.mxu0 0.0
    %1806 = vmatpush1.xpose.msra.mxu0 0.0
    %1807 = vmatprep.subr.mxu0 0.0
    %1808 = vmatpush1.xpose.msra.mxu0 0.0
    %1809 = vmatprep.subr.mxu0 0.0
    %1810 = vmatpush1.xpose.msra.mxu0 0.0
    %1811 = vmatprep.subr.mxu0 0.0
    %1812 = vmatpush1.xpose.msra.mxu0 0.0
    %1813 = vmatprep.subr.mxu0 0.0
    %1814 = vmatpush1.xpose.msra.mxu0 0.0
    %1815 = vmatprep.subr.mxu0 0.0
    %1816 = vmatpush1.xpose.msra.mxu0 0.0
    %1817 = vmatprep.subr.mxu0 0.0
    %1818 = vmatpush1.xpose.msra.mxu0 %v1789
    %1819 = vmatprep.subr.mxu0 0.0
    %1820 = vmatpush1.xpose.msra.mxu0 %v1787
    %1821 = vmatprep.subr.mxu0 0.0
    %1822 = vmatpush1.xpose.msra.mxu0 %v1785
    %1823 = vmatprep.subr.mxu0 0.0
    %1824 = vmatpush2.xpose.msra.mxu0 0.0
    %1825 = vmatprep.subr.mxu0 0.0
    %1826 = vmatpush2.xpose.msra.mxu0 0.0
    %1827 = vmatprep.subr.mxu0 0.0
    %1828 = vmatpush2.xpose.msra.mxu0 0.0
    %1829 = vmatprep.subr.mxu0 0.0
    %1830 = vmatpush2.xpose.msra.mxu0 0.0
    %1831 = vmatprep.subr.mxu0 0.0
    %1832 = vmatpush2.xpose.msra.mxu0 0.0
    %1833 = vmatprep.subr.mxu0 0.0
    %1834 = vmatpush2.xpose.msra.mxu0 0.0
    %1835 = vmatprep.subr.mxu0 0.0
    %1836 = vmatpush2.xpose.msra.mxu0 0.0
    %1837 = vmatprep.subr.mxu0 0.0
    %1838 = vmatpush2.xpose.msra.mxu0 0.0
    %1839 = vmatprep.subr.mxu0 0.0
    %1840 = vmatpush2.xpose.msra.mxu0 0.0
    %1841 = vmatprep.subr.mxu0 0.0
    %1842 = vmatpush2.xpose.msra.mxu0 0.0
    %1843 = vmatprep.subr.mxu0 0.0
    %1844 = vmatpush2.xpose.msra.mxu0 0.0
    %1845 = vmatprep.subr.mxu0 0.0
    %1846 = vmatpush2.xpose.msra.mxu0 0.0
    %1847 = vmatprep.subr.mxu0 0.0
    %1848 = vmatpush2.xpose.msra.mxu0 0.0
    %1849 = vmatprep.subr.mxu0 0.0
    %1850 = vmatpush2.xpose.msra.mxu0 0.0
    %1851 = vmatprep.subr.mxu0 0.0
    %1852 = vmatpush2.xpose.msra.mxu0 0.0
    %1853 = vmatprep.subr.mxu0 0.0
    %1854 = vmatpush2.xpose.msra.mxu0 0.0
    %1855 = vmatprep.mubr.f32.mxu0 0.0
    %1856 = vmatmul.mubr.f32.gmra.mxu0 %v1779
    %v1857 = vpop.f32.mrf.mxu0
    %v1858 = vadd.f32 0.0, %v1857
    %v1859 = vpop.f32.mrf.mxu0
    %1860 = vmatprep.mubr.f32.mxu0 0.0
    %1861 = vmatmul.mubr.f32.gmra.mxu0 %v1781
    %v1862 = vpop.f32.mrf.mxu0
    %v1863 = vadd.f32 0.0, %v1862
    %v1864 = vpop.f32.mrf.mxu0
    %1865 = vmatprep.mubr.f32.mxu0 0.0
    %1866 = vmatmul.mubr.f32.gmra.mxu0 %v1783
    %v1867 = vpop.f32.mrf.mxu0
    %v1868 = vadd.f32 0.0, %v1867
    %v1869 = vpop.f32.mrf.mxu0
    %1870 = vdwg.mxu0
    %v1871 = vsel %vm640, %v1858, -inf
    %1872 = vmax.xlane.f32.xlu0 %v1871
    %v1873 = vpop.xlane.xlu0 %1872
    %v1874 = vsel %vm640, %v1863, -inf
    %1875 = vmax.xlane.f32.xlu0 %v1874
    %v1876 = vpop.xlane.xlu0 %1875
    %v1877 = vsel %vm647, %v1868, -inf
    %1878 = vmax.xlane.f32.xlu0 %v1877
    %v1879 = vpop.xlane.xlu0 %1878
    %v1880 = vsub.f32 %v1858, %v1873
    %v1881 = vsub.f32 %v1863, %v1876
    %v1882 = vsub.f32 %v1868, %v1879
    %v1883 = vmul.f32 %v1880, 1.442695
    %v1884 = vpow.pop %v1883
    %v1885 = vmul.f32 %v1881, 1.442695
    %v1886 = vpow.pop %v1885
    %v1887 = vmul.f32 %v1882, 1.442695
    %v1888 = vpow.pop %v1887
    %v1889 = vsel %vm640, %v1884, 0.0
    %1890 = vadd.xlane.f32.xlu0 %v1889
    %v1891 = vpop.xlane.xlu0 %1890
    %v1892 = vsel %vm640, %v1886, 0.0
    %1893 = vadd.xlane.f32.xlu0 %v1892
    %v1894 = vpop.xlane.xlu0 %1893
    %v1895 = vsel %vm647, %v1888, 0.0
    %1896 = vadd.xlane.f32.xlu0 %v1895
    %v1897 = vpop.xlane.xlu0 %1896
    %v1898 = vrcp.pop %v1891
    %v1899 = vrcp.pop %v1894
    %v1900 = vrcp.pop %v1897
    %v1901 = vmul.f32 %v1884, %v1898
    %v1902 = vmul.f32 %v1886, %v1899
    %v1903 = vmul.f32 %v1888, %v1900
    %1904 = vrot.lane.b32.xlu0 %v525, 56
    %v1905 = vpop.permute.xlu0 %1904
    %1906 = vrot.lane.b32.xlu0 %v530, 56
    %v1907 = vpop.permute.xlu0 %1906
    %1908 = vrot.lane.b32.xlu0 %v535, 56
    %v1909 = vpop.permute.xlu0 %1908
    %v1913 = vsel %vm640, %v1901, 0
    %v1916 = vsel %vm640, %v1902, 0
    %v1919 = vsel %vm640, %v1903, 0
    %v1921 = vsel %vm692, %v1909, 0
    %1923 = vmatprep.subr.mxu0 0.0
    %1924 = vmatpush1.msra.mxu0 0.0
    %1925 = vmatprep.subr.mxu0 0.0
    %1926 = vmatpush1.msra.mxu0 0.0
    %1927 = vmatprep.subr.mxu0 0.0
    %1928 = vmatpush1.msra.mxu0 0.0
    %1929 = vmatprep.subr.mxu0 0.0
    %1930 = vmatpush1.msra.mxu0 0.0
    %1931 = vmatprep.subr.mxu0 0.0
    %1932 = vmatpush1.msra.mxu0 0.0
    %1933 = vmatprep.subr.mxu0 0.0
    %1934 = vmatpush1.msra.mxu0 0.0
    %1935 = vmatprep.subr.mxu0 0.0
    %1936 = vmatpush1.msra.mxu0 0.0
    %1937 = vmatprep.subr.mxu0 0.0
    %1938 = vmatpush1.msra.mxu0 0.0
    %1939 = vmatprep.subr.mxu0 0.0
    %1940 = vmatpush1.msra.mxu0 0.0
    %1941 = vmatprep.subr.mxu0 0.0
    %1942 = vmatpush1.msra.mxu0 0.0
    %1943 = vmatprep.subr.mxu0 0.0
    %1944 = vmatpush1.msra.mxu0 0.0
    %1945 = vmatprep.subr.mxu0 0.0
    %1946 = vmatpush1.msra.mxu0 0.0
    %1947 = vmatprep.subr.mxu0 0.0
    %1948 = vmatpush1.msra.mxu0 0.0
    %1949 = vmatprep.subr.mxu0 0.0
    %1950 = vmatpush1.msra.mxu0 %v1921
    %1951 = vmatprep.subr.mxu0 0.0
    %1952 = vmatpush1.msra.mxu0 %v1907
    %1953 = vmatprep.subr.mxu0 0.0
    %1954 = vmatpush1.msra.mxu0 %v1905
    %1955 = vmatprep.subr.mxu0 0.0
    %1956 = vmatpush2.msra.mxu0 0.0
    %1957 = vmatprep.subr.mxu0 0.0
    %1958 = vmatpush2.msra.mxu0 0.0
    %1959 = vmatprep.subr.mxu0 0.0
    %1960 = vmatpush2.msra.mxu0 0.0
    %1961 = vmatprep.subr.mxu0 0.0
    %1962 = vmatpush2.msra.mxu0 0.0
    %1963 = vmatprep.subr.mxu0 0.0
    %1964 = vmatpush2.msra.mxu0 0.0
    %1965 = vmatprep.subr.mxu0 0.0
    %1966 = vmatpush2.msra.mxu0 0.0
    %1967 = vmatprep.subr.mxu0 0.0
    %1968 = vmatpush2.msra.mxu0 0.0
    %1969 = vmatprep.subr.mxu0 0.0
    %1970 = vmatpush2.msra.mxu0 0.0
    %1971 = vmatprep.subr.mxu0 0.0
    %1972 = vmatpush2.msra.mxu0 0.0
    %1973 = vmatprep.subr.mxu0 0.0
    %1974 = vmatpush2.msra.mxu0 0.0
    %1975 = vmatprep.subr.mxu0 0.0
    %1976 = vmatpush2.msra.mxu0 0.0
    %1977 = vmatprep.subr.mxu0 0.0
    %1978 = vmatpush2.msra.mxu0 0.0
    %1979 = vmatprep.subr.mxu0 0.0
    %1980 = vmatpush2.msra.mxu0 0.0
    %1981 = vmatprep.subr.mxu0 0.0
    %1982 = vmatpush2.msra.mxu0 0.0
    %1983 = vmatprep.subr.mxu0 0.0
    %1984 = vmatpush2.msra.mxu0 0.0
    %1985 = vmatprep.subr.mxu0 0.0
    %1986 = vmatpush2.msra.mxu0 0.0
    %1987 = vmatprep.mubr.f32.mxu0 0.0
    %1988 = vmatmul.mubr.f32.gmra.mxu0 %v1913
    %v1989 = vpop.f32.mrf.mxu0
    %v1990 = vadd.f32 0.0, %v1989
    %v1991 = vpop.f32.mrf.mxu0
    %1992 = vmatprep.mubr.f32.mxu0 0.0
    %1993 = vmatmul.mubr.f32.gmra.mxu0 %v1916
    %v1994 = vpop.f32.mrf.mxu0
    %v1995 = vadd.f32 0.0, %v1994
    %v1996 = vpop.f32.mrf.mxu0
    %1997 = vmatprep.mubr.f32.mxu0 0.0
    %1998 = vmatmul.mubr.f32.gmra.mxu0 %v1919
    %v1999 = vpop.f32.mrf.mxu0
    %v2000 = vadd.f32 0.0, %v1999
    %v2001 = vpop.f32.mrf.mxu0
    %2002 = vdwg.mxu0
    %2003 = vrot.lane.b32.xlu0 %v525, 112
    %v2004 = vpop.permute.xlu0 %2003
    %2005 = vrot.lane.b32.xlu0 %v530, 112
    %v2006 = vpop.permute.xlu0 %2005
    %2007 = vrot.lane.b32.xlu0 %v535, 112
    %v2008 = vpop.permute.xlu0 %2007
    %2009 = vrot.lane.b32.xlu0 %v525, 80
    %v2010 = vpop.permute.xlu0 %2009
    %2011 = vrot.lane.b32.xlu0 %v530, 80
    %v2012 = vpop.permute.xlu0 %2011
    %2013 = vrot.lane.b32.xlu0 %v535, 80
    %v2014 = vpop.permute.xlu0 %2013
    %v2015 = vsel %vm547, %v2004, 0
    %v2017 = vsel %vm547, %v2006, 0
    %v2019 = vsel %vm547, %v2008, 0
    %v2021 = vsel %vm547, %v2010, 0
    %v2023 = vsel %vm547, %v2012, 0
    %v2025 = vsel %vm547, %v2014, 0
    %2027 = vmatprep.subr.mxu0 0.0
    %2028 = vmatpush1.xpose.msra.mxu0 0.0
    %2029 = vmatprep.subr.mxu0 0.0
    %2030 = vmatpush1.xpose.msra.mxu0 0.0
    %2031 = vmatprep.subr.mxu0 0.0
    %2032 = vmatpush1.xpose.msra.mxu0 0.0
    %2033 = vmatprep.subr.mxu0 0.0
    %2034 = vmatpush1.xpose.msra.mxu0 0.0
    %2035 = vmatprep.subr.mxu0 0.0
    %2036 = vmatpush1.xpose.msra.mxu0 0.0
    %2037 = vmatprep.subr.mxu0 0.0
    %2038 = vmatpush1.xpose.msra.mxu0 0.0
    %2039 = vmatprep.subr.mxu0 0.0
    %2040 = vmatpush1.xpose.msra.mxu0 0.0
    %2041 = vmatprep.subr.mxu0 0.0
    %2042 = vmatpush1.xpose.msra.mxu0 0.0
    %2043 = vmatprep.subr.mxu0 0.0
    %2044 = vmatpush1.xpose.msra.mxu0 0.0
    %2045 = vmatprep.subr.mxu0 0.0
    %2046 = vmatpush1.xpose.msra.mxu0 0.0
    %2047 = vmatprep.subr.mxu0 0.0
    %2048 = vmatpush1.xpose.msra.mxu0 0.0
    %2049 = vmatprep.subr.mxu0 0.0
    %2050 = vmatpush1.xpose.msra.mxu0 0.0
    %2051 = vmatprep.subr.mxu0 0.0
    %2052 = vmatpush1.xpose.msra.mxu0 0.0
    %2053 = vmatprep.subr.mxu0 0.0
    %2054 = vmatpush1.xpose.msra.mxu0 %v2025
    %2055 = vmatprep.subr.mxu0 0.0
    %2056 = vmatpush1.xpose.msra.mxu0 %v2023
    %2057 = vmatprep.subr.mxu0 0.0
    %2058 = vmatpush1.xpose.msra.mxu0 %v2021
    %2059 = vmatprep.subr.mxu0 0.0
    %2060 = vmatpush2.xpose.msra.mxu0 0.0
    %2061 = vmatprep.subr.mxu0 0.0
    %2062 = vmatpush2.xpose.msra.mxu0 0.0
    %2063 = vmatprep.subr.mxu0 0.0
    %2064 = vmatpush2.xpose.msra.mxu0 0.0
    %2065 = vmatprep.subr.mxu0 0.0
    %2066 = vmatpush2.xpose.msra.mxu0 0.0
    %2067 = vmatprep.subr.mxu0 0.0
    %2068 = vmatpush2.xpose.msra.mxu0 0.0
    %2069 = vmatprep.subr.mxu0 0.0
    %2070 = vmatpush2.xpose.msra.mxu0 0.0
    %2071 = vmatprep.subr.mxu0 0.0
    %2072 = vmatpush2.xpose.msra.mxu0 0.0
    %2073 = vmatprep.subr.mxu0 0.0
    %2074 = vmatpush2.xpose.msra.mxu0 0.0
    %2075 = vmatprep.subr.mxu0 0.0
    %2076 = vmatpush2.xpose.msra.mxu0 0.0
    %2077 = vmatprep.subr.mxu0 0.0
    %2078 = vmatpush2.xpose.msra.mxu0 0.0
    %2079 = vmatprep.subr.mxu0 0.0
    %2080 = vmatpush2.xpose.msra.mxu0 0.0
    %2081 = vmatprep.subr.mxu0 0.0
    %2082 = vmatpush2.xpose.msra.mxu0 0.0
    %2083 = vmatprep.subr.mxu0 0.0
    %2084 = vmatpush2.xpose.msra.mxu0 0.0
    %2085 = vmatprep.subr.mxu0 0.0
    %2086 = vmatpush2.xpose.msra.mxu0 0.0
    %2087 = vmatprep.subr.mxu0 0.0
    %2088 = vmatpush2.xpose.msra.mxu0 0.0
    %2089 = vmatprep.subr.mxu0 0.0
    %2090 = vmatpush2.xpose.msra.mxu0 0.0
    %2091 = vmatprep.mubr.f32.mxu0 0.0
    %2092 = vmatmul.mubr.f32.gmra.mxu0 %v2015
    %v2093 = vpop.f32.mrf.mxu0
    %v2094 = vadd.f32 0.0, %v2093
    %v2095 = vpop.f32.mrf.mxu0
    %2096 = vmatprep.mubr.f32.mxu0 0.0
    %2097 = vmatmul.mubr.f32.gmra.mxu0 %v2017
    %v2098 = vpop.f32.mrf.mxu0
    %v2099 = vadd.f32 0.0, %v2098
    %v2100 = vpop.f32.mrf.mxu0
    %2101 = vmatprep.mubr.f32.mxu0 0.0
    %2102 = vmatmul.mubr.f32.gmra.mxu0 %v2019
    %v2103 = vpop.f32.mrf.mxu0
    %v2104 = vadd.f32 0.0, %v2103
    %v2105 = vpop.f32.mrf.mxu0
    %2106 = vdwg.mxu0
    %v2107 = vsel %vm640, %v2094, -inf
    %2108 = vmax.xlane.f32.xlu0 %v2107
    %v2109 = vpop.xlane.xlu0 %2108
    %v2110 = vsel %vm640, %v2099, -inf
    %2111 = vmax.xlane.f32.xlu0 %v2110
    %v2112 = vpop.xlane.xlu0 %2111
    %v2113 = vsel %vm647, %v2104, -inf
    %2114 = vmax.xlane.f32.xlu0 %v2113
    %v2115 = vpop.xlane.xlu0 %2114
    %v2116 = vsub.f32 %v2094, %v2109
    %v2117 = vsub.f32 %v2099, %v2112
    %v2118 = vsub.f32 %v2104, %v2115
    %v2119 = vmul.f32 %v2116, 1.442695
    %v2120 = vpow.pop %v2119
    %v2121 = vmul.f32 %v2117, 1.442695
    %v2122 = vpow.pop %v2121
    %v2123 = vmul.f32 %v2118, 1.442695
    %v2124 = vpow.pop %v2123
    %v2125 = vsel %vm640, %v2120, 0.0
    %2126 = vadd.xlane.f32.xlu0 %v2125
    %v2127 = vpop.xlane.xlu0 %2126
    %v2128 = vsel %vm640, %v2122, 0.0
    %2129 = vadd.xlane.f32.xlu0 %v2128
    %v2130 = vpop.xlane.xlu0 %2129
    %v2131 = vsel %vm647, %v2124, 0.0
    %2132 = vadd.xlane.f32.xlu0 %v2131
    %v2133 = vpop.xlane.xlu0 %2132
    %v2134 = vrcp.pop %v2127
    %v2135 = vrcp.pop %v2130
    %v2136 = vrcp.pop %v2133
    %v2137 = vmul.f32 %v2120, %v2134
    %v2138 = vmul.f32 %v2122, %v2135
    %v2139 = vmul.f32 %v2124, %v2136
    %2140 = vrot.lane.b32.xlu0 %v525, 48
    %v2141 = vpop.permute.xlu0 %2140
    %2142 = vrot.lane.b32.xlu0 %v530, 48
    %v2143 = vpop.permute.xlu0 %2142
    %2144 = vrot.lane.b32.xlu0 %v535, 48
    %v2145 = vpop.permute.xlu0 %2144
    %v2149 = vsel %vm640, %v2137, 0
    %v2152 = vsel %vm640, %v2138, 0
    %v2155 = vsel %vm640, %v2139, 0
    %v2157 = vsel %vm692, %v2145, 0
    %2159 = vmatprep.subr.mxu0 0.0
    %2160 = vmatpush1.msra.mxu0 0.0
    %2161 = vmatprep.subr.mxu0 0.0
    %2162 = vmatpush1.msra.mxu0 0.0
    %2163 = vmatprep.subr.mxu0 0.0
    %2164 = vmatpush1.msra.mxu0 0.0
    %2165 = vmatprep.subr.mxu0 0.0
    %2166 = vmatpush1.msra.mxu0 0.0
    %2167 = vmatprep.subr.mxu0 0.0
    %2168 = vmatpush1.msra.mxu0 0.0
    %2169 = vmatprep.subr.mxu0 0.0
    %2170 = vmatpush1.msra.mxu0 0.0
    %2171 = vmatprep.subr.mxu0 0.0
    %2172 = vmatpush1.msra.mxu0 0.0
    %2173 = vmatprep.subr.mxu0 0.0
    %2174 = vmatpush1.msra.mxu0 0.0
    %2175 = vmatprep.subr.mxu0 0.0
    %2176 = vmatpush1.msra.mxu0 0.0
    %2177 = vmatprep.subr.mxu0 0.0
    %2178 = vmatpush1.msra.mxu0 0.0
    %2179 = vmatprep.subr.mxu0 0.0
    %2180 = vmatpush1.msra.mxu0 0.0
    %2181 = vmatprep.subr.mxu0 0.0
    %2182 = vmatpush1.msra.mxu0 0.0
    %2183 = vmatprep.subr.mxu0 0.0
    %2184 = vmatpush1.msra.mxu0 0.0
    %2185 = vmatprep.subr.mxu0 0.0
    %2186 = vmatpush1.msra.mxu0 %v2157
    %2187 = vmatprep.subr.mxu0 0.0
    %2188 = vmatpush1.msra.mxu0 %v2143
    %2189 = vmatprep.subr.mxu0 0.0
    %2190 = vmatpush1.msra.mxu0 %v2141
    %2191 = vmatprep.subr.mxu0 0.0
    %2192 = vmatpush2.msra.mxu0 0.0
    %2193 = vmatprep.subr.mxu0 0.0
    %2194 = vmatpush2.msra.mxu0 0.0
    %2195 = vmatprep.subr.mxu0 0.0
    %2196 = vmatpush2.msra.mxu0 0.0
    %2197 = vmatprep.subr.mxu0 0.0
    %2198 = vmatpush2.msra.mxu0 0.0
    %2199 = vmatprep.subr.mxu0 0.0
    %2200 = vmatpush2.msra.mxu0 0.0
    %2201 = vmatprep.subr.mxu0 0.0
    %2202 = vmatpush2.msra.mxu0 0.0
    %2203 = vmatprep.subr.mxu0 0.0
    %2204 = vmatpush2.msra.mxu0 0.0
    %2205 = vmatprep.subr.mxu0 0.0
    %2206 = vmatpush2.msra.mxu0 0.0
    %2207 = vmatprep.subr.mxu0 0.0
    %2208 = vmatpush2.msra.mxu0 0.0
    %2209 = vmatprep.subr.mxu0 0.0
    %2210 = vmatpush2.msra.mxu0 0.0
    %2211 = vmatprep.subr.mxu0 0.0
    %2212 = vmatpush2.msra.mxu0 0.0
    %2213 = vmatprep.subr.mxu0 0.0
    %2214 = vmatpush2.msra.mxu0 0.0
    %2215 = vmatprep.subr.mxu0 0.0
    %2216 = vmatpush2.msra.mxu0 0.0
    %2217 = vmatprep.subr.mxu0 0.0
    %2218 = vmatpush2.msra.mxu0 0.0
    %2219 = vmatprep.subr.mxu0 0.0
    %2220 = vmatpush2.msra.mxu0 0.0
    %2221 = vmatprep.subr.mxu0 0.0
    %2222 = vmatpush2.msra.mxu0 0.0
    %2223 = vmatprep.mubr.f32.mxu0 0.0
    %2224 = vmatmul.mubr.f32.gmra.mxu0 %v2149
    %v2225 = vpop.f32.mrf.mxu0
    %v2226 = vadd.f32 0.0, %v2225
    %v2227 = vpop.f32.mrf.mxu0
    %2228 = vmatprep.mubr.f32.mxu0 0.0
    %2229 = vmatmul.mubr.f32.gmra.mxu0 %v2152
    %v2230 = vpop.f32.mrf.mxu0
    %v2231 = vadd.f32 0.0, %v2230
    %v2232 = vpop.f32.mrf.mxu0
    %2233 = vmatprep.mubr.f32.mxu0 0.0
    %2234 = vmatmul.mubr.f32.gmra.mxu0 %v2155
    %v2235 = vpop.f32.mrf.mxu0
    %v2236 = vadd.f32 0.0, %v2235
    %v2237 = vpop.f32.mrf.mxu0
    %2238 = vdwg.mxu0
    %2239 = vrot.lane.b32.xlu0 %v525, 104
    %v2240 = vpop.permute.xlu0 %2239
    %2241 = vrot.lane.b32.xlu0 %v530, 104
    %v2242 = vpop.permute.xlu0 %2241
    %2243 = vrot.lane.b32.xlu0 %v535, 104
    %v2244 = vpop.permute.xlu0 %2243
    %2245 = vrot.lane.b32.xlu0 %v525, 72
    %v2246 = vpop.permute.xlu0 %2245
    %2247 = vrot.lane.b32.xlu0 %v530, 72
    %v2248 = vpop.permute.xlu0 %2247
    %2249 = vrot.lane.b32.xlu0 %v535, 72
    %v2250 = vpop.permute.xlu0 %2249
    %v2251 = vsel %vm547, %v2240, 0
    %v2253 = vsel %vm547, %v2242, 0
    %v2255 = vsel %vm547, %v2244, 0
    %v2257 = vsel %vm547, %v2246, 0
    %v2259 = vsel %vm547, %v2248, 0
    %v2261 = vsel %vm547, %v2250, 0
    %2263 = vmatprep.subr.mxu0 0.0
    %2264 = vmatpush1.xpose.msra.mxu0 0.0
    %2265 = vmatprep.subr.mxu0 0.0
    %2266 = vmatpush1.xpose.msra.mxu0 0.0
    %2267 = vmatprep.subr.mxu0 0.0
    %2268 = vmatpush1.xpose.msra.mxu0 0.0
    %2269 = vmatprep.subr.mxu0 0.0
    %2270 = vmatpush1.xpose.msra.mxu0 0.0
    %2271 = vmatprep.subr.mxu0 0.0
    %2272 = vmatpush1.xpose.msra.mxu0 0.0
    %2273 = vmatprep.subr.mxu0 0.0
    %2274 = vmatpush1.xpose.msra.mxu0 0.0
    %2275 = vmatprep.subr.mxu0 0.0
    %2276 = vmatpush1.xpose.msra.mxu0 0.0
    %2277 = vmatprep.subr.mxu0 0.0
    %2278 = vmatpush1.xpose.msra.mxu0 0.0
    %2279 = vmatprep.subr.mxu0 0.0
    %2280 = vmatpush1.xpose.msra.mxu0 0.0
    %2281 = vmatprep.subr.mxu0 0.0
    %2282 = vmatpush1.xpose.msra.mxu0 0.0
    %2283 = vmatprep.subr.mxu0 0.0
    %2284 = vmatpush1.xpose.msra.mxu0 0.0
    %2285 = vmatprep.subr.mxu0 0.0
    %2286 = vmatpush1.xpose.msra.mxu0 0.0
    %2287 = vmatprep.subr.mxu0 0.0
    %2288 = vmatpush1.xpose.msra.mxu0 0.0
    %2289 = vmatprep.subr.mxu0 0.0
    %2290 = vmatpush1.xpose.msra.mxu0 %v2261
    %2291 = vmatprep.subr.mxu0 0.0
    %2292 = vmatpush1.xpose.msra.mxu0 %v2259
    %2293 = vmatprep.subr.mxu0 0.0
    %2294 = vmatpush1.xpose.msra.mxu0 %v2257
    %2295 = vmatprep.subr.mxu0 0.0
    %2296 = vmatpush2.xpose.msra.mxu0 0.0
    %2297 = vmatprep.subr.mxu0 0.0
    %2298 = vmatpush2.xpose.msra.mxu0 0.0
    %2299 = vmatprep.subr.mxu0 0.0
    %2300 = vmatpush2.xpose.msra.mxu0 0.0
    %2301 = vmatprep.subr.mxu0 0.0
    %2302 = vmatpush2.xpose.msra.mxu0 0.0
    %2303 = vmatprep.subr.mxu0 0.0
    %2304 = vmatpush2.xpose.msra.mxu0 0.0
    %2305 = vmatprep.subr.mxu0 0.0
    %2306 = vmatpush2.xpose.msra.mxu0 0.0
    %2307 = vmatprep.subr.mxu0 0.0
    %2308 = vmatpush2.xpose.msra.mxu0 0.0
    %2309 = vmatprep.subr.mxu0 0.0
    %2310 = vmatpush2.xpose.msra.mxu0 0.0
    %2311 = vmatprep.subr.mxu0 0.0
    %2312 = vmatpush2.xpose.msra.mxu0 0.0
    %2313 = vmatprep.subr.mxu0 0.0
    %2314 = vmatpush2.xpose.msra.mxu0 0.0
    %2315 = vmatprep.subr.mxu0 0.0
    %2316 = vmatpush2.xpose.msra.mxu0 0.0
    %2317 = vmatprep.subr.mxu0 0.0
    %2318 = vmatpush2.xpose.msra.mxu0 0.0
    %2319 = vmatprep.subr.mxu0 0.0
    %2320 = vmatpush2.xpose.msra.mxu0 0.0
    %2321 = vmatprep.subr.mxu0 0.0
    %2322 = vmatpush2.xpose.msra.mxu0 0.0
    %2323 = vmatprep.subr.mxu0 0.0
    %2324 = vmatpush2.xpose.msra.mxu0 0.0
    %2325 = vmatprep.subr.mxu0 0.0
    %2326 = vmatpush2.xpose.msra.mxu0 0.0
    %2327 = vmatprep.mubr.f32.mxu0 0.0
    %2328 = vmatmul.mubr.f32.gmra.mxu0 %v2251
    %v2329 = vpop.f32.mrf.mxu0
    %v2330 = vadd.f32 0.0, %v2329
    %v2331 = vpop.f32.mrf.mxu0
    %2332 = vmatprep.mubr.f32.mxu0 0.0
    %2333 = vmatmul.mubr.f32.gmra.mxu0 %v2253
    %v2334 = vpop.f32.mrf.mxu0
    %v2335 = vadd.f32 0.0, %v2334
    %v2336 = vpop.f32.mrf.mxu0
    %2337 = vmatprep.mubr.f32.mxu0 0.0
    %2338 = vmatmul.mubr.f32.gmra.mxu0 %v2255
    %v2339 = vpop.f32.mrf.mxu0
    %v2340 = vadd.f32 0.0, %v2339
    %v2341 = vpop.f32.mrf.mxu0
    %2342 = vdwg.mxu0
    %v2343 = vsel %vm640, %v2330, -inf
    %2344 = vmax.xlane.f32.xlu0 %v2343
    %v2345 = vpop.xlane.xlu0 %2344
    %v2346 = vsel %vm640, %v2335, -inf
    %2347 = vmax.xlane.f32.xlu0 %v2346
    %v2348 = vpop.xlane.xlu0 %2347
    %v2349 = vsel %vm647, %v2340, -inf
    %2350 = vmax.xlane.f32.xlu0 %v2349
    %v2351 = vpop.xlane.xlu0 %2350
    %v2352 = vsub.f32 %v2330, %v2345
    %v2353 = vsub.f32 %v2335, %v2348
    %v2354 = vsub.f32 %v2340, %v2351
    %v2355 = vmul.f32 %v2352, 1.442695
    %v2356 = vpow.pop %v2355
    %v2357 = vmul.f32 %v2353, 1.442695
    %v2358 = vpow.pop %v2357
    %v2359 = vmul.f32 %v2354, 1.442695
    %v2360 = vpow.pop %v2359
    %v2361 = vsel %vm640, %v2356, 0.0
    %2362 = vadd.xlane.f32.xlu0 %v2361
    %v2363 = vpop.xlane.xlu0 %2362
    %v2364 = vsel %vm640, %v2358, 0.0
    %2365 = vadd.xlane.f32.xlu0 %v2364
    %v2366 = vpop.xlane.xlu0 %2365
    %v2367 = vsel %vm647, %v2360, 0.0
    %2368 = vadd.xlane.f32.xlu0 %v2367
    %v2369 = vpop.xlane.xlu0 %2368
    %v2370 = vrcp.pop %v2363
    %v2371 = vrcp.pop %v2366
    %v2372 = vrcp.pop %v2369
    %v2373 = vmul.f32 %v2356, %v2370
    %v2374 = vmul.f32 %v2358, %v2371
    %v2375 = vmul.f32 %v2360, %v2372
    %2376 = vrot.lane.b32.xlu0 %v525, 40
    %v2377 = vpop.permute.xlu0 %2376
    %2378 = vrot.lane.b32.xlu0 %v530, 40
    %v2379 = vpop.permute.xlu0 %2378
    %2380 = vrot.lane.b32.xlu0 %v535, 40
    %v2381 = vpop.permute.xlu0 %2380
    %v2385 = vsel %vm640, %v2373, 0
    %v2388 = vsel %vm640, %v2374, 0
    %v2391 = vsel %vm640, %v2375, 0
    %v2393 = vsel %vm692, %v2381, 0
    %2395 = vmatprep.subr.mxu0 0.0
    %2396 = vmatpush1.msra.mxu0 0.0
    %2397 = vmatprep.subr.mxu0 0.0
    %2398 = vmatpush1.msra.mxu0 0.0
    %2399 = vmatprep.subr.mxu0 0.0
    %2400 = vmatpush1.msra.mxu0 0.0
    %2401 = vmatprep.subr.mxu0 0.0
    %2402 = vmatpush1.msra.mxu0 0.0
    %2403 = vmatprep.subr.mxu0 0.0
    %2404 = vmatpush1.msra.mxu0 0.0
    %2405 = vmatprep.subr.mxu0 0.0
    %2406 = vmatpush1.msra.mxu0 0.0
    %2407 = vmatprep.subr.mxu0 0.0
    %2408 = vmatpush1.msra.mxu0 0.0
    %2409 = vmatprep.subr.mxu0 0.0
    %2410 = vmatpush1.msra.mxu0 0.0
    %2411 = vmatprep.subr.mxu0 0.0
    %2412 = vmatpush1.msra.mxu0 0.0
    %2413 = vmatprep.subr.mxu0 0.0
    %2414 = vmatpush1.msra.mxu0 0.0
    %2415 = vmatprep.subr.mxu0 0.0
    %2416 = vmatpush1.msra.mxu0 0.0
    %2417 = vmatprep.subr.mxu0 0.0
    %2418 = vmatpush1.msra.mxu0 0.0
    %2419 = vmatprep.subr.mxu0 0.0
    %2420 = vmatpush1.msra.mxu0 0.0
    %2421 = vmatprep.subr.mxu0 0.0
    %2422 = vmatpush1.msra.mxu0 %v2393
    %2423 = vmatprep.subr.mxu0 0.0
    %2424 = vmatpush1.msra.mxu0 %v2379
    %2425 = vmatprep.subr.mxu0 0.0
    %2426 = vmatpush1.msra.mxu0 %v2377
    %2427 = vmatprep.subr.mxu0 0.0
    %2428 = vmatpush2.msra.mxu0 0.0
    %2429 = vmatprep.subr.mxu0 0.0
    %2430 = vmatpush2.msra.mxu0 0.0
    %2431 = vmatprep.subr.mxu0 0.0
    %2432 = vmatpush2.msra.mxu0 0.0
    %2433 = vmatprep.subr.mxu0 0.0
    %2434 = vmatpush2.msra.mxu0 0.0
    %2435 = vmatprep.subr.mxu0 0.0
    %2436 = vmatpush2.msra.mxu0 0.0
    %2437 = vmatprep.subr.mxu0 0.0
    %2438 = vmatpush2.msra.mxu0 0.0
    %2439 = vmatprep.subr.mxu0 0.0
    %2440 = vmatpush2.msra.mxu0 0.0
    %2441 = vmatprep.subr.mxu0 0.0
    %2442 = vmatpush2.msra.mxu0 0.0
    %2443 = vmatprep.subr.mxu0 0.0
    %2444 = vmatpush2.msra.mxu0 0.0
    %2445 = vmatprep.subr.mxu0 0.0
    %2446 = vmatpush2.msra.mxu0 0.0
    %2447 = vmatprep.subr.mxu0 0.0
    %2448 = vmatpush2.msra.mxu0 0.0
    %2449 = vmatprep.subr.mxu0 0.0
    %2450 = vmatpush2.msra.mxu0 0.0
    %2451 = vmatprep.subr.mxu0 0.0
    %2452 = vmatpush2.msra.mxu0 0.0
    %2453 = vmatprep.subr.mxu0 0.0
    %2454 = vmatpush2.msra.mxu0 0.0
    %2455 = vmatprep.subr.mxu0 0.0
    %2456 = vmatpush2.msra.mxu0 0.0
    %2457 = vmatprep.subr.mxu0 0.0
    %2458 = vmatpush2.msra.mxu0 0.0
    %2459 = vmatprep.mubr.f32.mxu0 0.0
    %2460 = vmatmul.mubr.f32.gmra.mxu0 %v2385
    %v2461 = vpop.f32.mrf.mxu0
    %v2462 = vadd.f32 0.0, %v2461
    %v2463 = vpop.f32.mrf.mxu0
    %2464 = vmatprep.mubr.f32.mxu0 0.0
    %2465 = vmatmul.mubr.f32.gmra.mxu0 %v2388
    %v2466 = vpop.f32.mrf.mxu0
    %v2467 = vadd.f32 0.0, %v2466
    %v2468 = vpop.f32.mrf.mxu0
    %2469 = vmatprep.mubr.f32.mxu0 0.0
    %2470 = vmatmul.mubr.f32.gmra.mxu0 %v2391
    %v2471 = vpop.f32.mrf.mxu0
    %v2472 = vadd.f32 0.0, %v2471
    %v2473 = vpop.f32.mrf.mxu0
    %2474 = vdwg.mxu0
    %2478 = vrot.lane.b32.xlu0 %v1990, 8
    %v2479 = vpop.permute.xlu0 %2478
    %2480 = vrot.lane.b32.xlu0 %v1995, 8
    %v2481 = vpop.permute.xlu0 %2480
    %2482 = vrot.lane.b32.xlu0 %v2000, 8
    %v2483 = vpop.permute.xlu0 %2482
    %2490 = vrot.lane.b32.xlu0 %v2226, 16
    %v2491 = vpop.permute.xlu0 %2490
    %2492 = vrot.lane.b32.xlu0 %v2231, 16
    %v2493 = vpop.permute.xlu0 %2492
    %2494 = vrot.lane.b32.xlu0 %v2236, 16
    %v2495 = vpop.permute.xlu0 %2494
    %2502 = vrot.lane.b32.xlu0 %v2462, 24
    %v2503 = vpop.permute.xlu0 %2502
    %2504 = vrot.lane.b32.xlu0 %v2467, 24
    %v2505 = vpop.permute.xlu0 %2504
    %2506 = vrot.lane.b32.xlu0 %v2472, 24
    %v2507 = vpop.permute.xlu0 %2506
    %v2511 = vsel %vm547, %v1754, %v2479
    %v2512 = vsel %vm547, %v1759, %v2481
    %v2513 = vsel %vm547, %v1764, %v2483
    %v2514 = vsel %vm1522, %v2511, %v2491
    %v2515 = vsel %vm1522, %v2512, %v2493
    %v2516 = vsel %vm1522, %v2513, %v2495
    %v2517 = vsel %vm1526, %v2514, %v2503
    %v2518 = vsel %vm1526, %v2515, %v2505
    %v2519 = vsel %vm1526, %v2516, %v2507
    %2520 = vst.msk [vmem:[#allocation2 + $0x18] sm:$0xff] %vm200, %v2517
    %2521 = vst.msk [vmem:[#allocation2 + $0x20] sm:$0xff] %vm200, %v2518
    %2522 = vst.msk [vmem:[#allocation2 + $0x28] sm:$0x1] %vm1532, %v2519
    %v2523 = vld [vmem:[#allocation2] sm:$0xff]
    %v2524 = vld [vmem:[#allocation2 + $0x8] sm:$0xff]
    %v2525 = vld [vmem:[#allocation2 + $0x10] sm:$0xff]
    %v2526 = vld [vmem:[#allocation2 + $0x18] sm:$0xff]
    %v2527 = vld [vmem:[#allocation2 + $0x20] sm:$0xff]
    %v2528 = vld [vmem:[#allocation2 + $0x28] sm:$0xff]
    %v2529 = vld [vmem:[%s9] sm:$0xff]
    %v2530 = vld [vmem:[%s9 + $0x8] sm:$0xff]
    %v2531 = vld [vmem:[%s9 + $0x10] sm:$0xff]
    %v2532 = vld [vmem:[%s9 + $0x18] sm:$0xff]
    %v2534 = vsel %vm200, %v2523, 0
    %v2537 = vsel %vm200, %v2524, 0
    %v2540 = vsel %vm200, %v2525, 0
    %v2543 = vsel %vm200, %v2526, 0
    %v2546 = vsel %vm200, %v2527, 0
    %v2549 = vsel %vm200, %v2528, 0
    %2551 = vmatprep.subr.mxu0 0.0
    %2552 = vmatpush1.msra.mxu0 0.0
    %2553 = vmatprep.subr.mxu0 0.0
    %2554 = vmatpush1.msra.mxu0 0.0
    %2555 = vmatprep.subr.mxu0 0.0
    %2556 = vmatpush1.msra.mxu0 0.0
    %2557 = vmatprep.subr.mxu0 0.0
    %2558 = vmatpush1.msra.mxu0 0.0
    %2559 = vmatprep.subr.mxu0 0.0
    %2560 = vmatpush1.msra.mxu0 0.0
    %2561 = vmatprep.subr.mxu0 0.0
    %2562 = vmatpush1.msra.mxu0 0.0
    %2563 = vmatprep.subr.mxu0 0.0
    %2564 = vmatpush1.msra.mxu0 0.0
    %2565 = vmatprep.subr.mxu0 0.0
    %2566 = vmatpush1.msra.mxu0 0.0
    %2567 = vmatprep.subr.mxu0 0.0
    %2568 = vmatpush1.msra.mxu0 0.0
    %2569 = vmatprep.subr.mxu0 0.0
    %2570 = vmatpush1.msra.mxu0 0.0
    %2571 = vmatprep.subr.mxu0 0.0
    %2572 = vmatpush1.msra.mxu0 0.0
    %2573 = vmatprep.subr.mxu0 0.0
    %2574 = vmatpush1.msra.mxu0 0.0
    %2575 = vmatprep.subr.mxu0 0.0
    %2576 = vmatpush1.msra.mxu0 %v2532
    %2577 = vmatprep.subr.mxu0 0.0
    %2578 = vmatpush1.msra.mxu0 %v2531
    %2579 = vmatprep.subr.mxu0 0.0
    %2580 = vmatpush1.msra.mxu0 %v2530
    %2581 = vmatprep.subr.mxu0 0.0
    %2582 = vmatpush1.msra.mxu0 %v2529
    %2583 = vmatprep.subr.mxu0 0.0
    %2584 = vmatpush2.msra.mxu0 0.0
    %2585 = vmatprep.subr.mxu0 0.0
    %2586 = vmatpush2.msra.mxu0 0.0
    %2587 = vmatprep.subr.mxu0 0.0
    %2588 = vmatpush2.msra.mxu0 0.0
    %2589 = vmatprep.subr.mxu0 0.0
    %2590 = vmatpush2.msra.mxu0 0.0
    %2591 = vmatprep.subr.mxu0 0.0
    %2592 = vmatpush2.msra.mxu0 0.0
    %2593 = vmatprep.subr.mxu0 0.0
    %2594 = vmatpush2.msra.mxu0 0.0
    %2595 = vmatprep.subr.mxu0 0.0
    %2596 = vmatpush2.msra.mxu0 0.0
    %2597 = vmatprep.subr.mxu0 0.0
    %2598 = vmatpush2.msra.mxu0 0.0
    %2599 = vmatprep.subr.mxu0 0.0
    %2600 = vmatpush2.msra.mxu0 0.0
    %2601 = vmatprep.subr.mxu0 0.0
    %2602 = vmatpush2.msra.mxu0 0.0
    %2603 = vmatprep.subr.mxu0 0.0
    %2604 = vmatpush2.msra.mxu0 0.0
    %2605 = vmatprep.subr.mxu0 0.0
    %2606 = vmatpush2.msra.mxu0 0.0
    %2607 = vmatprep.subr.mxu0 0.0
    %2608 = vmatpush2.msra.mxu0 0.0
    %2609 = vmatprep.subr.mxu0 0.0
    %2610 = vmatpush2.msra.mxu0 0.0
    %2611 = vmatprep.subr.mxu0 0.0
    %2612 = vmatpush2.msra.mxu0 0.0
    %2613 = vmatprep.subr.mxu0 0.0
    %2614 = vmatpush2.msra.mxu0 0.0
    %2615 = vmatprep.mubr.f32.mxu0 0.0
    %2616 = vmatmul.mubr.f32.gmra.mxu0 %v2534
    %v2617 = vpop.f32.mrf.mxu0
    %v2618 = vadd.f32 0.0, %v2617
    %v2619 = vpop.f32.mrf.mxu0
    %2620 = vmatprep.mubr.f32.mxu0 0.0
    %2621 = vmatmul.mubr.f32.gmra.mxu0 %v2537
    %v2622 = vpop.f32.mrf.mxu0
    %v2623 = vadd.f32 0.0, %v2622
    %v2624 = vpop.f32.mrf.mxu0
    %2625 = vmatprep.mubr.f32.mxu0 0.0
    %2626 = vmatmul.mubr.f32.gmra.mxu0 %v2540
    %v2627 = vpop.f32.mrf.mxu0
    %v2628 = vadd.f32 0.0, %v2627
    %v2629 = vpop.f32.mrf.mxu0
    %2630 = vmatprep.mubr.f32.mxu0 0.0
    %2631 = vmatmul.mubr.f32.gmra.mxu0 %v2543
    %v2632 = vpop.f32.mrf.mxu0
    %v2633 = vadd.f32 0.0, %v2632
    %v2634 = vpop.f32.mrf.mxu0
    %2635 = vmatprep.mubr.f32.mxu0 0.0
    %2636 = vmatmul.mubr.f32.gmra.mxu0 %v2546
    %v2637 = vpop.f32.mrf.mxu0
    %v2638 = vadd.f32 0.0, %v2637
    %v2639 = vpop.f32.mrf.mxu0
    %2640 = vmatprep.mubr.f32.mxu0 0.0
    %2641 = vmatmul.mubr.f32.gmra.mxu0 %v2549
    %v2642 = vpop.f32.mrf.mxu0
    %v2643 = vadd.f32 0.0, %v2642
    %v2644 = vpop.f32.mrf.mxu0
    %2645 = vdwg.mxu0
    %v2646 = vadd.f32 %v298, %v2618
    %v2647 = vadd.f32 %v299, %v2623
    %v2648 = vadd.f32 %v300, %v2628
    %v2649 = vadd.f32 %v301, %v2633
    %v2650 = vadd.f32 %v302, %v2638
    %v2651 = vadd.f32 %v303, %v2643
    %v2652 = vld [vmem:[%s10] sm:$0x1]
    %v2654 = vlaneseq
    %v2655 = vshrl.u32 %v2654, 7
    %v2656 = vsub.s32 0, %v2655
    %v2657 = vrot.slane %v2652, %v2656
    %v2659 = vadd.f32 %v2646, %v2657
    %v2660 = vadd.f32 %v2647, %v2657
    %v2661 = vadd.f32 %v2648, %v2657
    %v2662 = vadd.f32 %v2649, %v2657
    %v2663 = vadd.f32 %v2650, %v2657
    %v2664 = vadd.f32 %v2651, %v2657
    %v2665 = vld [vmem:[%s11] sm:$0x1]
    %v2666 = vld [vmem:[%s12] sm:$0x1]
    %v2667 = vsel %vm200, %v2659, 0.0
    %2668 = vadd.xlane.f32.xlu0 %v2667
    %v2669 = vpop.xlane.xlu0 %2668
    %v2670 = vsel %vm200, %v2660, 0.0
    %2671 = vadd.xlane.f32.xlu0 %v2670
    %v2672 = vpop.xlane.xlu0 %2671
    %v2673 = vsel %vm200, %v2661, 0.0
    %2674 = vadd.xlane.f32.xlu0 %v2673
    %v2675 = vpop.xlane.xlu0 %2674
    %v2676 = vsel %vm200, %v2662, 0.0
    %2677 = vadd.xlane.f32.xlu0 %v2676
    %v2678 = vpop.xlane.xlu0 %2677
    %v2679 = vsel %vm200, %v2663, 0.0
    %2680 = vadd.xlane.f32.xlu0 %v2679
    %v2681 = vpop.xlane.xlu0 %2680
    %v2682 = vsel %vm200, %v2664, 0.0
    %2683 = vadd.xlane.f32.xlu0 %v2682
    %v2684 = vpop.xlane.xlu0 %2683
    %v2685 = vmul.f32 %v2669, %v219
    %v2686 = vmul.f32 %v2672, %v219
    %v2687 = vmul.f32 %v2675, %v219
    %v2688 = vmul.f32 %v2678, %v219
    %v2689 = vmul.f32 %v2681, %v219
    %v2690 = vmul.f32 %v2684, %v219
    %v2691 = vsub.f32 %v2659, %v2685
    %v2692 = vsub.f32 %v2660, %v2686
    %v2693 = vsub.f32 %v2661, %v2687
    %v2694 = vsub.f32 %v2662, %v2688
    %v2695 = vsub.f32 %v2663, %v2689
    %v2696 = vsub.f32 %v2664, %v2690
    %v2697 = vmul.f32 %v2691, %v2691
    %v2698 = vmul.f32 %v2692, %v2692
    %v2699 = vmul.f32 %v2693, %v2693
    %v2700 = vmul.f32 %v2694, %v2694
    %v2701 = vmul.f32 %v2695, %v2695
    %v2702 = vmul.f32 %v2696, %v2696
    %v2703 = vsel %vm200, %v2697, 0.0
    %2704 = vadd.xlane.f32.xlu0 %v2703
    %v2705 = vpop.xlane.xlu0 %2704
    %v2706 = vsel %vm200, %v2698, 0.0
    %2707 = vadd.xlane.f32.xlu0 %v2706
    %v2708 = vpop.xlane.xlu0 %2707
    %v2709 = vsel %vm200, %v2699, 0.0
    %2710 = vadd.xlane.f32.xlu0 %v2709
    %v2711 = vpop.xlane.xlu0 %2710
    %v2712 = vsel %vm200, %v2700, 0.0
    %2713 = vadd.xlane.f32.xlu0 %v2712
    %v2714 = vpop.xlane.xlu0 %2713
    %v2715 = vsel %vm200, %v2701, 0.0
    %2716 = vadd.xlane.f32.xlu0 %v2715
    %v2717 = vpop.xlane.xlu0 %2716
    %v2718 = vsel %vm200, %v2702, 0.0
    %2719 = vadd.xlane.f32.xlu0 %v2718
    %v2720 = vpop.xlane.xlu0 %2719
    %v2721 = vmul.f32 %v2705, %v219
    %v2722 = vmul.f32 %v2708, %v219
    %v2723 = vmul.f32 %v2711, %v219
    %v2724 = vmul.f32 %v2714, %v219
    %v2725 = vmul.f32 %v2717, %v219
    %v2726 = vmul.f32 %v2720, %v219
    %v2727 = vadd.f32 %v2721, 1e-05
    %v2728 = vadd.f32 %v2722, 1e-05
    %v2729 = vadd.f32 %v2723, 1e-05
    %v2730 = vadd.f32 %v2724, 1e-05
    %v2731 = vadd.f32 %v2725, 1e-05
    %v2732 = vadd.f32 %v2726, 1e-05
    %v2733 = vrsqrt.pop %v2727
    %v2734 = vrsqrt.pop %v2728
    %v2735 = vrsqrt.pop %v2729
    %v2736 = vrsqrt.pop %v2730
    %v2737 = vrsqrt.pop %v2731
    %v2738 = vrsqrt.pop %v2732
    %v2739 = vmul.f32 %v2691, %v2733
    %v2740 = vmul.f32 %v2692, %v2734
    %v2741 = vmul.f32 %v2693, %v2735
    %v2742 = vmul.f32 %v2694, %v2736
    %v2743 = vmul.f32 %v2695, %v2737
    %v2744 = vmul.f32 %v2696, %v2738
    %v2746 = vlaneseq
    %v2747 = vshrl.u32 %v2746, 7
    %v2748 = vsub.s32 0, %v2747
    %v2749 = vrot.slane %v2665, %v2748
    %v2751 = vmul.f32 %v2739, %v2749
    %v2752 = vmul.f32 %v2740, %v2749
    %v2753 = vmul.f32 %v2741, %v2749
    %v2754 = vmul.f32 %v2742, %v2749
    %v2755 = vmul.f32 %v2743, %v2749
    %v2756 = vmul.f32 %v2744, %v2749
    %v2758 = vlaneseq
    %v2759 = vshrl.u32 %v2758, 7
    %v2760 = vsub.s32 0, %v2759
    %v2761 = vrot.slane %v2666, %v2760
    %v2763 = vadd.f32 %v2751, %v2761
    %v2764 = vadd.f32 %v2752, %v2761
    %v2765 = vadd.f32 %v2753, %v2761
    %v2766 = vadd.f32 %v2754, %v2761
    %v2767 = vadd.f32 %v2755, %v2761
    %v2768 = vadd.f32 %v2756, %v2761
    %v2769 = vld [vmem:[%s13] sm:$0xff]
    %v2770 = vld [vmem:[%s13 + $0x8] sm:$0xff]
    %v2771 = vld [vmem:[%s13 + $0x10] sm:$0xff]
    %v2772 = vld [vmem:[%s13 + $0x18] sm:$0xff]
    %v2773 = vld [vmem:[%s14] sm:$0x1]
    %v2775 = vlaneseq
    %v2776 = vshrl.u32 %v2775, 7
    %v2777 = vsub.s32 0, %v2776
    %v2778 = vrot.slane %v2773, %v2777
    %v2781 = vsel %vm200, %v2763, 0
    %v2784 = vsel %vm200, %v2764, 0
    %v2787 = vsel %vm200, %v2765, 0
    %v2790 = vsel %vm200, %v2766, 0
    %v2793 = vsel %vm200, %v2767, 0
    %v2796 = vsel %vm200, %v2768, 0
    %2798 = vmatprep.subr.mxu0 0.0
    %2799 = vmatpush1.msra.mxu0 0.0
    %2800 = vmatprep.subr.mxu0 0.0
    %2801 = vmatpush1.msra.mxu0 0.0
    %2802 = vmatprep.subr.mxu0 0.0
    %2803 = vmatpush1.msra.mxu0 0.0
    %2804 = vmatprep.subr.mxu0 0.0
    %2805 = vmatpush1.msra.mxu0 0.0
    %2806 = vmatprep.subr.mxu0 0.0
    %2807 = vmatpush1.msra.mxu0 0.0
    %2808 = vmatprep.subr.mxu0 0.0
    %2809 = vmatpush1.msra.mxu0 0.0
    %2810 = vmatprep.subr.mxu0 0.0
    %2811 = vmatpush1.msra.mxu0 0.0
    %2812 = vmatprep.subr.mxu0 0.0
    %2813 = vmatpush1.msra.mxu0 0.0
    %2814 = vmatprep.subr.mxu0 0.0
    %2815 = vmatpush1.msra.mxu0 0.0
    %2816 = vmatprep.subr.mxu0 0.0
    %2817 = vmatpush1.msra.mxu0 0.0
    %2818 = vmatprep.subr.mxu0 0.0
    %2819 = vmatpush1.msra.mxu0 0.0
    %2820 = vmatprep.subr.mxu0 0.0
    %2821 = vmatpush1.msra.mxu0 0.0
    %2822 = vmatprep.subr.mxu0 0.0
    %2823 = vmatpush1.msra.mxu0 %v2772
    %2824 = vmatprep.subr.mxu0 0.0
    %2825 = vmatpush1.msra.mxu0 %v2771
    %2826 = vmatprep.subr.mxu0 0.0
    %2827 = vmatpush1.msra.mxu0 %v2770
    %2828 = vmatprep.subr.mxu0 0.0
    %2829 = vmatpush1.msra.mxu0 %v2769
    %2830 = vmatprep.subr.mxu0 0.0
    %2831 = vmatpush2.msra.mxu0 0.0
    %2832 = vmatprep.subr.mxu0 0.0
    %2833 = vmatpush2.msra.mxu0 0.0
    %2834 = vmatprep.subr.mxu0 0.0
    %2835 = vmatpush2.msra.mxu0 0.0
    %2836 = vmatprep.subr.mxu0 0.0
    %2837 = vmatpush2.msra.mxu0 0.0
    %2838 = vmatprep.subr.mxu0 0.0
    %2839 = vmatpush2.msra.mxu0 0.0
    %2840 = vmatprep.subr.mxu0 0.0
    %2841 = vmatpush2.msra.mxu0 0.0
    %2842 = vmatprep.subr.mxu0 0.0
    %2843 = vmatpush2.msra.mxu0 0.0
    %2844 = vmatprep.subr.mxu0 0.0
    %2845 = vmatpush2.msra.mxu0 0.0
    %2846 = vmatprep.subr.mxu0 0.0
    %2847 = vmatpush2.msra.mxu0 0.0
    %2848 = vmatprep.subr.mxu0 0.0
    %2849 = vmatpush2.msra.mxu0 0.0
    %2850 = vmatprep.subr.mxu0 0.0
    %2851 = vmatpush2.msra.mxu0 0.0
    %2852 = vmatprep.subr.mxu0 0.0
    %2853 = vmatpush2.msra.mxu0 0.0
    %2854 = vmatprep.subr.mxu0 0.0
    %2855 = vmatpush2.msra.mxu0 0.0
    %2856 = vmatprep.subr.mxu0 0.0
    %2857 = vmatpush2.msra.mxu0 0.0
    %2858 = vmatprep.subr.mxu0 0.0
    %2859 = vmatpush2.msra.mxu0 0.0
    %2860 = vmatprep.subr.mxu0 0.0
    %2861 = vmatpush2.msra.mxu0 0.0
    %2862 = vmatprep.mubr.f32.mxu0 0.0
    %2863 = vmatmul.mubr.f32.gmra.mxu0 %v2781
    %v2864 = vpop.f32.mrf.mxu0
    %v2865 = vadd.f32 %v2778, %v2864
    %v2866 = vpop.f32.mrf.mxu0
    %2867 = vmatprep.mubr.f32.mxu0 0.0
    %2868 = vmatmul.mubr.f32.gmra.mxu0 %v2784
    %v2869 = vpop.f32.mrf.mxu0
    %v2870 = vadd.f32 %v2778, %v2869
    %v2871 = vpop.f32.mrf.mxu0
    %2872 = vmatprep.mubr.f32.mxu0 0.0
    %2873 = vmatmul.mubr.f32.gmra.mxu0 %v2787
    %v2874 = vpop.f32.mrf.mxu0
    %v2875 = vadd.f32 %v2778, %v2874
    %v2876 = vpop.f32.mrf.mxu0
    %2877 = vmatprep.mubr.f32.mxu0 0.0
    %2878 = vmatmul.mubr.f32.gmra.mxu0 %v2790
    %v2879 = vpop.f32.mrf.mxu0
    %v2880 = vadd.f32 %v2778, %v2879
    %v2881 = vpop.f32.mrf.mxu0
    %2882 = vmatprep.mubr.f32.mxu0 0.0
    %2883 = vmatmul.mubr.f32.gmra.mxu0 %v2793
    %v2884 = vpop.f32.mrf.mxu0
    %v2885 = vadd.f32 %v2778, %v2884
    %v2886 = vpop.f32.mrf.mxu0
    %2887 = vmatprep.mubr.f32.mxu0 0.0
    %2888 = vmatmul.mubr.f32.gmra.mxu0 %v2796
    %v2889 = vpop.f32.mrf.mxu0
    %v2890 = vadd.f32 %v2778, %v2889
    %v2891 = vpop.f32.mrf.mxu0
    %2892 = vdwg.mxu0
    %v2893 = vmul.f32 %v2865, 1.702
    %v2894 = vmul.f32 %v2870, 1.702
    %v2895 = vmul.f32 %v2875, 1.702
    %v2896 = vmul.f32 %v2880, 1.702
    %v2897 = vmul.f32 %v2885, 1.702
    %v2898 = vmul.f32 %v2890, 1.702
    %v2899 = vxor.u32 %v2893, 2147483648
    %v2900 = vxor.u32 %v2894, 2147483648
    %v2901 = vxor.u32 %v2895, 2147483648
    %v2902 = vxor.u32 %v2896, 2147483648
    %v2903 = vxor.u32 %v2897, 2147483648
    %v2904 = vxor.u32 %v2898, 2147483648
    %v2905 = vmul.f32 %v2899, 1.442695
    %v2906 = vpow.pop %v2905
    %v2907 = vmul.f32 %v2900, 1.442695
    %v2908 = vpow.pop %v2907
    %v2909 = vmul.f32 %v2901, 1.442695
    %v2910 = vpow.pop %v2909
    %v2911 = vmul.f32 %v2902, 1.442695
    %v2912 = vpow.pop %v2911
    %v2913 = vmul.f32 %v2903, 1.442695
    %v2914 = vpow.pop %v2913
    %v2915 = vmul.f32 %v2904, 1.442695
    %v2916 = vpow.pop %v2915
    %v2917 = vadd.f32 %v2906, 1.0
    %v2918 = vadd.f32 %v2908, 1.0
    %v2919 = vadd.f32 %v2910, 1.0
    %v2920 = vadd.f32 %v2912, 1.0
    %v2921 = vadd.f32 %v2914, 1.0
    %v2922 = vadd.f32 %v2916, 1.0
    %v2923 = vrcp.pop %v2917
    %v2924 = vmul.f32 1.0, %v2923
    %v2925 = vrcp.pop %v2918
    %v2926 = vmul.f32 1.0, %v2925
    %v2927 = vrcp.pop %v2919
    %v2928 = vmul.f32 1.0, %v2927
    %v2929 = vrcp.pop %v2920
    %v2930 = vmul.f32 1.0, %v2929
    %v2931 = vrcp.pop %v2921
    %v2932 = vmul.f32 1.0, %v2931
    %v2933 = vrcp.pop %v2922
    %v2934 = vmul.f32 1.0, %v2933
    %v2935 = vmul.f32 %v2865, %v2924
    %v2936 = vmul.f32 %v2870, %v2926
    %v2937 = vmul.f32 %v2875, %v2928
    %v2938 = vmul.f32 %v2880, %v2930
    %v2939 = vmul.f32 %v2885, %v2932
    %v2940 = vmul.f32 %v2890, %v2934
    %v2941 = vld [vmem:[%s15] sm:$0xff]
    %v2942 = vld [vmem:[%s15 + $0x8] sm:$0xff]
    %v2943 = vld [vmem:[%s15 + $0x10] sm:$0xff]
    %v2944 = vld [vmem:[%s15 + $0x18] sm:$0xff]
    %v2945 = vld [vmem:[%s15 + $0x20] sm:$0xff]
    %v2946 = vld [vmem:[%s15 + $0x28] sm:$0xff]
    %v2947 = vld [vmem:[%s15 + $0x30] sm:$0xff]
    %v2948 = vld [vmem:[%s15 + $0x38] sm:$0xff]
    %v2949 = vld [vmem:[%s15 + $0x40] sm:$0xff]
    %v2950 = vld [vmem:[%s15 + $0x48] sm:$0xff]
    %v2951 = vld [vmem:[%s15 + $0x50] sm:$0xff]
    %v2952 = vld [vmem:[%s15 + $0x58] sm:$0xff]
    %v2953 = vld [vmem:[%s15 + $0x60] sm:$0xff]
    %v2954 = vld [vmem:[%s15 + $0x68] sm:$0xff]
    %v2955 = vld [vmem:[%s15 + $0x70] sm:$0xff]
    %v2956 = vld [vmem:[%s15 + $0x78] sm:$0xff]
    %v2957 = vld [vmem:[%s16] sm:$0x1]
    %v2959 = vlaneseq
    %v2960 = vshrl.u32 %v2959, 7
    %v2961 = vsub.s32 0, %v2960
    %v2962 = vrot.slane %v2957, %v2961
    %2964 = vmatprep.subr.mxu0 0.0
    %2965 = vmatpush1.msra.mxu0 %v2956
    %2966 = vmatprep.subr.mxu0 0.0
    %2967 = vmatpush1.msra.mxu0 %v2955
    %2968 = vmatprep.subr.mxu0 0.0
    %2969 = vmatpush1.msra.mxu0 %v2954
    %2970 = vmatprep.subr.mxu0 0.0
    %2971 = vmatpush1.msra.mxu0 %v2953
    %2972 = vmatprep.subr.mxu0 0.0
    %2973 = vmatpush1.msra.mxu0 %v2952
    %2974 = vmatprep.subr.mxu0 0.0
    %2975 = vmatpush1.msra.mxu0 %v2951
    %2976 = vmatprep.subr.mxu0 0.0
    %2977 = vmatpush1.msra.mxu0 %v2950
    %2978 = vmatprep.subr.mxu0 0.0
    %2979 = vmatpush1.msra.mxu0 %v2949
    %2980 = vmatprep.subr.mxu0 0.0
    %2981 = vmatpush1.msra.mxu0 %v2948
    %2982 = vmatprep.subr.mxu0 0.0
    %2983 = vmatpush1.msra.mxu0 %v2947
    %2984 = vmatprep.subr.mxu0 0.0
    %2985 = vmatpush1.msra.mxu0 %v2946
    %2986 = vmatprep.subr.mxu0 0.0
    %2987 = vmatpush1.msra.mxu0 %v2945
    %2988 = vmatprep.subr.mxu0 0.0
    %2989 = vmatpush1.msra.mxu0 %v2944
    %2990 = vmatprep.subr.mxu0 0.0
    %2991 = vmatpush1.msra.mxu0 %v2943
    %2992 = vmatprep.subr.mxu0 0.0
    %2993 = vmatpush1.msra.mxu0 %v2942
    %2994 = vmatprep.subr.mxu0 0.0
    %2995 = vmatpush1.msra.mxu0 %v2941
    %2996 = vmatprep.subr.mxu0 0.0
    %2997 = vmatpush2.msra.mxu0 0.0
    %2998 = vmatprep.subr.mxu0 0.0
    %2999 = vmatpush2.msra.mxu0 0.0
    %3000 = vmatprep.subr.mxu0 0.0
    %3001 = vmatpush2.msra.mxu0 0.0
    %3002 = vmatprep.subr.mxu0 0.0
    %3003 = vmatpush2.msra.mxu0 0.0
    %3004 = vmatprep.subr.mxu0 0.0
    %3005 = vmatpush2.msra.mxu0 0.0
    %3006 = vmatprep.subr.mxu0 0.0
    %3007 = vmatpush2.msra.mxu0 0.0
    %3008 = vmatprep.subr.mxu0 0.0
    %3009 = vmatpush2.msra.mxu0 0.0
    %3010 = vmatprep.subr.mxu0 0.0
    %3011 = vmatpush2.msra.mxu0 0.0
    %3012 = vmatprep.subr.mxu0 0.0
    %3013 = vmatpush2.msra.mxu0 0.0
    %3014 = vmatprep.subr.mxu0 0.0
    %3015 = vmatpush2.msra.mxu0 0.0
    %3016 = vmatprep.subr.mxu0 0.0
    %3017 = vmatpush2.msra.mxu0 0.0
    %3018 = vmatprep.subr.mxu0 0.0
    %3019 = vmatpush2.msra.mxu0 0.0
    %3020 = vmatprep.subr.mxu0 0.0
    %3021 = vmatpush2.msra.mxu0 0.0
    %3022 = vmatprep.subr.mxu0 0.0
    %3023 = vmatpush2.msra.mxu0 0.0
    %3024 = vmatprep.subr.mxu0 0.0
    %3025 = vmatpush2.msra.mxu0 0.0
    %3026 = vmatprep.subr.mxu0 0.0
    %3027 = vmatpush2.msra.mxu0 0.0
    %3028 = vmatprep.mubr.f32.mxu0 0.0
    %3029 = vmatmul.mubr.f32.gmra.mxu0 %v2935
    %v3030 = vpop.f32.mrf.mxu0
    %v3031 = vadd.f32 %v2962, %v3030
    %v3032 = vpop.f32.mrf.mxu0
    %3033 = vmatprep.mubr.f32.mxu0 0.0
    %3034 = vmatmul.mubr.f32.gmra.mxu0 %v2936
    %v3035 = vpop.f32.mrf.mxu0
    %v3036 = vadd.f32 %v2962, %v3035
    %v3037 = vpop.f32.mrf.mxu0
    %3038 = vmatprep.mubr.f32.mxu0 0.0
    %3039 = vmatmul.mubr.f32.gmra.mxu0 %v2937
    %v3040 = vpop.f32.mrf.mxu0
    %v3041 = vadd.f32 %v2962, %v3040
    %v3042 = vpop.f32.mrf.mxu0
    %3043 = vmatprep.mubr.f32.mxu0 0.0
    %3044 = vmatmul.mubr.f32.gmra.mxu0 %v2938
    %v3045 = vpop.f32.mrf.mxu0
    %v3046 = vadd.f32 %v2962, %v3045
    %v3047 = vpop.f32.mrf.mxu0
    %3048 = vmatprep.mubr.f32.mxu0 0.0
    %3049 = vmatmul.mubr.f32.gmra.mxu0 %v2939
    %v3050 = vpop.f32.mrf.mxu0
    %v3051 = vadd.f32 %v2962, %v3050
    %v3052 = vpop.f32.mrf.mxu0
    %3053 = vmatprep.mubr.f32.mxu0 0.0
    %3054 = vmatmul.mubr.f32.gmra.mxu0 %v2940
    %v3055 = vpop.f32.mrf.mxu0
    %v3056 = vadd.f32 %v2962, %v3055
    %v3057 = vpop.f32.mrf.mxu0
    %3058 = vdwg.mxu0
    %v3059 = vadd.f32 %v2659, %v3031
    %v3060 = vadd.f32 %v2660, %v3036
    %v3061 = vadd.f32 %v2661, %v3041
    %v3062 = vadd.f32 %v2662, %v3046
    %v3063 = vadd.f32 %v2663, %v3051
    %v3064 = vadd.f32 %v2664, %v3056
    %s3065 = scalar_lea.vmem %s5, 1
    %v3066 = vld [vmem:[%s3065] sm:$0x1]
    %s3067 = scalar_lea.vmem %s6, 1
    %v3068 = vld [vmem:[%s3067] sm:$0x1]
    %v3069 = vsel %vm200, %v3059, 0.0
    %3070 = vadd.xlane.f32.xlu0 %v3069
    %v3071 = vpop.xlane.xlu0 %3070
    %v3072 = vsel %vm200, %v3060, 0.0
    %3073 = vadd.xlane.f32.xlu0 %v3072
    %v3074 = vpop.xlane.xlu0 %3073
    %v3075 = vsel %vm200, %v3061, 0.0
    %3076 = vadd.xlane.f32.xlu0 %v3075
    %v3077 = vpop.xlane.xlu0 %3076
    %v3078 = vsel %vm200, %v3062, 0.0
    %3079 = vadd.xlane.f32.xlu0 %v3078
    %v3080 = vpop.xlane.xlu0 %3079
    %v3081 = vsel %vm200, %v3063, 0.0
    %3082 = vadd.xlane.f32.xlu0 %v3081
    %v3083 = vpop.xlane.xlu0 %3082
    %v3084 = vsel %vm200, %v3064, 0.0
    %3085 = vadd.xlane.f32.xlu0 %v3084
    %v3086 = vpop.xlane.xlu0 %3085
    %v3087 = vmul.f32 %v3071, %v219
    %v3088 = vmul.f32 %v3074, %v219
    %v3089 = vmul.f32 %v3077, %v219
    %v3090 = vmul.f32 %v3080, %v219
    %v3091 = vmul.f32 %v3083, %v219
    %v3092 = vmul.f32 %v3086, %v219
    %v3093 = vsub.f32 %v3059, %v3087
    %v3094 = vsub.f32 %v3060, %v3088
    %v3095 = vsub.f32 %v3061, %v3089
    %v3096 = vsub.f32 %v3062, %v3090
    %v3097 = vsub.f32 %v3063, %v3091
    %v3098 = vsub.f32 %v3064, %v3092
    %v3099 = vmul.f32 %v3093, %v3093
    %v3100 = vmul.f32 %v3094, %v3094
    %v3101 = vmul.f32 %v3095, %v3095
    %v3102 = vmul.f32 %v3096, %v3096
    %v3103 = vmul.f32 %v3097, %v3097
    %v3104 = vmul.f32 %v3098, %v3098
    %v3105 = vsel %vm200, %v3099, 0.0
    %3106 = vadd.xlane.f32.xlu0 %v3105
    %v3107 = vpop.xlane.xlu0 %3106
    %v3108 = vsel %vm200, %v3100, 0.0
    %3109 = vadd.xlane.f32.xlu0 %v3108
    %v3110 = vpop.xlane.xlu0 %3109
    %v3111 = vsel %vm200, %v3101, 0.0
    %3112 = vadd.xlane.f32.xlu0 %v3111
    %v3113 = vpop.xlane.xlu0 %3112
    %v3114 = vsel %vm200, %v3102, 0.0
    %3115 = vadd.xlane.f32.xlu0 %v3114
    %v3116 = vpop.xlane.xlu0 %3115
    %v3117 = vsel %vm200, %v3103, 0.0
    %3118 = vadd.xlane.f32.xlu0 %v3117
    %v3119 = vpop.xlane.xlu0 %3118
    %v3120 = vsel %vm200, %v3104, 0.0
    %3121 = vadd.xlane.f32.xlu0 %v3120
    %v3122 = vpop.xlane.xlu0 %3121
    %v3123 = vmul.f32 %v3107, %v219
    %v3124 = vmul.f32 %v3110, %v219
    %v3125 = vmul.f32 %v3113, %v219
    %v3126 = vmul.f32 %v3116, %v219
    %v3127 = vmul.f32 %v3119, %v219
    %v3128 = vmul.f32 %v3122, %v219
    %v3129 = vadd.f32 %v3123, 1e-05
    %v3130 = vadd.f32 %v3124, 1e-05
    %v3131 = vadd.f32 %v3125, 1e-05
    %v3132 = vadd.f32 %v3126, 1e-05
    %v3133 = vadd.f32 %v3127, 1e-05
    %v3134 = vadd.f32 %v3128, 1e-05
    %v3135 = vrsqrt.pop %v3129
    %v3136 = vrsqrt.pop %v3130
    %v3137 = vrsqrt.pop %v3131
    %v3138 = vrsqrt.pop %v3132
    %v3139 = vrsqrt.pop %v3133
    %v3140 = vrsqrt.pop %v3134
    %v3141 = vmul.f32 %v3093, %v3135
    %v3142 = vmul.f32 %v3094, %v3136
    %v3143 = vmul.f32 %v3095, %v3137
    %v3144 = vmul.f32 %v3096, %v3138
    %v3145 = vmul.f32 %v3097, %v3139
    %v3146 = vmul.f32 %v3098, %v3140
    %v3148 = vlaneseq
    %v3149 = vshrl.u32 %v3148, 7
    %v3150 = vsub.s32 0, %v3149
    %v3151 = vrot.slane %v3066, %v3150
    %v3153 = vmul.f32 %v3141, %v3151
    %v3154 = vmul.f32 %v3142, %v3151
    %v3155 = vmul.f32 %v3143, %v3151
    %v3156 = vmul.f32 %v3144, %v3151
    %v3157 = vmul.f32 %v3145, %v3151
    %v3158 = vmul.f32 %v3146, %v3151
    %v3160 = vlaneseq
    %v3161 = vshrl.u32 %v3160, 7
    %v3162 = vsub.s32 0, %v3161
    %v3163 = vrot.slane %v3068, %v3162
    %v3165 = vadd.f32 %v3153, %v3163
    %v3166 = vadd.f32 %v3154, %v3163
    %v3167 = vadd.f32 %v3155, %v3163
    %v3168 = vadd.f32 %v3156, %v3163
    %v3169 = vadd.f32 %v3157, %v3163
    %v3170 = vadd.f32 %v3158, %v3163
    %s3171 = scalar_lea.vmem %s7, 32
    %v3172 = vld [vmem:[%s3171] sm:$0xff]
    %v3173 = vld [vmem:[%s3171 + $0x8] sm:$0xff]
    %v3174 = vld [vmem:[%s3171 + $0x10] sm:$0xff]
    %v3175 = vld [vmem:[%s3171 + $0x18] sm:$0xff]
    %s3176 = scalar_lea.vmem %s8, 1
    %v3177 = vld [vmem:[%s3176] sm:$0x1]
    %v3179 = vlaneseq
    %v3180 = vshrl.u32 %v3179, 7
    %v3181 = vsub.s32 0, %v3180
    %v3182 = vrot.slane %v3177, %v3181
    %v3185 = vsel %vm200, %v3165, 0
    %v3188 = vsel %vm200, %v3166, 0
    %v3191 = vsel %vm200, %v3167, 0
    %v3194 = vsel %vm200, %v3168, 0
    %v3197 = vsel %vm200, %v3169, 0
    %v3200 = vsel %vm200, %v3170, 0
    %3202 = vmatprep.subr.mxu0 0.0
    %3203 = vmatpush1.msra.mxu0 0.0
    %3204 = vmatprep.subr.mxu0 0.0
    %3205 = vmatpush1.msra.mxu0 0.0
    %3206 = vmatprep.subr.mxu0 0.0
    %3207 = vmatpush1.msra.mxu0 0.0
    %3208 = vmatprep.subr.mxu0 0.0
    %3209 = vmatpush1.msra.mxu0 0.0
    %3210 = vmatprep.subr.mxu0 0.0
    %3211 = vmatpush1.msra.mxu0 0.0
    %3212 = vmatprep.subr.mxu0 0.0
    %3213 = vmatpush1.msra.mxu0 0.0
    %3214 = vmatprep.subr.mxu0 0.0
    %3215 = vmatpush1.msra.mxu0 0.0
    %3216 = vmatprep.subr.mxu0 0.0
    %3217 = vmatpush1.msra.mxu0 0.0
    %3218 = vmatprep.subr.mxu0 0.0
    %3219 = vmatpush1.msra.mxu0 0.0
    %3220 = vmatprep.subr.mxu0 0.0
    %3221 = vmatpush1.msra.mxu0 0.0
    %3222 = vmatprep.subr.mxu0 0.0
    %3223 = vmatpush1.msra.mxu0 0.0
    %3224 = vmatprep.subr.mxu0 0.0
    %3225 = vmatpush1.msra.mxu0 0.0
    %3226 = vmatprep.subr.mxu0 0.0
    %3227 = vmatpush1.msra.mxu0 %v3175
    %3228 = vmatprep.subr.mxu0 0.0
    %3229 = vmatpush1.msra.mxu0 %v3174
    %3230 = vmatprep.subr.mxu0 0.0
    %3231 = vmatpush1.msra.mxu0 %v3173
    %3232 = vmatprep.subr.mxu0 0.0
    %3233 = vmatpush1.msra.mxu0 %v3172
    %3234 = vmatprep.subr.mxu0 0.0
    %3235 = vmatpush2.msra.mxu0 0.0
    %3236 = vmatprep.subr.mxu0 0.0
    %3237 = vmatpush2.msra.mxu0 0.0
    %3238 = vmatprep.subr.mxu0 0.0
    %3239 = vmatpush2.msra.mxu0 0.0
    %3240 = vmatprep.subr.mxu0 0.0
    %3241 = vmatpush2.msra.mxu0 0.0
    %3242 = vmatprep.subr.mxu0 0.0
    %3243 = vmatpush2.msra.mxu0 0.0
    %3244 = vmatprep.subr.mxu0 0.0
    %3245 = vmatpush2.msra.mxu0 0.0
    %3246 = vmatprep.subr.mxu0 0.0
    %3247 = vmatpush2.msra.mxu0 0.0
    %3248 = vmatprep.subr.mxu0 0.0
    %3249 = vmatpush2.msra.mxu0 0.0
    %3250 = vmatprep.subr.mxu0 0.0
    %3251 = vmatpush2.msra.mxu0 0.0
    %3252 = vmatprep.subr.mxu0 0.0
    %3253 = vmatpush2.msra.mxu0 0.0
    %3254 = vmatprep.subr.mxu0 0.0
    %3255 = vmatpush2.msra.mxu0 0.0
    %3256 = vmatprep.subr.mxu0 0.0
    %3257 = vmatpush2.msra.mxu0 0.0
    %3258 = vmatprep.subr.mxu0 0.0
    %3259 = vmatpush2.msra.mxu0 0.0
    %3260 = vmatprep.subr.mxu0 0.0
    %3261 = vmatpush2.msra.mxu0 0.0
    %3262 = vmatprep.subr.mxu0 0.0
    %3263 = vmatpush2.msra.mxu0 0.0
    %3264 = vmatprep.subr.mxu0 0.0
    %3265 = vmatpush2.msra.mxu0 0.0
    %3266 = vmatprep.mubr.f32.mxu0 0.0
    %3267 = vmatmul.mubr.f32.gmra.mxu0 %v3185
    %v3268 = vpop.f32.mrf.mxu0
    %v3269 = vadd.f32 %v3182, %v3268
    %v3270 = vpop.f32.mrf.mxu0
    %3271 = vmatprep.mubr.f32.mxu0 0.0
    %3272 = vmatmul.mubr.f32.gmra.mxu0 %v3188
    %v3273 = vpop.f32.mrf.mxu0
    %v3274 = vadd.f32 %v3182, %v3273
    %v3275 = vpop.f32.mrf.mxu0
    %3276 = vmatprep.mubr.f32.mxu0 0.0
    %3277 = vmatmul.mubr.f32.gmra.mxu0 %v3191
    %v3278 = vpop.f32.mrf.mxu0
    %v3279 = vadd.f32 %v3182, %v3278
    %v3280 = vpop.f32.mrf.mxu0
    %3281 = vmatprep.mubr.f32.mxu0 0.0
    %3282 = vmatmul.mubr.f32.gmra.mxu0 %v3194
    %v3283 = vpop.f32.mrf.mxu0
    %v3284 = vadd.f32 %v3182, %v3283
    %v3285 = vpop.f32.mrf.mxu0
    %3286 = vmatprep.mubr.f32.mxu0 0.0
    %3287 = vmatmul.mubr.f32.gmra.mxu0 %v3197
    %v3288 = vpop.f32.mrf.mxu0
    %v3289 = vadd.f32 %v3182, %v3288
    %v3290 = vpop.f32.mrf.mxu0
    %3291 = vmatprep.mubr.f32.mxu0 0.0
    %3292 = vmatmul.mubr.f32.gmra.mxu0 %v3200
    %v3293 = vpop.f32.mrf.mxu0
    %v3294 = vadd.f32 %v3182, %v3293
    %v3295 = vpop.f32.mrf.mxu0
    %3296 = vdwg.mxu0
    %3300 = vrot.lane.b32.xlu0 %v3269, 96
    %v3301 = vpop.permute.xlu0 %3300
    %3302 = vrot.lane.b32.xlu0 %v3274, 96
    %v3303 = vpop.permute.xlu0 %3302
    %3304 = vrot.lane.b32.xlu0 %v3279, 96
    %v3305 = vpop.permute.xlu0 %3304
    %v3306 = vsel %vm547, %v3269, 0
    %v3308 = vsel %vm547, %v3274, 0
    %v3310 = vsel %vm547, %v3279, 0
    %v3312 = vsel %vm547, %v3301, 0
    %v3314 = vsel %vm547, %v3303, 0
    %v3316 = vsel %vm547, %v3305, 0
    %3318 = vmatprep.subr.mxu0 0.0
    %3319 = vmatpush1.xpose.msra.mxu0 0.0
    %3320 = vmatprep.subr.mxu0 0.0
    %3321 = vmatpush1.xpose.msra.mxu0 0.0
    %3322 = vmatprep.subr.mxu0 0.0
    %3323 = vmatpush1.xpose.msra.mxu0 0.0
    %3324 = vmatprep.subr.mxu0 0.0
    %3325 = vmatpush1.xpose.msra.mxu0 0.0
    %3326 = vmatprep.subr.mxu0 0.0
    %3327 = vmatpush1.xpose.msra.mxu0 0.0
    %3328 = vmatprep.subr.mxu0 0.0
    %3329 = vmatpush1.xpose.msra.mxu0 0.0
    %3330 = vmatprep.subr.mxu0 0.0
    %3331 = vmatpush1.xpose.msra.mxu0 0.0
    %3332 = vmatprep.subr.mxu0 0.0
    %3333 = vmatpush1.xpose.msra.mxu0 0.0
    %3334 = vmatprep.subr.mxu0 0.0
    %3335 = vmatpush1.xpose.msra.mxu0 0.0
    %3336 = vmatprep.subr.mxu0 0.0
    %3337 = vmatpush1.xpose.msra.mxu0 0.0
    %3338 = vmatprep.subr.mxu0 0.0
    %3339 = vmatpush1.xpose.msra.mxu0 0.0
    %3340 = vmatprep.subr.mxu0 0.0
    %3341 = vmatpush1.xpose.msra.mxu0 0.0
    %3342 = vmatprep.subr.mxu0 0.0
    %3343 = vmatpush1.xpose.msra.mxu0 0.0
    %3344 = vmatprep.subr.mxu0 0.0
    %3345 = vmatpush1.xpose.msra.mxu0 %v3316
    %3346 = vmatprep.subr.mxu0 0.0
    %3347 = vmatpush1.xpose.msra.mxu0 %v3314
    %3348 = vmatprep.subr.mxu0 0.0
    %3349 = vmatpush1.xpose.msra.mxu0 %v3312
    %3350 = vmatprep.subr.mxu0 0.0
    %3351 = vmatpush2.xpose.msra.mxu0 0.0
    %3352 = vmatprep.subr.mxu0 0.0
    %3353 = vmatpush2.xpose.msra.mxu0 0.0
    %3354 = vmatprep.subr.mxu0 0.0
    %3355 = vmatpush2.xpose.msra.mxu0 0.0
    %3356 = vmatprep.subr.mxu0 0.0
    %3357 = vmatpush2.xpose.msra.mxu0 0.0
    %3358 = vmatprep.subr.mxu0 0.0
    %3359 = vmatpush2.xpose.msra.mxu0 0.0
    %3360 = vmatprep.subr.mxu0 0.0
    %3361 = vmatpush2.xpose.msra.mxu0 0.0
    %3362 = vmatprep.subr.mxu0 0.0
    %3363 = vmatpush2.xpose.msra.mxu0 0.0
    %3364 = vmatprep.subr.mxu0 0.0
    %3365 = vmatpush2.xpose.msra.mxu0 0.0
    %3366 = vmatprep.subr.mxu0 0.0
    %3367 = vmatpush2.xpose.msra.mxu0 0.0
    %3368 = vmatprep.subr.mxu0 0.0
    %3369 = vmatpush2.xpose.msra.mxu0 0.0
    %3370 = vmatprep.subr.mxu0 0.0
    %3371 = vmatpush2.xpose.msra.mxu0 0.0
    %3372 = vmatprep.subr.mxu0 0.0
    %3373 = vmatpush2.xpose.msra.mxu0 0.0
    %3374 = vmatprep.subr.mxu0 0.0
    %3375 = vmatpush2.xpose.msra.mxu0 0.0
    %3376 = vmatprep.subr.mxu0 0.0
    %3377 = vmatpush2.xpose.msra.mxu0 0.0
    %3378 = vmatprep.subr.mxu0 0.0
    %3379 = vmatpush2.xpose.msra.mxu0 0.0
    %3380 = vmatprep.subr.mxu0 0.0
    %3381 = vmatpush2.xpose.msra.mxu0 0.0
    %3382 = vmatprep.mubr.f32.mxu0 0.0
    %3383 = vmatmul.mubr.f32.gmra.mxu0 %v3306
    %v3384 = vpop.f32.mrf.mxu0
    %v3385 = vadd.f32 0.0, %v3384
    %v3386 = vpop.f32.mrf.mxu0
    %3387 = vmatprep.mubr.f32.mxu0 0.0
    %3388 = vmatmul.mubr.f32.gmra.mxu0 %v3308
    %v3389 = vpop.f32.mrf.mxu0
    %v3390 = vadd.f32 0.0, %v3389
    %v3391 = vpop.f32.mrf.mxu0
    %3392 = vmatprep.mubr.f32.mxu0 0.0
    %3393 = vmatmul.mubr.f32.gmra.mxu0 %v3310
    %v3394 = vpop.f32.mrf.mxu0
    %v3395 = vadd.f32 0.0, %v3394
    %v3396 = vpop.f32.mrf.mxu0
    %3397 = vdwg.mxu0
    %v3398 = vsel %vm640, %v3385, -inf
    %3399 = vmax.xlane.f32.xlu0 %v3398
    %v3400 = vpop.xlane.xlu0 %3399
    %v3401 = vsel %vm640, %v3390, -inf
    %3402 = vmax.xlane.f32.xlu0 %v3401
    %v3403 = vpop.xlane.xlu0 %3402
    %v3404 = vsel %vm647, %v3395, -inf
    %3405 = vmax.xlane.f32.xlu0 %v3404
    %v3406 = vpop.xlane.xlu0 %3405
    %v3407 = vsub.f32 %v3385, %v3400
    %v3408 = vsub.f32 %v3390, %v3403
    %v3409 = vsub.f32 %v3395, %v3406
    %v3410 = vmul.f32 %v3407, 1.442695
    %v3411 = vpow.pop %v3410
    %v3412 = vmul.f32 %v3408, 1.442695
    %v3413 = vpow.pop %v3412
    %v3414 = vmul.f32 %v3409, 1.442695
    %v3415 = vpow.pop %v3414
    %v3416 = vsel %vm640, %v3411, 0.0
    %3417 = vadd.xlane.f32.xlu0 %v3416
    %v3418 = vpop.xlane.xlu0 %3417
    %v3419 = vsel %vm640, %v3413, 0.0
    %3420 = vadd.xlane.f32.xlu0 %v3419
    %v3421 = vpop.xlane.xlu0 %3420
    %v3422 = vsel %vm647, %v3415, 0.0
    %3423 = vadd.xlane.f32.xlu0 %v3422
    %v3424 = vpop.xlane.xlu0 %3423
    %v3425 = vrcp.pop %v3418
    %v3426 = vrcp.pop %v3421
    %v3427 = vrcp.pop %v3424
    %v3428 = vmul.f32 %v3411, %v3425
    %v3429 = vmul.f32 %v3413, %v3426
    %v3430 = vmul.f32 %v3415, %v3427
    %3431 = vrot.lane.b32.xlu0 %v3269, 64
    %v3432 = vpop.permute.xlu0 %3431
    %3433 = vrot.lane.b32.xlu0 %v3274, 64
    %v3434 = vpop.permute.xlu0 %3433
    %3435 = vrot.lane.b32.xlu0 %v3279, 64
    %v3436 = vpop.permute.xlu0 %3435
    %v3440 = vsel %vm640, %v3428, 0
    %v3443 = vsel %vm640, %v3429, 0
    %v3446 = vsel %vm640, %v3430, 0
    %v3448 = vsel %vm692, %v3436, 0
    %3450 = vmatprep.subr.mxu0 0.0
    %3451 = vmatpush1.msra.mxu0 0.0
    %3452 = vmatprep.subr.mxu0 0.0
    %3453 = vmatpush1.msra.mxu0 0.0
    %3454 = vmatprep.subr.mxu0 0.0
    %3455 = vmatpush1.msra.mxu0 0.0
    %3456 = vmatprep.subr.mxu0 0.0
    %3457 = vmatpush1.msra.mxu0 0.0
    %3458 = vmatprep.subr.mxu0 0.0
    %3459 = vmatpush1.msra.mxu0 0.0
    %3460 = vmatprep.subr.mxu0 0.0
    %3461 = vmatpush1.msra.mxu0 0.0
    %3462 = vmatprep.subr.mxu0 0.0
    %3463 = vmatpush1.msra.mxu0 0.0
    %3464 = vmatprep.subr.mxu0 0.0
    %3465 = vmatpush1.msra.mxu0 0.0
    %3466 = vmatprep.subr.mxu0 0.0
    %3467 = vmatpush1.msra.mxu0 0.0
    %3468 = vmatprep.subr.mxu0 0.0
    %3469 = vmatpush1.msra.mxu0 0.0
    %3470 = vmatprep.subr.mxu0 0.0
    %3471 = vmatpush1.msra.mxu0 0.0
    %3472 = vmatprep.subr.mxu0 0.0
    %3473 = vmatpush1.msra.mxu0 0.0
    %3474 = vmatprep.subr.mxu0 0.0
    %3475 = vmatpush1.msra.mxu0 0.0
    %3476 = vmatprep.subr.mxu0 0.0
    %3477 = vmatpush1.msra.mxu0 %v3448
    %3478 = vmatprep.subr.mxu0 0.0
    %3479 = vmatpush1.msra.mxu0 %v3434
    %3480 = vmatprep.subr.mxu0 0.0
    %3481 = vmatpush1.msra.mxu0 %v3432
    %3482 = vmatprep.subr.mxu0 0.0
    %3483 = vmatpush2.msra.mxu0 0.0
    %3484 = vmatprep.subr.mxu0 0.0
    %3485 = vmatpush2.msra.mxu0 0.0
    %3486 = vmatprep.subr.mxu0 0.0
    %3487 = vmatpush2.msra.mxu0 0.0
    %3488 = vmatprep.subr.mxu0 0.0
    %3489 = vmatpush2.msra.mxu0 0.0
    %3490 = vmatprep.subr.mxu0 0.0
    %3491 = vmatpush2.msra.mxu0 0.0
    %3492 = vmatprep.subr.mxu0 0.0
    %3493 = vmatpush2.msra.mxu0 0.0
    %3494 = vmatprep.subr.mxu0 0.0
    %3495 = vmatpush2.msra.mxu0 0.0
    %3496 = vmatprep.subr.mxu0 0.0
    %3497 = vmatpush2.msra.mxu0 0.0
    %3498 = vmatprep.subr.mxu0 0.0
    %3499 = vmatpush2.msra.mxu0 0.0
    %3500 = vmatprep.subr.mxu0 0.0
    %3501 = vmatpush2.msra.mxu0 0.0
    %3502 = vmatprep.subr.mxu0 0.0
    %3503 = vmatpush2.msra.mxu0 0.0
    %3504 = vmatprep.subr.mxu0 0.0
    %3505 = vmatpush2.msra.mxu0 0.0
    %3506 = vmatprep.subr.mxu0 0.0
    %3507 = vmatpush2.msra.mxu0 0.0
    %3508 = vmatprep.subr.mxu0 0.0
    %3509 = vmatpush2.msra.mxu0 0.0
    %3510 = vmatprep.subr.mxu0 0.0
    %3511 = vmatpush2.msra.mxu0 0.0
    %3512 = vmatprep.subr.mxu0 0.0
    %3513 = vmatpush2.msra.mxu0 0.0
    %3514 = vmatprep.mubr.f32.mxu0 0.0
    %3515 = vmatmul.mubr.f32.gmra.mxu0 %v3440
    %v3516 = vpop.f32.mrf.mxu0
    %v3517 = vadd.f32 0.0, %v3516
    %v3518 = vpop.f32.mrf.mxu0
    %3519 = vmatprep.mubr.f32.mxu0 0.0
    %3520 = vmatmul.mubr.f32.gmra.mxu0 %v3443
    %v3521 = vpop.f32.mrf.mxu0
    %v3522 = vadd.f32 0.0, %v3521
    %v3523 = vpop.f32.mrf.mxu0
    %3524 = vmatprep.mubr.f32.mxu0 0.0
    %3525 = vmatmul.mubr.f32.gmra.mxu0 %v3446
    %v3526 = vpop.f32.mrf.mxu0
    %v3527 = vadd.f32 0.0, %v3526
    %v3528 = vpop.f32.mrf.mxu0
    %3529 = vdwg.mxu0
    %3530 = vrot.lane.b32.xlu0 %v3269, 120
    %v3531 = vpop.permute.xlu0 %3530
    %3532 = vrot.lane.b32.xlu0 %v3274, 120
    %v3533 = vpop.permute.xlu0 %3532
    %3534 = vrot.lane.b32.xlu0 %v3279, 120
    %v3535 = vpop.permute.xlu0 %3534
    %3536 = vrot.lane.b32.xlu0 %v3269, 88
    %v3537 = vpop.permute.xlu0 %3536
    %3538 = vrot.lane.b32.xlu0 %v3274, 88
    %v3539 = vpop.permute.xlu0 %3538
    %3540 = vrot.lane.b32.xlu0 %v3279, 88
    %v3541 = vpop.permute.xlu0 %3540
    %v3542 = vsel %vm547, %v3531, 0
    %v3544 = vsel %vm547, %v3533, 0
    %v3546 = vsel %vm547, %v3535, 0
    %v3548 = vsel %vm547, %v3537, 0
    %v3550 = vsel %vm547, %v3539, 0
    %v3552 = vsel %vm547, %v3541, 0
    %3554 = vmatprep.subr.mxu0 0.0
    %3555 = vmatpush1.xpose.msra.mxu0 0.0
    %3556 = vmatprep.subr.mxu0 0.0
    %3557 = vmatpush1.xpose.msra.mxu0 0.0
    %3558 = vmatprep.subr.mxu0 0.0
    %3559 = vmatpush1.xpose.msra.mxu0 0.0
    %3560 = vmatprep.subr.mxu0 0.0
    %3561 = vmatpush1.xpose.msra.mxu0 0.0
    %3562 = vmatprep.subr.mxu0 0.0
    %3563 = vmatpush1.xpose.msra.mxu0 0.0
    %3564 = vmatprep.subr.mxu0 0.0
    %3565 = vmatpush1.xpose.msra.mxu0 0.0
    %3566 = vmatprep.subr.mxu0 0.0
    %3567 = vmatpush1.xpose.msra.mxu0 0.0
    %3568 = vmatprep.subr.mxu0 0.0
    %3569 = vmatpush1.xpose.msra.mxu0 0.0
    %3570 = vmatprep.subr.mxu0 0.0
    %3571 = vmatpush1.xpose.msra.mxu0 0.0
    %3572 = vmatprep.subr.mxu0 0.0
    %3573 = vmatpush1.xpose.msra.mxu0 0.0
    %3574 = vmatprep.subr.mxu0 0.0
    %3575 = vmatpush1.xpose.msra.mxu0 0.0
    %3576 = vmatprep.subr.mxu0 0.0
    %3577 = vmatpush1.xpose.msra.mxu0 0.0
    %3578 = vmatprep.subr.mxu0 0.0
    %3579 = vmatpush1.xpose.msra.mxu0 0.0
    %3580 = vmatprep.subr.mxu0 0.0
    %3581 = vmatpush1.xpose.msra.mxu0 %v3552
    %3582 = vmatprep.subr.mxu0 0.0
    %3583 = vmatpush1.xpose.msra.mxu0 %v3550
    %3584 = vmatprep.subr.mxu0 0.0
    %3585 = vmatpush1.xpose.msra.mxu0 %v3548
    %3586 = vmatprep.subr.mxu0 0.0
    %3587 = vmatpush2.xpose.msra.mxu0 0.0
    %3588 = vmatprep.subr.mxu0 0.0
    %3589 = vmatpush2.xpose.msra.mxu0 0.0
    %3590 = vmatprep.subr.mxu0 0.0
    %3591 = vmatpush2.xpose.msra.mxu0 0.0
    %3592 = vmatprep.subr.mxu0 0.0
    %3593 = vmatpush2.xpose.msra.mxu0 0.0
    %3594 = vmatprep.subr.mxu0 0.0
    %3595 = vmatpush2.xpose.msra.mxu0 0.0
    %3596 = vmatprep.subr.mxu0 0.0
    %3597 = vmatpush2.xpose.msra.mxu0 0.0
    %3598 = vmatprep.subr.mxu0 0.0
    %3599 = vmatpush2.xpose.msra.mxu0 0.0
    %3600 = vmatprep.subr.mxu0 0.0
    %3601 = vmatpush2.xpose.msra.mxu0 0.0
    %3602 = vmatprep.subr.mxu0 0.0
    %3603 = vmatpush2.xpose.msra.mxu0 0.0
    %3604 = vmatprep.subr.mxu0 0.0
    %3605 = vmatpush2.xpose.msra.mxu0 0.0
    %3606 = vmatprep.subr.mxu0 0.0
    %3607 = vmatpush2.xpose.msra.mxu0 0.0
    %3608 = vmatprep.subr.mxu0 0.0
    %3609 = vmatpush2.xpose.msra.mxu0 0.0
    %3610 = vmatprep.subr.mxu0 0.0
    %3611 = vmatpush2.xpose.msra.mxu0 0.0
    %3612 = vmatprep.subr.mxu0 0.0
    %3613 = vmatpush2.xpose.msra.mxu0 0.0
    %3614 = vmatprep.subr.mxu0 0.0
    %3615 = vmatpush2.xpose.msra.mxu0 0.0
    %3616 = vmatprep.subr.mxu0 0.0
    %3617 = vmatpush2.xpose.msra.mxu0 0.0
    %3618 = vmatprep.mubr.f32.mxu0 0.0
    %3619 = vmatmul.mubr.f32.gmra.mxu0 %v3542
    %v3620 = vpop.f32.mrf.mxu0
    %v3621 = vadd.f32 0.0, %v3620
    %v3622 = vpop.f32.mrf.mxu0
    %3623 = vmatprep.mubr.f32.mxu0 0.0
    %3624 = vmatmul.mubr.f32.gmra.mxu0 %v3544
    %v3625 = vpop.f32.mrf.mxu0
    %v3626 = vadd.f32 0.0, %v3625
    %v3627 = vpop.f32.mrf.mxu0
    %3628 = vmatprep.mubr.f32.mxu0 0.0
    %3629 = vmatmul.mubr.f32.gmra.mxu0 %v3546
    %v3630 = vpop.f32.mrf.mxu0
    %v3631 = vadd.f32 0.0, %v3630
    %v3632 = vpop.f32.mrf.mxu0
    %3633 = vdwg.mxu0
    %v3634 = vsel %vm640, %v3621, -inf
    %3635 = vmax.xlane.f32.xlu0 %v3634
    %v3636 = vpop.xlane.xlu0 %3635
    %v3637 = vsel %vm640, %v3626, -inf
    %3638 = vmax.xlane.f32.xlu0 %v3637
    %v3639 = vpop.xlane.xlu0 %3638
    %v3640 = vsel %vm647, %v3631, -inf
    %3641 = vmax.xlane.f32.xlu0 %v3640
    %v3642 = vpop.xlane.xlu0 %3641
    %v3643 = vsub.f32 %v3621, %v3636
    %v3644 = vsub.f32 %v3626, %v3639
    %v3645 = vsub.f32 %v3631, %v3642
    %v3646 = vmul.f32 %v3643, 1.442695
    %v3647 = vpow.pop %v3646
    %v3648 = vmul.f32 %v3644, 1.442695
    %v3649 = vpow.pop %v3648
    %v3650 = vmul.f32 %v3645, 1.442695
    %v3651 = vpow.pop %v3650
    %v3652 = vsel %vm640, %v3647, 0.0
    %3653 = vadd.xlane.f32.xlu0 %v3652
    %v3654 = vpop.xlane.xlu0 %3653
    %v3655 = vsel %vm640, %v3649, 0.0
    %3656 = vadd.xlane.f32.xlu0 %v3655
    %v3657 = vpop.xlane.xlu0 %3656
    %v3658 = vsel %vm647, %v3651, 0.0
    %3659 = vadd.xlane.f32.xlu0 %v3658
    %v3660 = vpop.xlane.xlu0 %3659
    %v3661 = vrcp.pop %v3654
    %v3662 = vrcp.pop %v3657
    %v3663 = vrcp.pop %v3660
    %v3664 = vmul.f32 %v3647, %v3661
    %v3665 = vmul.f32 %v3649, %v3662
    %v3666 = vmul.f32 %v3651, %v3663
    %3667 = vrot.lane.b32.xlu0 %v3269, 56
    %v3668 = vpop.permute.xlu0 %3667
    %3669 = vrot.lane.b32.xlu0 %v3274, 56
    %v3670 = vpop.permute.xlu0 %3669
    %3671 = vrot.lane.b32.xlu0 %v3279, 56
    %v3672 = vpop.permute.xlu0 %3671
    %v3676 = vsel %vm640, %v3664, 0
    %v3679 = vsel %vm640, %v3665, 0
    %v3682 = vsel %vm640, %v3666, 0
    %v3684 = vsel %vm692, %v3672, 0
    %3686 = vmatprep.subr.mxu0 0.0
    %3687 = vmatpush1.msra.mxu0 0.0
    %3688 = vmatprep.subr.mxu0 0.0
    %3689 = vmatpush1.msra.mxu0 0.0
    %3690 = vmatprep.subr.mxu0 0.0
    %3691 = vmatpush1.msra.mxu0 0.0
    %3692 = vmatprep.subr.mxu0 0.0
    %3693 = vmatpush1.msra.mxu0 0.0
    %3694 = vmatprep.subr.mxu0 0.0
    %3695 = vmatpush1.msra.mxu0 0.0
    %3696 = vmatprep.subr.mxu0 0.0
    %3697 = vmatpush1.msra.mxu0 0.0
    %3698 = vmatprep.subr.mxu0 0.0
    %3699 = vmatpush1.msra.mxu0 0.0
    %3700 = vmatprep.subr.mxu0 0.0
    %3701 = vmatpush1.msra.mxu0 0.0
    %3702 = vmatprep.subr.mxu0 0.0
    %3703 = vmatpush1.msra.mxu0 0.0
    %3704 = vmatprep.subr.mxu0 0.0
    %3705 = vmatpush1.msra.mxu0 0.0
    %3706 = vmatprep.subr.mxu0 0.0
    %3707 = vmatpush1.msra.mxu0 0.0
    %3708 = vmatprep.subr.mxu0 0.0
    %3709 = vmatpush1.msra.mxu0 0.0
    %3710 = vmatprep.subr.mxu0 0.0
    %3711 = vmatpush1.msra.mxu0 0.0
    %3712 = vmatprep.subr.mxu0 0.0
    %3713 = vmatpush1.msra.mxu0 %v3684
    %3714 = vmatprep.subr.mxu0 0.0
    %3715 = vmatpush1.msra.mxu0 %v3670
    %3716 = vmatprep.subr.mxu0 0.0
    %3717 = vmatpush1.msra.mxu0 %v3668
    %3718 = vmatprep.subr.mxu0 0.0
    %3719 = vmatpush2.msra.mxu0 0.0
    %3720 = vmatprep.subr.mxu0 0.0
    %3721 = vmatpush2.msra.mxu0 0.0
    %3722 = vmatprep.subr.mxu0 0.0
    %3723 = vmatpush2.msra.mxu0 0.0
    %3724 = vmatprep.subr.mxu0 0.0
    %3725 = vmatpush2.msra.mxu0 0.0
    %3726 = vmatprep.subr.mxu0 0.0
    %3727 = vmatpush2.msra.mxu0 0.0
    %3728 = vmatprep.subr.mxu0 0.0
    %3729 = vmatpush2.msra.mxu0 0.0
    %3730 = vmatprep.subr.mxu0 0.0
    %3731 = vmatpush2.msra.mxu0 0.0
    %3732 = vmatprep.subr.mxu0 0.0
    %3733 = vmatpush2.msra.mxu0 0.0
    %3734 = vmatprep.subr.mxu0 0.0
    %3735 = vmatpush2.msra.mxu0 0.0
    %3736 = vmatprep.subr.mxu0 0.0
    %3737 = vmatpush2.msra.mxu0 0.0
    %3738 = vmatprep.subr.mxu0 0.0
    %3739 = vmatpush2.msra.mxu0 0.0
    %3740 = vmatprep.subr.mxu0 0.0
    %3741 = vmatpush2.msra.mxu0 0.0
    %3742 = vmatprep.subr.mxu0 0.0
    %3743 = vmatpush2.msra.mxu0 0.0
    %3744 = vmatprep.subr.mxu0 0.0
    %3745 = vmatpush2.msra.mxu0 0.0
    %3746 = vmatprep.subr.mxu0 0.0
    %3747 = vmatpush2.msra.mxu0 0.0
    %3748 = vmatprep.subr.mxu0 0.0
    %3749 = vmatpush2.msra.mxu0 0.0
    %3750 = vmatprep.mubr.f32.mxu0 0.0
    %3751 = vmatmul.mubr.f32.gmra.mxu0 %v3676
    %v3752 = vpop.f32.mrf.mxu0
    %v3753 = vadd.f32 0.0, %v3752
    %v3754 = vpop.f32.mrf.mxu0
    %3755 = vmatprep.mubr.f32.mxu0 0.0
    %3756 = vmatmul.mubr.f32.gmra.mxu0 %v3679
    %v3757 = vpop.f32.mrf.mxu0
    %v3758 = vadd.f32 0.0, %v3757
    %v3759 = vpop.f32.mrf.mxu0
    %3760 = vmatprep.mubr.f32.mxu0 0.0
    %3761 = vmatmul.mubr.f32.gmra.mxu0 %v3682
    %v3762 = vpop.f32.mrf.mxu0
    %v3763 = vadd.f32 0.0, %v3762
    %v3764 = vpop.f32.mrf.mxu0
    %3765 = vdwg.mxu0
    %3766 = vrot.lane.b32.xlu0 %v3269, 112
    %v3767 = vpop.permute.xlu0 %3766
    %3768 = vrot.lane.b32.xlu0 %v3274, 112
    %v3769 = vpop.permute.xlu0 %3768
    %3770 = vrot.lane.b32.xlu0 %v3279, 112
    %v3771 = vpop.permute.xlu0 %3770
    %3772 = vrot.lane.b32.xlu0 %v3269, 80
    %v3773 = vpop.permute.xlu0 %3772
    %3774 = vrot.lane.b32.xlu0 %v3274, 80
    %v3775 = vpop.permute.xlu0 %3774
    %3776 = vrot.lane.b32.xlu0 %v3279, 80
    %v3777 = vpop.permute.xlu0 %3776
    %v3778 = vsel %vm547, %v3767, 0
    %v3780 = vsel %vm547, %v3769, 0
    %v3782 = vsel %vm547, %v3771, 0
    %v3784 = vsel %vm547, %v3773, 0
    %v3786 = vsel %vm547, %v3775, 0
    %v3788 = vsel %vm547, %v3777, 0
    %3790 = vmatprep.subr.mxu0 0.0
    %3791 = vmatpush1.xpose.msra.mxu0 0.0
    %3792 = vmatprep.subr.mxu0 0.0
    %3793 = vmatpush1.xpose.msra.mxu0 0.0
    %3794 = vmatprep.subr.mxu0 0.0
    %3795 = vmatpush1.xpose.msra.mxu0 0.0
    %3796 = vmatprep.subr.mxu0 0.0
    %3797 = vmatpush1.xpose.msra.mxu0 0.0
    %3798 = vmatprep.subr.mxu0 0.0
    %3799 = vmatpush1.xpose.msra.mxu0 0.0
    %3800 = vmatprep.subr.mxu0 0.0
    %3801 = vmatpush1.xpose.msra.mxu0 0.0
    %3802 = vmatprep.subr.mxu0 0.0
    %3803 = vmatpush1.xpose.msra.mxu0 0.0
    %3804 = vmatprep.subr.mxu0 0.0
    %3805 = vmatpush1.xpose.msra.mxu0 0.0
    %3806 = vmatprep.subr.mxu0 0.0
    %3807 = vmatpush1.xpose.msra.mxu0 0.0
    %3808 = vmatprep.subr.mxu0 0.0
    %3809 = vmatpush1.xpose.msra.mxu0 0.0
    %3810 = vmatprep.subr.mxu0 0.0
    %3811 = vmatpush1.xpose.msra.mxu0 0.0
    %3812 = vmatprep.subr.mxu0 0.0
    %3813 = vmatpush1.xpose.msra.mxu0 0.0
    %3814 = vmatprep.subr.mxu0 0.0
    %3815 = vmatpush1.xpose.msra.mxu0 0.0
    %3816 = vmatprep.subr.mxu0 0.0
    %3817 = vmatpush1.xpose.msra.mxu0 %v3788
    %3818 = vmatprep.subr.mxu0 0.0
    %3819 = vmatpush1.xpose.msra.mxu0 %v3786
    %3820 = vmatprep.subr.mxu0 0.0
    %3821 = vmatpush1.xpose.msra.mxu0 %v3784
    %3822 = vmatprep.subr.mxu0 0.0
    %3823 = vmatpush2.xpose.msra.mxu0 0.0
    %3824 = vmatprep.subr.mxu0 0.0
    %3825 = vmatpush2.xpose.msra.mxu0 0.0
    %3826 = vmatprep.subr.mxu0 0.0
    %3827 = vmatpush2.xpose.msra.mxu0 0.0
    %3828 = vmatprep.subr.mxu0 0.0
    %3829 = vmatpush2.xpose.msra.mxu0 0.0
    %3830 = vmatprep.subr.mxu0 0.0
    %3831 = vmatpush2.xpose.msra.mxu0 0.0
    %3832 = vmatprep.subr.mxu0 0.0
    %3833 = vmatpush2.xpose.msra.mxu0 0.0
    %3834 = vmatprep.subr.mxu0 0.0
    %3835 = vmatpush2.xpose.msra.mxu0 0.0
    %3836 = vmatprep.subr.mxu0 0.0
    %3837 = vmatpush2.xpose.msra.mxu0 0.0
    %3838 = vmatprep.subr.mxu0 0.0
    %3839 = vmatpush2.xpose.msra.mxu0 0.0
    %3840 = vmatprep.subr.mxu0 0.0
    %3841 = vmatpush2.xpose.msra.mxu0 0.0
    %3842 = vmatprep.subr.mxu0 0.0
    %3843 = vmatpush2.xpose.msra.mxu0 0.0
    %3844 = vmatprep.subr.mxu0 0.0
    %3845 = vmatpush2.xpose.msra.mxu0 0.0
    %3846 = vmatprep.subr.mxu0 0.0
    %3847 = vmatpush2.xpose.msra.mxu0 0.0
    %3848 = vmatprep.subr.mxu0 0.0
    %3849 = vmatpush2.xpose.msra.mxu0 0.0
    %3850 = vmatprep.subr.mxu0 0.0
    %3851 = vmatpush2.xpose.msra.mxu0 0.0
    %3852 = vmatprep.subr.mxu0 0.0
    %3853 = vmatpush2.xpose.msra.mxu0 0.0
    %3854 = vmatprep.mubr.f32.mxu0 0.0
    %3855 = vmatmul.mubr.f32.gmra.mxu0 %v3778
    %v3856 = vpop.f32.mrf.mxu0
    %v3857 = vadd.f32 0.0, %v3856
    %v3858 = vpop.f32.mrf.mxu0
    %3859 = vmatprep.mubr.f32.mxu0 0.0
    %3860 = vmatmul.mubr.f32.gmra.mxu0 %v3780
    %v3861 = vpop.f32.mrf.mxu0
    %v3862 = vadd.f32 0.0, %v3861
    %v3863 = vpop.f32.mrf.mxu0
    %3864 = vmatprep.mubr.f32.mxu0 0.0
    %3865 = vmatmul.mubr.f32.gmra.mxu0 %v3782
    %v3866 = vpop.f32.mrf.mxu0
    %v3867 = vadd.f32 0.0, %v3866
    %v3868 = vpop.f32.mrf.mxu0
    %3869 = vdwg.mxu0
    %v3870 = vsel %vm640, %v3857, -inf
    %3871 = vmax.xlane.f32.xlu0 %v3870
    %v3872 = vpop.xlane.xlu0 %3871
    %v3873 = vsel %vm640, %v3862, -inf
    %3874 = vmax.xlane.f32.xlu0 %v3873
    %v3875 = vpop.xlane.xlu0 %3874
    %v3876 = vsel %vm647, %v3867, -inf
    %3877 = vmax.xlane.f32.xlu0 %v3876
    %v3878 = vpop.xlane.xlu0 %3877
    %v3879 = vsub.f32 %v3857, %v3872
    %v3880 = vsub.f32 %v3862, %v3875
    %v3881 = vsub.f32 %v3867, %v3878
    %v3882 = vmul.f32 %v3879, 1.442695
    %v3883 = vpow.pop %v3882
    %v3884 = vmul.f32 %v3880, 1.442695
    %v3885 = vpow.pop %v3884
    %v3886 = vmul.f32 %v3881, 1.442695
    %v3887 = vpow.pop %v3886
    %v3888 = vsel %vm640, %v3883, 0.0
    %3889 = vadd.xlane.f32.xlu0 %v3888
    %v3890 = vpop.xlane.xlu0 %3889
    %v3891 = vsel %vm640, %v3885, 0.0
    %3892 = vadd.xlane.f32.xlu0 %v3891
    %v3893 = vpop.xlane.xlu0 %3892
    %v3894 = vsel %vm647, %v3887, 0.0
    %3895 = vadd.xlane.f32.xlu0 %v3894
    %v3896 = vpop.xlane.xlu0 %3895
    %v3897 = vrcp.pop %v3890
    %v3898 = vrcp.pop %v3893
    %v3899 = vrcp.pop %v3896
    %v3900 = vmul.f32 %v3883, %v3897
    %v3901 = vmul.f32 %v3885, %v3898
    %v3902 = vmul.f32 %v3887, %v3899
    %3903 = vrot.lane.b32.xlu0 %v3269, 48
    %v3904 = vpop.permute.xlu0 %3903
    %3905 = vrot.lane.b32.xlu0 %v3274, 48
    %v3906 = vpop.permute.xlu0 %3905
    %3907 = vrot.lane.b32.xlu0 %v3279, 48
    %v3908 = vpop.permute.xlu0 %3907
    %v3912 = vsel %vm640, %v3900, 0
    %v3915 = vsel %vm640, %v3901, 0
    %v3918 = vsel %vm640, %v3902, 0
    %v3920 = vsel %vm692, %v3908, 0
    %3922 = vmatprep.subr.mxu0 0.0
    %3923 = vmatpush1.msra.mxu0 0.0
    %3924 = vmatprep.subr.mxu0 0.0
    %3925 = vmatpush1.msra.mxu0 0.0
    %3926 = vmatprep.subr.mxu0 0.0
    %3927 = vmatpush1.msra.mxu0 0.0
    %3928 = vmatprep.subr.mxu0 0.0
    %3929 = vmatpush1.msra.mxu0 0.0
    %3930 = vmatprep.subr.mxu0 0.0
    %3931 = vmatpush1.msra.mxu0 0.0
    %3932 = vmatprep.subr.mxu0 0.0
    %3933 = vmatpush1.msra.mxu0 0.0
    %3934 = vmatprep.subr.mxu0 0.0
    %3935 = vmatpush1.msra.mxu0 0.0
    %3936 = vmatprep.subr.mxu0 0.0
    %3937 = vmatpush1.msra.mxu0 0.0
    %3938 = vmatprep.subr.mxu0 0.0
    %3939 = vmatpush1.msra.mxu0 0.0
    %3940 = vmatprep.subr.mxu0 0.0
    %3941 = vmatpush1.msra.mxu0 0.0
    %3942 = vmatprep.subr.mxu0 0.0
    %3943 = vmatpush1.msra.mxu0 0.0
    %3944 = vmatprep.subr.mxu0 0.0
    %3945 = vmatpush1.msra.mxu0 0.0
    %3946 = vmatprep.subr.mxu0 0.0
    %3947 = vmatpush1.msra.mxu0 0.0
    %3948 = vmatprep.subr.mxu0 0.0
    %3949 = vmatpush1.msra.mxu0 %v3920
    %3950 = vmatprep.subr.mxu0 0.0
    %3951 = vmatpush1.msra.mxu0 %v3906
    %3952 = vmatprep.subr.mxu0 0.0
    %3953 = vmatpush1.msra.mxu0 %v3904
    %3954 = vmatprep.subr.mxu0 0.0
    %3955 = vmatpush2.msra.mxu0 0.0
    %3956 = vmatprep.subr.mxu0 0.0
    %3957 = vmatpush2.msra.mxu0 0.0
    %3958 = vmatprep.subr.mxu0 0.0
    %3959 = vmatpush2.msra.mxu0 0.0
    %3960 = vmatprep.subr.mxu0 0.0
    %3961 = vmatpush2.msra.mxu0 0.0
    %3962 = vmatprep.subr.mxu0 0.0
    %3963 = vmatpush2.msra.mxu0 0.0
    %3964 = vmatprep.subr.mxu0 0.0
    %3965 = vmatpush2.msra.mxu0 0.0
    %3966 = vmatprep.subr.mxu0 0.0
    %3967 = vmatpush2.msra.mxu0 0.0
    %3968 = vmatprep.subr.mxu0 0.0
    %3969 = vmatpush2.msra.mxu0 0.0
    %3970 = vmatprep.subr.mxu0 0.0
    %3971 = vmatpush2.msra.mxu0 0.0
    %3972 = vmatprep.subr.mxu0 0.0
    %3973 = vmatpush2.msra.mxu0 0.0
    %3974 = vmatprep.subr.mxu0 0.0
    %3975 = vmatpush2.msra.mxu0 0.0
    %3976 = vmatprep.subr.mxu0 0.0
    %3977 = vmatpush2.msra.mxu0 0.0
    %3978 = vmatprep.subr.mxu0 0.0
    %3979 = vmatpush2.msra.mxu0 0.0
    %3980 = vmatprep.subr.mxu0 0.0
    %3981 = vmatpush2.msra.mxu0 0.0
    %3982 = vmatprep.subr.mxu0 0.0
    %3983 = vmatpush2.msra.mxu0 0.0
    %3984 = vmatprep.subr.mxu0 0.0
    %3985 = vmatpush2.msra.mxu0 0.0
    %3986 = vmatprep.mubr.f32.mxu0 0.0
    %3987 = vmatmul.mubr.f32.gmra.mxu0 %v3912
    %v3988 = vpop.f32.mrf.mxu0
    %v3989 = vadd.f32 0.0, %v3988
    %v3990 = vpop.f32.mrf.mxu0
    %3991 = vmatprep.mubr.f32.mxu0 0.0
    %3992 = vmatmul.mubr.f32.gmra.mxu0 %v3915
    %v3993 = vpop.f32.mrf.mxu0
    %v3994 = vadd.f32 0.0, %v3993
    %v3995 = vpop.f32.mrf.mxu0
    %3996 = vmatprep.mubr.f32.mxu0 0.0
    %3997 = vmatmul.mubr.f32.gmra.mxu0 %v3918
    %v3998 = vpop.f32.mrf.mxu0
    %v3999 = vadd.f32 0.0, %v3998
    %v4000 = vpop.f32.mrf.mxu0
    %4001 = vdwg.mxu0
    %4002 = vrot.lane.b32.xlu0 %v3269, 104
    %v4003 = vpop.permute.xlu0 %4002
    %4004 = vrot.lane.b32.xlu0 %v3274, 104
    %v4005 = vpop.permute.xlu0 %4004
    %4006 = vrot.lane.b32.xlu0 %v3279, 104
    %v4007 = vpop.permute.xlu0 %4006
    %4008 = vrot.lane.b32.xlu0 %v3269, 72
    %v4009 = vpop.permute.xlu0 %4008
    %4010 = vrot.lane.b32.xlu0 %v3274, 72
    %v4011 = vpop.permute.xlu0 %4010
    %4012 = vrot.lane.b32.xlu0 %v3279, 72
    %v4013 = vpop.permute.xlu0 %4012
    %v4014 = vsel %vm547, %v4003, 0
    %v4016 = vsel %vm547, %v4005, 0
    %v4018 = vsel %vm547, %v4007, 0
    %v4020 = vsel %vm547, %v4009, 0
    %v4022 = vsel %vm547, %v4011, 0
    %v4024 = vsel %vm547, %v4013, 0
    %4026 = vmatprep.subr.mxu0 0.0
    %4027 = vmatpush1.xpose.msra.mxu0 0.0
    %4028 = vmatprep.subr.mxu0 0.0
    %4029 = vmatpush1.xpose.msra.mxu0 0.0
    %4030 = vmatprep.subr.mxu0 0.0
    %4031 = vmatpush1.xpose.msra.mxu0 0.0
    %4032 = vmatprep.subr.mxu0 0.0
    %4033 = vmatpush1.xpose.msra.mxu0 0.0
    %4034 = vmatprep.subr.mxu0 0.0
    %4035 = vmatpush1.xpose.msra.mxu0 0.0
    %4036 = vmatprep.subr.mxu0 0.0
    %4037 = vmatpush1.xpose.msra.mxu0 0.0
    %4038 = vmatprep.subr.mxu0 0.0
    %4039 = vmatpush1.xpose.msra.mxu0 0.0
    %4040 = vmatprep.subr.mxu0 0.0
    %4041 = vmatpush1.xpose.msra.mxu0 0.0
    %4042 = vmatprep.subr.mxu0 0.0
    %4043 = vmatpush1.xpose.msra.mxu0 0.0
    %4044 = vmatprep.subr.mxu0 0.0
    %4045 = vmatpush1.xpose.msra.mxu0 0.0
    %4046 = vmatprep.subr.mxu0 0.0
    %4047 = vmatpush1.xpose.msra.mxu0 0.0
    %4048 = vmatprep.subr.mxu0 0.0
    %4049 = vmatpush1.xpose.msra.mxu0 0.0
    %4050 = vmatprep.subr.mxu0 0.0
    %4051 = vmatpush1.xpose.msra.mxu0 0.0
    %4052 = vmatprep.subr.mxu0 0.0
    %4053 = vmatpush1.xpose.msra.mxu0 %v4024
    %4054 = vmatprep.subr.mxu0 0.0
    %4055 = vmatpush1.xpose.msra.mxu0 %v4022
    %4056 = vmatprep.subr.mxu0 0.0
    %4057 = vmatpush1.xpose.msra.mxu0 %v4020
    %4058 = vmatprep.subr.mxu0 0.0
    %4059 = vmatpush2.xpose.msra.mxu0 0.0
    %4060 = vmatprep.subr.mxu0 0.0
    %4061 = vmatpush2.xpose.msra.mxu0 0.0
    %4062 = vmatprep.subr.mxu0 0.0
    %4063 = vmatpush2.xpose.msra.mxu0 0.0
    %4064 = vmatprep.subr.mxu0 0.0
    %4065 = vmatpush2.xpose.msra.mxu0 0.0
    %4066 = vmatprep.subr.mxu0 0.0
    %4067 = vmatpush2.xpose.msra.mxu0 0.0
    %4068 = vmatprep.subr.mxu0 0.0
    %4069 = vmatpush2.xpose.msra.mxu0 0.0
    %4070 = vmatprep.subr.mxu0 0.0
    %4071 = vmatpush2.xpose.msra.mxu0 0.0
    %4072 = vmatprep.subr.mxu0 0.0
    %4073 = vmatpush2.xpose.msra.mxu0 0.0
    %4074 = vmatprep.subr.mxu0 0.0
    %4075 = vmatpush2.xpose.msra.mxu0 0.0
    %4076 = vmatprep.subr.mxu0 0.0
    %4077 = vmatpush2.xpose.msra.mxu0 0.0
    %4078 = vmatprep.subr.mxu0 0.0
    %4079 = vmatpush2.xpose.msra.mxu0 0.0
    %4080 = vmatprep.subr.mxu0 0.0
    %4081 = vmatpush2.xpose.msra.mxu0 0.0
    %4082 = vmatprep.subr.mxu0 0.0
    %4083 = vmatpush2.xpose.msra.mxu0 0.0
    %4084 = vmatprep.subr.mxu0 0.0
    %4085 = vmatpush2.xpose.msra.mxu0 0.0
    %4086 = vmatprep.subr.mxu0 0.0
    %4087 = vmatpush2.xpose.msra.mxu0 0.0
    %4088 = vmatprep.subr.mxu0 0.0
    %4089 = vmatpush2.xpose.msra.mxu0 0.0
    %4090 = vmatprep.mubr.f32.mxu0 0.0
    %4091 = vmatmul.mubr.f32.gmra.mxu0 %v4014
    %v4092 = vpop.f32.mrf.mxu0
    %v4093 = vadd.f32 0.0, %v4092
    %v4094 = vpop.f32.mrf.mxu0
    %4095 = vmatprep.mubr.f32.mxu0 0.0
    %4096 = vmatmul.mubr.f32.gmra.mxu0 %v4016
    %v4097 = vpop.f32.mrf.mxu0
    %v4098 = vadd.f32 0.0, %v4097
    %v4099 = vpop.f32.mrf.mxu0
    %4100 = vmatprep.mubr.f32.mxu0 0.0
    %4101 = vmatmul.mubr.f32.gmra.mxu0 %v4018
    %v4102 = vpop.f32.mrf.mxu0
    %v4103 = vadd.f32 0.0, %v4102
    %v4104 = vpop.f32.mrf.mxu0
    %4105 = vdwg.mxu0
    %v4106 = vsel %vm640, %v4093, -inf
    %4107 = vmax.xlane.f32.xlu0 %v4106
    %v4108 = vpop.xlane.xlu0 %4107
    %v4109 = vsel %vm640, %v4098, -inf
    %4110 = vmax.xlane.f32.xlu0 %v4109
    %v4111 = vpop.xlane.xlu0 %4110
    %v4112 = vsel %vm647, %v4103, -inf
    %4113 = vmax.xlane.f32.xlu0 %v4112
    %v4114 = vpop.xlane.xlu0 %4113
    %v4115 = vsub.f32 %v4093, %v4108
    %v4116 = vsub.f32 %v4098, %v4111
    %v4117 = vsub.f32 %v4103, %v4114
    %v4118 = vmul.f32 %v4115, 1.442695
    %v4119 = vpow.pop %v4118
    %v4120 = vmul.f32 %v4116, 1.442695
    %v4121 = vpow.pop %v4120
    %v4122 = vmul.f32 %v4117, 1.442695
    %v4123 = vpow.pop %v4122
    %v4124 = vsel %vm640, %v4119, 0.0
    %4125 = vadd.xlane.f32.xlu0 %v4124
    %v4126 = vpop.xlane.xlu0 %4125
    %v4127 = vsel %vm640, %v4121, 0.0
    %4128 = vadd.xlane.f32.xlu0 %v4127
    %v4129 = vpop.xlane.xlu0 %4128
    %v4130 = vsel %vm647, %v4123, 0.0
    %4131 = vadd.xlane.f32.xlu0 %v4130
    %v4132 = vpop.xlane.xlu0 %4131
    %v4133 = vrcp.pop %v4126
    %v4134 = vrcp.pop %v4129
    %v4135 = vrcp.pop %v4132
    %v4136 = vmul.f32 %v4119, %v4133
    %v4137 = vmul.f32 %v4121, %v4134
    %v4138 = vmul.f32 %v4123, %v4135
    %4139 = vrot.lane.b32.xlu0 %v3269, 40
    %v4140 = vpop.permute.xlu0 %4139
    %4141 = vrot.lane.b32.xlu0 %v3274, 40
    %v4142 = vpop.permute.xlu0 %4141
    %4143 = vrot.lane.b32.xlu0 %v3279, 40
    %v4144 = vpop.permute.xlu0 %4143
    %v4148 = vsel %vm640, %v4136, 0
    %v4151 = vsel %vm640, %v4137, 0
    %v4154 = vsel %vm640, %v4138, 0
    %v4156 = vsel %vm692, %v4144, 0
    %4158 = vmatprep.subr.mxu0 0.0
    %4159 = vmatpush1.msra.mxu0 0.0
    %4160 = vmatprep.subr.mxu0 0.0
    %4161 = vmatpush1.msra.mxu0 0.0
    %4162 = vmatprep.subr.mxu0 0.0
    %4163 = vmatpush1.msra.mxu0 0.0
    %4164 = vmatprep.subr.mxu0 0.0
    %4165 = vmatpush1.msra.mxu0 0.0
    %4166 = vmatprep.subr.mxu0 0.0
    %4167 = vmatpush1.msra.mxu0 0.0
    %4168 = vmatprep.subr.mxu0 0.0
    %4169 = vmatpush1.msra.mxu0 0.0
    %4170 = vmatprep.subr.mxu0 0.0
    %4171 = vmatpush1.msra.mxu0 0.0
    %4172 = vmatprep.subr.mxu0 0.0
    %4173 = vmatpush1.msra.mxu0 0.0
    %4174 = vmatprep.subr.mxu0 0.0
    %4175 = vmatpush1.msra.mxu0 0.0
    %4176 = vmatprep.subr.mxu0 0.0
    %4177 = vmatpush1.msra.mxu0 0.0
    %4178 = vmatprep.subr.mxu0 0.0
    %4179 = vmatpush1.msra.mxu0 0.0
    %4180 = vmatprep.subr.mxu0 0.0
    %4181 = vmatpush1.msra.mxu0 0.0
    %4182 = vmatprep.subr.mxu0 0.0
    %4183 = vmatpush1.msra.mxu0 0.0
    %4184 = vmatprep.subr.mxu0 0.0
    %4185 = vmatpush1.msra.mxu0 %v4156
    %4186 = vmatprep.subr.mxu0 0.0
    %4187 = vmatpush1.msra.mxu0 %v4142
    %4188 = vmatprep.subr.mxu0 0.0
    %4189 = vmatpush1.msra.mxu0 %v4140
    %4190 = vmatprep.subr.mxu0 0.0
    %4191 = vmatpush2.msra.mxu0 0.0
    %4192 = vmatprep.subr.mxu0 0.0
    %4193 = vmatpush2.msra.mxu0 0.0
    %4194 = vmatprep.subr.mxu0 0.0
    %4195 = vmatpush2.msra.mxu0 0.0
    %4196 = vmatprep.subr.mxu0 0.0
    %4197 = vmatpush2.msra.mxu0 0.0
    %4198 = vmatprep.subr.mxu0 0.0
    %4199 = vmatpush2.msra.mxu0 0.0
    %4200 = vmatprep.subr.mxu0 0.0
    %4201 = vmatpush2.msra.mxu0 0.0
    %4202 = vmatprep.subr.mxu0 0.0
    %4203 = vmatpush2.msra.mxu0 0.0
    %4204 = vmatprep.subr.mxu0 0.0
    %4205 = vmatpush2.msra.mxu0 0.0
    %4206 = vmatprep.subr.mxu0 0.0
    %4207 = vmatpush2.msra.mxu0 0.0
    %4208 = vmatprep.subr.mxu0 0.0
    %4209 = vmatpush2.msra.mxu0 0.0
    %4210 = vmatprep.subr.mxu0 0.0
    %4211 = vmatpush2.msra.mxu0 0.0
    %4212 = vmatprep.subr.mxu0 0.0
    %4213 = vmatpush2.msra.mxu0 0.0
    %4214 = vmatprep.subr.mxu0 0.0
    %4215 = vmatpush2.msra.mxu0 0.0
    %4216 = vmatprep.subr.mxu0 0.0
    %4217 = vmatpush2.msra.mxu0 0.0
    %4218 = vmatprep.subr.mxu0 0.0
    %4219 = vmatpush2.msra.mxu0 0.0
    %4220 = vmatprep.subr.mxu0 0.0
    %4221 = vmatpush2.msra.mxu0 0.0
    %4222 = vmatprep.mubr.f32.mxu0 0.0
    %4223 = vmatmul.mubr.f32.gmra.mxu0 %v4148
    %v4224 = vpop.f32.mrf.mxu0
    %v4225 = vadd.f32 0.0, %v4224
    %v4226 = vpop.f32.mrf.mxu0
    %4227 = vmatprep.mubr.f32.mxu0 0.0
    %4228 = vmatmul.mubr.f32.gmra.mxu0 %v4151
    %v4229 = vpop.f32.mrf.mxu0
    %v4230 = vadd.f32 0.0, %v4229
    %v4231 = vpop.f32.mrf.mxu0
    %4232 = vmatprep.mubr.f32.mxu0 0.0
    %4233 = vmatmul.mubr.f32.gmra.mxu0 %v4154
    %v4234 = vpop.f32.mrf.mxu0
    %v4235 = vadd.f32 0.0, %v4234
    %v4236 = vpop.f32.mrf.mxu0
    %4237 = vdwg.mxu0
    %4241 = vrot.lane.b32.xlu0 %v3753, 8
    %v4242 = vpop.permute.xlu0 %4241
    %4243 = vrot.lane.b32.xlu0 %v3758, 8
    %v4244 = vpop.permute.xlu0 %4243
    %4245 = vrot.lane.b32.xlu0 %v3763, 8
    %v4246 = vpop.permute.xlu0 %4245
    %4253 = vrot.lane.b32.xlu0 %v3989, 16
    %v4254 = vpop.permute.xlu0 %4253
    %4255 = vrot.lane.b32.xlu0 %v3994, 16
    %v4256 = vpop.permute.xlu0 %4255
    %4257 = vrot.lane.b32.xlu0 %v3999, 16
    %v4258 = vpop.permute.xlu0 %4257
    %4265 = vrot.lane.b32.xlu0 %v4225, 24
    %v4266 = vpop.permute.xlu0 %4265
    %4267 = vrot.lane.b32.xlu0 %v4230, 24
    %v4268 = vpop.permute.xlu0 %4267
    %4269 = vrot.lane.b32.xlu0 %v4235, 24
    %v4270 = vpop.permute.xlu0 %4269
    %v4274 = vsel %vm547, %v3517, %v4242
    %v4275 = vsel %vm547, %v3522, %v4244
    %v4276 = vsel %vm547, %v3527, %v4246
    %v4277 = vsel %vm1522, %v4274, %v4254
    %v4278 = vsel %vm1522, %v4275, %v4256
    %v4279 = vsel %vm1522, %v4276, %v4258
    %v4280 = vsel %vm1526, %v4277, %v4266
    %v4281 = vsel %vm1526, %v4278, %v4268
    %v4282 = vsel %vm1526, %v4279, %v4270
    %4283 = vst.msk [vmem:[#allocation2] sm:$0xff] %vm200, %v4280
    %4284 = vst.msk [vmem:[#allocation2 + $0x8] sm:$0xff] %vm200, %v4281
    %4285 = vst.msk [vmem:[#allocation2 + $0x10] sm:$0x1] %vm1532, %v4282
    %4289 = vrot.lane.b32.xlu0 %v3284, 96
    %v4290 = vpop.permute.xlu0 %4289
    %4291 = vrot.lane.b32.xlu0 %v3289, 96
    %v4292 = vpop.permute.xlu0 %4291
    %4293 = vrot.lane.b32.xlu0 %v3294, 96
    %v4294 = vpop.permute.xlu0 %4293
    %v4295 = vsel %vm547, %v3284, 0
    %v4297 = vsel %vm547, %v3289, 0
    %v4299 = vsel %vm547, %v3294, 0
    %v4301 = vsel %vm547, %v4290, 0
    %v4303 = vsel %vm547, %v4292, 0
    %v4305 = vsel %vm547, %v4294, 0
    %4307 = vmatprep.subr.mxu0 0.0
    %4308 = vmatpush1.xpose.msra.mxu0 0.0
    %4309 = vmatprep.subr.mxu0 0.0
    %4310 = vmatpush1.xpose.msra.mxu0 0.0
    %4311 = vmatprep.subr.mxu0 0.0
    %4312 = vmatpush1.xpose.msra.mxu0 0.0
    %4313 = vmatprep.subr.mxu0 0.0
    %4314 = vmatpush1.xpose.msra.mxu0 0.0
    %4315 = vmatprep.subr.mxu0 0.0
    %4316 = vmatpush1.xpose.msra.mxu0 0.0
    %4317 = vmatprep.subr.mxu0 0.0
    %4318 = vmatpush1.xpose.msra.mxu0 0.0
    %4319 = vmatprep.subr.mxu0 0.0
    %4320 = vmatpush1.xpose.msra.mxu0 0.0
    %4321 = vmatprep.subr.mxu0 0.0
    %4322 = vmatpush1.xpose.msra.mxu0 0.0
    %4323 = vmatprep.subr.mxu0 0.0
    %4324 = vmatpush1.xpose.msra.mxu0 0.0
    %4325 = vmatprep.subr.mxu0 0.0
    %4326 = vmatpush1.xpose.msra.mxu0 0.0
    %4327 = vmatprep.subr.mxu0 0.0
    %4328 = vmatpush1.xpose.msra.mxu0 0.0
    %4329 = vmatprep.subr.mxu0 0.0
    %4330 = vmatpush1.xpose.msra.mxu0 0.0
    %4331 = vmatprep.subr.mxu0 0.0
    %4332 = vmatpush1.xpose.msra.mxu0 0.0
    %4333 = vmatprep.subr.mxu0 0.0
    %4334 = vmatpush1.xpose.msra.mxu0 %v4305
    %4335 = vmatprep.subr.mxu0 0.0
    %4336 = vmatpush1.xpose.msra.mxu0 %v4303
    %4337 = vmatprep.subr.mxu0 0.0
    %4338 = vmatpush1.xpose.msra.mxu0 %v4301
    %4339 = vmatprep.subr.mxu0 0.0
    %4340 = vmatpush2.xpose.msra.mxu0 0.0
    %4341 = vmatprep.subr.mxu0 0.0
    %4342 = vmatpush2.xpose.msra.mxu0 0.0
    %4343 = vmatprep.subr.mxu0 0.0
    %4344 = vmatpush2.xpose.msra.mxu0 0.0
    %4345 = vmatprep.subr.mxu0 0.0
    %4346 = vmatpush2.xpose.msra.mxu0 0.0
    %4347 = vmatprep.subr.mxu0 0.0
    %4348 = vmatpush2.xpose.msra.mxu0 0.0
    %4349 = vmatprep.subr.mxu0 0.0
    %4350 = vmatpush2.xpose.msra.mxu0 0.0
    %4351 = vmatprep.subr.mxu0 0.0
    %4352 = vmatpush2.xpose.msra.mxu0 0.0
    %4353 = vmatprep.subr.mxu0 0.0
    %4354 = vmatpush2.xpose.msra.mxu0 0.0
    %4355 = vmatprep.subr.mxu0 0.0
    %4356 = vmatpush2.xpose.msra.mxu0 0.0
    %4357 = vmatprep.subr.mxu0 0.0
    %4358 = vmatpush2.xpose.msra.mxu0 0.0
    %4359 = vmatprep.subr.mxu0 0.0
    %4360 = vmatpush2.xpose.msra.mxu0 0.0
    %4361 = vmatprep.subr.mxu0 0.0
    %4362 = vmatpush2.xpose.msra.mxu0 0.0
    %4363 = vmatprep.subr.mxu0 0.0
    %4364 = vmatpush2.xpose.msra.mxu0 0.0
    %4365 = vmatprep.subr.mxu0 0.0
    %4366 = vmatpush2.xpose.msra.mxu0 0.0
    %4367 = vmatprep.subr.mxu0 0.0
    %4368 = vmatpush2.xpose.msra.mxu0 0.0
    %4369 = vmatprep.subr.mxu0 0.0
    %4370 = vmatpush2.xpose.msra.mxu0 0.0
    %4371 = vmatprep.mubr.f32.mxu0 0.0
    %4372 = vmatmul.mubr.f32.gmra.mxu0 %v4295
    %v4373 = vpop.f32.mrf.mxu0
    %v4374 = vadd.f32 0.0, %v4373
    %v4375 = vpop.f32.mrf.mxu0
    %4376 = vmatprep.mubr.f32.mxu0 0.0
    %4377 = vmatmul.mubr.f32.gmra.mxu0 %v4297
    %v4378 = vpop.f32.mrf.mxu0
    %v4379 = vadd.f32 0.0, %v4378
    %v4380 = vpop.f32.mrf.mxu0
    %4381 = vmatprep.mubr.f32.mxu0 0.0
    %4382 = vmatmul.mubr.f32.gmra.mxu0 %v4299
    %v4383 = vpop.f32.mrf.mxu0
    %v4384 = vadd.f32 0.0, %v4383
    %v4385 = vpop.f32.mrf.mxu0
    %4386 = vdwg.mxu0
    %v4387 = vsel %vm640, %v4374, -inf
    %4388 = vmax.xlane.f32.xlu0 %v4387
    %v4389 = vpop.xlane.xlu0 %4388
    %v4390 = vsel %vm640, %v4379, -inf
    %4391 = vmax.xlane.f32.xlu0 %v4390
    %v4392 = vpop.xlane.xlu0 %4391
    %v4393 = vsel %vm647, %v4384, -inf
    %4394 = vmax.xlane.f32.xlu0 %v4393
    %v4395 = vpop.xlane.xlu0 %4394
    %v4396 = vsub.f32 %v4374, %v4389
    %v4397 = vsub.f32 %v4379, %v4392
    %v4398 = vsub.f32 %v4384, %v4395
    %v4399 = vmul.f32 %v4396, 1.442695
    %v4400 = vpow.pop %v4399
    %v4401 = vmul.f32 %v4397, 1.442695
    %v4402 = vpow.pop %v4401
    %v4403 = vmul.f32 %v4398, 1.442695
    %v4404 = vpow.pop %v4403
    %v4405 = vsel %vm640, %v4400, 0.0
    %4406 = vadd.xlane.f32.xlu0 %v4405
    %v4407 = vpop.xlane.xlu0 %4406
    %v4408 = vsel %vm640, %v4402, 0.0
    %4409 = vadd.xlane.f32.xlu0 %v4408
    %v4410 = vpop.xlane.xlu0 %4409
    %v4411 = vsel %vm647, %v4404, 0.0
    %4412 = vadd.xlane.f32.xlu0 %v4411
    %v4413 = vpop.xlane.xlu0 %4412
    %v4414 = vrcp.pop %v4407
    %v4415 = vrcp.pop %v4410
    %v4416 = vrcp.pop %v4413
    %v4417 = vmul.f32 %v4400, %v4414
    %v4418 = vmul.f32 %v4402, %v4415
    %v4419 = vmul.f32 %v4404, %v4416
    %4420 = vrot.lane.b32.xlu0 %v3284, 64
    %v4421 = vpop.permute.xlu0 %4420
    %4422 = vrot.lane.b32.xlu0 %v3289, 64
    %v4423 = vpop.permute.xlu0 %4422
    %4424 = vrot.lane.b32.xlu0 %v3294, 64
    %v4425 = vpop.permute.xlu0 %4424
    %v4429 = vsel %vm640, %v4417, 0
    %v4432 = vsel %vm640, %v4418, 0
    %v4435 = vsel %vm640, %v4419, 0
    %v4437 = vsel %vm692, %v4425, 0
    %4439 = vmatprep.subr.mxu0 0.0
    %4440 = vmatpush1.msra.mxu0 0.0
    %4441 = vmatprep.subr.mxu0 0.0
    %4442 = vmatpush1.msra.mxu0 0.0
    %4443 = vmatprep.subr.mxu0 0.0
    %4444 = vmatpush1.msra.mxu0 0.0
    %4445 = vmatprep.subr.mxu0 0.0
    %4446 = vmatpush1.msra.mxu0 0.0
    %4447 = vmatprep.subr.mxu0 0.0
    %4448 = vmatpush1.msra.mxu0 0.0
    %4449 = vmatprep.subr.mxu0 0.0
    %4450 = vmatpush1.msra.mxu0 0.0
    %4451 = vmatprep.subr.mxu0 0.0
    %4452 = vmatpush1.msra.mxu0 0.0
    %4453 = vmatprep.subr.mxu0 0.0
    %4454 = vmatpush1.msra.mxu0 0.0
    %4455 = vmatprep.subr.mxu0 0.0
    %4456 = vmatpush1.msra.mxu0 0.0
    %4457 = vmatprep.subr.mxu0 0.0
    %4458 = vmatpush1.msra.mxu0 0.0
    %4459 = vmatprep.subr.mxu0 0.0
    %4460 = vmatpush1.msra.mxu0 0.0
    %4461 = vmatprep.subr.mxu0 0.0
    %4462 = vmatpush1.msra.mxu0 0.0
    %4463 = vmatprep.subr.mxu0 0.0
    %4464 = vmatpush1.msra.mxu0 0.0
    %4465 = vmatprep.subr.mxu0 0.0
    %4466 = vmatpush1.msra.mxu0 %v4437
    %4467 = vmatprep.subr.mxu0 0.0
    %4468 = vmatpush1.msra.mxu0 %v4423
    %4469 = vmatprep.subr.mxu0 0.0
    %4470 = vmatpush1.msra.mxu0 %v4421
    %4471 = vmatprep.subr.mxu0 0.0
    %4472 = vmatpush2.msra.mxu0 0.0
    %4473 = vmatprep.subr.mxu0 0.0
    %4474 = vmatpush2.msra.mxu0 0.0
    %4475 = vmatprep.subr.mxu0 0.0
    %4476 = vmatpush2.msra.mxu0 0.0
    %4477 = vmatprep.subr.mxu0 0.0
    %4478 = vmatpush2.msra.mxu0 0.0
    %4479 = vmatprep.subr.mxu0 0.0
    %4480 = vmatpush2.msra.mxu0 0.0
    %4481 = vmatprep.subr.mxu0 0.0
    %4482 = vmatpush2.msra.mxu0 0.0
    %4483 = vmatprep.subr.mxu0 0.0
    %4484 = vmatpush2.msra.mxu0 0.0
    %4485 = vmatprep.subr.mxu0 0.0
    %4486 = vmatpush2.msra.mxu0 0.0
    %4487 = vmatprep.subr.mxu0 0.0
    %4488 = vmatpush2.msra.mxu0 0.0
    %4489 = vmatprep.subr.mxu0 0.0
    %4490 = vmatpush2.msra.mxu0 0.0
    %4491 = vmatprep.subr.mxu0 0.0
    %4492 = vmatpush2.msra.mxu0 0.0
    %4493 = vmatprep.subr.mxu0 0.0
    %4494 = vmatpush2.msra.mxu0 0.0
    %4495 = vmatprep.subr.mxu0 0.0
    %4496 = vmatpush2.msra.mxu0 0.0
    %4497 = vmatprep.subr.mxu0 0.0
    %4498 = vmatpush2.msra.mxu0 0.0
    %4499 = vmatprep.subr.mxu0 0.0
    %4500 = vmatpush2.msra.mxu0 0.0
    %4501 = vmatprep.subr.mxu0 0.0
    %4502 = vmatpush2.msra.mxu0 0.0
    %4503 = vmatprep.mubr.f32.mxu0 0.0
    %4504 = vmatmul.mubr.f32.gmra.mxu0 %v4429
    %v4505 = vpop.f32.mrf.mxu0
    %v4506 = vadd.f32 0.0, %v4505
    %v4507 = vpop.f32.mrf.mxu0
    %4508 = vmatprep.mubr.f32.mxu0 0.0
    %4509 = vmatmul.mubr.f32.gmra.mxu0 %v4432
    %v4510 = vpop.f32.mrf.mxu0
    %v4511 = vadd.f32 0.0, %v4510
    %v4512 = vpop.f32.mrf.mxu0
    %4513 = vmatprep.mubr.f32.mxu0 0.0
    %4514 = vmatmul.mubr.f32.gmra.mxu0 %v4435
    %v4515 = vpop.f32.mrf.mxu0
    %v4516 = vadd.f32 0.0, %v4515
    %v4517 = vpop.f32.mrf.mxu0
    %4518 = vdwg.mxu0
    %4519 = vrot.lane.b32.xlu0 %v3284, 120
    %v4520 = vpop.permute.xlu0 %4519
    %4521 = vrot.lane.b32.xlu0 %v3289, 120
    %v4522 = vpop.permute.xlu0 %4521
    %4523 = vrot.lane.b32.xlu0 %v3294, 120
    %v4524 = vpop.permute.xlu0 %4523
    %4525 = vrot.lane.b32.xlu0 %v3284, 88
    %v4526 = vpop.permute.xlu0 %4525
    %4527 = vrot.lane.b32.xlu0 %v3289, 88
    %v4528 = vpop.permute.xlu0 %4527
    %4529 = vrot.lane.b32.xlu0 %v3294, 88
    %v4530 = vpop.permute.xlu0 %4529
    %v4531 = vsel %vm547, %v4520, 0
    %v4533 = vsel %vm547, %v4522, 0
    %v4535 = vsel %vm547, %v4524, 0
    %v4537 = vsel %vm547, %v4526, 0
    %v4539 = vsel %vm547, %v4528, 0
    %v4541 = vsel %vm547, %v4530, 0
    %4543 = vmatprep.subr.mxu0 0.0
    %4544 = vmatpush1.xpose.msra.mxu0 0.0
    %4545 = vmatprep.subr.mxu0 0.0
    %4546 = vmatpush1.xpose.msra.mxu0 0.0
    %4547 = vmatprep.subr.mxu0 0.0
    %4548 = vmatpush1.xpose.msra.mxu0 0.0
    %4549 = vmatprep.subr.mxu0 0.0
    %4550 = vmatpush1.xpose.msra.mxu0 0.0
    %4551 = vmatprep.subr.mxu0 0.0
    %4552 = vmatpush1.xpose.msra.mxu0 0.0
    %4553 = vmatprep.subr.mxu0 0.0
    %4554 = vmatpush1.xpose.msra.mxu0 0.0
    %4555 = vmatprep.subr.mxu0 0.0
    %4556 = vmatpush1.xpose.msra.mxu0 0.0
    %4557 = vmatprep.subr.mxu0 0.0
    %4558 = vmatpush1.xpose.msra.mxu0 0.0
    %4559 = vmatprep.subr.mxu0 0.0
    %4560 = vmatpush1.xpose.msra.mxu0 0.0
    %4561 = vmatprep.subr.mxu0 0.0
    %4562 = vmatpush1.xpose.msra.mxu0 0.0
    %4563 = vmatprep.subr.mxu0 0.0
    %4564 = vmatpush1.xpose.msra.mxu0 0.0
    %4565 = vmatprep.subr.mxu0 0.0
    %4566 = vmatpush1.xpose.msra.mxu0 0.0
    %4567 = vmatprep.subr.mxu0 0.0
    %4568 = vmatpush1.xpose.msra.mxu0 0.0
    %4569 = vmatprep.subr.mxu0 0.0
    %4570 = vmatpush1.xpose.msra.mxu0 %v4541
    %4571 = vmatprep.subr.mxu0 0.0
    %4572 = vmatpush1.xpose.msra.mxu0 %v4539
    %4573 = vmatprep.subr.mxu0 0.0
    %4574 = vmatpush1.xpose.msra.mxu0 %v4537
    %4575 = vmatprep.subr.mxu0 0.0
    %4576 = vmatpush2.xpose.msra.mxu0 0.0
    %4577 = vmatprep.subr.mxu0 0.0
    %4578 = vmatpush2.xpose.msra.mxu0 0.0
    %4579 = vmatprep.subr.mxu0 0.0
    %4580 = vmatpush2.xpose.msra.mxu0 0.0
    %4581 = vmatprep.subr.mxu0 0.0
    %4582 = vmatpush2.xpose.msra.mxu0 0.0
    %4583 = vmatprep.subr.mxu0 0.0
    %4584 = vmatpush2.xpose.msra.mxu0 0.0
    %4585 = vmatprep.subr.mxu0 0.0
    %4586 = vmatpush2.xpose.msra.mxu0 0.0
    %4587 = vmatprep.subr.mxu0 0.0
    %4588 = vmatpush2.xpose.msra.mxu0 0.0
    %4589 = vmatprep.subr.mxu0 0.0
    %4590 = vmatpush2.xpose.msra.mxu0 0.0
    %4591 = vmatprep.subr.mxu0 0.0
    %4592 = vmatpush2.xpose.msra.mxu0 0.0
    %4593 = vmatprep.subr.mxu0 0.0
    %4594 = vmatpush2.xpose.msra.mxu0 0.0
    %4595 = vmatprep.subr.mxu0 0.0
    %4596 = vmatpush2.xpose.msra.mxu0 0.0
    %4597 = vmatprep.subr.mxu0 0.0
    %4598 = vmatpush2.xpose.msra.mxu0 0.0
    %4599 = vmatprep.subr.mxu0 0.0
    %4600 = vmatpush2.xpose.msra.mxu0 0.0
    %4601 = vmatprep.subr.mxu0 0.0
    %4602 = vmatpush2.xpose.msra.mxu0 0.0
    %4603 = vmatprep.subr.mxu0 0.0
    %4604 = vmatpush2.xpose.msra.mxu0 0.0
    %4605 = vmatprep.subr.mxu0 0.0
    %4606 = vmatpush2.xpose.msra.mxu0 0.0
    %4607 = vmatprep.mubr.f32.mxu0 0.0
    %4608 = vmatmul.mubr.f32.gmra.mxu0 %v4531
    %v4609 = vpop.f32.mrf.mxu0
    %v4610 = vadd.f32 0.0, %v4609
    %v4611 = vpop.f32.mrf.mxu0
    %4612 = vmatprep.mubr.f32.mxu0 0.0
    %4613 = vmatmul.mubr.f32.gmra.mxu0 %v4533
    %v4614 = vpop.f32.mrf.mxu0
    %v4615 = vadd.f32 0.0, %v4614
    %v4616 = vpop.f32.mrf.mxu0
    %4617 = vmatprep.mubr.f32.mxu0 0.0
    %4618 = vmatmul.mubr.f32.gmra.mxu0 %v4535
    %v4619 = vpop.f32.mrf.mxu0
    %v4620 = vadd.f32 0.0, %v4619
    %v4621 = vpop.f32.mrf.mxu0
    %4622 = vdwg.mxu0
    %v4623 = vsel %vm640, %v4610, -inf
    %4624 = vmax.xlane.f32.xlu0 %v4623
    %v4625 = vpop.xlane.xlu0 %4624
    %v4626 = vsel %vm640, %v4615, -inf
    %4627 = vmax.xlane.f32.xlu0 %v4626
    %v4628 = vpop.xlane.xlu0 %4627
    %v4629 = vsel %vm647, %v4620, -inf
    %4630 = vmax.xlane.f32.xlu0 %v4629
    %v4631 = vpop.xlane.xlu0 %4630
    %v4632 = vsub.f32 %v4610, %v4625
    %v4633 = vsub.f32 %v4615, %v4628
    %v4634 = vsub.f32 %v4620, %v4631
    %v4635 = vmul.f32 %v4632, 1.442695
    %v4636 = vpow.pop %v4635
    %v4637 = vmul.f32 %v4633, 1.442695
    %v4638 = vpow.pop %v4637
    %v4639 = vmul.f32 %v4634, 1.442695
    %v4640 = vpow.pop %v4639
    %v4641 = vsel %vm640, %v4636, 0.0
    %4642 = vadd.xlane.f32.xlu0 %v4641
    %v4643 = vpop.xlane.xlu0 %4642
    %v4644 = vsel %vm640, %v4638, 0.0
    %4645 = vadd.xlane.f32.xlu0 %v4644
    %v4646 = vpop.xlane.xlu0 %4645
    %v4647 = vsel %vm647, %v4640, 0.0
    %4648 = vadd.xlane.f32.xlu0 %v4647
    %v4649 = vpop.xlane.xlu0 %4648
    %v4650 = vrcp.pop %v4643
    %v4651 = vrcp.pop %v4646
    %v4652 = vrcp.pop %v4649
    %v4653 = vmul.f32 %v4636, %v4650
    %v4654 = vmul.f32 %v4638, %v4651
    %v4655 = vmul.f32 %v4640, %v4652
    %4656 = vrot.lane.b32.xlu0 %v3284, 56
    %v4657 = vpop.permute.xlu0 %4656
    %4658 = vrot.lane.b32.xlu0 %v3289, 56
    %v4659 = vpop.permute.xlu0 %4658
    %4660 = vrot.lane.b32.xlu0 %v3294, 56
    %v4661 = vpop.permute.xlu0 %4660
    %v4665 = vsel %vm640, %v4653, 0
    %v4668 = vsel %vm640, %v4654, 0
    %v4671 = vsel %vm640, %v4655, 0
    %v4673 = vsel %vm692, %v4661, 0
    %4675 = vmatprep.subr.mxu0 0.0
    %4676 = vmatpush1.msra.mxu0 0.0
    %4677 = vmatprep.subr.mxu0 0.0
    %4678 = vmatpush1.msra.mxu0 0.0
    %4679 = vmatprep.subr.mxu0 0.0
    %4680 = vmatpush1.msra.mxu0 0.0
    %4681 = vmatprep.subr.mxu0 0.0
    %4682 = vmatpush1.msra.mxu0 0.0
    %4683 = vmatprep.subr.mxu0 0.0
    %4684 = vmatpush1.msra.mxu0 0.0
    %4685 = vmatprep.subr.mxu0 0.0
    %4686 = vmatpush1.msra.mxu0 0.0
    %4687 = vmatprep.subr.mxu0 0.0
    %4688 = vmatpush1.msra.mxu0 0.0
    %4689 = vmatprep.subr.mxu0 0.0
    %4690 = vmatpush1.msra.mxu0 0.0
    %4691 = vmatprep.subr.mxu0 0.0
    %4692 = vmatpush1.msra.mxu0 0.0
    %4693 = vmatprep.subr.mxu0 0.0
    %4694 = vmatpush1.msra.mxu0 0.0
    %4695 = vmatprep.subr.mxu0 0.0
    %4696 = vmatpush1.msra.mxu0 0.0
    %4697 = vmatprep.subr.mxu0 0.0
    %4698 = vmatpush1.msra.mxu0 0.0
    %4699 = vmatprep.subr.mxu0 0.0
    %4700 = vmatpush1.msra.mxu0 0.0
    %4701 = vmatprep.subr.mxu0 0.0
    %4702 = vmatpush1.msra.mxu0 %v4673
    %4703 = vmatprep.subr.mxu0 0.0
    %4704 = vmatpush1.msra.mxu0 %v4659
    %4705 = vmatprep.subr.mxu0 0.0
    %4706 = vmatpush1.msra.mxu0 %v4657
    %4707 = vmatprep.subr.mxu0 0.0
    %4708 = vmatpush2.msra.mxu0 0.0
    %4709 = vmatprep.subr.mxu0 0.0
    %4710 = vmatpush2.msra.mxu0 0.0
    %4711 = vmatprep.subr.mxu0 0.0
    %4712 = vmatpush2.msra.mxu0 0.0
    %4713 = vmatprep.subr.mxu0 0.0
    %4714 = vmatpush2.msra.mxu0 0.0
    %4715 = vmatprep.subr.mxu0 0.0
    %4716 = vmatpush2.msra.mxu0 0.0
    %4717 = vmatprep.subr.mxu0 0.0
    %4718 = vmatpush2.msra.mxu0 0.0
    %4719 = vmatprep.subr.mxu0 0.0
    %4720 = vmatpush2.msra.mxu0 0.0
    %4721 = vmatprep.subr.mxu0 0.0
    %4722 = vmatpush2.msra.mxu0 0.0
    %4723 = vmatprep.subr.mxu0 0.0
    %4724 = vmatpush2.msra.mxu0 0.0
    %4725 = vmatprep.subr.mxu0 0.0
    %4726 = vmatpush2.msra.mxu0 0.0
    %4727 = vmatprep.subr.mxu0 0.0
    %4728 = vmatpush2.msra.mxu0 0.0
    %4729 = vmatprep.subr.mxu0 0.0
    %4730 = vmatpush2.msra.mxu0 0.0
    %4731 = vmatprep.subr.mxu0 0.0
    %4732 = vmatpush2.msra.mxu0 0.0
    %4733 = vmatprep.subr.mxu0 0.0
    %4734 = vmatpush2.msra.mxu0 0.0
    %4735 = vmatprep.subr.mxu0 0.0
    %4736 = vmatpush2.msra.mxu0 0.0
    %4737 = vmatprep.subr.mxu0 0.0
    %4738 = vmatpush2.msra.mxu0 0.0
    %4739 = vmatprep.mubr.f32.mxu0 0.0
    %4740 = vmatmul.mubr.f32.gmra.mxu0 %v4665
    %v4741 = vpop.f32.mrf.mxu0
    %v4742 = vadd.f32 0.0, %v4741
    %v4743 = vpop.f32.mrf.mxu0
    %4744 = vmatprep.mubr.f32.mxu0 0.0
    %4745 = vmatmul.mubr.f32.gmra.mxu0 %v4668
    %v4746 = vpop.f32.mrf.mxu0
    %v4747 = vadd.f32 0.0, %v4746
    %v4748 = vpop.f32.mrf.mxu0
    %4749 = vmatprep.mubr.f32.mxu0 0.0
    %4750 = vmatmul.mubr.f32.gmra.mxu0 %v4671
    %v4751 = vpop.f32.mrf.mxu0
    %v4752 = vadd.f32 0.0, %v4751
    %v4753 = vpop.f32.mrf.mxu0
    %4754 = vdwg.mxu0
    %4755 = vrot.lane.b32.xlu0 %v3284, 112
    %v4756 = vpop.permute.xlu0 %4755
    %4757 = vrot.lane.b32.xlu0 %v3289, 112
    %v4758 = vpop.permute.xlu0 %4757
    %4759 = vrot.lane.b32.xlu0 %v3294, 112
    %v4760 = vpop.permute.xlu0 %4759
    %4761 = vrot.lane.b32.xlu0 %v3284, 80
    %v4762 = vpop.permute.xlu0 %4761
    %4763 = vrot.lane.b32.xlu0 %v3289, 80
    %v4764 = vpop.permute.xlu0 %4763
    %4765 = vrot.lane.b32.xlu0 %v3294, 80
    %v4766 = vpop.permute.xlu0 %4765
    %v4767 = vsel %vm547, %v4756, 0
    %v4769 = vsel %vm547, %v4758, 0
    %v4771 = vsel %vm547, %v4760, 0
    %v4773 = vsel %vm547, %v4762, 0
    %v4775 = vsel %vm547, %v4764, 0
    %v4777 = vsel %vm547, %v4766, 0
    %4779 = vmatprep.subr.mxu0 0.0
    %4780 = vmatpush1.xpose.msra.mxu0 0.0
    %4781 = vmatprep.subr.mxu0 0.0
    %4782 = vmatpush1.xpose.msra.mxu0 0.0
    %4783 = vmatprep.subr.mxu0 0.0
    %4784 = vmatpush1.xpose.msra.mxu0 0.0
    %4785 = vmatprep.subr.mxu0 0.0
    %4786 = vmatpush1.xpose.msra.mxu0 0.0
    %4787 = vmatprep.subr.mxu0 0.0
    %4788 = vmatpush1.xpose.msra.mxu0 0.0
    %4789 = vmatprep.subr.mxu0 0.0
    %4790 = vmatpush1.xpose.msra.mxu0 0.0
    %4791 = vmatprep.subr.mxu0 0.0
    %4792 = vmatpush1.xpose.msra.mxu0 0.0
    %4793 = vmatprep.subr.mxu0 0.0
    %4794 = vmatpush1.xpose.msra.mxu0 0.0
    %4795 = vmatprep.subr.mxu0 0.0
    %4796 = vmatpush1.xpose.msra.mxu0 0.0
    %4797 = vmatprep.subr.mxu0 0.0
    %4798 = vmatpush1.xpose.msra.mxu0 0.0
    %4799 = vmatprep.subr.mxu0 0.0
    %4800 = vmatpush1.xpose.msra.mxu0 0.0
    %4801 = vmatprep.subr.mxu0 0.0
    %4802 = vmatpush1.xpose.msra.mxu0 0.0
    %4803 = vmatprep.subr.mxu0 0.0
    %4804 = vmatpush1.xpose.msra.mxu0 0.0
    %4805 = vmatprep.subr.mxu0 0.0
    %4806 = vmatpush1.xpose.msra.mxu0 %v4777
    %4807 = vmatprep.subr.mxu0 0.0
    %4808 = vmatpush1.xpose.msra.mxu0 %v4775
    %4809 = vmatprep.subr.mxu0 0.0
    %4810 = vmatpush1.xpose.msra.mxu0 %v4773
    %4811 = vmatprep.subr.mxu0 0.0
    %4812 = vmatpush2.xpose.msra.mxu0 0.0
    %4813 = vmatprep.subr.mxu0 0.0
    %4814 = vmatpush2.xpose.msra.mxu0 0.0
    %4815 = vmatprep.subr.mxu0 0.0
    %4816 = vmatpush2.xpose.msra.mxu0 0.0
    %4817 = vmatprep.subr.mxu0 0.0
    %4818 = vmatpush2.xpose.msra.mxu0 0.0
    %4819 = vmatprep.subr.mxu0 0.0
    %4820 = vmatpush2.xpose.msra.mxu0 0.0
    %4821 = vmatprep.subr.mxu0 0.0
    %4822 = vmatpush2.xpose.msra.mxu0 0.0
    %4823 = vmatprep.subr.mxu0 0.0
    %4824 = vmatpush2.xpose.msra.mxu0 0.0
    %4825 = vmatprep.subr.mxu0 0.0
    %4826 = vmatpush2.xpose.msra.mxu0 0.0
    %4827 = vmatprep.subr.mxu0 0.0
    %4828 = vmatpush2.xpose.msra.mxu0 0.0
    %4829 = vmatprep.subr.mxu0 0.0
    %4830 = vmatpush2.xpose.msra.mxu0 0.0
    %4831 = vmatprep.subr.mxu0 0.0
    %4832 = vmatpush2.xpose.msra.mxu0 0.0
    %4833 = vmatprep.subr.mxu0 0.0
    %4834 = vmatpush2.xpose.msra.mxu0 0.0
    %4835 = vmatprep.subr.mxu0 0.0
    %4836 = vmatpush2.xpose.msra.mxu0 0.0
    %4837 = vmatprep.subr.mxu0 0.0
    %4838 = vmatpush2.xpose.msra.mxu0 0.0
    %4839 = vmatprep.subr.mxu0 0.0
    %4840 = vmatpush2.xpose.msra.mxu0 0.0
    %4841 = vmatprep.subr.mxu0 0.0
    %4842 = vmatpush2.xpose.msra.mxu0 0.0
    %4843 = vmatprep.mubr.f32.mxu0 0.0
    %4844 = vmatmul.mubr.f32.gmra.mxu0 %v4767
    %v4845 = vpop.f32.mrf.mxu0
    %v4846 = vadd.f32 0.0, %v4845
    %v4847 = vpop.f32.mrf.mxu0
    %4848 = vmatprep.mubr.f32.mxu0 0.0
    %4849 = vmatmul.mubr.f32.gmra.mxu0 %v4769
    %v4850 = vpop.f32.mrf.mxu0
    %v4851 = vadd.f32 0.0, %v4850
    %v4852 = vpop.f32.mrf.mxu0
    %4853 = vmatprep.mubr.f32.mxu0 0.0
    %4854 = vmatmul.mubr.f32.gmra.mxu0 %v4771
    %v4855 = vpop.f32.mrf.mxu0
    %v4856 = vadd.f32 0.0, %v4855
    %v4857 = vpop.f32.mrf.mxu0
    %4858 = vdwg.mxu0
    %v4859 = vsel %vm640, %v4846, -inf
    %4860 = vmax.xlane.f32.xlu0 %v4859
    %v4861 = vpop.xlane.xlu0 %4860
    %v4862 = vsel %vm640, %v4851, -inf
    %4863 = vmax.xlane.f32.xlu0 %v4862
    %v4864 = vpop.xlane.xlu0 %4863
    %v4865 = vsel %vm647, %v4856, -inf
    %4866 = vmax.xlane.f32.xlu0 %v4865
    %v4867 = vpop.xlane.xlu0 %4866
    %v4868 = vsub.f32 %v4846, %v4861
    %v4869 = vsub.f32 %v4851, %v4864
    %v4870 = vsub.f32 %v4856, %v4867
    %v4871 = vmul.f32 %v4868, 1.442695
    %v4872 = vpow.pop %v4871
    %v4873 = vmul.f32 %v4869, 1.442695
    %v4874 = vpow.pop %v4873
    %v4875 = vmul.f32 %v4870, 1.442695
    %v4876 = vpow.pop %v4875
    %v4877 = vsel %vm640, %v4872, 0.0
    %4878 = vadd.xlane.f32.xlu0 %v4877
    %v4879 = vpop.xlane.xlu0 %4878
    %v4880 = vsel %vm640, %v4874, 0.0
    %4881 = vadd.xlane.f32.xlu0 %v4880
    %v4882 = vpop.xlane.xlu0 %4881
    %v4883 = vsel %vm647, %v4876, 0.0
    %4884 = vadd.xlane.f32.xlu0 %v4883
    %v4885 = vpop.xlane.xlu0 %4884
    %v4886 = vrcp.pop %v4879
    %v4887 = vrcp.pop %v4882
    %v4888 = vrcp.pop %v4885
    %v4889 = vmul.f32 %v4872, %v4886
    %v4890 = vmul.f32 %v4874, %v4887
    %v4891 = vmul.f32 %v4876, %v4888
    %4892 = vrot.lane.b32.xlu0 %v3284, 48
    %v4893 = vpop.permute.xlu0 %4892
    %4894 = vrot.lane.b32.xlu0 %v3289, 48
    %v4895 = vpop.permute.xlu0 %4894
    %4896 = vrot.lane.b32.xlu0 %v3294, 48
    %v4897 = vpop.permute.xlu0 %4896
    %v4901 = vsel %vm640, %v4889, 0
    %v4904 = vsel %vm640, %v4890, 0
    %v4907 = vsel %vm640, %v4891, 0
    %v4909 = vsel %vm692, %v4897, 0
    %4911 = vmatprep.subr.mxu0 0.0
    %4912 = vmatpush1.msra.mxu0 0.0
    %4913 = vmatprep.subr.mxu0 0.0
    %4914 = vmatpush1.msra.mxu0 0.0
    %4915 = vmatprep.subr.mxu0 0.0
    %4916 = vmatpush1.msra.mxu0 0.0
    %4917 = vmatprep.subr.mxu0 0.0
    %4918 = vmatpush1.msra.mxu0 0.0
    %4919 = vmatprep.subr.mxu0 0.0
    %4920 = vmatpush1.msra.mxu0 0.0
    %4921 = vmatprep.subr.mxu0 0.0
    %4922 = vmatpush1.msra.mxu0 0.0
    %4923 = vmatprep.subr.mxu0 0.0
    %4924 = vmatpush1.msra.mxu0 0.0
    %4925 = vmatprep.subr.mxu0 0.0
    %4926 = vmatpush1.msra.mxu0 0.0
    %4927 = vmatprep.subr.mxu0 0.0
    %4928 = vmatpush1.msra.mxu0 0.0
    %4929 = vmatprep.subr.mxu0 0.0
    %4930 = vmatpush1.msra.mxu0 0.0
    %4931 = vmatprep.subr.mxu0 0.0
    %4932 = vmatpush1.msra.mxu0 0.0
    %4933 = vmatprep.subr.mxu0 0.0
    %4934 = vmatpush1.msra.mxu0 0.0
    %4935 = vmatprep.subr.mxu0 0.0
    %4936 = vmatpush1.msra.mxu0 0.0
    %4937 = vmatprep.subr.mxu0 0.0
    %4938 = vmatpush1.msra.mxu0 %v4909
    %4939 = vmatprep.subr.mxu0 0.0
    %4940 = vmatpush1.msra.mxu0 %v4895
    %4941 = vmatprep.subr.mxu0 0.0
    %4942 = vmatpush1.msra.mxu0 %v4893
    %4943 = vmatprep.subr.mxu0 0.0
    %4944 = vmatpush2.msra.mxu0 0.0
    %4945 = vmatprep.subr.mxu0 0.0
    %4946 = vmatpush2.msra.mxu0 0.0
    %4947 = vmatprep.subr.mxu0 0.0
    %4948 = vmatpush2.msra.mxu0 0.0
    %4949 = vmatprep.subr.mxu0 0.0
    %4950 = vmatpush2.msra.mxu0 0.0
    %4951 = vmatprep.subr.mxu0 0.0
    %4952 = vmatpush2.msra.mxu0 0.0
    %4953 = vmatprep.subr.mxu0 0.0
    %4954 = vmatpush2.msra.mxu0 0.0
    %4955 = vmatprep.subr.mxu0 0.0
    %4956 = vmatpush2.msra.mxu0 0.0
    %4957 = vmatprep.subr.mxu0 0.0
    %4958 = vmatpush2.msra.mxu0 0.0
    %4959 = vmatprep.subr.mxu0 0.0
    %4960 = vmatpush2.msra.mxu0 0.0
    %4961 = vmatprep.subr.mxu0 0.0
    %4962 = vmatpush2.msra.mxu0 0.0
    %4963 = vmatprep.subr.mxu0 0.0
    %4964 = vmatpush2.msra.mxu0 0.0
    %4965 = vmatprep.subr.mxu0 0.0
    %4966 = vmatpush2.msra.mxu0 0.0
    %4967 = vmatprep.subr.mxu0 0.0
    %4968 = vmatpush2.msra.mxu0 0.0
    %4969 = vmatprep.subr.mxu0 0.0
    %4970 = vmatpush2.msra.mxu0 0.0
    %4971 = vmatprep.subr.mxu0 0.0
    %4972 = vmatpush2.msra.mxu0 0.0
    %4973 = vmatprep.subr.mxu0 0.0
    %4974 = vmatpush2.msra.mxu0 0.0
    %4975 = vmatprep.mubr.f32.mxu0 0.0
    %4976 = vmatmul.mubr.f32.gmra.mxu0 %v4901
    %v4977 = vpop.f32.mrf.mxu0
    %v4978 = vadd.f32 0.0, %v4977
    %v4979 = vpop.f32.mrf.mxu0
    %4980 = vmatprep.mubr.f32.mxu0 0.0
    %4981 = vmatmul.mubr.f32.gmra.mxu0 %v4904
    %v4982 = vpop.f32.mrf.mxu0
    %v4983 = vadd.f32 0.0, %v4982
    %v4984 = vpop.f32.mrf.mxu0
    %4985 = vmatprep.mubr.f32.mxu0 0.0
    %4986 = vmatmul.mubr.f32.gmra.mxu0 %v4907
    %v4987 = vpop.f32.mrf.mxu0
    %v4988 = vadd.f32 0.0, %v4987
    %v4989 = vpop.f32.mrf.mxu0
    %4990 = vdwg.mxu0
    %4991 = vrot.lane.b32.xlu0 %v3284, 104
    %v4992 = vpop.permute.xlu0 %4991
    %4993 = vrot.lane.b32.xlu0 %v3289, 104
    %v4994 = vpop.permute.xlu0 %4993
    %4995 = vrot.lane.b32.xlu0 %v3294, 104
    %v4996 = vpop.permute.xlu0 %4995
    %4997 = vrot.lane.b32.xlu0 %v3284, 72
    %v4998 = vpop.permute.xlu0 %4997
    %4999 = vrot.lane.b32.xlu0 %v3289, 72
    %v5000 = vpop.permute.xlu0 %4999
    %5001 = vrot.lane.b32.xlu0 %v3294, 72
    %v5002 = vpop.permute.xlu0 %5001
    %v5003 = vsel %vm547, %v4992, 0
    %v5005 = vsel %vm547, %v4994, 0
    %v5007 = vsel %vm547, %v4996, 0
    %v5009 = vsel %vm547, %v4998, 0
    %v5011 = vsel %vm547, %v5000, 0
    %v5013 = vsel %vm547, %v5002, 0
    %5015 = vmatprep.subr.mxu0 0.0
    %5016 = vmatpush1.xpose.msra.mxu0 0.0
    %5017 = vmatprep.subr.mxu0 0.0
    %5018 = vmatpush1.xpose.msra.mxu0 0.0
    %5019 = vmatprep.subr.mxu0 0.0
    %5020 = vmatpush1.xpose.msra.mxu0 0.0
    %5021 = vmatprep.subr.mxu0 0.0
    %5022 = vmatpush1.xpose.msra.mxu0 0.0
    %5023 = vmatprep.subr.mxu0 0.0
    %5024 = vmatpush1.xpose.msra.mxu0 0.0
    %5025 = vmatprep.subr.mxu0 0.0
    %5026 = vmatpush1.xpose.msra.mxu0 0.0
    %5027 = vmatprep.subr.mxu0 0.0
    %5028 = vmatpush1.xpose.msra.mxu0 0.0
    %5029 = vmatprep.subr.mxu0 0.0
    %5030 = vmatpush1.xpose.msra.mxu0 0.0
    %5031 = vmatprep.subr.mxu0 0.0
    %5032 = vmatpush1.xpose.msra.mxu0 0.0
    %5033 = vmatprep.subr.mxu0 0.0
    %5034 = vmatpush1.xpose.msra.mxu0 0.0
    %5035 = vmatprep.subr.mxu0 0.0
    %5036 = vmatpush1.xpose.msra.mxu0 0.0
    %5037 = vmatprep.subr.mxu0 0.0
    %5038 = vmatpush1.xpose.msra.mxu0 0.0
    %5039 = vmatprep.subr.mxu0 0.0
    %5040 = vmatpush1.xpose.msra.mxu0 0.0
    %5041 = vmatprep.subr.mxu0 0.0
    %5042 = vmatpush1.xpose.msra.mxu0 %v5013
    %5043 = vmatprep.subr.mxu0 0.0
    %5044 = vmatpush1.xpose.msra.mxu0 %v5011
    %5045 = vmatprep.subr.mxu0 0.0
    %5046 = vmatpush1.xpose.msra.mxu0 %v5009
    %5047 = vmatprep.subr.mxu0 0.0
    %5048 = vmatpush2.xpose.msra.mxu0 0.0
    %5049 = vmatprep.subr.mxu0 0.0
    %5050 = vmatpush2.xpose.msra.mxu0 0.0
    %5051 = vmatprep.subr.mxu0 0.0
    %5052 = vmatpush2.xpose.msra.mxu0 0.0
    %5053 = vmatprep.subr.mxu0 0.0
    %5054 = vmatpush2.xpose.msra.mxu0 0.0
    %5055 = vmatprep.subr.mxu0 0.0
    %5056 = vmatpush2.xpose.msra.mxu0 0.0
    %5057 = vmatprep.subr.mxu0 0.0
    %5058 = vmatpush2.xpose.msra.mxu0 0.0
    %5059 = vmatprep.subr.mxu0 0.0
    %5060 = vmatpush2.xpose.msra.mxu0 0.0
    %5061 = vmatprep.subr.mxu0 0.0
    %5062 = vmatpush2.xpose.msra.mxu0 0.0
    %5063 = vmatprep.subr.mxu0 0.0
    %5064 = vmatpush2.xpose.msra.mxu0 0.0
    %5065 = vmatprep.subr.mxu0 0.0
    %5066 = vmatpush2.xpose.msra.mxu0 0.0
    %5067 = vmatprep.subr.mxu0 0.0
    %5068 = vmatpush2.xpose.msra.mxu0 0.0
    %5069 = vmatprep.subr.mxu0 0.0
    %5070 = vmatpush2.xpose.msra.mxu0 0.0
    %5071 = vmatprep.subr.mxu0 0.0
    %5072 = vmatpush2.xpose.msra.mxu0 0.0
    %5073 = vmatprep.subr.mxu0 0.0
    %5074 = vmatpush2.xpose.msra.mxu0 0.0
    %5075 = vmatprep.subr.mxu0 0.0
    %5076 = vmatpush2.xpose.msra.mxu0 0.0
    %5077 = vmatprep.subr.mxu0 0.0
    %5078 = vmatpush2.xpose.msra.mxu0 0.0
    %5079 = vmatprep.mubr.f32.mxu0 0.0
    %5080 = vmatmul.mubr.f32.gmra.mxu0 %v5003
    %v5081 = vpop.f32.mrf.mxu0
    %v5082 = vadd.f32 0.0, %v5081
    %v5083 = vpop.f32.mrf.mxu0
    %5084 = vmatprep.mubr.f32.mxu0 0.0
    %5085 = vmatmul.mubr.f32.gmra.mxu0 %v5005
    %v5086 = vpop.f32.mrf.mxu0
    %v5087 = vadd.f32 0.0, %v5086
    %v5088 = vpop.f32.mrf.mxu0
    %5089 = vmatprep.mubr.f32.mxu0 0.0
    %5090 = vmatmul.mubr.f32.gmra.mxu0 %v5007
    %v5091 = vpop.f32.mrf.mxu0
    %v5092 = vadd.f32 0.0, %v5091
    %v5093 = vpop.f32.mrf.mxu0
    %5094 = vdwg.mxu0
    %v5095 = vsel %vm640, %v5082, -inf
    %5096 = vmax.xlane.f32.xlu0 %v5095
    %v5097 = vpop.xlane.xlu0 %5096
    %v5098 = vsel %vm640, %v5087, -inf
    %5099 = vmax.xlane.f32.xlu0 %v5098
    %v5100 = vpop.xlane.xlu0 %5099
    %v5101 = vsel %vm647, %v5092, -inf
    %5102 = vmax.xlane.f32.xlu0 %v5101
    %v5103 = vpop.xlane.xlu0 %5102
    %v5104 = vsub.f32 %v5082, %v5097
    %v5105 = vsub.f32 %v5087, %v5100
    %v5106 = vsub.f32 %v5092, %v5103
    %v5107 = vmul.f32 %v5104, 1.442695
    %v5108 = vpow.pop %v5107
    %v5109 = vmul.f32 %v5105, 1.442695
    %v5110 = vpow.pop %v5109
    %v5111 = vmul.f32 %v5106, 1.442695
    %v5112 = vpow.pop %v5111
    %v5113 = vsel %vm640, %v5108, 0.0
    %5114 = vadd.xlane.f32.xlu0 %v5113
    %v5115 = vpop.xlane.xlu0 %5114
    %v5116 = vsel %vm640, %v5110, 0.0
    %5117 = vadd.xlane.f32.xlu0 %v5116
    %v5118 = vpop.xlane.xlu0 %5117
    %v5119 = vsel %vm647, %v5112, 0.0
    %5120 = vadd.xlane.f32.xlu0 %v5119
    %v5121 = vpop.xlane.xlu0 %5120
    %v5122 = vrcp.pop %v5115
    %v5123 = vrcp.pop %v5118
    %v5124 = vrcp.pop %v5121
    %v5125 = vmul.f32 %v5108, %v5122
    %v5126 = vmul.f32 %v5110, %v5123
    %v5127 = vmul.f32 %v5112, %v5124
    %5128 = vrot.lane.b32.xlu0 %v3284, 40
    %v5129 = vpop.permute.xlu0 %5128
    %5130 = vrot.lane.b32.xlu0 %v3289, 40
    %v5131 = vpop.permute.xlu0 %5130
    %5132 = vrot.lane.b32.xlu0 %v3294, 40
    %v5133 = vpop.permute.xlu0 %5132
    %v5137 = vsel %vm640, %v5125, 0
    %v5140 = vsel %vm640, %v5126, 0
    %v5143 = vsel %vm640, %v5127, 0
    %v5145 = vsel %vm692, %v5133, 0
    %5147 = vmatprep.subr.mxu0 0.0
    %5148 = vmatpush1.msra.mxu0 0.0
    %5149 = vmatprep.subr.mxu0 0.0
    %5150 = vmatpush1.msra.mxu0 0.0
    %5151 = vmatprep.subr.mxu0 0.0
    %5152 = vmatpush1.msra.mxu0 0.0
    %5153 = vmatprep.subr.mxu0 0.0
    %5154 = vmatpush1.msra.mxu0 0.0
    %5155 = vmatprep.subr.mxu0 0.0
    %5156 = vmatpush1.msra.mxu0 0.0
    %5157 = vmatprep.subr.mxu0 0.0
    %5158 = vmatpush1.msra.mxu0 0.0
    %5159 = vmatprep.subr.mxu0 0.0
    %5160 = vmatpush1.msra.mxu0 0.0
    %5161 = vmatprep.subr.mxu0 0.0
    %5162 = vmatpush1.msra.mxu0 0.0
    %5163 = vmatprep.subr.mxu0 0.0
    %5164 = vmatpush1.msra.mxu0 0.0
    %5165 = vmatprep.subr.mxu0 0.0
    %5166 = vmatpush1.msra.mxu0 0.0
    %5167 = vmatprep.subr.mxu0 0.0
    %5168 = vmatpush1.msra.mxu0 0.0
    %5169 = vmatprep.subr.mxu0 0.0
    %5170 = vmatpush1.msra.mxu0 0.0
    %5171 = vmatprep.subr.mxu0 0.0
    %5172 = vmatpush1.msra.mxu0 0.0
    %5173 = vmatprep.subr.mxu0 0.0
    %5174 = vmatpush1.msra.mxu0 %v5145
    %5175 = vmatprep.subr.mxu0 0.0
    %5176 = vmatpush1.msra.mxu0 %v5131
    %5177 = vmatprep.subr.mxu0 0.0
    %5178 = vmatpush1.msra.mxu0 %v5129
    %5179 = vmatprep.subr.mxu0 0.0
    %5180 = vmatpush2.msra.mxu0 0.0
    %5181 = vmatprep.subr.mxu0 0.0
    %5182 = vmatpush2.msra.mxu0 0.0
    %5183 = vmatprep.subr.mxu0 0.0
    %5184 = vmatpush2.msra.mxu0 0.0
    %5185 = vmatprep.subr.mxu0 0.0
    %5186 = vmatpush2.msra.mxu0 0.0
    %5187 = vmatprep.subr.mxu0 0.0
    %5188 = vmatpush2.msra.mxu0 0.0
    %5189 = vmatprep.subr.mxu0 0.0
    %5190 = vmatpush2.msra.mxu0 0.0
    %5191 = vmatprep.subr.mxu0 0.0
    %5192 = vmatpush2.msra.mxu0 0.0
    %5193 = vmatprep.subr.mxu0 0.0
    %5194 = vmatpush2.msra.mxu0 0.0
    %5195 = vmatprep.subr.mxu0 0.0
    %5196 = vmatpush2.msra.mxu0 0.0
    %5197 = vmatprep.subr.mxu0 0.0
    %5198 = vmatpush2.msra.mxu0 0.0
    %5199 = vmatprep.subr.mxu0 0.0
    %5200 = vmatpush2.msra.mxu0 0.0
    %5201 = vmatprep.subr.mxu0 0.0
    %5202 = vmatpush2.msra.mxu0 0.0
    %5203 = vmatprep.subr.mxu0 0.0
    %5204 = vmatpush2.msra.mxu0 0.0
    %5205 = vmatprep.subr.mxu0 0.0
    %5206 = vmatpush2.msra.mxu0 0.0
    %5207 = vmatprep.subr.mxu0 0.0
    %5208 = vmatpush2.msra.mxu0 0.0
    %5209 = vmatprep.subr.mxu0 0.0
    %5210 = vmatpush2.msra.mxu0 0.0
    %5211 = vmatprep.mubr.f32.mxu0 0.0
    %5212 = vmatmul.mubr.f32.gmra.mxu0 %v5137
    %v5213 = vpop.f32.mrf.mxu0
    %v5214 = vadd.f32 0.0, %v5213
    %v5215 = vpop.f32.mrf.mxu0
    %5216 = vmatprep.mubr.f32.mxu0 0.0
    %5217 = vmatmul.mubr.f32.gmra.mxu0 %v5140
    %v5218 = vpop.f32.mrf.mxu0
    %v5219 = vadd.f32 0.0, %v5218
    %v5220 = vpop.f32.mrf.mxu0
    %5221 = vmatprep.mubr.f32.mxu0 0.0
    %5222 = vmatmul.mubr.f32.gmra.mxu0 %v5143
    %v5223 = vpop.f32.mrf.mxu0
    %v5224 = vadd.f32 0.0, %v5223
    %v5225 = vpop.f32.mrf.mxu0
    %5226 = vdwg.mxu0
    %5230 = vrot.lane.b32.xlu0 %v4742, 8
    %v5231 = vpop.permute.xlu0 %5230
    %5232 = vrot.lane.b32.xlu0 %v4747, 8
    %v5233 = vpop.permute.xlu0 %5232
    %5234 = vrot.lane.b32.xlu0 %v4752, 8
    %v5235 = vpop.permute.xlu0 %5234
    %5242 = vrot.lane.b32.xlu0 %v4978, 16
    %v5243 = vpop.permute.xlu0 %5242
    %5244 = vrot.lane.b32.xlu0 %v4983, 16
    %v5245 = vpop.permute.xlu0 %5244
    %5246 = vrot.lane.b32.xlu0 %v4988, 16
    %v5247 = vpop.permute.xlu0 %5246
    %5254 = vrot.lane.b32.xlu0 %v5214, 24
    %v5255 = vpop.permute.xlu0 %5254
    %5256 = vrot.lane.b32.xlu0 %v5219, 24
    %v5257 = vpop.permute.xlu0 %5256
    %5258 = vrot.lane.b32.xlu0 %v5224, 24
    %v5259 = vpop.permute.xlu0 %5258
    %v5263 = vsel %vm547, %v4506, %v5231
    %v5264 = vsel %vm547, %v4511, %v5233
    %v5265 = vsel %vm547, %v4516, %v5235
    %v5266 = vsel %vm1522, %v5263, %v5243
    %v5267 = vsel %vm1522, %v5264, %v5245
    %v5268 = vsel %vm1522, %v5265, %v5247
    %v5269 = vsel %vm1526, %v5266, %v5255
    %v5270 = vsel %vm1526, %v5267, %v5257
    %v5271 = vsel %vm1526, %v5268, %v5259
    %5272 = vst.msk [vmem:[#allocation2 + $0x18] sm:$0xff] %vm200, %v5269
    %5273 = vst.msk [vmem:[#allocation2 + $0x20] sm:$0xff] %vm200, %v5270
    %5274 = vst.msk [vmem:[#allocation2 + $0x28] sm:$0x1] %vm1532, %v5271
    %v5275 = vld [vmem:[#allocation2] sm:$0xff]
    %v5276 = vld [vmem:[#allocation2 + $0x8] sm:$0xff]
    %v5277 = vld [vmem:[#allocation2 + $0x10] sm:$0xff]
    %v5278 = vld [vmem:[#allocation2 + $0x18] sm:$0xff]
    %v5279 = vld [vmem:[#allocation2 + $0x20] sm:$0xff]
    %v5280 = vld [vmem:[#allocation2 + $0x28] sm:$0xff]
    %s5281 = scalar_lea.vmem %s9, 32
    %v5282 = vld [vmem:[%s5281] sm:$0xff]
    %v5283 = vld [vmem:[%s5281 + $0x8] sm:$0xff]
    %v5284 = vld [vmem:[%s5281 + $0x10] sm:$0xff]
    %v5285 = vld [vmem:[%s5281 + $0x18] sm:$0xff]
    %v5287 = vsel %vm200, %v5275, 0
    %v5290 = vsel %vm200, %v5276, 0
    %v5293 = vsel %vm200, %v5277, 0
    %v5296 = vsel %vm200, %v5278, 0
    %v5299 = vsel %vm200, %v5279, 0
    %v5302 = vsel %vm200, %v5280, 0
    %5304 = vmatprep.subr.mxu0 0.0
    %5305 = vmatpush1.msra.mxu0 0.0
    %5306 = vmatprep.subr.mxu0 0.0
    %5307 = vmatpush1.msra.mxu0 0.0
    %5308 = vmatprep.subr.mxu0 0.0
    %5309 = vmatpush1.msra.mxu0 0.0
    %5310 = vmatprep.subr.mxu0 0.0
    %5311 = vmatpush1.msra.mxu0 0.0
    %5312 = vmatprep.subr.mxu0 0.0
    %5313 = vmatpush1.msra.mxu0 0.0
    %5314 = vmatprep.subr.mxu0 0.0
    %5315 = vmatpush1.msra.mxu0 0.0
    %5316 = vmatprep.subr.mxu0 0.0
    %5317 = vmatpush1.msra.mxu0 0.0
    %5318 = vmatprep.subr.mxu0 0.0
    %5319 = vmatpush1.msra.mxu0 0.0
    %5320 = vmatprep.subr.mxu0 0.0
    %5321 = vmatpush1.msra.mxu0 0.0
    %5322 = vmatprep.subr.mxu0 0.0
    %5323 = vmatpush1.msra.mxu0 0.0
    %5324 = vmatprep.subr.mxu0 0.0
    %5325 = vmatpush1.msra.mxu0 0.0
    %5326 = vmatprep.subr.mxu0 0.0
    %5327 = vmatpush1.msra.mxu0 0.0
    %5328 = vmatprep.subr.mxu0 0.0
    %5329 = vmatpush1.msra.mxu0 %v5285
    %5330 = vmatprep.subr.mxu0 0.0
    %5331 = vmatpush1.msra.mxu0 %v5284
    %5332 = vmatprep.subr.mxu0 0.0
    %5333 = vmatpush1.msra.mxu0 %v5283
    %5334 = vmatprep.subr.mxu0 0.0
    %5335 = vmatpush1.msra.mxu0 %v5282
    %5336 = vmatprep.subr.mxu0 0.0
    %5337 = vmatpush2.msra.mxu0 0.0
    %5338 = vmatprep.subr.mxu0 0.0
    %5339 = vmatpush2.msra.mxu0 0.0
    %5340 = vmatprep.subr.mxu0 0.0
    %5341 = vmatpush2.msra.mxu0 0.0
    %5342 = vmatprep.subr.mxu0 0.0
    %5343 = vmatpush2.msra.mxu0 0.0
    %5344 = vmatprep.subr.mxu0 0.0
    %5345 = vmatpush2.msra.mxu0 0.0
    %5346 = vmatprep.subr.mxu0 0.0
    %5347 = vmatpush2.msra.mxu0 0.0
    %5348 = vmatprep.subr.mxu0 0.0
    %5349 = vmatpush2.msra.mxu0 0.0
    %5350 = vmatprep.subr.mxu0 0.0
    %5351 = vmatpush2.msra.mxu0 0.0
    %5352 = vmatprep.subr.mxu0 0.0
    %5353 = vmatpush2.msra.mxu0 0.0
    %5354 = vmatprep.subr.mxu0 0.0
    %5355 = vmatpush2.msra.mxu0 0.0
    %5356 = vmatprep.subr.mxu0 0.0
    %5357 = vmatpush2.msra.mxu0 0.0
    %5358 = vmatprep.subr.mxu0 0.0
    %5359 = vmatpush2.msra.mxu0 0.0
    %5360 = vmatprep.subr.mxu0 0.0
    %5361 = vmatpush2.msra.mxu0 0.0
    %5362 = vmatprep.subr.mxu0 0.0
    %5363 = vmatpush2.msra.mxu0 0.0
    %5364 = vmatprep.subr.mxu0 0.0
    %5365 = vmatpush2.msra.mxu0 0.0
    %5366 = vmatprep.subr.mxu0 0.0
    %5367 = vmatpush2.msra.mxu0 0.0
    %5368 = vmatprep.mubr.f32.mxu0 0.0
    %5369 = vmatmul.mubr.f32.gmra.mxu0 %v5287
    %v5370 = vpop.f32.mrf.mxu0
    %v5371 = vadd.f32 0.0, %v5370
    %v5372 = vpop.f32.mrf.mxu0
    %5373 = vmatprep.mubr.f32.mxu0 0.0
    %5374 = vmatmul.mubr.f32.gmra.mxu0 %v5290
    %v5375 = vpop.f32.mrf.mxu0
    %v5376 = vadd.f32 0.0, %v5375
    %v5377 = vpop.f32.mrf.mxu0
    %5378 = vmatprep.mubr.f32.mxu0 0.0
    %5379 = vmatmul.mubr.f32.gmra.mxu0 %v5293
    %v5380 = vpop.f32.mrf.mxu0
    %v5381 = vadd.f32 0.0, %v5380
    %v5382 = vpop.f32.mrf.mxu0
    %5383 = vmatprep.mubr.f32.mxu0 0.0
    %5384 = vmatmul.mubr.f32.gmra.mxu0 %v5296
    %v5385 = vpop.f32.mrf.mxu0
    %v5386 = vadd.f32 0.0, %v5385
    %v5387 = vpop.f32.mrf.mxu0
    %5388 = vmatprep.mubr.f32.mxu0 0.0
    %5389 = vmatmul.mubr.f32.gmra.mxu0 %v5299
    %v5390 = vpop.f32.mrf.mxu0
    %v5391 = vadd.f32 0.0, %v5390
    %v5392 = vpop.f32.mrf.mxu0
    %5393 = vmatprep.mubr.f32.mxu0 0.0
    %5394 = vmatmul.mubr.f32.gmra.mxu0 %v5302
    %v5395 = vpop.f32.mrf.mxu0
    %v5396 = vadd.f32 0.0, %v5395
    %v5397 = vpop.f32.mrf.mxu0
    %5398 = vdwg.mxu0
    %v5399 = vadd.f32 %v3059, %v5371
    %v5400 = vadd.f32 %v3060, %v5376
    %v5401 = vadd.f32 %v3061, %v5381
    %v5402 = vadd.f32 %v3062, %v5386
    %v5403 = vadd.f32 %v3063, %v5391
    %v5404 = vadd.f32 %v3064, %v5396
    %s5405 = scalar_lea.vmem %s10, 1
    %v5406 = vld [vmem:[%s5405] sm:$0x1]
    %v5408 = vlaneseq
    %v5409 = vshrl.u32 %v5408, 7
    %v5410 = vsub.s32 0, %v5409
    %v5411 = vrot.slane %v5406, %v5410
    %v5413 = vadd.f32 %v5399, %v5411
    %v5414 = vadd.f32 %v5400, %v5411
    %v5415 = vadd.f32 %v5401, %v5411
    %v5416 = vadd.f32 %v5402, %v5411
    %v5417 = vadd.f32 %v5403, %v5411
    %v5418 = vadd.f32 %v5404, %v5411
    %s5419 = scalar_lea.vmem %s11, 1
    %v5420 = vld [vmem:[%s5419] sm:$0x1]
    %s5421 = scalar_lea.vmem %s12, 1
    %v5422 = vld [vmem:[%s5421] sm:$0x1]
    %v5423 = vsel %vm200, %v5413, 0.0
    %5424 = vadd.xlane.f32.xlu0 %v5423
    %v5425 = vpop.xlane.xlu0 %5424
    %v5426 = vsel %vm200, %v5414, 0.0
    %5427 = vadd.xlane.f32.xlu0 %v5426
    %v5428 = vpop.xlane.xlu0 %5427
    %v5429 = vsel %vm200, %v5415, 0.0
    %5430 = vadd.xlane.f32.xlu0 %v5429
    %v5431 = vpop.xlane.xlu0 %5430
    %v5432 = vsel %vm200, %v5416, 0.0
    %5433 = vadd.xlane.f32.xlu0 %v5432
    %v5434 = vpop.xlane.xlu0 %5433
    %v5435 = vsel %vm200, %v5417, 0.0
    %5436 = vadd.xlane.f32.xlu0 %v5435
    %v5437 = vpop.xlane.xlu0 %5436
    %v5438 = vsel %vm200, %v5418, 0.0
    %5439 = vadd.xlane.f32.xlu0 %v5438
    %v5440 = vpop.xlane.xlu0 %5439
    %v5441 = vmul.f32 %v5425, %v219
    %v5442 = vmul.f32 %v5428, %v219
    %v5443 = vmul.f32 %v5431, %v219
    %v5444 = vmul.f32 %v5434, %v219
    %v5445 = vmul.f32 %v5437, %v219
    %v5446 = vmul.f32 %v5440, %v219
    %v5447 = vsub.f32 %v5413, %v5441
    %v5448 = vsub.f32 %v5414, %v5442
    %v5449 = vsub.f32 %v5415, %v5443
    %v5450 = vsub.f32 %v5416, %v5444
    %v5451 = vsub.f32 %v5417, %v5445
    %v5452 = vsub.f32 %v5418, %v5446
    %v5453 = vmul.f32 %v5447, %v5447
    %v5454 = vmul.f32 %v5448, %v5448
    %v5455 = vmul.f32 %v5449, %v5449
    %v5456 = vmul.f32 %v5450, %v5450
    %v5457 = vmul.f32 %v5451, %v5451
    %v5458 = vmul.f32 %v5452, %v5452
    %v5459 = vsel %vm200, %v5453, 0.0
    %5460 = vadd.xlane.f32.xlu0 %v5459
    %v5461 = vpop.xlane.xlu0 %5460
    %v5462 = vsel %vm200, %v5454, 0.0
    %5463 = vadd.xlane.f32.xlu0 %v5462
    %v5464 = vpop.xlane.xlu0 %5463
    %v5465 = vsel %vm200, %v5455, 0.0
    %5466 = vadd.xlane.f32.xlu0 %v5465
    %v5467 = vpop.xlane.xlu0 %5466
    %v5468 = vsel %vm200, %v5456, 0.0
    %5469 = vadd.xlane.f32.xlu0 %v5468
    %v5470 = vpop.xlane.xlu0 %5469
    %v5471 = vsel %vm200, %v5457, 0.0
    %5472 = vadd.xlane.f32.xlu0 %v5471
    %v5473 = vpop.xlane.xlu0 %5472
    %v5474 = vsel %vm200, %v5458, 0.0
    %5475 = vadd.xlane.f32.xlu0 %v5474
    %v5476 = vpop.xlane.xlu0 %5475
    %v5477 = vmul.f32 %v5461, %v219
    %v5478 = vmul.f32 %v5464, %v219
    %v5479 = vmul.f32 %v5467, %v219
    %v5480 = vmul.f32 %v5470, %v219
    %v5481 = vmul.f32 %v5473, %v219
    %v5482 = vmul.f32 %v5476, %v219
    %v5483 = vadd.f32 %v5477, 1e-05
    %v5484 = vadd.f32 %v5478, 1e-05
    %v5485 = vadd.f32 %v5479, 1e-05
    %v5486 = vadd.f32 %v5480, 1e-05
    %v5487 = vadd.f32 %v5481, 1e-05
    %v5488 = vadd.f32 %v5482, 1e-05
    %v5489 = vrsqrt.pop %v5483
    %v5490 = vrsqrt.pop %v5484
    %v5491 = vrsqrt.pop %v5485
    %v5492 = vrsqrt.pop %v5486
    %v5493 = vrsqrt.pop %v5487
    %v5494 = vrsqrt.pop %v5488
    %v5495 = vmul.f32 %v5447, %v5489
    %v5496 = vmul.f32 %v5448, %v5490
    %v5497 = vmul.f32 %v5449, %v5491
    %v5498 = vmul.f32 %v5450, %v5492
    %v5499 = vmul.f32 %v5451, %v5493
    %v5500 = vmul.f32 %v5452, %v5494
    %v5502 = vlaneseq
    %v5503 = vshrl.u32 %v5502, 7
    %v5504 = vsub.s32 0, %v5503
    %v5505 = vrot.slane %v5420, %v5504
    %v5507 = vmul.f32 %v5495, %v5505
    %v5508 = vmul.f32 %v5496, %v5505
    %v5509 = vmul.f32 %v5497, %v5505
    %v5510 = vmul.f32 %v5498, %v5505
    %v5511 = vmul.f32 %v5499, %v5505
    %v5512 = vmul.f32 %v5500, %v5505
    %v5514 = vlaneseq
    %v5515 = vshrl.u32 %v5514, 7
    %v5516 = vsub.s32 0, %v5515
    %v5517 = vrot.slane %v5422, %v5516
    %v5519 = vadd.f32 %v5507, %v5517
    %v5520 = vadd.f32 %v5508, %v5517
    %v5521 = vadd.f32 %v5509, %v5517
    %v5522 = vadd.f32 %v5510, %v5517
    %v5523 = vadd.f32 %v5511, %v5517
    %v5524 = vadd.f32 %v5512, %v5517
    %s5525 = scalar_lea.vmem %s13, 32
    %v5526 = vld [vmem:[%s5525] sm:$0xff]
    %v5527 = vld [vmem:[%s5525 + $0x8] sm:$0xff]
    %v5528 = vld [vmem:[%s5525 + $0x10] sm:$0xff]
    %v5529 = vld [vmem:[%s5525 + $0x18] sm:$0xff]
    %s5530 = scalar_lea.vmem %s14, 1
    %v5531 = vld [vmem:[%s5530] sm:$0x1]
    %v5533 = vlaneseq
    %v5534 = vshrl.u32 %v5533, 7
    %v5535 = vsub.s32 0, %v5534
    %v5536 = vrot.slane %v5531, %v5535
    %v5539 = vsel %vm200, %v5519, 0
    %v5542 = vsel %vm200, %v5520, 0
    %v5545 = vsel %vm200, %v5521, 0
    %v5548 = vsel %vm200, %v5522, 0
    %v5551 = vsel %vm200, %v5523, 0
    %v5554 = vsel %vm200, %v5524, 0
    %5556 = vmatprep.subr.mxu0 0.0
    %5557 = vmatpush1.msra.mxu0 0.0
    %5558 = vmatprep.subr.mxu0 0.0
    %5559 = vmatpush1.msra.mxu0 0.0
    %5560 = vmatprep.subr.mxu0 0.0
    %5561 = vmatpush1.msra.mxu0 0.0
    %5562 = vmatprep.subr.mxu0 0.0
    %5563 = vmatpush1.msra.mxu0 0.0
    %5564 = vmatprep.subr.mxu0 0.0
    %5565 = vmatpush1.msra.mxu0 0.0
    %5566 = vmatprep.subr.mxu0 0.0
    %5567 = vmatpush1.msra.mxu0 0.0
    %5568 = vmatprep.subr.mxu0 0.0
    %5569 = vmatpush1.msra.mxu0 0.0
    %5570 = vmatprep.subr.mxu0 0.0
    %5571 = vmatpush1.msra.mxu0 0.0
    %5572 = vmatprep.subr.mxu0 0.0
    %5573 = vmatpush1.msra.mxu0 0.0
    %5574 = vmatprep.subr.mxu0 0.0
    %5575 = vmatpush1.msra.mxu0 0.0
    %5576 = vmatprep.subr.mxu0 0.0
    %5577 = vmatpush1.msra.mxu0 0.0
    %5578 = vmatprep.subr.mxu0 0.0
    %5579 = vmatpush1.msra.mxu0 0.0
    %5580 = vmatprep.subr.mxu0 0.0
    %5581 = vmatpush1.msra.mxu0 %v5529
    %5582 = vmatprep.subr.mxu0 0.0
    %5583 = vmatpush1.msra.mxu0 %v5528
    %5584 = vmatprep.subr.mxu0 0.0
    %5585 = vmatpush1.msra.mxu0 %v5527
    %5586 = vmatprep.subr.mxu0 0.0
    %5587 = vmatpush1.msra.mxu0 %v5526
    %5588 = vmatprep.subr.mxu0 0.0
    %5589 = vmatpush2.msra.mxu0 0.0
    %5590 = vmatprep.subr.mxu0 0.0
    %5591 = vmatpush2.msra.mxu0 0.0
    %5592 = vmatprep.subr.mxu0 0.0
    %5593 = vmatpush2.msra.mxu0 0.0
    %5594 = vmatprep.subr.mxu0 0.0
    %5595 = vmatpush2.msra.mxu0 0.0
    %5596 = vmatprep.subr.mxu0 0.0
    %5597 = vmatpush2.msra.mxu0 0.0
    %5598 = vmatprep.subr.mxu0 0.0
    %5599 = vmatpush2.msra.mxu0 0.0
    %5600 = vmatprep.subr.mxu0 0.0
    %5601 = vmatpush2.msra.mxu0 0.0
    %5602 = vmatprep.subr.mxu0 0.0
    %5603 = vmatpush2.msra.mxu0 0.0
    %5604 = vmatprep.subr.mxu0 0.0
    %5605 = vmatpush2.msra.mxu0 0.0
    %5606 = vmatprep.subr.mxu0 0.0
    %5607 = vmatpush2.msra.mxu0 0.0
    %5608 = vmatprep.subr.mxu0 0.0
    %5609 = vmatpush2.msra.mxu0 0.0
    %5610 = vmatprep.subr.mxu0 0.0
    %5611 = vmatpush2.msra.mxu0 0.0
    %5612 = vmatprep.subr.mxu0 0.0
    %5613 = vmatpush2.msra.mxu0 0.0
    %5614 = vmatprep.subr.mxu0 0.0
    %5615 = vmatpush2.msra.mxu0 0.0
    %5616 = vmatprep.subr.mxu0 0.0
    %5617 = vmatpush2.msra.mxu0 0.0
    %5618 = vmatprep.subr.mxu0 0.0
    %5619 = vmatpush2.msra.mxu0 0.0
    %5620 = vmatprep.mubr.f32.mxu0 0.0
    %5621 = vmatmul.mubr.f32.gmra.mxu0 %v5539
    %v5622 = vpop.f32.mrf.mxu0
    %v5623 = vadd.f32 %v5536, %v5622
    %v5624 = vpop.f32.mrf.mxu0
    %5625 = vmatprep.mubr.f32.mxu0 0.0
    %5626 = vmatmul.mubr.f32.gmra.mxu0 %v5542
    %v5627 = vpop.f32.mrf.mxu0
    %v5628 = vadd.f32 %v5536, %v5627
    %v5629 = vpop.f32.mrf.mxu0
    %5630 = vmatprep.mubr.f32.mxu0 0.0
    %5631 = vmatmul.mubr.f32.gmra.mxu0 %v5545
    %v5632 = vpop.f32.mrf.mxu0
    %v5633 = vadd.f32 %v5536, %v5632
    %v5634 = vpop.f32.mrf.mxu0
    %5635 = vmatprep.mubr.f32.mxu0 0.0
    %5636 = vmatmul.mubr.f32.gmra.mxu0 %v5548
    %v5637 = vpop.f32.mrf.mxu0
    %v5638 = vadd.f32 %v5536, %v5637
    %v5639 = vpop.f32.mrf.mxu0
    %5640 = vmatprep.mubr.f32.mxu0 0.0
    %5641 = vmatmul.mubr.f32.gmra.mxu0 %v5551
    %v5642 = vpop.f32.mrf.mxu0
    %v5643 = vadd.f32 %v5536, %v5642
    %v5644 = vpop.f32.mrf.mxu0
    %5645 = vmatprep.mubr.f32.mxu0 0.0
    %5646 = vmatmul.mubr.f32.gmra.mxu0 %v5554
    %v5647 = vpop.f32.mrf.mxu0
    %v5648 = vadd.f32 %v5536, %v5647
    %v5649 = vpop.f32.mrf.mxu0
    %5650 = vdwg.mxu0
    %v5651 = vmul.f32 %v5623, 1.702
    %v5652 = vmul.f32 %v5628, 1.702
    %v5653 = vmul.f32 %v5633, 1.702
    %v5654 = vmul.f32 %v5638, 1.702
    %v5655 = vmul.f32 %v5643, 1.702
    %v5656 = vmul.f32 %v5648, 1.702
    %v5657 = vxor.u32 %v5651, 2147483648
    %v5658 = vxor.u32 %v5652, 2147483648
    %v5659 = vxor.u32 %v5653, 2147483648
    %v5660 = vxor.u32 %v5654, 2147483648
    %v5661 = vxor.u32 %v5655, 2147483648
    %v5662 = vxor.u32 %v5656, 2147483648
    %v5663 = vmul.f32 %v5657, 1.442695
    %v5664 = vpow.pop %v5663
    %v5665 = vmul.f32 %v5658, 1.442695
    %v5666 = vpow.pop %v5665
    %v5667 = vmul.f32 %v5659, 1.442695
    %v5668 = vpow.pop %v5667
    %v5669 = vmul.f32 %v5660, 1.442695
    %v5670 = vpow.pop %v5669
    %v5671 = vmul.f32 %v5661, 1.442695
    %v5672 = vpow.pop %v5671
    %v5673 = vmul.f32 %v5662, 1.442695
    %v5674 = vpow.pop %v5673
    %v5675 = vadd.f32 %v5664, 1.0
    %v5676 = vadd.f32 %v5666, 1.0
    %v5677 = vadd.f32 %v5668, 1.0
    %v5678 = vadd.f32 %v5670, 1.0
    %v5679 = vadd.f32 %v5672, 1.0
    %v5680 = vadd.f32 %v5674, 1.0
    %v5681 = vrcp.pop %v5675
    %v5682 = vmul.f32 1.0, %v5681
    %v5683 = vrcp.pop %v5676
    %v5684 = vmul.f32 1.0, %v5683
    %v5685 = vrcp.pop %v5677
    %v5686 = vmul.f32 1.0, %v5685
    %v5687 = vrcp.pop %v5678
    %v5688 = vmul.f32 1.0, %v5687
    %v5689 = vrcp.pop %v5679
    %v5690 = vmul.f32 1.0, %v5689
    %v5691 = vrcp.pop %v5680
    %v5692 = vmul.f32 1.0, %v5691
    %v5693 = vmul.f32 %v5623, %v5682
    %v5694 = vmul.f32 %v5628, %v5684
    %v5695 = vmul.f32 %v5633, %v5686
    %v5696 = vmul.f32 %v5638, %v5688
    %v5697 = vmul.f32 %v5643, %v5690
    %v5698 = vmul.f32 %v5648, %v5692
    %s5699 = scalar_lea.vmem %s15, 128
    %v5700 = vld [vmem:[%s5699] sm:$0xff]
    %v5701 = vld [vmem:[%s5699 + $0x8] sm:$0xff]
    %v5702 = vld [vmem:[%s5699 + $0x10] sm:$0xff]
    %v5703 = vld [vmem:[%s5699 + $0x18] sm:$0xff]
    %v5704 = vld [vmem:[%s5699 + $0x20] sm:$0xff]
    %v5705 = vld [vmem:[%s5699 + $0x28] sm:$0xff]
    %v5706 = vld [vmem:[%s5699 + $0x30] sm:$0xff]
    %v5707 = vld [vmem:[%s5699 + $0x38] sm:$0xff]
    %v5708 = vld [vmem:[%s5699 + $0x40] sm:$0xff]
    %v5709 = vld [vmem:[%s5699 + $0x48] sm:$0xff]
    %v5710 = vld [vmem:[%s5699 + $0x50] sm:$0xff]
    %v5711 = vld [vmem:[%s5699 + $0x58] sm:$0xff]
    %v5712 = vld [vmem:[%s5699 + $0x60] sm:$0xff]
    %v5713 = vld [vmem:[%s5699 + $0x68] sm:$0xff]
    %v5714 = vld [vmem:[%s5699 + $0x70] sm:$0xff]
    %v5715 = vld [vmem:[%s5699 + $0x78] sm:$0xff]
    %s5716 = scalar_lea.vmem %s16, 1
    %v5717 = vld [vmem:[%s5716] sm:$0x1]
    %v5719 = vlaneseq
    %v5720 = vshrl.u32 %v5719, 7
    %v5721 = vsub.s32 0, %v5720
    %v5722 = vrot.slane %v5717, %v5721
    %5724 = vmatprep.subr.mxu0 0.0
    %5725 = vmatpush1.msra.mxu0 %v5715
    %5726 = vmatprep.subr.mxu0 0.0
    %5727 = vmatpush1.msra.mxu0 %v5714
    %5728 = vmatprep.subr.mxu0 0.0
    %5729 = vmatpush1.msra.mxu0 %v5713
    %5730 = vmatprep.subr.mxu0 0.0
    %5731 = vmatpush1.msra.mxu0 %v5712
    %5732 = vmatprep.subr.mxu0 0.0
    %5733 = vmatpush1.msra.mxu0 %v5711
    %5734 = vmatprep.subr.mxu0 0.0
    %5735 = vmatpush1.msra.mxu0 %v5710
    %5736 = vmatprep.subr.mxu0 0.0
    %5737 = vmatpush1.msra.mxu0 %v5709
    %5738 = vmatprep.subr.mxu0 0.0
    %5739 = vmatpush1.msra.mxu0 %v5708
    %5740 = vmatprep.subr.mxu0 0.0
    %5741 = vmatpush1.msra.mxu0 %v5707
    %5742 = vmatprep.subr.mxu0 0.0
    %5743 = vmatpush1.msra.mxu0 %v5706
    %5744 = vmatprep.subr.mxu0 0.0
    %5745 = vmatpush1.msra.mxu0 %v5705
    %5746 = vmatprep.subr.mxu0 0.0
    %5747 = vmatpush1.msra.mxu0 %v5704
    %5748 = vmatprep.subr.mxu0 0.0
    %5749 = vmatpush1.msra.mxu0 %v5703
    %5750 = vmatprep.subr.mxu0 0.0
    %5751 = vmatpush1.msra.mxu0 %v5702
    %5752 = vmatprep.subr.mxu0 0.0
    %5753 = vmatpush1.msra.mxu0 %v5701
    %5754 = vmatprep.subr.mxu0 0.0
    %5755 = vmatpush1.msra.mxu0 %v5700
    %5756 = vmatprep.subr.mxu0 0.0
    %5757 = vmatpush2.msra.mxu0 0.0
    %5758 = vmatprep.subr.mxu0 0.0
    %5759 = vmatpush2.msra.mxu0 0.0
    %5760 = vmatprep.subr.mxu0 0.0
    %5761 = vmatpush2.msra.mxu0 0.0
    %5762 = vmatprep.subr.mxu0 0.0
    %5763 = vmatpush2.msra.mxu0 0.0
    %5764 = vmatprep.subr.mxu0 0.0
    %5765 = vmatpush2.msra.mxu0 0.0
    %5766 = vmatprep.subr.mxu0 0.0
    %5767 = vmatpush2.msra.mxu0 0.0
    %5768 = vmatprep.subr.mxu0 0.0
    %5769 = vmatpush2.msra.mxu0 0.0
    %5770 = vmatprep.subr.mxu0 0.0
    %5771 = vmatpush2.msra.mxu0 0.0
    %5772 = vmatprep.subr.mxu0 0.0
    %5773 = vmatpush2.msra.mxu0 0.0
    %5774 = vmatprep.subr.mxu0 0.0
    %5775 = vmatpush2.msra.mxu0 0.0
    %5776 = vmatprep.subr.mxu0 0.0
    %5777 = vmatpush2.msra.mxu0 0.0
    %5778 = vmatprep.subr.mxu0 0.0
    %5779 = vmatpush2.msra.mxu0 0.0
    %5780 = vmatprep.subr.mxu0 0.0
    %5781 = vmatpush2.msra.mxu0 0.0
    %5782 = vmatprep.subr.mxu0 0.0
    %5783 = vmatpush2.msra.mxu0 0.0
    %5784 = vmatprep.subr.mxu0 0.0
    %5785 = vmatpush2.msra.mxu0 0.0
    %5786 = vmatprep.subr.mxu0 0.0
    %5787 = vmatpush2.msra.mxu0 0.0
    %5788 = vmatprep.mubr.f32.mxu0 0.0
    %5789 = vmatmul.mubr.f32.gmra.mxu0 %v5693
    %v5790 = vpop.f32.mrf.mxu0
    %v5791 = vadd.f32 %v5722, %v5790
    %v5792 = vpop.f32.mrf.mxu0
    %5793 = vmatprep.mubr.f32.mxu0 0.0
    %5794 = vmatmul.mubr.f32.gmra.mxu0 %v5694
    %v5795 = vpop.f32.mrf.mxu0
    %v5796 = vpop.f32.mrf.mxu0
    %5797 = vmatprep.mubr.f32.mxu0 0.0
    %5798 = vmatmul.mubr.f32.gmra.mxu0 %v5695
    %v5799 = vpop.f32.mrf.mxu0
    %v5800 = vpop.f32.mrf.mxu0
    %5801 = vmatprep.mubr.f32.mxu0 0.0
    %5802 = vmatmul.mubr.f32.gmra.mxu0 %v5696
    %v5803 = vpop.f32.mrf.mxu0
    %v5804 = vadd.f32 %v5722, %v5803
    %v5805 = vpop.f32.mrf.mxu0
    %5806 = vmatprep.mubr.f32.mxu0 0.0
    %5807 = vmatmul.mubr.f32.gmra.mxu0 %v5697
    %v5808 = vpop.f32.mrf.mxu0
    %v5809 = vpop.f32.mrf.mxu0
    %5810 = vmatprep.mubr.f32.mxu0 0.0
    %5811 = vmatmul.mubr.f32.gmra.mxu0 %v5698
    %v5812 = vpop.f32.mrf.mxu0
    %v5813 = vpop.f32.mrf.mxu0
    %5814 = vdwg.mxu0
    %v5815 = vadd.f32 %v5413, %v5791
    %v5816 = vadd.f32 %v5416, %v5804
    %v5818 = vrot.slane %v5816, 7
    %v5820 = vsel %vm692, %v5815, %v5818
    %v5821 = vld [vmem:[%s17] sm:$0x1]
    %v5822 = vld [vmem:[%s18] sm:$0x1]
    %vm5823 = vcmask 254976
    %v5824 = vsel %vm5823, %v5820, 0.0
    %5825 = vadd.xlane.f32.xlu0 %v5824
    %v5826 = vpop.xlane.xlu0 %5825
    %v5827 = vmul.f32 %v5826, %v219
    %v5828 = vsub.f32 %v5820, %v5827
    %v5829 = vmul.f32 %v5828, %v5828
    %v5830 = vsel %vm5823, %v5829, 0.0
    %5831 = vadd.xlane.f32.xlu0 %v5830
    %v5832 = vpop.xlane.xlu0 %5831
    %v5833 = vmul.f32 %v5832, %v219
    %v5834 = vadd.f32 %v5833, 1e-05
    %v5835 = vrsqrt.pop %v5834
    %v5836 = vmul.f32 %v5828, %v5835
    %v5838 = vlaneseq
    %v5839 = vshrl.u32 %v5838, 7
    %v5840 = vsub.s32 0, %v5839
    %v5841 = vrot.slane %v5821, %v5840
    %v5843 = vmul.f32 %v5836, %v5841
    %v5845 = vlaneseq
    %v5846 = vshrl.u32 %v5845, 7
    %v5847 = vsub.s32 0, %v5846
    %v5848 = vrot.slane %v5822, %v5847
    %v5850 = vadd.f32 %v5843, %v5848
    %v5851 = vld [vmem:[%s19] sm:$0xff]
    %v5852 = vld [vmem:[%s19 + $0x8] sm:$0xff]
    %v5853 = vld [vmem:[%s19 + $0x10] sm:$0xff]
    %v5854 = vld [vmem:[%s19 + $0x18] sm:$0xff]
    %v5856 = vsel %vm200, %v5850, 0
    %5858 = vmatprep.subr.mxu0 0.0
    %5859 = vmatpush1.msra.mxu0 0.0
    %5860 = vmatprep.subr.mxu0 0.0
    %5861 = vmatpush1.msra.mxu0 0.0
    %5862 = vmatprep.subr.mxu0 0.0
    %5863 = vmatpush1.msra.mxu0 0.0
    %5864 = vmatprep.subr.mxu0 0.0
    %5865 = vmatpush1.msra.mxu0 0.0
    %5866 = vmatprep.subr.mxu0 0.0
    %5867 = vmatpush1.msra.mxu0 0.0
    %5868 = vmatprep.subr.mxu0 0.0
    %5869 = vmatpush1.msra.mxu0 0.0
    %5870 = vmatprep.subr.mxu0 0.0
    %5871 = vmatpush1.msra.mxu0 0.0
    %5872 = vmatprep.subr.mxu0 0.0
    %5873 = vmatpush1.msra.mxu0 0.0
    %5874 = vmatprep.subr.mxu0 0.0
    %5875 = vmatpush1.msra.mxu0 0.0
    %5876 = vmatprep.subr.mxu0 0.0
    %5877 = vmatpush1.msra.mxu0 0.0
    %5878 = vmatprep.subr.mxu0 0.0
    %5879 = vmatpush1.msra.mxu0 0.0
    %5880 = vmatprep.subr.mxu0 0.0
    %5881 = vmatpush1.msra.mxu0 0.0
    %5882 = vmatprep.subr.mxu0 0.0
    %5883 = vmatpush1.msra.mxu0 %v5854
    %5884 = vmatprep.subr.mxu0 0.0
    %5885 = vmatpush1.msra.mxu0 %v5853
    %5886 = vmatprep.subr.mxu0 0.0
    %5887 = vmatpush1.msra.mxu0 %v5852
    %5888 = vmatprep.subr.mxu0 0.0
    %5889 = vmatpush1.msra.mxu0 %v5851
    %5890 = vmatprep.subr.mxu0 0.0
    %5891 = vmatpush2.msra.mxu0 0.0
    %5892 = vmatprep.subr.mxu0 0.0
    %5893 = vmatpush2.msra.mxu0 0.0
    %5894 = vmatprep.subr.mxu0 0.0
    %5895 = vmatpush2.msra.mxu0 0.0
    %5896 = vmatprep.subr.mxu0 0.0
    %5897 = vmatpush2.msra.mxu0 0.0
    %5898 = vmatprep.subr.mxu0 0.0
    %5899 = vmatpush2.msra.mxu0 0.0
    %5900 = vmatprep.subr.mxu0 0.0
    %5901 = vmatpush2.msra.mxu0 0.0
    %5902 = vmatprep.subr.mxu0 0.0
    %5903 = vmatpush2.msra.mxu0 0.0
    %5904 = vmatprep.subr.mxu0 0.0
    %5905 = vmatpush2.msra.mxu0 0.0
    %5906 = vmatprep.subr.mxu0 0.0
    %5907 = vmatpush2.msra.mxu0 0.0
    %5908 = vmatprep.subr.mxu0 0.0
    %5909 = vmatpush2.msra.mxu0 0.0
    %5910 = vmatprep.subr.mxu0 0.0
    %5911 = vmatpush2.msra.mxu0 0.0
    %5912 = vmatprep.subr.mxu0 0.0
    %5913 = vmatpush2.msra.mxu0 0.0
    %5914 = vmatprep.subr.mxu0 0.0
    %5915 = vmatpush2.msra.mxu0 0.0
    %5916 = vmatprep.subr.mxu0 0.0
    %5917 = vmatpush2.msra.mxu0 0.0
    %5918 = vmatprep.subr.mxu0 0.0
    %5919 = vmatpush2.msra.mxu0 0.0
    %5920 = vmatprep.subr.mxu0 0.0
    %5921 = vmatpush2.msra.mxu0 0.0
    %5922 = vmatprep.mubr.f32.mxu0 0.0
    %5923 = vmatmul.mubr.f32.gmra.mxu0 %v5856
    %v5924 = vpop.f32.mrf.mxu0
    %v5925 = vadd.f32 0.0, %v5924
    %v5926 = vpop.f32.mrf.mxu0
    %5927 = vdwg.mxu0
    %5928 = vst [vmem:[#allocation3] sm:$0x3] %v5925
    // Predicated region
    $region82: #{encode_image.1} parent=1 // pred_check
      _
    $region83: #{encode_image.1} parent=1 // pred_check_branch
      %5930 = sbr.rel (0) target = $region85
    $region84: #{encode_image.1} parent=1 // pred_region
      %s5932 = ssub.s32 32, 32
      %5933 = vsyncadd [#allocation4], %s5932
      %s5935 = sshll.u32 [#allocation3], 4
      %s5936 = int_to_ptr.vmem [resolvable:$true] %s5935
      %5938 = dma.vmem_to_hbm [thread:$0]  %s5936, 32, %s20, [#allocation4]
    $region85: #{encode_image.1} parent=1 // pred_fallthru
      _
    // Predicated region
    $region86: #{encode_image.1} parent=1 // pred_check
      _
    $region87: #{encode_image.1} parent=1 // pred_check_branch
      %5940 = sbr.rel (0) target = $region89
    $region88: #{encode_image.1} parent=1 // pred_region
      %5941 = dma.done [#allocation4], 32
    $region89: #{encode_image.1} parent=1 // pred_fallthru
      _
    %5942 = vsyncpa [#allocation4], 1

</llo_original>
